<compile_context>
chip_gen: v5e
topology: v5e:2x2
jax: 0.10.0
libtpu: 0.0.40
codegen_flags: <defaults>
</compile_context>

<pallas_src>
import math
from functools import partial

import jax
import jax.numpy as jnp
from jax.experimental import pallas as pl
from jax.experimental.pallas import tpu as pltpu


# ----------------------------------------------------------------------------
# In-kernel helpers
# ----------------------------------------------------------------------------
def _ln(x, g, b, eps=1e-5):
    """LayerNorm over the last (feature) axis; g/b are (1, E)."""
    mu = jnp.mean(x, axis=-1, keepdims=True)
    xc = x - mu
    var = jnp.mean(xc * xc, axis=-1, keepdims=True)
    return xc * jax.lax.rsqrt(var + eps) * g + b


# ----------------------------------------------------------------------------
# Single fused kernel: preamble (step 0) -> encoder layer l -> head (last step)
# ----------------------------------------------------------------------------
def _fused_model_kernel(
        # grid-invariant inputs (constant index_map -> DMA'd once, resident)
        x9_ref, w1f_ref, sc1_ref, sh1_ref, w2f_ref, sc2_ref, sh2_ref,
        we_ref, be_ref, pe_ref,
        # per-layer stacked weights (layer axis selected by index_map)
        wqkv_ref, bqkv_ref, wo_ref, bo_ref, ln1g_ref, ln1b_ref,
        wff1_ref, bff1_ref, wff2_ref, bff2_ref, ln2g_ref, ln2b_ref,
        # output head
        outw_ref, outb_ref,
        # output + scratch
        o_ref, h_vmem,
        *, num_heads, batch, seq, embed_scale):
    layer = pl.program_id(0)
    n_layers = pl.num_programs(0)
    B, S = batch, seq
    E = we_ref.shape[0]
    Dh = E // num_heads
    attn_scale = 1.0 / math.sqrt(Dh)

    # ---------------- step 0: conv stack + embedding + positional encoding ---
    @pl.when(layer == 0)
    def _preamble():
        x9 = x9_ref[...].astype(jnp.bfloat16)                        # (B*S, K*Cin)
        a1 = jnp.dot(x9, w1f_ref[...], preferred_element_type=jnp.float32)
        a1 = jnp.maximum(a1 * sc1_ref[...] + sh1_ref[...], 0.0)      # (B*S, C1)
        c1 = a1.shape[1]
        zrow = jnp.zeros((1, c1), jnp.float32)
        # Build conv2's 3-tap im2col per batch (zero halo of the conv1 output).
        pieces = []
        for b in range(B):
            a1p = jnp.concatenate([zrow, a1[b * S:(b + 1) * S, :], zrow], axis=0)
            pieces.append(jnp.concatenate(
                [a1p[0:S, :], a1p[1:S + 1, :], a1p[2:S + 2, :]], axis=-1))
        a2in = jnp.concatenate(pieces, axis=0).astype(jnp.bfloat16)  # (B*S, 3*C1)
        a2 = jnp.dot(a2in, w2f_ref[...], preferred_element_type=jnp.float32)
        a2 = jnp.maximum(a2 * sc2_ref[...] + sh2_ref[...], 0.0)      # (B*S, E)
        emb = jnp.dot(a2.astype(jnp.bfloat16), we_ref[...],
                      preferred_element_type=jnp.float32) + be_ref[...]
        pe = pe_ref[...]
        rows = [emb[b * S:(b + 1) * S, :] * embed_scale + pe for b in range(B)]
        h_vmem[...] = jnp.concatenate(rows, axis=0)                  # (B*S, E)

    # ---------------- encoder layer `layer` (post-norm, eval) ----------------
    x = h_vmem[...]                                                  # (B*S, E) f32
    xb = x.astype(jnp.bfloat16)

    qkv = jnp.dot(xb, wqkv_ref[...],
                  preferred_element_type=jnp.float32) + bqkv_ref[...]  # (B*S, 3E)

    attn_parts = []
    for b in range(B):                                  # attention is per-batch
        rb = qkv[b * S:(b + 1) * S, :]                               # (S, 3E)
        q3 = jnp.stack([rb[:, h * Dh:(h + 1) * Dh]
                        for h in range(num_heads)], axis=0).astype(jnp.bfloat16)
        k3 = jnp.stack([rb[:, E + h * Dh:E + (h + 1) * Dh]
                        for h in range(num_heads)], axis=0).astype(jnp.bfloat16)
        v3 = jnp.stack([rb[:, 2 * E + h * Dh:2 * E + (h + 1) * Dh]
                        for h in range(num_heads)], axis=0).astype(jnp.bfloat16)
        # head-batched QK^T and PV
        s = jax.lax.dot_general(q3, k3, (((2,), (2,)), ((0,), (0,))),
                                preferred_element_type=jnp.float32) * attn_scale
        m = jnp.max(s, axis=-1, keepdims=True)
        p = jnp.exp(s - m)
        p = p * pl.reciprocal(jnp.sum(p, axis=-1, keepdims=True), approx=True)
        o3 = jax.lax.dot_general(p.astype(jnp.bfloat16), v3,
                                 (((2,), (1,)), ((0,), (0,))),
                                 preferred_element_type=jnp.float32)  # (H, S, Dh)
        attn_parts.append(jnp.concatenate(
            [o3[h] for h in range(num_heads)], axis=-1))              # (S, E)

    attn_in = jnp.concatenate(attn_parts, axis=0).astype(jnp.bfloat16)  # (B*S, E)
    attn = jnp.dot(attn_in, wo_ref[...],                 # single K=E out-proj
                   preferred_element_type=jnp.float32) + bo_ref[...]

    r1 = _ln(x + attn, ln1g_ref[...], ln1b_ref[...])
    h1 = jnp.maximum(jnp.dot(r1.astype(jnp.bfloat16), wff1_ref[...],
                             preferred_element_type=jnp.float32) + bff1_ref[...],
                     0.0)
    h2 = jnp.dot(h1.astype(jnp.bfloat16), wff2_ref[...],
                 preferred_element_type=jnp.float32) + bff2_ref[...]
    h_new = _ln(r1 + h2, ln2g_ref[...], ln2b_ref[...])
    h_vmem[...] = h_new

    # ---------------- last step: output linear + log_softmax -----------------
    @pl.when(layer == n_layers - 1)
    def _head():
        # lane-dense (C, B*S) output: logits^T = W^T_out · h^T
        logits = jax.lax.dot_general(outw_ref[...], h_new.astype(jnp.bfloat16),
                                     (((1,), (1,)), ((), ())),
                                     preferred_element_type=jnp.float32)
        logits = logits + outb_ref[...]                              # (C, B*S)
        m = jnp.max(logits, axis=0, keepdims=True)
        z = jnp.exp(logits - m)
        lse = m + jnp.log(jnp.sum(z, axis=0, keepdims=True))
        o_ref[...] = logits - lse


# ----------------------------------------------------------------------------
# Parameter preparation (done ONCE): fold eval-BatchNorm, flatten conv taps,
# stack per-layer weights along a leading layer axis, pre-cast weights to bf16.
# ----------------------------------------------------------------------------
def prepare_params(params):
    eps = 1e-5
    conv1_w, conv1_b = params['conv1_w'], params['conv1_b']   # (K, Cin, C1)
    conv2_w, conv2_b = params['conv2_w'], params['conv2_b']   # (K, C1, E)
    g, bb, rm, rv = (params['bn_g'], params['bn_b'],
                     params['bn_rm'], params['bn_rv'])
    C1 = conv1_w.shape[2]
    E = conv2_w.shape[2]
    # TODO(synk): the reference applies BatchNorm1d(dim_model) to conv1's
    # dim_model//2-channel output (a shape bug that raises in PyTorch); we use
    # the first dim_model//2 channels of conv_norm's parameters for that step.
    inv1 = g[:C1] * jax.lax.rsqrt(rv[:C1] + eps)
    sc1 = inv1.reshape(1, -1)
    sh1 = (bb[:C1] + (conv1_b - rm[:C1]) * inv1).reshape(1, -1)
    inv2 = g * jax.lax.rsqrt(rv + eps)
    sc2 = inv2.reshape(1, -1)
    sh2 = (bb + (conv2_b - rm) * inv2).reshape(1, -1)

    layers = params['layers']

    def stack_w(name):
        return jnp.stack([lp[name] for lp in layers], axis=0).astype(jnp.bfloat16)

    def stack_b(name):
        return jnp.stack([lp[name] for lp in layers], axis=0)[:, None, :]

    return dict(
        w1f=conv1_w.reshape(-1, C1).astype(jnp.bfloat16),     # (K*Cin, C1)
        sc1=sc1, sh1=sh1,
        w2f=conv2_w.reshape(-1, E).astype(jnp.bfloat16),      # (K*C1, E)
        sc2=sc2, sh2=sh2,
        we=params['emb_w'].astype(jnp.bfloat16),
        be=params['emb_b'].reshape(1, -1),
        pe=params['pe'],
        wqkv=stack_w('wqkv'), bqkv=stack_b('bqkv'),
        wo=stack_w('wo'), bo=stack_b('bo'),
        ln1g=stack_b('ln1_g'), ln1b=stack_b('ln1_b'),
        wff1=stack_w('w1'), bff1=stack_b('b1'),
        wff2=stack_w('w2'), bff2=stack_b('b2'),
        ln2g=stack_b('ln2_g'), ln2b=stack_b('ln2_b'),
        out_w_t=params['out_w'].T.astype(jnp.bfloat16),       # (C, E)
        out_b=params['out_b'].reshape(-1, 1),                 # (C, 1)
    )


# ----------------------------------------------------------------------------
# Full forward pass (mirrors TransformerModel.forward, eval mode). ONE kernel.
# ----------------------------------------------------------------------------
def forward(x, kp, *, num_heads):
    # x: (B, in_channels, L) in the PyTorch NCL convention.
    B, Cin, L = x.shape
    E = kp['we'].shape[0]
    C1 = kp['w1f'].shape[1]
    KC1 = kp['w1f'].shape[0]
    KC2 = kp['w2f'].shape[0]
    FF = kp['wff1'].shape[2]
    nL = kp['wqkv'].shape[0]
    C = kp['out_w_t'].shape[0]

    # Host-side layout plumbing only: NCL -> (B*L, K*Cin) conv1 im2col.
    xcl = jnp.transpose(x, (0, 2, 1)).astype(jnp.float32)            # (B, L, Cin)
    xp = jnp.pad(xcl, ((0, 0), (1, 1), (0, 0)))
    x9 = jnp.concatenate([xp[:, 0:L], xp[:, 1:L + 1], xp[:, 2:L + 2]], axis=-1)
    x9 = x9.reshape(B * L, KC1)

    pe = kp['pe'][:L]

    kernel = partial(_fused_model_kernel, num_heads=num_heads, batch=B, seq=L,
                     embed_scale=math.sqrt(float(E)))

    const2 = lambda l: (0, 0)
    lay3 = lambda l: (l, 0, 0)

    out_t = pl.pallas_call(
        kernel,
        out_shape=jax.ShapeDtypeStruct((C, B * L), jnp.float32),
        grid=(nL,),
        in_specs=[
            pl.BlockSpec((B * L, KC1), const2),          # x9 (conv1 im2col)
            pl.BlockSpec((KC1, C1), const2),             # conv1 weight (flat)
            pl.BlockSpec((1, C1), const2),               # conv1 BN scale
            pl.BlockSpec((1, C1), const2),               # conv1 BN shift
            pl.BlockSpec((KC2, E), const2),              # conv2 weight (flat)
            pl.BlockSpec((1, E), const2),                # conv2 BN scale
            pl.BlockSpec((1, E), const2),                # conv2 BN shift
            pl.BlockSpec((E, E), const2),                # input_embedding W
            pl.BlockSpec((1, E), const2),                # input_embedding b
            pl.BlockSpec((L, E), const2),                # positional encoding
            pl.BlockSpec((None, E, 3 * E), lay3),        # wqkv  (layer-stacked)
            pl.BlockSpec((None, 1, 3 * E), lay3),        # bqkv
            pl.BlockSpec((None, E, E), lay3),            # wo
            pl.BlockSpec((None, 1, E), lay3),            # bo
            pl.BlockSpec((None, 1, E), lay3),            # ln1 gamma
            pl.BlockSpec((None, 1, E), lay3),            # ln1 beta
            pl.BlockSpec((None, E, FF), lay3),           # ff linear1 W
            pl.BlockSpec((None, 1, FF), lay3),           # ff linear1 b
            pl.BlockSpec((None, FF, E), lay3),           # ff linear2 W
            pl.BlockSpec((None, 1, E), lay3),            # ff linear2 b
            pl.BlockSpec((None, 1, E), lay3),            # ln2 gamma
            pl.BlockSpec((None, 1, E), lay3),            # ln2 beta
            pl.BlockSpec((C, E), const2),                # output linear W^T
            pl.BlockSpec((C, 1), const2),                # output linear b
        ],
        out_specs=pl.BlockSpec((C, B * L), const2),
        scratch_shapes=[pltpu.VMEM((B * L, E), jnp.float32)],   # resident h
        compiler_params=pltpu.CompilerParams(
            dimension_semantics=("arbitrary",)),
    )(x9, kp['w1f'], kp['sc1'], kp['sh1'], kp['w2f'], kp['sc2'], kp['sh2'],
      kp['we'], kp['be'], pe,
      kp['wqkv'], kp['bqkv'], kp['wo'], kp['bo'], kp['ln1g'], kp['ln1b'],
      kp['wff1'], kp['bff1'], kp['wff2'], kp['bff2'], kp['ln2g'], kp['ln2b'],
      kp['out_w_t'], kp['out_b'])

    # Lane-dense (C, B*L) -> (B, L, C); pure layout plumbing in the wrapper.
    return out_t.T.reshape(B, L, C)


# ----------------------------------------------------------------------------
# Deterministic parameter init (shapes match the torch module; stored in
# kernel-friendly (in, out) / (K, Cin, Cout) layouts).
# ----------------------------------------------------------------------------
class _KeyGen:
    def __init__(self, key):
        self.key = key

    def __call__(self):
        self.key, k = jax.random.split(self.key)
        return k


def _uniform(key, shape, bound):
    return jax.random.uniform(key, shape, jnp.float32, -bound, bound)


def init_params(key, *, in_channels=3, num_classes=3, dim_model=128, num_heads=4,
                num_encoder_layers=2, dim_feedforward=256, seq_len=64):
    assert dim_model % 2 == 0, 'dim_model must be divisible by 2'
    assert dim_model % num_heads == 0
    kg = _KeyGen(key)
    E, C1, K = dim_model, dim_model // 2, 3

    def conv(cin, cout, k):
        b = 1.0 / math.sqrt(cin * k)
        return _uniform(kg(), (k, cin, cout), b), _uniform(kg(), (cout,), b)

    def linear(fin, fout):
        b = 1.0 / math.sqrt(fin)
        return _uniform(kg(), (fin, fout), b), _uniform(kg(), (fout,), b)

    conv1_w, conv1_b = conv(in_channels, C1, K)
    conv2_w, conv2_b = conv(C1, E, K)
    emb_w, emb_b = linear(E, E)

    layers = []
    for _ in range(num_encoder_layers):
        wqkv, bqkv = linear(E, 3 * E)
        wo, bo = linear(E, E)
        w1, b1 = linear(E, dim_feedforward)
        w2, b2 = linear(dim_feedforward, E)
        layers.append(dict(
            wqkv=wqkv, bqkv=bqkv, wo=wo, bo=bo, w1=w1, b1=b1, w2=w2, b2=b2,
            ln1_g=jnp.ones((E,), jnp.float32), ln1_b=jnp.zeros((E,), jnp.float32),
            ln2_g=jnp.ones((E,), jnp.float32), ln2_b=jnp.zeros((E,), jnp.float32)))

    out_w, out_b = linear(E, num_classes)

    # PositionalEncoding table (first seq_len rows of the max_len table).
    pos = jnp.arange(seq_len, dtype=jnp.float32)[:, None]
    div = jnp.exp(jnp.arange(0, E, 2, dtype=jnp.float32)
                  * (-math.log(10000.0) / E))
    pe = jnp.zeros((seq_len, E), jnp.float32)
    pe = pe.at[:, 0::2].set(jnp.sin(pos * div))
    pe = pe.at[:, 1::2].set(jnp.cos(pos * div))

    return dict(conv1_w=conv1_w, conv1_b=conv1_b,
                conv2_w=conv2_w, conv2_b=conv2_b,
                bn_g=jnp.ones((E,), jnp.float32), bn_b=jnp.zeros((E,), jnp.float32),
                bn_rm=jnp.zeros((E,), jnp.float32), bn_rv=jnp.ones((E,), jnp.float32),
                emb_w=emb_w, emb_b=emb_b, pe=pe,
                layers=layers, out_w=out_w, out_b=out_b)


if __name__ == "__main__":
    # Small configuration consistent with the module (dim_model divisible by 2,
    # dim_model % num_heads == 0): B=2, in_channels=3, L=64, d_model=128,
    # 4 heads, 2 encoder layers, ff=256, 3 classes.
    B, Cin, L = 2, 3, 64
    dim_model, num_heads, num_layers, dim_ff, num_classes = 128, 4, 2, 256, 3

    key = jax.random.PRNGKey(0)
    kx, kparams = jax.random.split(key)
    x = jax.random.normal(kx, (B, Cin, L), jnp.float32)
    raw_params = init_params(kparams, in_channels=Cin, num_classes=num_classes,
                             dim_model=dim_model, num_heads=num_heads,
                             num_encoder_layers=num_layers,
                             dim_feedforward=dim_ff, seq_len=L)
    # bf16 pre-cast / layer stacking done ONCE, outside the jitted forward.
    kparams_prepared = prepare_params(raw_params)

    fwd = jax.jit(partial(forward, num_heads=num_heads))
    out = jax.block_until_ready(fwd(x, kparams_prepared))

    assert out.shape == (B, L, num_classes), out.shape
    assert bool(jnp.isfinite(out).all())
    # log_softmax rows must exponentiate-sum to 1.
    assert bool(jnp.allclose(jnp.exp(out).sum(-1), 1.0, atol=1e-3))
    print("KERNEL_OK")
</pallas_src>

<mosaic_0001>
module attributes {stable_mosaic.version = 11 : i64} {
  func.func @_fused_model_kernel(%arg0: i32, %arg1: memref<128x9xf32, #tpu.memory_space<vmem>>, %arg2: memref<9x64xbf16, #tpu.memory_space<vmem>>, %arg3: memref<1x64xf32, #tpu.memory_space<vmem>>, %arg4: memref<1x64xf32, #tpu.memory_space<vmem>>, %arg5: memref<192x128xbf16, #tpu.memory_space<vmem>>, %arg6: memref<1x128xf32, #tpu.memory_space<vmem>>, %arg7: memref<1x128xf32, #tpu.memory_space<vmem>>, %arg8: memref<128x128xbf16, #tpu.memory_space<vmem>>, %arg9: memref<1x128xf32, #tpu.memory_space<vmem>>, %arg10: memref<64x128xf32, #tpu.memory_space<vmem>>, %arg11: memref<1x128x384xbf16, #tpu.memory_space<vmem>>, %arg12: memref<1x1x384xf32, #tpu.memory_space<vmem>>, %arg13: memref<1x128x128xbf16, #tpu.memory_space<vmem>>, %arg14: memref<1x1x128xf32, #tpu.memory_space<vmem>>, %arg15: memref<1x1x128xf32, #tpu.memory_space<vmem>>, %arg16: memref<1x1x128xf32, #tpu.memory_space<vmem>>, %arg17: memref<1x128x256xbf16, #tpu.memory_space<vmem>>, %arg18: memref<1x1x256xf32, #tpu.memory_space<vmem>>, %arg19: memref<1x256x128xbf16, #tpu.memory_space<vmem>>, %arg20: memref<1x1x128xf32, #tpu.memory_space<vmem>>, %arg21: memref<1x1x128xf32, #tpu.memory_space<vmem>>, %arg22: memref<1x1x128xf32, #tpu.memory_space<vmem>>, %arg23: memref<3x128xbf16, #tpu.memory_space<vmem>>, %arg24: memref<3x1xf32, #tpu.memory_space<vmem>>, %arg25: memref<3x128xf32, #tpu.memory_space<vmem>>, %arg26: memref<128x128xf32, #tpu.memory_space<vmem>>) attributes {dimension_semantics = [#tpu.dimension_semantics<arbitrary>], iteration_bounds = array<i64: 2>, scalar_prefetch = 0 : i64, scratch_operands = 1 : i64, tpu.core_type = #tpu.core_type<tc>, window_params = [{pipeline_mode = #tpu.pipeline_mode<synchronous>, transform_indices = @transform_0, window_bounds = array<i64: 128, 9>}, {pipeline_mode = #tpu.pipeline_mode<synchronous>, transform_indices = @transform_1, window_bounds = array<i64: 9, 64>}, {pipeline_mode = #tpu.pipeline_mode<synchronous>, transform_indices = @transform_2, window_bounds = array<i64: 1, 64>}, {pipeline_mode = #tpu.pipeline_mode<synchronous>, transform_indices = @transform_3, window_bounds = array<i64: 1, 64>}, {pipeline_mode = #tpu.pipeline_mode<synchronous>, transform_indices = @transform_4, window_bounds = array<i64: 192, 128>}, {pipeline_mode = #tpu.pipeline_mode<synchronous>, transform_indices = @transform_5, window_bounds = array<i64: 1, 128>}, {pipeline_mode = #tpu.pipeline_mode<synchronous>, transform_indices = @transform_6, window_bounds = array<i64: 1, 128>}, {pipeline_mode = #tpu.pipeline_mode<synchronous>, transform_indices = @transform_7, window_bounds = array<i64: 128, 128>}, {pipeline_mode = #tpu.pipeline_mode<synchronous>, transform_indices = @transform_8, window_bounds = array<i64: 1, 128>}, {pipeline_mode = #tpu.pipeline_mode<synchronous>, transform_indices = @transform_9, window_bounds = array<i64: 64, 128>}, {transform_indices = @transform_10, window_bounds = array<i64: 1, 128, 384>}, {transform_indices = @transform_11, window_bounds = array<i64: 1, 1, 384>}, {transform_indices = @transform_12, window_bounds = array<i64: 1, 128, 128>}, {transform_indices = @transform_13, window_bounds = array<i64: 1, 1, 128>}, {transform_indices = @transform_14, window_bounds = array<i64: 1, 1, 128>}, {transform_indices = @transform_15, window_bounds = array<i64: 1, 1, 128>}, {transform_indices = @transform_16, window_bounds = array<i64: 1, 128, 256>}, {transform_indices = @transform_17, window_bounds = array<i64: 1, 1, 256>}, {transform_indices = @transform_18, window_bounds = array<i64: 1, 256, 128>}, {transform_indices = @transform_19, window_bounds = array<i64: 1, 1, 128>}, {transform_indices = @transform_20, window_bounds = array<i64: 1, 1, 128>}, {transform_indices = @transform_21, window_bounds = array<i64: 1, 1, 128>}, {pipeline_mode = #tpu.pipeline_mode<synchronous>, transform_indices = @transform_22, window_bounds = array<i64: 3, 128>}, {pipeline_mode = #tpu.pipeline_mode<synchronous>, transform_indices = @transform_23, window_bounds = array<i64: 3, 1>}, {pipeline_mode = #tpu.pipeline_mode<synchronous>, transform_indices = @transform_24, window_bounds = array<i64: 3, 128>}]} {
    %c0_i32 = arith.constant 0 : i32
    %0 = arith.cmpi eq, %arg0, %c0_i32 : i32
    %1 = arith.extui %0 : i1 to i32
    %c0_i32_0 = arith.constant 0 : i32
    %2 = arith.cmpi ne, %1, %c0_i32_0 : i32
    scf.if %2 {
      %c0_65 = arith.constant 0 : index
      %c0_66 = arith.constant 0 : index
      %203 = vector.load %arg1[%c0_65, %c0_66] : memref<128x9xf32, #tpu.memory_space<vmem>>, vector<128x9xf32>
      %204 = arith.truncf %203 : vector<128x9xf32> to vector<128x9xbf16>
      %c0_67 = arith.constant 0 : index
      %c0_68 = arith.constant 0 : index
      %205 = vector.load %arg2[%c0_67, %c0_68] : memref<9x64xbf16, #tpu.memory_space<vmem>>, vector<9x64xbf16>
      %cst_69 = arith.constant dense<0.000000e+00> : vector<128x64xf32>
      %206 = tpu.matmul %204, %205, %cst_69 {dimension_numbers = #tpu.dot_dimension_numbers<[1], [0], [0], [1], [0, 0, 1, 1], [], []>} : vector<128x9xbf16>, vector<9x64xbf16>, vector<128x64xf32> -> vector<128x64xf32>
      %c0_70 = arith.constant 0 : index
      %c0_71 = arith.constant 0 : index
      %207 = vector.load %arg3[%c0_70, %c0_71] : memref<1x64xf32, #tpu.memory_space<vmem>>, vector<1x64xf32>
      %208 = vector.broadcast %207 : vector<1x64xf32> to vector<128x64xf32>
      %209 = arith.mulf %206, %208 : vector<128x64xf32>
      %c0_72 = arith.constant 0 : index
      %c0_73 = arith.constant 0 : index
      %210 = vector.load %arg4[%c0_72, %c0_73] : memref<1x64xf32, #tpu.memory_space<vmem>>, vector<1x64xf32>
      %211 = vector.broadcast %210 : vector<1x64xf32> to vector<128x64xf32>
      %212 = arith.addf %209, %211 : vector<128x64xf32>
      %cst_74 = arith.constant 0.000000e+00 : f32
      %213 = vector.broadcast %cst_74 : f32 to vector<128x64xf32>
      %214 = arith.maximumf %212, %213 : vector<128x64xf32>
      %cst_75 = arith.constant 0.000000e+00 : f32
      %215 = vector.broadcast %cst_75 : f32 to vector<1x64xf32>
      %216 = vector.extract_strided_slice %214 {offsets = [0, 0], sizes = [64, 64], strides = [1, 1]} : vector<128x64xf32> to vector<64x64xf32>
      %217 = tpu.concatenate %215, %216, %215 in 0 : vector<1x64xf32>, vector<64x64xf32>, vector<1x64xf32> -> vector<66x64xf32>
      %218 = vector.extract_strided_slice %217 {offsets = [0, 0], sizes = [64, 64], strides = [1, 1]} : vector<66x64xf32> to vector<64x64xf32>
      %219 = vector.extract_strided_slice %217 {offsets = [1, 0], sizes = [64, 64], strides = [1, 1]} : vector<66x64xf32> to vector<64x64xf32>
      %220 = vector.extract_strided_slice %217 {offsets = [2, 0], sizes = [64, 64], strides = [1, 1]} : vector<66x64xf32> to vector<64x64xf32>
      %221 = tpu.concatenate %218, %219, %220 in 1 : vector<64x64xf32>, vector<64x64xf32>, vector<64x64xf32> -> vector<64x192xf32>
      %222 = vector.extract_strided_slice %214 {offsets = [64, 0], sizes = [64, 64], strides = [1, 1]} : vector<128x64xf32> to vector<64x64xf32>
      %223 = tpu.concatenate %215, %222, %215 in 0 : vector<1x64xf32>, vector<64x64xf32>, vector<1x64xf32> -> vector<66x64xf32>
      %224 = vector.extract_strided_slice %223 {offsets = [0, 0], sizes = [64, 64], strides = [1, 1]} : vector<66x64xf32> to vector<64x64xf32>
      %225 = vector.extract_strided_slice %223 {offsets = [1, 0], sizes = [64, 64], strides = [1, 1]} : vector<66x64xf32> to vector<64x64xf32>
      %226 = vector.extract_strided_slice %223 {offsets = [2, 0], sizes = [64, 64], strides = [1, 1]} : vector<66x64xf32> to vector<64x64xf32>
      %227 = tpu.concatenate %224, %225, %226 in 1 : vector<64x64xf32>, vector<64x64xf32>, vector<64x64xf32> -> vector<64x192xf32>
      %228 = tpu.concatenate %221, %227 in 0 : vector<64x192xf32>, vector<64x192xf32> -> vector<128x192xf32>
      %229 = arith.truncf %228 : vector<128x192xf32> to vector<128x192xbf16>
      %c0_76 = arith.constant 0 : index
      %c0_77 = arith.constant 0 : index
      %230 = vector.load %arg5[%c0_76, %c0_77] : memref<192x128xbf16, #tpu.memory_space<vmem>>, vector<192x128xbf16>
      %cst_78 = arith.constant dense<0.000000e+00> : vector<128x128xf32>
      %231 = tpu.matmul %229, %230, %cst_78 {dimension_numbers = #tpu.dot_dimension_numbers<[1], [0], [0], [1], [0, 0, 1, 1], [], []>} : vector<128x192xbf16>, vector<192x128xbf16>, vector<128x128xf32> -> vector<128x128xf32>
      %c0_79 = arith.constant 0 : index
      %c0_80 = arith.constant 0 : index
      %232 = vector.load %arg6[%c0_79, %c0_80] : memref<1x128xf32, #tpu.memory_space<vmem>>, vector<1x128xf32>
      %233 = vector.broadcast %232 : vector<1x128xf32> to vector<128x128xf32>
      %234 = arith.mulf %231, %233 : vector<128x128xf32>
      %c0_81 = arith.constant 0 : index
      %c0_82 = arith.constant 0 : index
      %235 = vector.load %arg7[%c0_81, %c0_82] : memref<1x128xf32, #tpu.memory_space<vmem>>, vector<1x128xf32>
      %236 = vector.broadcast %235 : vector<1x128xf32> to vector<128x128xf32>
      %237 = arith.addf %234, %236 : vector<128x128xf32>
      %cst_83 = arith.constant 0.000000e+00 : f32
      %238 = vector.broadcast %cst_83 : f32 to vector<128x128xf32>
      %239 = arith.maximumf %237, %238 : vector<128x128xf32>
      %240 = arith.truncf %239 : vector<128x128xf32> to vector<128x128xbf16>
      %c0_84 = arith.constant 0 : index
      %c0_85 = arith.constant 0 : index
      %241 = vector.load %arg8[%c0_84, %c0_85] : memref<128x128xbf16, #tpu.memory_space<vmem>>, vector<128x128xbf16>
      %cst_86 = arith.constant dense<0.000000e+00> : vector<128x128xf32>
      %242 = tpu.matmul %240, %241, %cst_86 {dimension_numbers = #tpu.dot_dimension_numbers<[1], [0], [0], [1], [0, 0, 1, 1], [], []>} : vector<128x128xbf16>, vector<128x128xbf16>, vector<128x128xf32> -> vector<128x128xf32>
      %c0_87 = arith.constant 0 : index
      %c0_88 = arith.constant 0 : index
      %243 = vector.load %arg9[%c0_87, %c0_88] : memref<1x128xf32, #tpu.memory_space<vmem>>, vector<1x128xf32>
      %244 = vector.broadcast %243 : vector<1x128xf32> to vector<128x128xf32>
      %245 = arith.addf %242, %244 : vector<128x128xf32>
      %c0_89 = arith.constant 0 : index
      %c0_90 = arith.constant 0 : index
      %246 = vector.load %arg10[%c0_89, %c0_90] : memref<64x128xf32, #tpu.memory_space<vmem>>, vector<64x128xf32>
      %247 = vector.extract_strided_slice %245 {offsets = [0, 0], sizes = [64, 128], strides = [1, 1]} : vector<128x128xf32> to vector<64x128xf32>
      %cst_91 = arith.constant 11.3137083 : f32
      %248 = vector.broadcast %cst_91 : f32 to vector<64x128xf32>
      %249 = arith.mulf %247, %248 : vector<64x128xf32>
      %250 = arith.addf %249, %246 : vector<64x128xf32>
      %251 = vector.extract_strided_slice %245 {offsets = [64, 0], sizes = [64, 128], strides = [1, 1]} : vector<128x128xf32> to vector<64x128xf32>
      %cst_92 = arith.constant 11.3137083 : f32
      %252 = vector.broadcast %cst_92 : f32 to vector<64x128xf32>
      %253 = arith.mulf %251, %252 : vector<64x128xf32>
      %254 = arith.addf %253, %246 : vector<64x128xf32>
      %255 = tpu.concatenate %250, %254 in 0 : vector<64x128xf32>, vector<64x128xf32> -> vector<128x128xf32>
      %c0_93 = arith.constant 0 : index
      %c0_94 = arith.constant 0 : index
      %256 = vector.load %arg26[%c0_93, %c0_94] : memref<128x128xf32, #tpu.memory_space<vmem>>, vector<128x128xf32>
      tpu.vector_store %arg26[%c0_93, %c0_94], %255 {strides = array<i32>} : memref<128x128xf32, #tpu.memory_space<vmem>>, vector<128x128xf32>,
    } else {
    }
    %c0 = arith.constant 0 : index
    %c0_1 = arith.constant 0 : index
    %3 = vector.load %arg26[%c0, %c0_1] : memref<128x128xf32, #tpu.memory_space<vmem>>, vector<128x128xf32>
    %4 = arith.truncf %3 : vector<128x128xf32> to vector<128x128xbf16>
    %c0_2 = arith.constant 0 : index
    %c0_3 = arith.constant 0 : index
    %c0_4 = arith.constant 0 : index
    %5 = vector.load %arg11[%c0_2, %c0_3, %c0_4] : memref<1x128x384xbf16, #tpu.memory_space<vmem>>, vector<1x128x384xbf16>
    %6 = vector.shape_cast %5 : vector<1x128x384xbf16> to vector<128x384xbf16>
    %cst = arith.constant dense<0.000000e+00> : vector<128x384xf32>
    %7 = tpu.matmul %4, %6, %cst {dimension_numbers = #tpu.dot_dimension_numbers<[1], [0], [0], [1], [0, 0, 1, 1], [], []>} : vector<128x128xbf16>, vector<128x384xbf16>, vector<128x384xf32> -> vector<128x384xf32>
    %c0_5 = arith.constant 0 : index
    %c0_6 = arith.constant 0 : index
    %c0_7 = arith.constant 0 : index
    %8 = vector.load %arg12[%c0_5, %c0_6, %c0_7] : memref<1x1x384xf32, #tpu.memory_space<vmem>>, vector<1x1x384xf32>
    %9 = vector.shape_cast %8 : vector<1x1x384xf32> to vector<1x384xf32>
    %10 = vector.broadcast %9 : vector<1x384xf32> to vector<128x384xf32>
    %11 = arith.addf %7, %10 : vector<128x384xf32>
    %12 = vector.extract_strided_slice %11 {offsets = [0, 0], sizes = [64, 384], strides = [1, 1]} : vector<128x384xf32> to vector<64x384xf32>
    %13 = vector.extract_strided_slice %12 {offsets = [0, 0], sizes = [64, 32], strides = [1, 1]} : vector<64x384xf32> to vector<64x32xf32>
    %14 = vector.extract_strided_slice %12 {offsets = [0, 32], sizes = [64, 32], strides = [1, 1]} : vector<64x384xf32> to vector<64x32xf32>
    %15 = vector.extract_strided_slice %12 {offsets = [0, 64], sizes = [64, 32], strides = [1, 1]} : vector<64x384xf32> to vector<64x32xf32>
    %16 = vector.extract_strided_slice %12 {offsets = [0, 96], sizes = [64, 32], strides = [1, 1]} : vector<64x384xf32> to vector<64x32xf32>
    %17 = vector.shape_cast %13 : vector<64x32xf32> to vector<1x64x32xf32>
    %18 = vector.shape_cast %14 : vector<64x32xf32> to vector<1x64x32xf32>
    %19 = vector.shape_cast %15 : vector<64x32xf32> to vector<1x64x32xf32>
    %20 = vector.shape_cast %16 : vector<64x32xf32> to vector<1x64x32xf32>
    %21 = tpu.concatenate %17, %18, %19, %20 in 0 : vector<1x64x32xf32>, vector<1x64x32xf32>, vector<1x64x32xf32>, vector<1x64x32xf32> -> vector<4x64x32xf32>
    %22 = arith.truncf %21 : vector<4x64x32xf32> to vector<4x64x32xbf16>
    %23 = vector.extract_strided_slice %12 {offsets = [0, 128], sizes = [64, 32], strides = [1, 1]} : vector<64x384xf32> to vector<64x32xf32>
    %24 = vector.extract_strided_slice %12 {offsets = [0, 160], sizes = [64, 32], strides = [1, 1]} : vector<64x384xf32> to vector<64x32xf32>
    %25 = vector.extract_strided_slice %12 {offsets = [0, 192], sizes = [64, 32], strides = [1, 1]} : vector<64x384xf32> to vector<64x32xf32>
    %26 = vector.extract_strided_slice %12 {offsets = [0, 224], sizes = [64, 32], strides = [1, 1]} : vector<64x384xf32> to vector<64x32xf32>
    %27 = vector.shape_cast %23 : vector<64x32xf32> to vector<1x64x32xf32>
    %28 = vector.shape_cast %24 : vector<64x32xf32> to vector<1x64x32xf32>
    %29 = vector.shape_cast %25 : vector<64x32xf32> to vector<1x64x32xf32>
    %30 = vector.shape_cast %26 : vector<64x32xf32> to vector<1x64x32xf32>
    %31 = tpu.concatenate %27, %28, %29, %30 in 0 : vector<1x64x32xf32>, vector<1x64x32xf32>, vector<1x64x32xf32>, vector<1x64x32xf32> -> vector<4x64x32xf32>
    %32 = arith.truncf %31 : vector<4x64x32xf32> to vector<4x64x32xbf16>
    %33 = vector.extract_strided_slice %12 {offsets = [0, 256], sizes = [64, 32], strides = [1, 1]} : vector<64x384xf32> to vector<64x32xf32>
    %34 = vector.extract_strided_slice %12 {offsets = [0, 288], sizes = [64, 32], strides = [1, 1]} : vector<64x384xf32> to vector<64x32xf32>
    %35 = vector.extract_strided_slice %12 {offsets = [0, 320], sizes = [64, 32], strides = [1, 1]} : vector<64x384xf32> to vector<64x32xf32>
    %36 = vector.extract_strided_slice %12 {offsets = [0, 352], sizes = [64, 32], strides = [1, 1]} : vector<64x384xf32> to vector<64x32xf32>
    %37 = vector.shape_cast %33 : vector<64x32xf32> to vector<1x64x32xf32>
    %38 = vector.shape_cast %34 : vector<64x32xf32> to vector<1x64x32xf32>
    %39 = vector.shape_cast %35 : vector<64x32xf32> to vector<1x64x32xf32>
    %40 = vector.shape_cast %36 : vector<64x32xf32> to vector<1x64x32xf32>
    %41 = tpu.concatenate %37, %38, %39, %40 in 0 : vector<1x64x32xf32>, vector<1x64x32xf32>, vector<1x64x32xf32>, vector<1x64x32xf32> -> vector<4x64x32xf32>
    %42 = arith.truncf %41 : vector<4x64x32xf32> to vector<4x64x32xbf16>
    %cst_8 = arith.constant dense<0.000000e+00> : vector<4x64x64xf32>
    %43 = tpu.matmul %22, %32, %cst_8 {dimension_numbers = #tpu.dot_dimension_numbers<[2], [2], [1], [1], [0, 0, 0, 1, 1, 1], [0], [0]>} : vector<4x64x32xbf16>, vector<4x64x32xbf16>, vector<4x64x64xf32> -> vector<4x64x64xf32>
    %cst_9 = arith.constant 0.176776692 : f32
    %44 = vector.broadcast %cst_9 : f32 to vector<4x64x64xf32>
    %45 = arith.mulf %43, %44 : vector<4x64x64xf32>
    %cst_10 = arith.constant dense<0xFF800000> : vector<4x64xf32>
    %46 = vector.multi_reduction <maximumf>, %45, %cst_10 [2] : vector<4x64x64xf32> to vector<4x64xf32>
    %47 = vector.shape_cast %46 : vector<4x64xf32> to vector<4x64x1xf32>
    %48 = vector.broadcast %47 : vector<4x64x1xf32> to vector<4x64x64xf32>
    %49 = arith.subf %45, %48 : vector<4x64x64xf32>
    %50 = math.exp %49 : vector<4x64x64xf32>
    %cst_11 = arith.constant dense<0.000000e+00> : vector<4x64xf32>
    %51 = vector.multi_reduction <add>, %50, %cst_11 [2] : vector<4x64x64xf32> to vector<4x64xf32>
    %52 = vector.shape_cast %51 : vector<4x64xf32> to vector<4x64x1xf32>
    %53 = tpu.reciprocal %52 {approx = true} : vector<4x64x1xf32> -> vector<4x64x1xf32>
    %54 = vector.broadcast %53 : vector<4x64x1xf32> to vector<4x64x64xf32>
    %55 = arith.mulf %50, %54 : vector<4x64x64xf32>
    %56 = arith.truncf %55 : vector<4x64x64xf32> to vector<4x64x64xbf16>
    %cst_12 = arith.constant dense<0.000000e+00> : vector<4x64x32xf32>
    %57 = tpu.matmul %56, %42, %cst_12 {dimension_numbers = #tpu.dot_dimension_numbers<[2], [1], [1], [2], [0, 0, 0, 1, 1, 2], [0], [0]>} : vector<4x64x64xbf16>, vector<4x64x32xbf16>, vector<4x64x32xf32> -> vector<4x64x32xf32>
    %58 = vector.extract_strided_slice %57 {offsets = [0, 0, 0], sizes = [1, 64, 32], strides = [1, 1, 1]} : vector<4x64x32xf32> to vector<1x64x32xf32>
    %59 = vector.shape_cast %58 : vector<1x64x32xf32> to vector<64x32xf32>
    %60 = vector.extract_strided_slice %57 {offsets = [1, 0, 0], sizes = [1, 64, 32], strides = [1, 1, 1]} : vector<4x64x32xf32> to vector<1x64x32xf32>
    %61 = vector.shape_cast %60 : vector<1x64x32xf32> to vector<64x32xf32>
    %62 = vector.extract_strided_slice %57 {offsets = [2, 0, 0], sizes = [1, 64, 32], strides = [1, 1, 1]} : vector<4x64x32xf32> to vector<1x64x32xf32>
    %63 = vector.shape_cast %62 : vector<1x64x32xf32> to vector<64x32xf32>
    %64 = vector.extract_strided_slice %57 {offsets = [3, 0, 0], sizes = [1, 64, 32], strides = [1, 1, 1]} : vector<4x64x32xf32> to vector<1x64x32xf32>
    %65 = vector.shape_cast %64 : vector<1x64x32xf32> to vector<64x32xf32>
    %66 = tpu.concatenate %59, %61, %63, %65 in 1 : vector<64x32xf32>, vector<64x32xf32>, vector<64x32xf32>, vector<64x32xf32> -> vector<64x128xf32>
    %67 = vector.extract_strided_slice %11 {offsets = [64, 0], sizes = [64, 384], strides = [1, 1]} : vector<128x384xf32> to vector<64x384xf32>
    %68 = vector.extract_strided_slice %67 {offsets = [0, 0], sizes = [64, 32], strides = [1, 1]} : vector<64x384xf32> to vector<64x32xf32>
    %69 = vector.extract_strided_slice %67 {offsets = [0, 32], sizes = [64, 32], strides = [1, 1]} : vector<64x384xf32> to vector<64x32xf32>
    %70 = vector.extract_strided_slice %67 {offsets = [0, 64], sizes = [64, 32], strides = [1, 1]} : vector<64x384xf32> to vector<64x32xf32>
    %71 = vector.extract_strided_slice %67 {offsets = [0, 96], sizes = [64, 32], strides = [1, 1]} : vector<64x384xf32> to vector<64x32xf32>
    %72 = vector.shape_cast %68 : vector<64x32xf32> to vector<1x64x32xf32>
    %73 = vector.shape_cast %69 : vector<64x32xf32> to vector<1x64x32xf32>
    %74 = vector.shape_cast %70 : vector<64x32xf32> to vector<1x64x32xf32>
    %75 = vector.shape_cast %71 : vector<64x32xf32> to vector<1x64x32xf32>
    %76 = tpu.concatenate %72, %73, %74, %75 in 0 : vector<1x64x32xf32>, vector<1x64x32xf32>, vector<1x64x32xf32>, vector<1x64x32xf32> -> vector<4x64x32xf32>
    %77 = arith.truncf %76 : vector<4x64x32xf32> to vector<4x64x32xbf16>
    %78 = vector.extract_strided_slice %67 {offsets = [0, 128], sizes = [64, 32], strides = [1, 1]} : vector<64x384xf32> to vector<64x32xf32>
    %79 = vector.extract_strided_slice %67 {offsets = [0, 160], sizes = [64, 32], strides = [1, 1]} : vector<64x384xf32> to vector<64x32xf32>
    %80 = vector.extract_strided_slice %67 {offsets = [0, 192], sizes = [64, 32], strides = [1, 1]} : vector<64x384xf32> to vector<64x32xf32>
    %81 = vector.extract_strided_slice %67 {offsets = [0, 224], sizes = [64, 32], strides = [1, 1]} : vector<64x384xf32> to vector<64x32xf32>
    %82 = vector.shape_cast %78 : vector<64x32xf32> to vector<1x64x32xf32>
    %83 = vector.shape_cast %79 : vector<64x32xf32> to vector<1x64x32xf32>
    %84 = vector.shape_cast %80 : vector<64x32xf32> to vector<1x64x32xf32>
    %85 = vector.shape_cast %81 : vector<64x32xf32> to vector<1x64x32xf32>
    %86 = tpu.concatenate %82, %83, %84, %85 in 0 : vector<1x64x32xf32>, vector<1x64x32xf32>, vector<1x64x32xf32>, vector<1x64x32xf32> -> vector<4x64x32xf32>
    %87 = arith.truncf %86 : vector<4x64x32xf32> to vector<4x64x32xbf16>
    %88 = vector.extract_strided_slice %67 {offsets = [0, 256], sizes = [64, 32], strides = [1, 1]} : vector<64x384xf32> to vector<64x32xf32>
    %89 = vector.extract_strided_slice %67 {offsets = [0, 288], sizes = [64, 32], strides = [1, 1]} : vector<64x384xf32> to vector<64x32xf32>
    %90 = vector.extract_strided_slice %67 {offsets = [0, 320], sizes = [64, 32], strides = [1, 1]} : vector<64x384xf32> to vector<64x32xf32>
    %91 = vector.extract_strided_slice %67 {offsets = [0, 352], sizes = [64, 32], strides = [1, 1]} : vector<64x384xf32> to vector<64x32xf32>
    %92 = vector.shape_cast %88 : vector<64x32xf32> to vector<1x64x32xf32>
    %93 = vector.shape_cast %89 : vector<64x32xf32> to vector<1x64x32xf32>
    %94 = vector.shape_cast %90 : vector<64x32xf32> to vector<1x64x32xf32>
    %95 = vector.shape_cast %91 : vector<64x32xf32> to vector<1x64x32xf32>
    %96 = tpu.concatenate %92, %93, %94, %95 in 0 : vector<1x64x32xf32>, vector<1x64x32xf32>, vector<1x64x32xf32>, vector<1x64x32xf32> -> vector<4x64x32xf32>
    %97 = arith.truncf %96 : vector<4x64x32xf32> to vector<4x64x32xbf16>
    %cst_13 = arith.constant dense<0.000000e+00> : vector<4x64x64xf32>
    %98 = tpu.matmul %77, %87, %cst_13 {dimension_numbers = #tpu.dot_dimension_numbers<[2], [2], [1], [1], [0, 0, 0, 1, 1, 1], [0], [0]>} : vector<4x64x32xbf16>, vector<4x64x32xbf16>, vector<4x64x64xf32> -> vector<4x64x64xf32>
    %cst_14 = arith.constant 0.176776692 : f32
    %99 = vector.broadcast %cst_14 : f32 to vector<4x64x64xf32>
    %100 = arith.mulf %98, %99 : vector<4x64x64xf32>
    %cst_15 = arith.constant dense<0xFF800000> : vector<4x64xf32>
    %101 = vector.multi_reduction <maximumf>, %100, %cst_15 [2] : vector<4x64x64xf32> to vector<4x64xf32>
    %102 = vector.shape_cast %101 : vector<4x64xf32> to vector<4x64x1xf32>
    %103 = vector.broadcast %102 : vector<4x64x1xf32> to vector<4x64x64xf32>
    %104 = arith.subf %100, %103 : vector<4x64x64xf32>
    %105 = math.exp %104 : vector<4x64x64xf32>
    %cst_16 = arith.constant dense<0.000000e+00> : vector<4x64xf32>
    %106 = vector.multi_reduction <add>, %105, %cst_16 [2] : vector<4x64x64xf32> to vector<4x64xf32>
    %107 = vector.shape_cast %106 : vector<4x64xf32> to vector<4x64x1xf32>
    %108 = tpu.reciprocal %107 {approx = true} : vector<4x64x1xf32> -> vector<4x64x1xf32>
    %109 = vector.broadcast %108 : vector<4x64x1xf32> to vector<4x64x64xf32>
    %110 = arith.mulf %105, %109 : vector<4x64x64xf32>
    %111 = arith.truncf %110 : vector<4x64x64xf32> to vector<4x64x64xbf16>
    %cst_17 = arith.constant dense<0.000000e+00> : vector<4x64x32xf32>
    %112 = tpu.matmul %111, %97, %cst_17 {dimension_numbers = #tpu.dot_dimension_numbers<[2], [1], [1], [2], [0, 0, 0, 1, 1, 2], [0], [0]>} : vector<4x64x64xbf16>, vector<4x64x32xbf16>, vector<4x64x32xf32> -> vector<4x64x32xf32>
    %113 = vector.extract_strided_slice %112 {offsets = [0, 0, 0], sizes = [1, 64, 32], strides = [1, 1, 1]} : vector<4x64x32xf32> to vector<1x64x32xf32>
    %114 = vector.shape_cast %113 : vector<1x64x32xf32> to vector<64x32xf32>
    %115 = vector.extract_strided_slice %112 {offsets = [1, 0, 0], sizes = [1, 64, 32], strides = [1, 1, 1]} : vector<4x64x32xf32> to vector<1x64x32xf32>
    %116 = vector.shape_cast %115 : vector<1x64x32xf32> to vector<64x32xf32>
    %117 = vector.extract_strided_slice %112 {offsets = [2, 0, 0], sizes = [1, 64, 32], strides = [1, 1, 1]} : vector<4x64x32xf32> to vector<1x64x32xf32>
    %118 = vector.shape_cast %117 : vector<1x64x32xf32> to vector<64x32xf32>
    %119 = vector.extract_strided_slice %112 {offsets = [3, 0, 0], sizes = [1, 64, 32], strides = [1, 1, 1]} : vector<4x64x32xf32> to vector<1x64x32xf32>
    %120 = vector.shape_cast %119 : vector<1x64x32xf32> to vector<64x32xf32>
    %121 = tpu.concatenate %114, %116, %118, %120 in 1 : vector<64x32xf32>, vector<64x32xf32>, vector<64x32xf32>, vector<64x32xf32> -> vector<64x128xf32>
    %122 = tpu.concatenate %66, %121 in 0 : vector<64x128xf32>, vector<64x128xf32> -> vector<128x128xf32>
    %123 = arith.truncf %122 : vector<128x128xf32> to vector<128x128xbf16>
    %c0_18 = arith.constant 0 : index
    %c0_19 = arith.constant 0 : index
    %c0_20 = arith.constant 0 : index
    %124 = vector.load %arg13[%c0_18, %c0_19, %c0_20] : memref<1x128x128xbf16, #tpu.memory_space<vmem>>, vector<1x128x128xbf16>
    %125 = vector.shape_cast %124 : vector<1x128x128xbf16> to vector<128x128xbf16>
    %cst_21 = arith.constant dense<0.000000e+00> : vector<128x128xf32>
    %126 = tpu.matmul %123, %125, %cst_21 {dimension_numbers = #tpu.dot_dimension_numbers<[1], [0], [0], [1], [0, 0, 1, 1], [], []>} : vector<128x128xbf16>, vector<128x128xbf16>, vector<128x128xf32> -> vector<128x128xf32>
    %c0_22 = arith.constant 0 : index
    %c0_23 = arith.constant 0 : index
    %c0_24 = arith.constant 0 : index
    %127 = vector.load %arg14[%c0_22, %c0_23, %c0_24] : memref<1x1x128xf32, #tpu.memory_space<vmem>>, vector<1x1x128xf32>
    %128 = vector.shape_cast %127 : vector<1x1x128xf32> to vector<1x128xf32>
    %129 = vector.broadcast %128 : vector<1x128xf32> to vector<128x128xf32>
    %130 = arith.addf %126, %129 : vector<128x128xf32>
    %131 = arith.addf %3, %130 : vector<128x128xf32>
    %c0_25 = arith.constant 0 : index
    %c0_26 = arith.constant 0 : index
    %c0_27 = arith.constant 0 : index
    %132 = vector.load %arg15[%c0_25, %c0_26, %c0_27] : memref<1x1x128xf32, #tpu.memory_space<vmem>>, vector<1x1x128xf32>
    %133 = vector.shape_cast %132 : vector<1x1x128xf32> to vector<1x128xf32>
    %c0_28 = arith.constant 0 : index
    %c0_29 = arith.constant 0 : index
    %c0_30 = arith.constant 0 : index
    %134 = vector.load %arg16[%c0_28, %c0_29, %c0_30] : memref<1x1x128xf32, #tpu.memory_space<vmem>>, vector<1x1x128xf32>
    %135 = vector.shape_cast %134 : vector<1x1x128xf32> to vector<1x128xf32>
    %cst_31 = arith.constant dense<0.000000e+00> : vector<128xf32>
    %136 = vector.multi_reduction <add>, %131, %cst_31 [1] : vector<128x128xf32> to vector<128xf32>
    %137 = vector.shape_cast %136 : vector<128xf32> to vector<128x1xf32>
    %cst_32 = arith.constant 1.280000e+02 : f32
    %138 = vector.broadcast %cst_32 : f32 to vector<128x1xf32>
    %139 = arith.divf %137, %138 : vector<128x1xf32>
    %140 = vector.broadcast %139 : vector<128x1xf32> to vector<128x128xf32>
    %141 = arith.subf %131, %140 : vector<128x128xf32>
    %142 = arith.mulf %141, %141 : vector<128x128xf32>
    %cst_33 = arith.constant dense<0.000000e+00> : vector<128xf32>
    %143 = vector.multi_reduction <add>, %142, %cst_33 [1] : vector<128x128xf32> to vector<128xf32>
    %144 = vector.shape_cast %143 : vector<128xf32> to vector<128x1xf32>
    %cst_34 = arith.constant 1.280000e+02 : f32
    %145 = vector.broadcast %cst_34 : f32 to vector<128x1xf32>
    %146 = arith.divf %144, %145 : vector<128x1xf32>
    %cst_35 = arith.constant 9.99999974E-6 : f32
    %147 = vector.broadcast %cst_35 : f32 to vector<128x1xf32>
    %148 = arith.addf %146, %147 : vector<128x1xf32>
    %149 = math.rsqrt %148 : vector<128x1xf32>
    %150 = vector.broadcast %149 : vector<128x1xf32> to vector<128x128xf32>
    %151 = arith.mulf %141, %150 : vector<128x128xf32>
    %152 = vector.broadcast %133 : vector<1x128xf32> to vector<128x128xf32>
    %153 = arith.mulf %151, %152 : vector<128x128xf32>
    %154 = vector.broadcast %135 : vector<1x128xf32> to vector<128x128xf32>
    %155 = arith.addf %153, %154 : vector<128x128xf32>
    %156 = arith.truncf %155 : vector<128x128xf32> to vector<128x128xbf16>
    %c0_36 = arith.constant 0 : index
    %c0_37 = arith.constant 0 : index
    %c0_38 = arith.constant 0 : index
    %157 = vector.load %arg17[%c0_36, %c0_37, %c0_38] : memref<1x128x256xbf16, #tpu.memory_space<vmem>>, vector<1x128x256xbf16>
    %158 = vector.shape_cast %157 : vector<1x128x256xbf16> to vector<128x256xbf16>
    %cst_39 = arith.constant dense<0.000000e+00> : vector<128x256xf32>
    %159 = tpu.matmul %156, %158, %cst_39 {dimension_numbers = #tpu.dot_dimension_numbers<[1], [0], [0], [1], [0, 0, 1, 1], [], []>} : vector<128x128xbf16>, vector<128x256xbf16>, vector<128x256xf32> -> vector<128x256xf32>
    %c0_40 = arith.constant 0 : index
    %c0_41 = arith.constant 0 : index
    %c0_42 = arith.constant 0 : index
    %160 = vector.load %arg18[%c0_40, %c0_41, %c0_42] : memref<1x1x256xf32, #tpu.memory_space<vmem>>, vector<1x1x256xf32>
    %161 = vector.shape_cast %160 : vector<1x1x256xf32> to vector<1x256xf32>
    %162 = vector.broadcast %161 : vector<1x256xf32> to vector<128x256xf32>
    %163 = arith.addf %159, %162 : vector<128x256xf32>
    %cst_43 = arith.constant 0.000000e+00 : f32
    %164 = vector.broadcast %cst_43 : f32 to vector<128x256xf32>
    %165 = arith.maximumf %163, %164 : vector<128x256xf32>
    %166 = arith.truncf %165 : vector<128x256xf32> to vector<128x256xbf16>
    %c0_44 = arith.constant 0 : index
    %c0_45 = arith.constant 0 : index
    %c0_46 = arith.constant 0 : index
    %167 = vector.load %arg19[%c0_44, %c0_45, %c0_46] : memref<1x256x128xbf16, #tpu.memory_space<vmem>>, vector<1x256x128xbf16>
    %168 = vector.shape_cast %167 : vector<1x256x128xbf16> to vector<256x128xbf16>
    %cst_47 = arith.constant dense<0.000000e+00> : vector<128x128xf32>
    %169 = tpu.matmul %166, %168, %cst_47 {dimension_numbers = #tpu.dot_dimension_numbers<[1], [0], [0], [1], [0, 0, 1, 1], [], []>} : vector<128x256xbf16>, vector<256x128xbf16>, vector<128x128xf32> -> vector<128x128xf32>
    %c0_48 = arith.constant 0 : index
    %c0_49 = arith.constant 0 : index
    %c0_50 = arith.constant 0 : index
    %170 = vector.load %arg20[%c0_48, %c0_49, %c0_50] : memref<1x1x128xf32, #tpu.memory_space<vmem>>, vector<1x1x128xf32>
    %171 = vector.shape_cast %170 : vector<1x1x128xf32> to vector<1x128xf32>
    %172 = vector.broadcast %171 : vector<1x128xf32> to vector<128x128xf32>
    %173 = arith.addf %169, %172 : vector<128x128xf32>
    %174 = arith.addf %155, %173 : vector<128x128xf32>
    %c0_51 = arith.constant 0 : index
    %c0_52 = arith.constant 0 : index
    %c0_53 = arith.constant 0 : index
    %175 = vector.load %arg21[%c0_51, %c0_52, %c0_53] : memref<1x1x128xf32, #tpu.memory_space<vmem>>, vector<1x1x128xf32>
    %176 = vector.shape_cast %175 : vector<1x1x128xf32> to vector<1x128xf32>
    %c0_54 = arith.constant 0 : index
    %c0_55 = arith.constant 0 : index
    %c0_56 = arith.constant 0 : index
    %177 = vector.load %arg22[%c0_54, %c0_55, %c0_56] : memref<1x1x128xf32, #tpu.memory_space<vmem>>, vector<1x1x128xf32>
    %178 = vector.shape_cast %177 : vector<1x1x128xf32> to vector<1x128xf32>
    %cst_57 = arith.constant dense<0.000000e+00> : vector<128xf32>
    %179 = vector.multi_reduction <add>, %174, %cst_57 [1] : vector<128x128xf32> to vector<128xf32>
    %180 = vector.shape_cast %179 : vector<128xf32> to vector<128x1xf32>
    %cst_58 = arith.constant 1.280000e+02 : f32
    %181 = vector.broadcast %cst_58 : f32 to vector<128x1xf32>
    %182 = arith.divf %180, %181 : vector<128x1xf32>
    %183 = vector.broadcast %182 : vector<128x1xf32> to vector<128x128xf32>
    %184 = arith.subf %174, %183 : vector<128x128xf32>
    %185 = arith.mulf %184, %184 : vector<128x128xf32>
    %cst_59 = arith.constant dense<0.000000e+00> : vector<128xf32>
    %186 = vector.multi_reduction <add>, %185, %cst_59 [1] : vector<128x128xf32> to vector<128xf32>
    %187 = vector.shape_cast %186 : vector<128xf32> to vector<128x1xf32>
    %cst_60 = arith.constant 1.280000e+02 : f32
    %188 = vector.broadcast %cst_60 : f32 to vector<128x1xf32>
    %189 = arith.divf %187, %188 : vector<128x1xf32>
    %cst_61 = arith.constant 9.99999974E-6 : f32
    %190 = vector.broadcast %cst_61 : f32 to vector<128x1xf32>
    %191 = arith.addf %189, %190 : vector<128x1xf32>
    %192 = math.rsqrt %191 : vector<128x1xf32>
    %193 = vector.broadcast %192 : vector<128x1xf32> to vector<128x128xf32>
    %194 = arith.mulf %184, %193 : vector<128x128xf32>
    %195 = vector.broadcast %176 : vector<1x128xf32> to vector<128x128xf32>
    %196 = arith.mulf %194, %195 : vector<128x128xf32>
    %197 = vector.broadcast %178 : vector<1x128xf32> to vector<128x128xf32>
    %198 = arith.addf %196, %197 : vector<128x128xf32>
    %c0_62 = arith.constant 0 : index
    %c0_63 = arith.constant 0 : index
    %199 = vector.load %arg26[%c0_62, %c0_63] : memref<128x128xf32, #tpu.memory_space<vmem>>, vector<128x128xf32>
    tpu.vector_store %arg26[%c0_62, %c0_63], %198 {strides = array<i32>} : memref<128x128xf32, #tpu.memory_space<vmem>>, vector<128x128xf32>,
    %c1_i32 = arith.constant 1 : i32
    %200 = arith.cmpi eq, %arg0, %c1_i32 : i32
    %201 = arith.extui %200 : i1 to i32
    %c0_i32_64 = arith.constant 0 : i32
    %202 = arith.cmpi ne, %201, %c0_i32_64 : i32
    scf.if %202 {
      %c0_65 = arith.constant 0 : index
      %c0_66 = arith.constant 0 : index
      %203 = vector.load %arg23[%c0_65, %c0_66] : memref<3x128xbf16, #tpu.memory_space<vmem>>, vector<3x128xbf16>
      %204 = arith.truncf %198 : vector<128x128xf32> to vector<128x128xbf16>
      %cst_67 = arith.constant dense<0.000000e+00> : vector<3x128xf32>
      %205 = tpu.matmul %203, %204, %cst_67 {dimension_numbers = #tpu.dot_dimension_numbers<[1], [1], [0], [0], [0, 0, 1, 0], [], []>} : vector<3x128xbf16>, vector<128x128xbf16>, vector<3x128xf32> -> vector<3x128xf32>
      %c0_68 = arith.constant 0 : index
      %c0_69 = arith.constant 0 : index
      %206 = vector.load %arg24[%c0_68, %c0_69] : memref<3x1xf32, #tpu.memory_space<vmem>>, vector<3x1xf32>
      %207 = vector.broadcast %206 : vector<3x1xf32> to vector<3x128xf32>
      %208 = arith.addf %205, %207 : vector<3x128xf32>
      %cst_70 = arith.constant dense<0xFF800000> : vector<128xf32>
      %209 = vector.multi_reduction <maximumf>, %208, %cst_70 [0] : vector<3x128xf32> to vector<128xf32>
      %210 = vector.shape_cast %209 : vector<128xf32> to vector<1x128xf32>
      %211 = vector.broadcast %210 : vector<1x128xf32> to vector<3x128xf32>
      %212 = arith.subf %208, %211 : vector<3x128xf32>
      %213 = math.exp %212 : vector<3x128xf32>
      %cst_71 = arith.constant dense<0.000000e+00> : vector<128xf32>
      %214 = vector.multi_reduction <add>, %213, %cst_71 [0] : vector<3x128xf32> to vector<128xf32>
      %215 = vector.shape_cast %214 : vector<128xf32> to vector<1x128xf32>
      %216 = math.log %215 : vector<1x128xf32>
      %217 = arith.addf %210, %216 : vector<1x128xf32>
      %218 = vector.broadcast %217 : vector<1x128xf32> to vector<3x128xf32>
      %219 = arith.subf %208, %218 : vector<3x128xf32>
      %c0_72 = arith.constant 0 : index
      %c0_73 = arith.constant 0 : index
      %220 = vector.load %arg25[%c0_72, %c0_73] : memref<3x128xf32, #tpu.memory_space<vmem>>, vector<3x128xf32>
      tpu.vector_store %arg25[%c0_72, %c0_73], %219 {strides = array<i32>} : memref<3x128xf32, #tpu.memory_space<vmem>>, vector<3x128xf32>,
    } else {
    }
    return
  }
  func.func @transform_0(%arg0: i32) -> (i32, i32) {
    %c0_i32 = arith.constant 0 : i32
    %c0_i32_0 = arith.constant 0 : i32
    %c0_i32_1 = arith.constant 0 : i32
    return %c0_i32, %c0_i32_0 : i32, i32
  }
  func.func @transform_1(%arg0: i32) -> (i32, i32) {
    %c0_i32 = arith.constant 0 : i32
    %c0_i32_0 = arith.constant 0 : i32
    %c0_i32_1 = arith.constant 0 : i32
    return %c0_i32, %c0_i32_0 : i32, i32
  }
  func.func @transform_2(%arg0: i32) -> (i32, i32) {
    %c0_i32 = arith.constant 0 : i32
    %c0_i32_0 = arith.constant 0 : i32
    %c0_i32_1 = arith.constant 0 : i32
    return %c0_i32, %c0_i32_0 : i32, i32
  }
  func.func @transform_3(%arg0: i32) -> (i32, i32) {
    %c0_i32 = arith.constant 0 : i32
    %c0_i32_0 = arith.constant 0 : i32
    %c0_i32_1 = arith.constant 0 : i32
    return %c0_i32, %c0_i32_0 : i32, i32
  }
  func.func @transform_4(%arg0: i32) -> (i32, i32) {
    %c0_i32 = arith.constant 0 : i32
    %c0_i32_0 = arith.constant 0 : i32
    %c0_i32_1 = arith.constant 0 : i32
    return %c0_i32, %c0_i32_0 : i32, i32
  }
  func.func @transform_5(%arg0: i32) -> (i32, i32) {
    %c0_i32 = arith.constant 0 : i32
    %c0_i32_0 = arith.constant 0 : i32
    %c0_i32_1 = arith.constant 0 : i32
    return %c0_i32, %c0_i32_0 : i32, i32
  }
  func.func @transform_6(%arg0: i32) -> (i32, i32) {
    %c0_i32 = arith.constant 0 : i32
    %c0_i32_0 = arith.constant 0 : i32
    %c0_i32_1 = arith.constant 0 : i32
    return %c0_i32, %c0_i32_0 : i32, i32
  }
  func.func @transform_7(%arg0: i32) -> (i32, i32) {
    %c0_i32 = arith.constant 0 : i32
    %c0_i32_0 = arith.constant 0 : i32
    %c0_i32_1 = arith.constant 0 : i32
    return %c0_i32, %c0_i32_0 : i32, i32
  }
  func.func @transform_8(%arg0: i32) -> (i32, i32) {
    %c0_i32 = arith.constant 0 : i32
    %c0_i32_0 = arith.constant 0 : i32
    %c0_i32_1 = arith.constant 0 : i32
    return %c0_i32, %c0_i32_0 : i32, i32
  }
  func.func @transform_9(%arg0: i32) -> (i32, i32) {
    %c0_i32 = arith.constant 0 : i32
    %c0_i32_0 = arith.constant 0 : i32
    %c0_i32_1 = arith.constant 0 : i32
    return %c0_i32, %c0_i32_0 : i32, i32
  }
  func.func @transform_10(%arg0: i32) -> (i32, i32, i32) {
    %c0_i32 = arith.constant 0 : i32
    %c0_i32_0 = arith.constant 0 : i32
    %c0_i32_1 = arith.constant 0 : i32
    return %arg0, %c0_i32, %c0_i32_0 : i32, i32, i32
  }
  func.func @transform_11(%arg0: i32) -> (i32, i32, i32) {
    %c0_i32 = arith.constant 0 : i32
    %c0_i32_0 = arith.constant 0 : i32
    %c0_i32_1 = arith.constant 0 : i32
    return %arg0, %c0_i32, %c0_i32_0 : i32, i32, i32
  }
  func.func @transform_12(%arg0: i32) -> (i32, i32, i32) {
    %c0_i32 = arith.constant 0 : i32
    %c0_i32_0 = arith.constant 0 : i32
    %c0_i32_1 = arith.constant 0 : i32
    return %arg0, %c0_i32, %c0_i32_0 : i32, i32, i32
  }
  func.func @transform_13(%arg0: i32) -> (i32, i32, i32) {
    %c0_i32 = arith.constant 0 : i32
    %c0_i32_0 = arith.constant 0 : i32
    %c0_i32_1 = arith.constant 0 : i32
    return %arg0, %c0_i32, %c0_i32_0 : i32, i32, i32
  }
  func.func @transform_14(%arg0: i32) -> (i32, i32, i32) {
    %c0_i32 = arith.constant 0 : i32
    %c0_i32_0 = arith.constant 0 : i32
    %c0_i32_1 = arith.constant 0 : i32
    return %arg0, %c0_i32, %c0_i32_0 : i32, i32, i32
  }
  func.func @transform_15(%arg0: i32) -> (i32, i32, i32) {
    %c0_i32 = arith.constant 0 : i32
    %c0_i32_0 = arith.constant 0 : i32
    %c0_i32_1 = arith.constant 0 : i32
    return %arg0, %c0_i32, %c0_i32_0 : i32, i32, i32
  }
  func.func @transform_16(%arg0: i32) -> (i32, i32, i32) {
    %c0_i32 = arith.constant 0 : i32
    %c0_i32_0 = arith.constant 0 : i32
    %c0_i32_1 = arith.constant 0 : i32
    return %arg0, %c0_i32, %c0_i32_0 : i32, i32, i32
  }
  func.func @transform_17(%arg0: i32) -> (i32, i32, i32) {
    %c0_i32 = arith.constant 0 : i32
    %c0_i32_0 = arith.constant 0 : i32
    %c0_i32_1 = arith.constant 0 : i32
    return %arg0, %c0_i32, %c0_i32_0 : i32, i32, i32
  }
  func.func @transform_18(%arg0: i32) -> (i32, i32, i32) {
    %c0_i32 = arith.constant 0 : i32
    %c0_i32_0 = arith.constant 0 : i32
    %c0_i32_1 = arith.constant 0 : i32
    return %arg0, %c0_i32, %c0_i32_0 : i32, i32, i32
  }
  func.func @transform_19(%arg0: i32) -> (i32, i32, i32) {
    %c0_i32 = arith.constant 0 : i32
    %c0_i32_0 = arith.constant 0 : i32
    %c0_i32_1 = arith.constant 0 : i32
    return %arg0, %c0_i32, %c0_i32_0 : i32, i32, i32
  }
  func.func @transform_20(%arg0: i32) -> (i32, i32, i32) {
    %c0_i32 = arith.constant 0 : i32
    %c0_i32_0 = arith.constant 0 : i32
    %c0_i32_1 = arith.constant 0 : i32
    return %arg0, %c0_i32, %c0_i32_0 : i32, i32, i32
  }
  func.func @transform_21(%arg0: i32) -> (i32, i32, i32) {
    %c0_i32 = arith.constant 0 : i32
    %c0_i32_0 = arith.constant 0 : i32
    %c0_i32_1 = arith.constant 0 : i32
    return %arg0, %c0_i32, %c0_i32_0 : i32, i32, i32
  }
  func.func @transform_22(%arg0: i32) -> (i32, i32) {
    %c0_i32 = arith.constant 0 : i32
    %c0_i32_0 = arith.constant 0 : i32
    %c0_i32_1 = arith.constant 0 : i32
    return %c0_i32, %c0_i32_0 : i32, i32
  }
  func.func @transform_23(%arg0: i32) -> (i32, i32) {
    %c0_i32 = arith.constant 0 : i32
    %c0_i32_0 = arith.constant 0 : i32
    %c0_i32_1 = arith.constant 0 : i32
    return %c0_i32, %c0_i32_0 : i32, i32
  }
  func.func @transform_24(%arg0: i32) -> (i32, i32) {
    %c0_i32 = arith.constant 0 : i32
    %c0_i32_0 = arith.constant 0 : i32
    %c0_i32_1 = arith.constant 0 : i32
    return %c0_i32, %c0_i32_0 : i32, i32
  }
}

</mosaic_0001>

<llo_original>
// kernel: forward.1
$region0: #{forward.1}
  #allocation0 [shape = 'u32[]', space=smem, size = 0x4, offset = 0x4, fixed_abs, tag = 'smem constant byte address 0x4 - core index']
  #allocation1 [shape = 'u32[72,128]{1,0:T(1,128)}', space=vmem, size = 0x9000, scoped, tag = 'internal scratch']
  #allocation2 [shape = 'f32[128,128]{1,0:T(8,128)}', space=vmem, size = 0x10000, scoped, tag = 'scratch operand']
  %s0 = inlined_call_operand.vmem [shape: f32[128,9], index: 0, kind: input, shape index: {}]
  %s1 = inlined_call_operand.vmem [shape: bf16[9,64], index: 1, kind: input, shape index: {}]
  %s2 = inlined_call_operand.hbm [shape: f32[1,64], index: 2, kind: input, shape index: {}]
  %s3 = inlined_call_operand.hbm [shape: f32[1,64], index: 3, kind: input, shape index: {}]
  %s4 = inlined_call_operand.hbm [shape: bf16[192,128], index: 4, kind: input, shape index: {}]
  %s5 = inlined_call_operand.hbm [shape: f32[1,128], index: 5, kind: input, shape index: {}]
  %s6 = inlined_call_operand.hbm [shape: f32[1,128], index: 6, kind: input, shape index: {}]
  %s7 = inlined_call_operand.vmem [shape: bf16[128,128], index: 7, kind: input, shape index: {}]
  %s8 = inlined_call_operand.vmem [shape: f32[1,128], index: 8, kind: input, shape index: {}]
  %s9 = inlined_call_operand.hbm [shape: f32[64,128], index: 9, kind: input, shape index: {}]
  %s10 = inlined_call_operand.hbm [shape: bf16[2,128,384], index: 10, kind: input, shape index: {}]
  %s11 = inlined_call_operand.vmem [shape: f32[2,1,384], index: 11, kind: input, shape index: {}]
  %s12 = inlined_call_operand.vmem [shape: bf16[2,128,128], index: 12, kind: input, shape index: {}]
  %s13 = inlined_call_operand.vmem [shape: f32[2,1,128], index: 13, kind: input, shape index: {}]
  %s14 = inlined_call_operand.vmem [shape: f32[2,1,128], index: 14, kind: input, shape index: {}]
  %s15 = inlined_call_operand.hbm [shape: f32[2,1,128], index: 15, kind: input, shape index: {}]
  %s16 = inlined_call_operand.hbm [shape: bf16[2,128,256], index: 16, kind: input, shape index: {}]
  %s17 = inlined_call_operand.vmem [shape: f32[2,1,256], index: 17, kind: input, shape index: {}]
  %s18 = inlined_call_operand.hbm [shape: bf16[2,256,128], index: 18, kind: input, shape index: {}]
  %s19 = inlined_call_operand.vmem [shape: f32[2,1,128], index: 19, kind: input, shape index: {}]
  %s20 = inlined_call_operand.hbm [shape: f32[2,1,128], index: 20, kind: input, shape index: {}]
  %s21 = inlined_call_operand.hbm [shape: f32[2,1,128], index: 21, kind: input, shape index: {}]
  %s22 = inlined_call_operand.hbm [shape: bf16[3,128], index: 22, kind: input, shape index: {}]
  %s23 = inlined_call_operand.vmem [shape: f32[3,1], index: 23, kind: input, shape index: {}]
  %s24 = inlined_call_operand.vmem [shape: f32[3,128], index: 24, kind: output, shape index: {}]
  %s25 = sld [smem:[#allocation0]]
  $region189: #{forward.1} parent=0
    _
  %s27 = ssub.s32 1, %s25
  %s28 = scalar_select 0, %s27, %s25
  $region1: #{forward.1} parent=0
    #allocation3 [shape = 'u8[512]{0}', space=vmem, size = 0x400, scoped, tag = 'input window, operand 2, single buffered']
    #allocation4 [shape = 's32[2]{0}', space=sflag, size = 0x8, scoped, tag = 'scoped memory for forward.1']
    #allocation5 [shape = 'u8[512]{0}', space=vmem, size = 0x400, scoped, tag = 'input window, operand 3, single buffered']
    #allocation6 [shape = 's32[1]{0}', space=sflag, size = 0x4, scoped, tag = 'scoped memory for forward.1']
    #allocation7 [shape = 'u8[49152]{0}', space=vmem, size = 0xc000, scoped, tag = 'input window, operand 4, single buffered']
    #allocation8 [shape = 'u8[512]{0}', space=vmem, size = 0x400, scoped, tag = 'input window, operand 5, single buffered']
    #allocation9 [shape = 's32[1]{0}', space=sflag, size = 0x4, scoped, tag = 'scoped memory for forward.1']
    #allocation10 [shape = 'u8[512]{0}', space=vmem, size = 0x400, scoped, tag = 'input window, operand 6, single buffered']
    #allocation11 [shape = 'u8[32768]{0}', space=vmem, size = 0x8000, scoped, tag = 'input window, operand 9, single buffered']
    #allocation12 [shape = 's32[1]{0}', space=sflag, size = 0x4, scoped, tag = 'scoped memory for forward.1']
    #allocation13 [shape = 'u8[196608]{0}', space=vmem, size = 0x30000, scoped, tag = 'input window, operand 10']
    #allocation14 [shape = 'u8[1024]{0}', space=vmem, size = 0x400, scoped, tag = 'input window, operand 15']
    #allocation15 [shape = 'u8[131072]{0}', space=vmem, size = 0x20000, scoped, tag = 'input window, operand 16']
    #allocation16 [shape = 'u8[131072]{0}', space=vmem, size = 0x20000, scoped, tag = 'input window, operand 18']
    #allocation17 [shape = 'u8[1024]{0}', space=vmem, size = 0x400, scoped, tag = 'input window, operand 20']
    #allocation18 [shape = 'u8[1024]{0}', space=vmem, size = 0x400, scoped, tag = 'input window, operand 21']
    #allocation19 [shape = 'u8[1024]{0}', space=vmem, size = 0x400, scoped, tag = 'input window, operand 22, single buffered']
    %29 = vsyncpa [#allocation4], 0
    %30 = vsyncpa [#allocation6], 0
    %31 = vsyncpa [#allocation9], 0
    %32 = vsyncpa [#allocation12], 0
    loop: start=0, step=1, limit=4
    $region2: #{forward.1} parent=1 // loop_pre_header
      _
    $region3: #{forward.1} parent=1 // loop_header
      %s34 = sphi 0, %s38
      %p35 = scmp.ge.s32.totalorder %s34, 4
      %s42 = sphi 0, %s42
      %s44 = sphi 0, %s42
      %s45 = sphi 0, %s44
      %s59 = sphi 0, %s45
      %s63 = sphi 0, %s63
      %s65 = sphi 0, %s63
      %s66 = sphi 0, %s65
      %s80 = sphi 0, %s66
      %s84 = sphi 0, %s84
      %s86 = sphi 0, %s84
      %s87 = sphi 0, %s86
      %s101 = sphi 0, %s87
      %s105 = sphi 0, %s105
      %s107 = sphi 0, %s105
      %s108 = sphi 0, %s107
      %s122 = sphi 0, %s108
      %s126 = sphi 0, %s126
      %s128 = sphi 0, %s126
      %s129 = sphi 0, %s128
      %s143 = sphi 0, %s129
      %s147 = sphi 0, %s147
      %s149 = sphi 0, %s147
      %s150 = sphi 0, %s149
      %s164 = sphi 0, %s150
      %s168 = sphi 0, %s168
      %s170 = sphi 0, %s168
      %s171 = sphi 0, %s170
      %s185 = sphi 0, %s171
      %s189 = sphi 0, %s189
      %s191 = sphi 0, %s189
      %s192 = sphi 0, %s191
      %s206 = sphi 0, %s192
      %s210 = sphi 0, %s210
      %s212 = sphi 0, %s210
      %s213 = sphi 0, %s212
      %s227 = sphi 0, %s213
      %s231 = sphi 0, %s231
      %s233 = sphi 0, %s231
      %s234 = sphi 0, %s233
      %s248 = sphi 0, %s234
      %s254 = sphi 0, %s256
      %s257 = sphi 0, %s254
      %s258 = sphi 0, %s257
      %s274 = sphi 0, %s258
      %s280 = sphi 0, %s282
      %s283 = sphi 0, %s280
      %s284 = sphi 0, %s283
      %s300 = sphi 0, %s284
      %s306 = sphi 0, %s308
      %s309 = sphi 0, %s306
      %s310 = sphi 0, %s309
      %s326 = sphi 0, %s310
      %s332 = sphi 0, %s334
      %s335 = sphi 0, %s332
      %s336 = sphi 0, %s335
      %s352 = sphi 0, %s336
      %s358 = sphi 0, %s360
      %s361 = sphi 0, %s358
      %s362 = sphi 0, %s361
      %s378 = sphi 0, %s362
      %s384 = sphi 0, %s386
      %s387 = sphi 0, %s384
      %s388 = sphi 0, %s387
      %s404 = sphi 0, %s388
      %s410 = sphi 0, %s412
      %s413 = sphi 0, %s410
      %s414 = sphi 0, %s413
      %s430 = sphi 0, %s414
      %s436 = sphi 0, %s438
      %s439 = sphi 0, %s436
      %s440 = sphi 0, %s439
      %s456 = sphi 0, %s440
      %s462 = sphi 0, %s464
      %s465 = sphi 0, %s462
      %s466 = sphi 0, %s465
      %s482 = sphi 0, %s466
      %s488 = sphi 0, %s490
      %s491 = sphi 0, %s488
      %s492 = sphi 0, %s491
      %s508 = sphi 0, %s492
      %s514 = sphi 0, %s516
      %s517 = sphi 0, %s514
      %s518 = sphi 0, %s517
      %s534 = sphi 0, %s518
      %s540 = sphi 0, %s542
      %s543 = sphi 0, %s540
      %s544 = sphi 0, %s543
      %s560 = sphi 0, %s544
      %s564 = sphi 0, %s564
      %s566 = sphi 0, %s564
      %s567 = sphi 0, %s566
      %s581 = sphi 0, %s567
      %s585 = sphi 0, %s585
      %s587 = sphi 0, %s585
      %s588 = sphi 0, %s587
      %s602 = sphi 0, %s588
      %s606 = sphi 0, %s606
      %s608 = sphi 0, %s606
      %s609 = sphi 0, %s608
      %s623 = sphi 0, %s609
    $region4: #{forward.1} parent=1 // loop_header_branch
      %37 = sbr.rel (%p35) target = $region8
    $region5: #{forward.1} parent=1 // loop_body
      %s39 = ssub.s32 %s34, 1
      %s40 = ssub.s32 %s34, 2
      %s41 = sadd.s32 %s34, 1
      %s43 = sadd.s32 %s42, 1
      %p46 = scmp.eq.s32.totalorder %s34, 1
      %p47 = scmp.ne.s32.totalorder %s42, %s44
      %p48 = scmp.eq.s32.totalorder %s34, 0
      %p49 = por %p47, %p48
      %p50 = scmp.ne.s32.totalorder %s42, %s44
      %p51 = scmp.eq.s32.totalorder %s39, 1
      %p52 = por %p50, %p51
      %p53 = scmp.ne.s32.totalorder %s44, %s45
      %p54 = scmp.eq.s32.totalorder %s39, 0
      %p55 = por %p53, %p54
      %p56 = scmp.ne.s32.totalorder %s44, %s45
      %p57 = scmp.eq.s32.totalorder %s40, 1
      %p58 = por %p56, %p57
      %p60 = scmp.ne.s32.totalorder %s45, %s59
      %p61 = scmp.eq.s32.totalorder %s40, 0
      %p62 = por %p60, %p61
      %s64 = sadd.s32 %s63, 1
      %p67 = scmp.eq.s32.totalorder %s34, 1
      %p68 = scmp.ne.s32.totalorder %s63, %s65
      %p69 = scmp.eq.s32.totalorder %s34, 0
      %p70 = por %p68, %p69
      %p71 = scmp.ne.s32.totalorder %s63, %s65
      %p72 = scmp.eq.s32.totalorder %s39, 1
      %p73 = por %p71, %p72
      %p74 = scmp.ne.s32.totalorder %s65, %s66
      %p75 = scmp.eq.s32.totalorder %s39, 0
      %p76 = por %p74, %p75
      %p77 = scmp.ne.s32.totalorder %s65, %s66
      %p78 = scmp.eq.s32.totalorder %s40, 1
      %p79 = por %p77, %p78
      %p81 = scmp.ne.s32.totalorder %s66, %s80
      %p82 = scmp.eq.s32.totalorder %s40, 0
      %p83 = por %p81, %p82
      %s85 = sadd.s32 %s84, 1
      %p88 = scmp.eq.s32.totalorder %s34, 1
      %p89 = scmp.ne.s32.totalorder %s84, %s86
      %p90 = scmp.eq.s32.totalorder %s34, 0
      %p91 = por %p89, %p90
      %p92 = scmp.ne.s32.totalorder %s84, %s86
      %p93 = scmp.eq.s32.totalorder %s39, 1
      %p94 = por %p92, %p93
      %p95 = scmp.ne.s32.totalorder %s86, %s87
      %p96 = scmp.eq.s32.totalorder %s39, 0
      %p97 = por %p95, %p96
      %p98 = scmp.ne.s32.totalorder %s86, %s87
      %p99 = scmp.eq.s32.totalorder %s40, 1
      %p100 = por %p98, %p99
      %p102 = scmp.ne.s32.totalorder %s87, %s101
      %p103 = scmp.eq.s32.totalorder %s40, 0
      %p104 = por %p102, %p103
      %s106 = sadd.s32 %s105, 1
      %p109 = scmp.eq.s32.totalorder %s34, 1
      %p110 = scmp.ne.s32.totalorder %s105, %s107
      %p111 = scmp.eq.s32.totalorder %s34, 0
      %p112 = por %p110, %p111
      %p113 = scmp.ne.s32.totalorder %s105, %s107
      %p114 = scmp.eq.s32.totalorder %s39, 1
      %p115 = por %p113, %p114
      %p116 = scmp.ne.s32.totalorder %s107, %s108
      %p117 = scmp.eq.s32.totalorder %s39, 0
      %p118 = por %p116, %p117
      %p119 = scmp.ne.s32.totalorder %s107, %s108
      %p120 = scmp.eq.s32.totalorder %s40, 1
      %p121 = por %p119, %p120
      %p123 = scmp.ne.s32.totalorder %s108, %s122
      %p124 = scmp.eq.s32.totalorder %s40, 0
      %p125 = por %p123, %p124
      %s127 = sadd.s32 %s126, 1
      %p130 = scmp.eq.s32.totalorder %s34, 1
      %p131 = scmp.ne.s32.totalorder %s126, %s128
      %p132 = scmp.eq.s32.totalorder %s34, 0
      %p133 = por %p131, %p132
      %p134 = scmp.ne.s32.totalorder %s126, %s128
      %p135 = scmp.eq.s32.totalorder %s39, 1
      %p136 = por %p134, %p135
      %p137 = scmp.ne.s32.totalorder %s128, %s129
      %p138 = scmp.eq.s32.totalorder %s39, 0
      %p139 = por %p137, %p138
      %p140 = scmp.ne.s32.totalorder %s128, %s129
      %p141 = scmp.eq.s32.totalorder %s40, 1
      %p142 = por %p140, %p141
      %p144 = scmp.ne.s32.totalorder %s129, %s143
      %p145 = scmp.eq.s32.totalorder %s40, 0
      %p146 = por %p144, %p145
      %s148 = sadd.s32 %s147, 1
      %p151 = scmp.eq.s32.totalorder %s34, 1
      %p152 = scmp.ne.s32.totalorder %s147, %s149
      %p153 = scmp.eq.s32.totalorder %s34, 0
      %p154 = por %p152, %p153
      %p155 = scmp.ne.s32.totalorder %s147, %s149
      %p156 = scmp.eq.s32.totalorder %s39, 1
      %p157 = por %p155, %p156
      %p158 = scmp.ne.s32.totalorder %s149, %s150
      %p159 = scmp.eq.s32.totalorder %s39, 0
      %p160 = por %p158, %p159
      %p161 = scmp.ne.s32.totalorder %s149, %s150
      %p162 = scmp.eq.s32.totalorder %s40, 1
      %p163 = por %p161, %p162
      %p165 = scmp.ne.s32.totalorder %s150, %s164
      %p166 = scmp.eq.s32.totalorder %s40, 0
      %p167 = por %p165, %p166
      %s169 = sadd.s32 %s168, 1
      %p172 = scmp.eq.s32.totalorder %s34, 1
      %p173 = scmp.ne.s32.totalorder %s168, %s170
      %p174 = scmp.eq.s32.totalorder %s34, 0
      %p175 = por %p173, %p174
      %p176 = scmp.ne.s32.totalorder %s168, %s170
      %p177 = scmp.eq.s32.totalorder %s39, 1
      %p178 = por %p176, %p177
      %p179 = scmp.ne.s32.totalorder %s170, %s171
      %p180 = scmp.eq.s32.totalorder %s39, 0
      %p181 = por %p179, %p180
      %p182 = scmp.ne.s32.totalorder %s170, %s171
      %p183 = scmp.eq.s32.totalorder %s40, 1
      %p184 = por %p182, %p183
      %p186 = scmp.ne.s32.totalorder %s171, %s185
      %p187 = scmp.eq.s32.totalorder %s40, 0
      %p188 = por %p186, %p187
      %s190 = sadd.s32 %s189, 1
      %p193 = scmp.eq.s32.totalorder %s34, 1
      %p194 = scmp.ne.s32.totalorder %s189, %s191
      %p195 = scmp.eq.s32.totalorder %s34, 0
      %p196 = por %p194, %p195
      %p197 = scmp.ne.s32.totalorder %s189, %s191
      %p198 = scmp.eq.s32.totalorder %s39, 1
      %p199 = por %p197, %p198
      %p200 = scmp.ne.s32.totalorder %s191, %s192
      %p201 = scmp.eq.s32.totalorder %s39, 0
      %p202 = por %p200, %p201
      %p203 = scmp.ne.s32.totalorder %s191, %s192
      %p204 = scmp.eq.s32.totalorder %s40, 1
      %p205 = por %p203, %p204
      %p207 = scmp.ne.s32.totalorder %s192, %s206
      %p208 = scmp.eq.s32.totalorder %s40, 0
      %p209 = por %p207, %p208
      %s211 = sadd.s32 %s210, 1
      %p214 = scmp.eq.s32.totalorder %s34, 1
      %p215 = scmp.ne.s32.totalorder %s210, %s212
      %p216 = scmp.eq.s32.totalorder %s34, 0
      %p217 = por %p215, %p216
      %p218 = scmp.ne.s32.totalorder %s210, %s212
      %p219 = scmp.eq.s32.totalorder %s39, 1
      %p220 = por %p218, %p219
      %p221 = scmp.ne.s32.totalorder %s212, %s213
      %p222 = scmp.eq.s32.totalorder %s39, 0
      %p223 = por %p221, %p222
      %p224 = scmp.ne.s32.totalorder %s212, %s213
      %p225 = scmp.eq.s32.totalorder %s40, 1
      %p226 = por %p224, %p225
      %p228 = scmp.ne.s32.totalorder %s213, %s227
      %p229 = scmp.eq.s32.totalorder %s40, 0
      %p230 = por %p228, %p229
      %s232 = sadd.s32 %s231, 1
      %p235 = scmp.eq.s32.totalorder %s34, 1
      %p236 = scmp.ne.s32.totalorder %s231, %s233
      %p237 = scmp.eq.s32.totalorder %s34, 0
      %p238 = por %p236, %p237
      %p239 = scmp.ne.s32.totalorder %s231, %s233
      %p240 = scmp.eq.s32.totalorder %s39, 1
      %p241 = por %p239, %p240
      %p242 = scmp.ne.s32.totalorder %s233, %s234
      %p243 = scmp.eq.s32.totalorder %s39, 0
      %p244 = por %p242, %p243
      %p245 = scmp.ne.s32.totalorder %s233, %s234
      %p246 = scmp.eq.s32.totalorder %s40, 1
      %p247 = por %p245, %p246
      %p249 = scmp.ne.s32.totalorder %s234, %s248
      %p250 = scmp.eq.s32.totalorder %s40, 0
      %p251 = por %p249, %p250
      %s252 = ssub.s32 %s34, %s41
      %p253 = scmp.eq.s32.totalorder %s252, 0
      %s255 = sadd.s32 %s254, 1
      %s256 = scalar_select %p253, %s254, %s255
      %p259 = pneg %p253
      %p260 = scmp.eq.s32.totalorder %s34, 1
      %p261 = por %p259, %p260
      %p262 = scmp.ne.s32.totalorder %s254, %s257
      %p263 = scmp.eq.s32.totalorder %s34, 0
      %p264 = por %p262, %p263
      %p265 = scmp.ne.s32.totalorder %s254, %s257
      %p266 = scmp.eq.s32.totalorder %s39, 1
      %p267 = por %p265, %p266
      %p268 = scmp.ne.s32.totalorder %s257, %s258
      %p269 = scmp.eq.s32.totalorder %s39, 0
      %p270 = por %p268, %p269
      %p271 = scmp.ne.s32.totalorder %s257, %s258
      %p272 = scmp.eq.s32.totalorder %s40, 1
      %p273 = por %p271, %p272
      %p275 = scmp.ne.s32.totalorder %s258, %s274
      %p276 = scmp.eq.s32.totalorder %s40, 0
      %p277 = por %p275, %p276
      %s278 = ssub.s32 %s34, %s41
      %p279 = scmp.eq.s32.totalorder %s278, 0
      %s281 = sadd.s32 %s280, 1
      %s282 = scalar_select %p279, %s280, %s281
      %p285 = pneg %p279
      %p286 = scmp.eq.s32.totalorder %s34, 1
      %p287 = por %p285, %p286
      %p288 = scmp.ne.s32.totalorder %s280, %s283
      %p289 = scmp.eq.s32.totalorder %s34, 0
      %p290 = por %p288, %p289
      %p291 = scmp.ne.s32.totalorder %s280, %s283
      %p292 = scmp.eq.s32.totalorder %s39, 1
      %p293 = por %p291, %p292
      %p294 = scmp.ne.s32.totalorder %s283, %s284
      %p295 = scmp.eq.s32.totalorder %s39, 0
      %p296 = por %p294, %p295
      %p297 = scmp.ne.s32.totalorder %s283, %s284
      %p298 = scmp.eq.s32.totalorder %s40, 1
      %p299 = por %p297, %p298
      %p301 = scmp.ne.s32.totalorder %s284, %s300
      %p302 = scmp.eq.s32.totalorder %s40, 0
      %p303 = por %p301, %p302
      %s304 = ssub.s32 %s34, %s41
      %p305 = scmp.eq.s32.totalorder %s304, 0
      %s307 = sadd.s32 %s306, 1
      %s308 = scalar_select %p305, %s306, %s307
      %p311 = pneg %p305
      %p312 = scmp.eq.s32.totalorder %s34, 1
      %p313 = por %p311, %p312
      %p314 = scmp.ne.s32.totalorder %s306, %s309
      %p315 = scmp.eq.s32.totalorder %s34, 0
      %p316 = por %p314, %p315
      %p317 = scmp.ne.s32.totalorder %s306, %s309
      %p318 = scmp.eq.s32.totalorder %s39, 1
      %p319 = por %p317, %p318
      %p320 = scmp.ne.s32.totalorder %s309, %s310
      %p321 = scmp.eq.s32.totalorder %s39, 0
      %p322 = por %p320, %p321
      %p323 = scmp.ne.s32.totalorder %s309, %s310
      %p324 = scmp.eq.s32.totalorder %s40, 1
      %p325 = por %p323, %p324
      %p327 = scmp.ne.s32.totalorder %s310, %s326
      %p328 = scmp.eq.s32.totalorder %s40, 0
      %p329 = por %p327, %p328
      %s330 = ssub.s32 %s34, %s41
      %p331 = scmp.eq.s32.totalorder %s330, 0
      %s333 = sadd.s32 %s332, 1
      %s334 = scalar_select %p331, %s332, %s333
      %p337 = pneg %p331
      %p338 = scmp.eq.s32.totalorder %s34, 1
      %p339 = por %p337, %p338
      %p340 = scmp.ne.s32.totalorder %s332, %s335
      %p341 = scmp.eq.s32.totalorder %s34, 0
      %p342 = por %p340, %p341
      %p343 = scmp.ne.s32.totalorder %s332, %s335
      %p344 = scmp.eq.s32.totalorder %s39, 1
      %p345 = por %p343, %p344
      %p346 = scmp.ne.s32.totalorder %s335, %s336
      %p347 = scmp.eq.s32.totalorder %s39, 0
      %p348 = por %p346, %p347
      %p349 = scmp.ne.s32.totalorder %s335, %s336
      %p350 = scmp.eq.s32.totalorder %s40, 1
      %p351 = por %p349, %p350
      %p353 = scmp.ne.s32.totalorder %s336, %s352
      %p354 = scmp.eq.s32.totalorder %s40, 0
      %p355 = por %p353, %p354
      %s356 = ssub.s32 %s34, %s41
      %p357 = scmp.eq.s32.totalorder %s356, 0
      %s359 = sadd.s32 %s358, 1
      %s360 = scalar_select %p357, %s358, %s359
      %p363 = pneg %p357
      %p364 = scmp.eq.s32.totalorder %s34, 1
      %p365 = por %p363, %p364
      %p366 = scmp.ne.s32.totalorder %s358, %s361
      %p367 = scmp.eq.s32.totalorder %s34, 0
      %p368 = por %p366, %p367
      %p369 = scmp.ne.s32.totalorder %s358, %s361
      %p370 = scmp.eq.s32.totalorder %s39, 1
      %p371 = por %p369, %p370
      %p372 = scmp.ne.s32.totalorder %s361, %s362
      %p373 = scmp.eq.s32.totalorder %s39, 0
      %p374 = por %p372, %p373
      %p375 = scmp.ne.s32.totalorder %s361, %s362
      %p376 = scmp.eq.s32.totalorder %s40, 1
      %p377 = por %p375, %p376
      %p379 = scmp.ne.s32.totalorder %s362, %s378
      %p380 = scmp.eq.s32.totalorder %s40, 0
      %p381 = por %p379, %p380
      %s382 = ssub.s32 %s34, %s41
      %p383 = scmp.eq.s32.totalorder %s382, 0
      %s385 = sadd.s32 %s384, 1
      %s386 = scalar_select %p383, %s384, %s385
      %p389 = pneg %p383
      %p390 = scmp.eq.s32.totalorder %s34, 1
      %p391 = por %p389, %p390
      %p392 = scmp.ne.s32.totalorder %s384, %s387
      %p393 = scmp.eq.s32.totalorder %s34, 0
      %p394 = por %p392, %p393
      %p395 = scmp.ne.s32.totalorder %s384, %s387
      %p396 = scmp.eq.s32.totalorder %s39, 1
      %p397 = por %p395, %p396
      %p398 = scmp.ne.s32.totalorder %s387, %s388
      %p399 = scmp.eq.s32.totalorder %s39, 0
      %p400 = por %p398, %p399
      %p401 = scmp.ne.s32.totalorder %s387, %s388
      %p402 = scmp.eq.s32.totalorder %s40, 1
      %p403 = por %p401, %p402
      %p405 = scmp.ne.s32.totalorder %s388, %s404
      %p406 = scmp.eq.s32.totalorder %s40, 0
      %p407 = por %p405, %p406
      %s408 = ssub.s32 %s34, %s41
      %p409 = scmp.eq.s32.totalorder %s408, 0
      %s411 = sadd.s32 %s410, 1
      %s412 = scalar_select %p409, %s410, %s411
      %p415 = pneg %p409
      %p416 = scmp.eq.s32.totalorder %s34, 1
      %p417 = por %p415, %p416
      %p418 = scmp.ne.s32.totalorder %s410, %s413
      %p419 = scmp.eq.s32.totalorder %s34, 0
      %p420 = por %p418, %p419
      %p421 = scmp.ne.s32.totalorder %s410, %s413
      %p422 = scmp.eq.s32.totalorder %s39, 1
      %p423 = por %p421, %p422
      %p424 = scmp.ne.s32.totalorder %s413, %s414
      %p425 = scmp.eq.s32.totalorder %s39, 0
      %p426 = por %p424, %p425
      %p427 = scmp.ne.s32.totalorder %s413, %s414
      %p428 = scmp.eq.s32.totalorder %s40, 1
      %p429 = por %p427, %p428
      %p431 = scmp.ne.s32.totalorder %s414, %s430
      %p432 = scmp.eq.s32.totalorder %s40, 0
      %p433 = por %p431, %p432
      %s434 = ssub.s32 %s34, %s41
      %p435 = scmp.eq.s32.totalorder %s434, 0
      %s437 = sadd.s32 %s436, 1
      %s438 = scalar_select %p435, %s436, %s437
      %p441 = pneg %p435
      %p442 = scmp.eq.s32.totalorder %s34, 1
      %p443 = por %p441, %p442
      %p444 = scmp.ne.s32.totalorder %s436, %s439
      %p445 = scmp.eq.s32.totalorder %s34, 0
      %p446 = por %p444, %p445
      %p447 = scmp.ne.s32.totalorder %s436, %s439
      %p448 = scmp.eq.s32.totalorder %s39, 1
      %p449 = por %p447, %p448
      %p450 = scmp.ne.s32.totalorder %s439, %s440
      %p451 = scmp.eq.s32.totalorder %s39, 0
      %p452 = por %p450, %p451
      %p453 = scmp.ne.s32.totalorder %s439, %s440
      %p454 = scmp.eq.s32.totalorder %s40, 1
      %p455 = por %p453, %p454
      %p457 = scmp.ne.s32.totalorder %s440, %s456
      %p458 = scmp.eq.s32.totalorder %s40, 0
      %p459 = por %p457, %p458
      %s460 = ssub.s32 %s34, %s41
      %p461 = scmp.eq.s32.totalorder %s460, 0
      %s463 = sadd.s32 %s462, 1
      %s464 = scalar_select %p461, %s462, %s463
      %p467 = pneg %p461
      %p468 = scmp.eq.s32.totalorder %s34, 1
      %p469 = por %p467, %p468
      %p470 = scmp.ne.s32.totalorder %s462, %s465
      %p471 = scmp.eq.s32.totalorder %s34, 0
      %p472 = por %p470, %p471
      %p473 = scmp.ne.s32.totalorder %s462, %s465
      %p474 = scmp.eq.s32.totalorder %s39, 1
      %p475 = por %p473, %p474
      %p476 = scmp.ne.s32.totalorder %s465, %s466
      %p477 = scmp.eq.s32.totalorder %s39, 0
      %p478 = por %p476, %p477
      %p479 = scmp.ne.s32.totalorder %s465, %s466
      %p480 = scmp.eq.s32.totalorder %s40, 1
      %p481 = por %p479, %p480
      %p483 = scmp.ne.s32.totalorder %s466, %s482
      %p484 = scmp.eq.s32.totalorder %s40, 0
      %p485 = por %p483, %p484
      %s486 = ssub.s32 %s34, %s41
      %p487 = scmp.eq.s32.totalorder %s486, 0
      %s489 = sadd.s32 %s488, 1
      %s490 = scalar_select %p487, %s488, %s489
      %p493 = pneg %p487
      %p494 = scmp.eq.s32.totalorder %s34, 1
      %p495 = por %p493, %p494
      %p496 = scmp.ne.s32.totalorder %s488, %s491
      %p497 = scmp.eq.s32.totalorder %s34, 0
      %p498 = por %p496, %p497
      %p499 = scmp.ne.s32.totalorder %s488, %s491
      %p500 = scmp.eq.s32.totalorder %s39, 1
      %p501 = por %p499, %p500
      %p502 = scmp.ne.s32.totalorder %s491, %s492
      %p503 = scmp.eq.s32.totalorder %s39, 0
      %p504 = por %p502, %p503
      %p505 = scmp.ne.s32.totalorder %s491, %s492
      %p506 = scmp.eq.s32.totalorder %s40, 1
      %p507 = por %p505, %p506
      %p509 = scmp.ne.s32.totalorder %s492, %s508
      %p510 = scmp.eq.s32.totalorder %s40, 0
      %p511 = por %p509, %p510
      %s512 = ssub.s32 %s34, %s41
      %p513 = scmp.eq.s32.totalorder %s512, 0
      %s515 = sadd.s32 %s514, 1
      %s516 = scalar_select %p513, %s514, %s515
      %p519 = pneg %p513
      %p520 = scmp.eq.s32.totalorder %s34, 1
      %p521 = por %p519, %p520
      %p522 = scmp.ne.s32.totalorder %s514, %s517
      %p523 = scmp.eq.s32.totalorder %s34, 0
      %p524 = por %p522, %p523
      %p525 = scmp.ne.s32.totalorder %s514, %s517
      %p526 = scmp.eq.s32.totalorder %s39, 1
      %p527 = por %p525, %p526
      %p528 = scmp.ne.s32.totalorder %s517, %s518
      %p529 = scmp.eq.s32.totalorder %s39, 0
      %p530 = por %p528, %p529
      %p531 = scmp.ne.s32.totalorder %s517, %s518
      %p532 = scmp.eq.s32.totalorder %s40, 1
      %p533 = por %p531, %p532
      %p535 = scmp.ne.s32.totalorder %s518, %s534
      %p536 = scmp.eq.s32.totalorder %s40, 0
      %p537 = por %p535, %p536
      %s538 = ssub.s32 %s34, %s41
      %p539 = scmp.eq.s32.totalorder %s538, 0
      %s541 = sadd.s32 %s540, 1
      %s542 = scalar_select %p539, %s540, %s541
      %p545 = pneg %p539
      %p546 = scmp.eq.s32.totalorder %s34, 1
      %p547 = por %p545, %p546
      %p548 = scmp.ne.s32.totalorder %s540, %s543
      %p549 = scmp.eq.s32.totalorder %s34, 0
      %p550 = por %p548, %p549
      %p551 = scmp.ne.s32.totalorder %s540, %s543
      %p552 = scmp.eq.s32.totalorder %s39, 1
      %p553 = por %p551, %p552
      %p554 = scmp.ne.s32.totalorder %s543, %s544
      %p555 = scmp.eq.s32.totalorder %s39, 0
      %p556 = por %p554, %p555
      %p557 = scmp.ne.s32.totalorder %s543, %s544
      %p558 = scmp.eq.s32.totalorder %s40, 1
      %p559 = por %p557, %p558
      %p561 = scmp.ne.s32.totalorder %s544, %s560
      %p562 = scmp.eq.s32.totalorder %s40, 0
      %p563 = por %p561, %p562
      %s565 = sadd.s32 %s564, 1
      %p568 = scmp.eq.s32.totalorder %s34, 1
      %p569 = scmp.ne.s32.totalorder %s564, %s566
      %p570 = scmp.eq.s32.totalorder %s34, 0
      %p571 = por %p569, %p570
      %p572 = scmp.ne.s32.totalorder %s564, %s566
      %p573 = scmp.eq.s32.totalorder %s39, 1
      %p574 = por %p572, %p573
      %p575 = scmp.ne.s32.totalorder %s566, %s567
      %p576 = scmp.eq.s32.totalorder %s39, 0
      %p577 = por %p575, %p576
      %p578 = scmp.ne.s32.totalorder %s566, %s567
      %p579 = scmp.eq.s32.totalorder %s40, 1
      %p580 = por %p578, %p579
      %p582 = scmp.ne.s32.totalorder %s567, %s581
      %p583 = scmp.eq.s32.totalorder %s40, 0
      %p584 = por %p582, %p583
      %s586 = sadd.s32 %s585, 1
      %p589 = scmp.eq.s32.totalorder %s34, 1
      %p590 = scmp.ne.s32.totalorder %s585, %s587
      %p591 = scmp.eq.s32.totalorder %s34, 0
      %p592 = por %p590, %p591
      %p593 = scmp.ne.s32.totalorder %s585, %s587
      %p594 = scmp.eq.s32.totalorder %s39, 1
      %p595 = por %p593, %p594
      %p596 = scmp.ne.s32.totalorder %s587, %s588
      %p597 = scmp.eq.s32.totalorder %s39, 0
      %p598 = por %p596, %p597
      %p599 = scmp.ne.s32.totalorder %s587, %s588
      %p600 = scmp.eq.s32.totalorder %s40, 1
      %p601 = por %p599, %p600
      %p603 = scmp.ne.s32.totalorder %s588, %s602
      %p604 = scmp.eq.s32.totalorder %s40, 0
      %p605 = por %p603, %p604
      %s607 = sadd.s32 %s606, 1
      %p610 = scmp.eq.s32.totalorder %s34, 1
      %p611 = scmp.ne.s32.totalorder %s606, %s608
      %p612 = scmp.eq.s32.totalorder %s34, 0
      %p613 = por %p611, %p612
      %p614 = scmp.ne.s32.totalorder %s606, %s608
      %p615 = scmp.eq.s32.totalorder %s39, 1
      %p616 = por %p614, %p615
      %p617 = scmp.ne.s32.totalorder %s608, %s609
      %p618 = scmp.eq.s32.totalorder %s39, 0
      %p619 = por %p617, %p618
      %p620 = scmp.ne.s32.totalorder %s608, %s609
      %p621 = scmp.eq.s32.totalorder %s40, 1
      %p622 = por %p620, %p621
      %p624 = scmp.ne.s32.totalorder %s609, %s623
      %p625 = scmp.eq.s32.totalorder %s40, 0
      %p626 = por %p624, %p625
      %p627 = scmp.le.s32.totalorder 1, %s34
      %p628 = scmp.lt.s32.totalorder %s34, 3
      %p629 = pnand %p627, %p628
      %p630 = pneg %p629
      // Predicated region
      $region9: #{forward.1} parent=5 // pred_check
        _
      $region10: #{forward.1} parent=5 // pred_check_branch
        %632 = sbr.rel (%p629) target = $region12
      $region11: #{forward.1} parent=5 // pred_region
        %s633 = ssub.s32 %s34, 1
        // Predicated region
        $region13: #{forward.1} parent=11 // pred_check
          %p634 = pneg %p55
        $region14: #{forward.1} parent=11 // pred_check_branch
          %636 = sbr.rel (%p634) target = $region16
        $region15: #{forward.1} parent=11 // pred_region
          _
        $region16: #{forward.1} parent=11 // pred_fallthru
          _
        // Predicated region
        $region17: #{forward.1} parent=11 // pred_check
          %p637 = pneg %p76
        $region18: #{forward.1} parent=11 // pred_check_branch
          %639 = sbr.rel (%p637) target = $region20
        $region19: #{forward.1} parent=11 // pred_region
          _
        $region20: #{forward.1} parent=11 // pred_fallthru
          _
        // Predicated region
        $region21: #{forward.1} parent=11 // pred_check
          %p640 = pneg %p97
        $region22: #{forward.1} parent=11 // pred_check_branch
          %642 = sbr.rel (%p640) target = $region24
        $region23: #{forward.1} parent=11 // pred_region
          %644 = vsyncadd [#allocation4], 0
          %s646 = sshll.u32 %s2, 4
          %s647 = int_to_ptr.hbm [resolvable:$true] %s646
          %s648 = sshll.u32 [#allocation3], 4
          %s649 = int_to_ptr.vmem [resolvable:$true] %s648
          %651 = dma.hbm_to_vmem [thread:$0]  %s647, 16, %s649, [#allocation4]
        $region24: #{forward.1} parent=11 // pred_fallthru
          _
        // Predicated region
        $region25: #{forward.1} parent=11 // pred_check
          %p652 = pneg %p118
        $region26: #{forward.1} parent=11 // pred_check_branch
          %654 = sbr.rel (%p652) target = $region28
        $region27: #{forward.1} parent=11 // pred_region
          %656 = vsyncadd [#allocation6], 0
          %s658 = sshll.u32 %s3, 4
          %s659 = int_to_ptr.hbm [resolvable:$true] %s658
          %s660 = sshll.u32 [#allocation5], 4
          %s661 = int_to_ptr.vmem [resolvable:$true] %s660
          %663 = dma.hbm_to_vmem [thread:$0]  %s659, 16, %s661, [#allocation6]
        $region28: #{forward.1} parent=11 // pred_fallthru
          _
        // Predicated region
        $region29: #{forward.1} parent=11 // pred_check
          %p664 = pneg %p139
        $region30: #{forward.1} parent=11 // pred_check_branch
          %666 = sbr.rel (%p664) target = $region32
        $region31: #{forward.1} parent=11 // pred_region
          %668 = vsyncadd [#allocation6], 0
          %s669 = sshll.u32 %s4, 4
          %s670 = int_to_ptr.hbm [resolvable:$true] %s669
          %s671 = sshll.u32 [#allocation7], 4
          %s672 = int_to_ptr.vmem [resolvable:$true] %s671
          %677 = dma.hbm_to_vmem [thread:$0]  %s670, 1536, %s672, [#allocation6], 64, 64, 4
        $region32: #{forward.1} parent=11 // pred_fallthru
          _
        // Predicated region
        $region33: #{forward.1} parent=11 // pred_check
          %p678 = pneg %p160
        $region34: #{forward.1} parent=11 // pred_check_branch
          %680 = sbr.rel (%p678) target = $region36
        $region35: #{forward.1} parent=11 // pred_region
          %682 = vsyncadd [#allocation9], 0
          %s684 = sshll.u32 %s5, 4
          %s685 = int_to_ptr.hbm [resolvable:$true] %s684
          %s686 = sshll.u32 [#allocation8], 4
          %s687 = int_to_ptr.vmem [resolvable:$true] %s686
          %689 = dma.hbm_to_vmem [thread:$0]  %s685, 16, %s687, [#allocation9]
        $region36: #{forward.1} parent=11 // pred_fallthru
          _
        // Predicated region
        $region37: #{forward.1} parent=11 // pred_check
          %p690 = pneg %p181
        $region38: #{forward.1} parent=11 // pred_check_branch
          %692 = sbr.rel (%p690) target = $region40
        $region39: #{forward.1} parent=11 // pred_region
          %694 = vsyncadd [#allocation9], 0
          %s696 = sshll.u32 %s6, 4
          %s697 = int_to_ptr.hbm [resolvable:$true] %s696
          %s698 = sshll.u32 [#allocation10], 4
          %s699 = int_to_ptr.vmem [resolvable:$true] %s698
          %701 = dma.hbm_to_vmem [thread:$0]  %s697, 16, %s699, [#allocation9]
        $region40: #{forward.1} parent=11 // pred_fallthru
          _
        // Predicated region
        $region41: #{forward.1} parent=11 // pred_check
          %p702 = pneg %p202
        $region42: #{forward.1} parent=11 // pred_check_branch
          %704 = sbr.rel (%p702) target = $region44
        $region43: #{forward.1} parent=11 // pred_region
          _
        $region44: #{forward.1} parent=11 // pred_fallthru
          _
        // Predicated region
        $region45: #{forward.1} parent=11 // pred_check
          %p705 = pneg %p223
        $region46: #{forward.1} parent=11 // pred_check_branch
          %707 = sbr.rel (%p705) target = $region48
        $region47: #{forward.1} parent=11 // pred_region
          _
        $region48: #{forward.1} parent=11 // pred_fallthru
          _
        // Predicated region
        $region49: #{forward.1} parent=11 // pred_check
          %p708 = pneg %p244
        $region50: #{forward.1} parent=11 // pred_check_branch
          %710 = sbr.rel (%p708) target = $region52
        $region51: #{forward.1} parent=11 // pred_region
          %712 = vsyncadd [#allocation12], 0
          %s713 = sshll.u32 %s9, 4
          %s714 = int_to_ptr.hbm [resolvable:$true] %s713
          %s715 = sshll.u32 [#allocation11], 4
          %s716 = int_to_ptr.vmem [resolvable:$true] %s715
          %721 = dma.hbm_to_vmem [thread:$0]  %s714, 1024, %s716, [#allocation12], 128, 128, 8
        $region52: #{forward.1} parent=11 // pred_fallthru
          _
        // Predicated region
        $region53: #{forward.1} parent=11 // pred_check
          %p722 = pneg %p577
        $region54: #{forward.1} parent=11 // pred_check_branch
          %724 = sbr.rel (%p722) target = $region56
        $region55: #{forward.1} parent=11 // pred_region
          %726 = vsyncadd [#allocation6], 0
          %s728 = sshll.u32 %s22, 4
          %s729 = int_to_ptr.hbm [resolvable:$true] %s728
          %s730 = sshll.u32 [#allocation19], 4
          %s731 = int_to_ptr.vmem [resolvable:$true] %s730
          %733 = dma.hbm_to_vmem [thread:$0]  %s729, 32, %s731, [#allocation6]
        $region56: #{forward.1} parent=11 // pred_fallthru
          _
        // Predicated region
        $region57: #{forward.1} parent=11 // pred_check
          %p734 = pneg %p598
        $region58: #{forward.1} parent=11 // pred_check_branch
          %736 = sbr.rel (%p734) target = $region60
        $region59: #{forward.1} parent=11 // pred_region
          _
        $region60: #{forward.1} parent=11 // pred_fallthru
          _
      $region12: #{forward.1} parent=5 // pred_fallthru
        _
      %p737 = scmp.lt.s32.totalorder %s34, 2
      // Predicated region
      $region61: #{forward.1} parent=5 // pred_check
        %p738 = pneg %p737
      $region62: #{forward.1} parent=5 // pred_check_branch
        %740 = sbr.rel (%p738) target = $region64
      $region63: #{forward.1} parent=5 // pred_region
        // Predicated region
        $region65: #{forward.1} parent=63 // pred_check
          %p741 = pneg %p264
        $region66: #{forward.1} parent=63 // pred_check_branch
          %743 = sbr.rel (%p741) target = $region68
        $region67: #{forward.1} parent=63 // pred_region
          %s744 = sand.u32 %s34, 1
          %s745 = scalar_lea.sflag [#allocation4], %s744
          %s746 = sand.u32 %s254, 1
          %s747 = smul.addr %s746, 192
          %s748 = scalar_lea.vmem [#allocation13], %s747
          %750 = vsyncadd %s745, 0
          %s751 = smul.addr %s34, 48
          %s752 = smul.addr %s751, 4
          %s753 = scalar_lea.hbm %s10, %s752
          %s754 = sshll.u32 %s753, 4
          %s755 = int_to_ptr.hbm [resolvable:$true] %s754
          %s756 = sshll.u32 %s748, 4
          %s757 = int_to_ptr.vmem [resolvable:$true] %s756
          %762 = dma.hbm_to_vmem [thread:$0]  %s755, 3072, %s757, %s745, 192, 192, 12
        $region68: #{forward.1} parent=63 // pred_fallthru
          _
        // Predicated region
        $region69: #{forward.1} parent=63 // pred_check
          %p763 = pneg %p290
        $region70: #{forward.1} parent=63 // pred_check_branch
          %765 = sbr.rel (%p763) target = $region72
        $region71: #{forward.1} parent=63 // pred_region
          %p766 = scmp.lt.s32.totalorder %s34, 1
          %s767 = scalar_select %p766, %s34, 1
          %s768 = smul.addr %s767, 3
          %s769 = scalar_lea.vmem %s11, %s768
        $region72: #{forward.1} parent=63 // pred_fallthru
          _
        // Predicated region
        $region73: #{forward.1} parent=63 // pred_check
          %p770 = pneg %p316
        $region74: #{forward.1} parent=63 // pred_check_branch
          %772 = sbr.rel (%p770) target = $region76
        $region75: #{forward.1} parent=63 // pred_region
          %p773 = scmp.lt.s32.totalorder %s34, 1
          %s774 = scalar_select %p773, %s34, 1
          %s775 = smul.addr %s774, 16
          %s776 = smul.addr %s775, 4
          %s777 = scalar_lea.vmem %s12, %s776
        $region76: #{forward.1} parent=63 // pred_fallthru
          _
        // Predicated region
        $region77: #{forward.1} parent=63 // pred_check
          %p778 = pneg %p342
        $region78: #{forward.1} parent=63 // pred_check_branch
          %780 = sbr.rel (%p778) target = $region80
        $region79: #{forward.1} parent=63 // pred_region
          %p781 = scmp.lt.s32.totalorder %s34, 1
          %s782 = scalar_select %p781, %s34, 1
          %s783 = scalar_lea.vmem %s13, %s782
        $region80: #{forward.1} parent=63 // pred_fallthru
          _
        // Predicated region
        $region81: #{forward.1} parent=63 // pred_check
          %p784 = pneg %p368
        $region82: #{forward.1} parent=63 // pred_check_branch
          %786 = sbr.rel (%p784) target = $region84
        $region83: #{forward.1} parent=63 // pred_region
          %p787 = scmp.lt.s32.totalorder %s34, 1
          %s788 = scalar_select %p787, %s34, 1
          %s789 = scalar_lea.vmem %s14, %s788
        $region84: #{forward.1} parent=63 // pred_fallthru
          _
        // Predicated region
        $region85: #{forward.1} parent=63 // pred_check
          %p790 = pneg %p394
        $region86: #{forward.1} parent=63 // pred_check_branch
          %792 = sbr.rel (%p790) target = $region88
        $region87: #{forward.1} parent=63 // pred_region
          %s793 = sand.u32 %s34, 1
          %s794 = scalar_lea.sflag [#allocation4], %s793
          %s795 = sand.u32 %s384, 1
          %s796 = scalar_lea.vmem [#allocation14], %s795
          %798 = vsyncadd %s794, 0
          %s799 = scalar_lea.hbm %s15, %s34
          %s801 = sshll.u32 %s799, 4
          %s802 = int_to_ptr.hbm [resolvable:$true] %s801
          %s803 = sshll.u32 %s796, 4
          %s804 = int_to_ptr.vmem [resolvable:$true] %s803
          %806 = dma.hbm_to_vmem [thread:$0]  %s802, 16, %s804, %s794
        $region88: #{forward.1} parent=63 // pred_fallthru
          _
        // Predicated region
        $region89: #{forward.1} parent=63 // pred_check
          %p807 = pneg %p420
        $region90: #{forward.1} parent=63 // pred_check_branch
          %809 = sbr.rel (%p807) target = $region92
        $region91: #{forward.1} parent=63 // pred_region
          %s810 = sand.u32 %s34, 1
          %s811 = scalar_lea.sflag [#allocation4], %s810
          %s812 = sand.u32 %s410, 1
          %s813 = smul.addr %s812, 128
          %s814 = scalar_lea.vmem [#allocation15], %s813
          %816 = vsyncadd %s811, 0
          %s817 = smul.addr %s34, 32
          %s818 = smul.addr %s817, 4
          %s819 = scalar_lea.hbm %s16, %s818
          %s820 = sshll.u32 %s819, 4
          %s821 = int_to_ptr.hbm [resolvable:$true] %s820
          %s822 = sshll.u32 %s814, 4
          %s823 = int_to_ptr.vmem [resolvable:$true] %s822
          %828 = dma.hbm_to_vmem [thread:$0]  %s821, 2048, %s823, %s811, 128, 128, 8
        $region92: #{forward.1} parent=63 // pred_fallthru
          _
        // Predicated region
        $region93: #{forward.1} parent=63 // pred_check
          %p829 = pneg %p446
        $region94: #{forward.1} parent=63 // pred_check_branch
          %831 = sbr.rel (%p829) target = $region96
        $region95: #{forward.1} parent=63 // pred_region
          %p832 = scmp.lt.s32.totalorder %s34, 1
          %s833 = scalar_select %p832, %s34, 1
          %s834 = smul.addr %s833, 2
          %s835 = scalar_lea.vmem %s17, %s834
        $region96: #{forward.1} parent=63 // pred_fallthru
          _
        // Predicated region
        $region97: #{forward.1} parent=63 // pred_check
          %p836 = pneg %p472
        $region98: #{forward.1} parent=63 // pred_check_branch
          %838 = sbr.rel (%p836) target = $region100
        $region99: #{forward.1} parent=63 // pred_region
          %s839 = sand.u32 %s34, 1
          %s840 = scalar_lea.sflag [#allocation4], %s839
          %s841 = sand.u32 %s462, 1
          %s842 = smul.addr %s841, 128
          %s843 = scalar_lea.vmem [#allocation16], %s842
          %845 = vsyncadd %s840, 0
          %s846 = smul.addr %s34, 32
          %s847 = smul.addr %s846, 4
          %s848 = scalar_lea.hbm %s18, %s847
          %s849 = sshll.u32 %s848, 4
          %s850 = int_to_ptr.hbm [resolvable:$true] %s849
          %s851 = sshll.u32 %s843, 4
          %s852 = int_to_ptr.vmem [resolvable:$true] %s851
          %857 = dma.hbm_to_vmem [thread:$0]  %s850, 2048, %s852, %s840, 64, 64, 4
        $region100: #{forward.1} parent=63 // pred_fallthru
          _
        // Predicated region
        $region101: #{forward.1} parent=63 // pred_check
          %p858 = pneg %p498
        $region102: #{forward.1} parent=63 // pred_check_branch
          %860 = sbr.rel (%p858) target = $region104
        $region103: #{forward.1} parent=63 // pred_region
          %p861 = scmp.lt.s32.totalorder %s34, 1
          %s862 = scalar_select %p861, %s34, 1
          %s863 = scalar_lea.vmem %s19, %s862
        $region104: #{forward.1} parent=63 // pred_fallthru
          _
        // Predicated region
        $region105: #{forward.1} parent=63 // pred_check
          %p864 = pneg %p524
        $region106: #{forward.1} parent=63 // pred_check_branch
          %866 = sbr.rel (%p864) target = $region108
        $region107: #{forward.1} parent=63 // pred_region
          %s867 = sand.u32 %s34, 1
          %s868 = scalar_lea.sflag [#allocation4], %s867
          %s869 = sand.u32 %s514, 1
          %s870 = scalar_lea.vmem [#allocation17], %s869
          %872 = vsyncadd %s868, 0
          %s873 = scalar_lea.hbm %s20, %s34
          %s875 = sshll.u32 %s873, 4
          %s876 = int_to_ptr.hbm [resolvable:$true] %s875
          %s877 = sshll.u32 %s870, 4
          %s878 = int_to_ptr.vmem [resolvable:$true] %s877
          %880 = dma.hbm_to_vmem [thread:$0]  %s876, 16, %s878, %s868
        $region108: #{forward.1} parent=63 // pred_fallthru
          _
        // Predicated region
        $region109: #{forward.1} parent=63 // pred_check
          %p881 = pneg %p550
        $region110: #{forward.1} parent=63 // pred_check_branch
          %883 = sbr.rel (%p881) target = $region112
        $region111: #{forward.1} parent=63 // pred_region
          %s884 = sand.u32 %s34, 1
          %s885 = scalar_lea.sflag [#allocation4], %s884
          %s886 = sand.u32 %s540, 1
          %s887 = scalar_lea.vmem [#allocation18], %s886
          %889 = vsyncadd %s885, 0
          %s890 = scalar_lea.hbm %s21, %s34
          %s892 = sshll.u32 %s890, 4
          %s893 = int_to_ptr.hbm [resolvable:$true] %s892
          %s894 = sshll.u32 %s887, 4
          %s895 = int_to_ptr.vmem [resolvable:$true] %s894
          %897 = dma.hbm_to_vmem [thread:$0]  %s893, 16, %s895, %s885
        $region112: #{forward.1} parent=63 // pred_fallthru
          _
      $region64: #{forward.1} parent=5 // pred_fallthru
        _
      %p898 = scmp.le.s32.totalorder 1, %s34
      %p899 = scmp.lt.s32.totalorder %s34, 3
      %p900 = pnand %p898, %p899
      %p901 = pneg %p900
      // Predicated region
      $region113: #{forward.1} parent=5 // pred_check
        _
      $region114: #{forward.1} parent=5 // pred_check_branch
        %903 = sbr.rel (%p900) target = $region116
      $region115: #{forward.1} parent=5 // pred_region
        %s904 = ssub.s32 %s34, 1
        // Predicated region
        $region117: #{forward.1} parent=115 // pred_check
          %p905 = pneg %p97
        $region118: #{forward.1} parent=115 // pred_check_branch
          %907 = sbr.rel (%p905) target = $region120
        $region119: #{forward.1} parent=115 // pred_region
          %909 = dma.done [#allocation4], 16
        $region120: #{forward.1} parent=115 // pred_fallthru
          _
        // Predicated region
        $region121: #{forward.1} parent=115 // pred_check
          %p910 = pneg %p118
        $region122: #{forward.1} parent=115 // pred_check_branch
          %912 = sbr.rel (%p910) target = $region124
        $region123: #{forward.1} parent=115 // pred_region
          %914 = dma.done [#allocation6], 16
        $region124: #{forward.1} parent=115 // pred_fallthru
          _
        // Predicated region
        $region125: #{forward.1} parent=115 // pred_check
          %p915 = pneg %p139
        $region126: #{forward.1} parent=115 // pred_check_branch
          %917 = sbr.rel (%p915) target = $region128
        $region127: #{forward.1} parent=115 // pred_region
          %919 = dma.done [#allocation6], 1536
        $region128: #{forward.1} parent=115 // pred_fallthru
          _
        // Predicated region
        $region129: #{forward.1} parent=115 // pred_check
          %p920 = pneg %p160
        $region130: #{forward.1} parent=115 // pred_check_branch
          %922 = sbr.rel (%p920) target = $region132
        $region131: #{forward.1} parent=115 // pred_region
          %924 = dma.done [#allocation9], 16
        $region132: #{forward.1} parent=115 // pred_fallthru
          _
        // Predicated region
        $region133: #{forward.1} parent=115 // pred_check
          %p925 = pneg %p181
        $region134: #{forward.1} parent=115 // pred_check_branch
          %927 = sbr.rel (%p925) target = $region136
        $region135: #{forward.1} parent=115 // pred_region
          %929 = dma.done [#allocation9], 16
        $region136: #{forward.1} parent=115 // pred_fallthru
          _
        // Predicated region
        $region137: #{forward.1} parent=115 // pred_check
          %p930 = pneg %p244
        $region138: #{forward.1} parent=115 // pred_check_branch
          %932 = sbr.rel (%p930) target = $region140
        $region139: #{forward.1} parent=115 // pred_region
          %934 = dma.done [#allocation12], 1024
        $region140: #{forward.1} parent=115 // pred_fallthru
          _
        %s935 = sand.u32 %s39, 1
        %s936 = scalar_lea.sflag [#allocation4], %s935
        %s937 = sand.u32 %s257, 1
        %s938 = smul.addr %s937, 192
        %s939 = scalar_lea.vmem [#allocation13], %s938
        // Predicated region
        $region141: #{forward.1} parent=115 // pred_check
          %p940 = pneg %p270
        $region142: #{forward.1} parent=115 // pred_check_branch
          %942 = sbr.rel (%p940) target = $region144
        $region143: #{forward.1} parent=115 // pred_region
          %944 = dma.done %s936, 3072
        $region144: #{forward.1} parent=115 // pred_fallthru
          _
        %s945 = sand.u32 %s39, 1
        %s946 = scalar_lea.sflag [#allocation4], %s945
        %s947 = sand.u32 %s387, 1
        %s948 = scalar_lea.vmem [#allocation14], %s947
        // Predicated region
        $region145: #{forward.1} parent=115 // pred_check
          %p949 = pneg %p400
        $region146: #{forward.1} parent=115 // pred_check_branch
          %951 = sbr.rel (%p949) target = $region148
        $region147: #{forward.1} parent=115 // pred_region
          %953 = dma.done %s946, 16
        $region148: #{forward.1} parent=115 // pred_fallthru
          _
        %s954 = sand.u32 %s39, 1
        %s955 = scalar_lea.sflag [#allocation4], %s954
        %s956 = sand.u32 %s413, 1
        %s957 = smul.addr %s956, 128
        %s958 = scalar_lea.vmem [#allocation15], %s957
        // Predicated region
        $region149: #{forward.1} parent=115 // pred_check
          %p959 = pneg %p426
        $region150: #{forward.1} parent=115 // pred_check_branch
          %961 = sbr.rel (%p959) target = $region152
        $region151: #{forward.1} parent=115 // pred_region
          %963 = dma.done %s955, 2048
        $region152: #{forward.1} parent=115 // pred_fallthru
          _
        %s964 = sand.u32 %s39, 1
        %s965 = scalar_lea.sflag [#allocation4], %s964
        %s966 = sand.u32 %s465, 1
        %s967 = smul.addr %s966, 128
        %s968 = scalar_lea.vmem [#allocation16], %s967
        // Predicated region
        $region153: #{forward.1} parent=115 // pred_check
          %p969 = pneg %p478
        $region154: #{forward.1} parent=115 // pred_check_branch
          %971 = sbr.rel (%p969) target = $region156
        $region155: #{forward.1} parent=115 // pred_region
          %973 = dma.done %s965, 2048
        $region156: #{forward.1} parent=115 // pred_fallthru
          _
        %s974 = sand.u32 %s39, 1
        %s975 = scalar_lea.sflag [#allocation4], %s974
        %s976 = sand.u32 %s517, 1
        %s977 = scalar_lea.vmem [#allocation17], %s976
        // Predicated region
        $region157: #{forward.1} parent=115 // pred_check
          %p978 = pneg %p530
        $region158: #{forward.1} parent=115 // pred_check_branch
          %980 = sbr.rel (%p978) target = $region160
        $region159: #{forward.1} parent=115 // pred_region
          %982 = dma.done %s975, 16
        $region160: #{forward.1} parent=115 // pred_fallthru
          _
        %s983 = sand.u32 %s39, 1
        %s984 = scalar_lea.sflag [#allocation4], %s983
        %s985 = sand.u32 %s543, 1
        %s986 = scalar_lea.vmem [#allocation18], %s985
        // Predicated region
        $region161: #{forward.1} parent=115 // pred_check
          %p987 = pneg %p556
        $region162: #{forward.1} parent=115 // pred_check_branch
          %989 = sbr.rel (%p987) target = $region164
        $region163: #{forward.1} parent=115 // pred_region
          %991 = dma.done %s984, 16
        $region164: #{forward.1} parent=115 // pred_fallthru
          _
        // Predicated region
        $region165: #{forward.1} parent=115 // pred_check
          %p992 = pneg %p577
        $region166: #{forward.1} parent=115 // pred_check_branch
          %994 = sbr.rel (%p992) target = $region168
        $region167: #{forward.1} parent=115 // pred_region
          %996 = dma.done [#allocation6], 32
        $region168: #{forward.1} parent=115 // pred_fallthru
          _
        %p997 = pneg %p55
        %p998 = pneg %p52
        %p999 = pneg %p76
        %p1000 = pneg %p73
        %p1001 = pneg %p97
        %p1002 = pneg %p94
        %p1003 = pneg %p118
        %p1004 = pneg %p115
        %p1005 = pneg %p139
        %p1006 = pneg %p136
        %p1007 = pneg %p160
        %p1008 = pneg %p157
        %p1009 = pneg %p181
        %p1010 = pneg %p178
        %p1011 = pneg %p202
        %p1012 = pneg %p199
        %p1013 = pneg %p223
        %p1014 = pneg %p220
        %p1015 = pneg %p244
        %p1016 = pneg %p241
        %s1017 = sand.u32 %s39, 1
        %s1018 = scalar_lea.sflag [#allocation4], %s1017
        %s1019 = sand.u32 %s257, 1
        %s1020 = smul.addr %s1019, 192
        %s1021 = scalar_lea.vmem [#allocation13], %s1020
        %p1022 = pneg %p270
        %p1023 = pneg %p267
        %p1024 = scmp.lt.s32.totalorder %s39, 1
        %s1025 = scalar_select %p1024, %s39, 1
        %s1026 = smul.addr %s1025, 3
        %s1027 = scalar_lea.vmem %s11, %s1026
        %p1028 = pneg %p296
        %p1029 = pneg %p293
        %p1030 = scmp.lt.s32.totalorder %s39, 1
        %s1031 = scalar_select %p1030, %s39, 1
        %s1032 = smul.addr %s1031, 16
        %s1033 = smul.addr %s1032, 4
        %s1034 = scalar_lea.vmem %s12, %s1033
        %p1035 = pneg %p322
        %p1036 = pneg %p319
        %p1037 = scmp.lt.s32.totalorder %s39, 1
        %s1038 = scalar_select %p1037, %s39, 1
        %s1039 = scalar_lea.vmem %s13, %s1038
        %p1040 = pneg %p348
        %p1041 = pneg %p345
        %p1042 = scmp.lt.s32.totalorder %s39, 1
        %s1043 = scalar_select %p1042, %s39, 1
        %s1044 = scalar_lea.vmem %s14, %s1043
        %p1045 = pneg %p374
        %p1046 = pneg %p371
        %s1047 = sand.u32 %s39, 1
        %s1048 = scalar_lea.sflag [#allocation4], %s1047
        %s1049 = sand.u32 %s387, 1
        %s1050 = scalar_lea.vmem [#allocation14], %s1049
        %p1051 = pneg %p400
        %p1052 = pneg %p397
        %s1053 = sand.u32 %s39, 1
        %s1054 = scalar_lea.sflag [#allocation4], %s1053
        %s1055 = sand.u32 %s413, 1
        %s1056 = smul.addr %s1055, 128
        %s1057 = scalar_lea.vmem [#allocation15], %s1056
        %p1058 = pneg %p426
        %p1059 = pneg %p423
        %p1060 = scmp.lt.s32.totalorder %s39, 1
        %s1061 = scalar_select %p1060, %s39, 1
        %s1062 = smul.addr %s1061, 2
        %s1063 = scalar_lea.vmem %s17, %s1062
        %p1064 = pneg %p452
        %p1065 = pneg %p449
        %s1066 = sand.u32 %s39, 1
        %s1067 = scalar_lea.sflag [#allocation4], %s1066
        %s1068 = sand.u32 %s465, 1
        %s1069 = smul.addr %s1068, 128
        %s1070 = scalar_lea.vmem [#allocation16], %s1069
        %p1071 = pneg %p478
        %p1072 = pneg %p475
        %p1073 = scmp.lt.s32.totalorder %s39, 1
        %s1074 = scalar_select %p1073, %s39, 1
        %s1075 = scalar_lea.vmem %s19, %s1074
        %p1076 = pneg %p504
        %p1077 = pneg %p501
        %s1078 = sand.u32 %s39, 1
        %s1079 = scalar_lea.sflag [#allocation4], %s1078
        %s1080 = sand.u32 %s517, 1
        %s1081 = scalar_lea.vmem [#allocation17], %s1080
        %p1082 = pneg %p530
        %p1083 = pneg %p527
        %s1084 = sand.u32 %s39, 1
        %s1085 = scalar_lea.sflag [#allocation4], %s1084
        %s1086 = sand.u32 %s543, 1
        %s1087 = scalar_lea.vmem [#allocation18], %s1086
        %p1088 = pneg %p556
        %p1089 = pneg %p553
        %p1090 = pneg %p577
        %p1091 = pneg %p574
        %p1092 = pneg %p598
        %p1093 = pneg %p595
        %p1094 = pneg %p619
        %p1095 = pneg %p616
        %p1096 = scmp.lt.s32.totalorder %s39, 1
        %s1097 = scalar_select %p1096, %s39, 1
        %s1098 = smul.addr %s1097, 3
        %s1099 = scalar_lea.vmem %s11, %s1098
        %p1100 = scmp.lt.s32.totalorder %s39, 1
        %s1101 = scalar_select %p1100, %s39, 1
        %s1102 = smul.addr %s1101, 16
        %s1103 = smul.addr %s1102, 4
        %s1104 = scalar_lea.vmem %s12, %s1103
        %p1105 = scmp.lt.s32.totalorder %s39, 1
        %s1106 = scalar_select %p1105, %s39, 1
        %s1107 = scalar_lea.vmem %s13, %s1106
        %p1108 = scmp.lt.s32.totalorder %s39, 1
        %s1109 = scalar_select %p1108, %s39, 1
        %s1110 = scalar_lea.vmem %s14, %s1109
        %p1111 = scmp.lt.s32.totalorder %s39, 1
        %s1112 = scalar_select %p1111, %s39, 1
        %s1113 = smul.addr %s1112, 2
        %s1114 = scalar_lea.vmem %s17, %s1113
        %p1115 = scmp.lt.s32.totalorder %s39, 1
        %s1116 = scalar_select %p1115, %s39, 1
        %s1117 = scalar_lea.vmem %s19, %s1116
        %p1119 = scmp.eq.s32.totalorder %s39, 0
        // Predicated region
        $region169: #{forward.1} parent=115 // pred_check
          %p1120 = pneg %p1119
        $region170: #{forward.1} parent=115 // pred_check_branch
          %1122 = sbr.rel (%p1120) target = $region172
        $region171: #{forward.1} parent=115 // pred_region
          %v1123 = vld [vmem:[%s0] sm:$0xff]
          %v1124 = vld [vmem:[%s0 + $0x8] sm:$0xff]
          %v1125 = vld [vmem:[%s0 + $0x10] sm:$0xff]
          %v1126 = vld [vmem:[%s0 + $0x18] sm:$0xff]
          %v1127 = vld [vmem:[%s0 + $0x20] sm:$0xff]
          %v1128 = vld [vmem:[%s0 + $0x28] sm:$0xff]
          %v1129 = vld [vmem:[%s0 + $0x30] sm:$0xff]
          %v1130 = vld [vmem:[%s0 + $0x38] sm:$0xff]
          %v1131 = vld [vmem:[%s0 + $0x40] sm:$0xff]
          %v1132 = vld [vmem:[%s0 + $0x48] sm:$0xff]
          %v1133 = vld [vmem:[%s0 + $0x50] sm:$0xff]
          %v1134 = vld [vmem:[%s0 + $0x58] sm:$0xff]
          %v1135 = vld [vmem:[%s0 + $0x60] sm:$0xff]
          %v1136 = vld [vmem:[%s0 + $0x68] sm:$0xff]
          %v1137 = vld [vmem:[%s0 + $0x70] sm:$0xff]
          %v1138 = vld [vmem:[%s0 + $0x78] sm:$0xff]
          %v1139 = vpack.c.bf16 %v1124, %v1123
          %v1140 = vpack.c.bf16 %v1126, %v1125
          %v1141 = vpack.c.bf16 %v1128, %v1127
          %v1142 = vpack.c.bf16 %v1130, %v1129
          %v1143 = vpack.c.bf16 %v1132, %v1131
          %v1144 = vpack.c.bf16 %v1134, %v1133
          %v1145 = vpack.c.bf16 %v1136, %v1135
          %v1146 = vpack.c.bf16 %v1138, %v1137
          %v1147 = vld [vmem:[%s1] sm:$0xf]
          %v1148 = vld [vmem:[%s1 + $0x4] sm:$0x1]
          %v1151 = vunpack.c.l.b16 %v1147
          %v1152 = vunpack.c.l.b16 %v1148
          %v1153 = vpack.c.b16 %v1152, %v1151
          %vm1154 = vcmask 72704
          %v1156 = vsel %vm1154, %v1139, 0
          %v1159 = vsel %vm1154, %v1140, 0
          %v1162 = vsel %vm1154, %v1141, 0
          %v1165 = vsel %vm1154, %v1142, 0
          %v1168 = vsel %vm1154, %v1143, 0
          %v1171 = vsel %vm1154, %v1144, 0
          %v1174 = vsel %vm1154, %v1145, 0
          %v1177 = vsel %vm1154, %v1146, 0
          %vm1179 = vcmask 1043456
          %vm1180 = vcmask 1044480
          %v1181 = vsel %vm1179, 4294967295, 65535
          %v1182 = vsel %vm1180, %v1181, 0
          %v1184 = vand.u32 %v1153, %v1182
          %1186 = vmatpush.bf16.msra.mxu0 0
          %1187 = vmatpush.bf16.msra.mxu0 0
          %1188 = vmatpush.bf16.msra.mxu0 0
          %1189 = vmatpush.bf16.msra.mxu0 0
          %1190 = vmatpush.bf16.msra.mxu0 0
          %1191 = vmatpush.bf16.msra.mxu0 0
          %1192 = vmatpush.bf16.msra.mxu0 0
          %1193 = vmatpush.bf16.msra.mxu0 %v1184
          %1194 = vmatmul.bf16.gmra.mxu0 %v1156
          %v1195 = vpop.f32.mrf.mxu0
          %v1196 = vadd.f32 0.0, %v1195
          %v1197 = vpop.f32.mrf.mxu0
          %v1198 = vadd.f32 0.0, %v1197
          %1199 = vmatmul.bf16.gmra.mxu0 %v1159
          %v1200 = vpop.f32.mrf.mxu0
          %v1201 = vadd.f32 0.0, %v1200
          %v1202 = vpop.f32.mrf.mxu0
          %v1203 = vadd.f32 0.0, %v1202
          %1204 = vmatmul.bf16.gmra.mxu0 %v1162
          %v1205 = vpop.f32.mrf.mxu0
          %v1206 = vadd.f32 0.0, %v1205
          %v1207 = vpop.f32.mrf.mxu0
          %v1208 = vadd.f32 0.0, %v1207
          %1209 = vmatmul.bf16.gmra.mxu0 %v1165
          %v1210 = vpop.f32.mrf.mxu0
          %v1211 = vadd.f32 0.0, %v1210
          %v1212 = vpop.f32.mrf.mxu0
          %v1213 = vadd.f32 0.0, %v1212
          %1214 = vmatmul.bf16.gmra.mxu0 %v1168
          %v1215 = vpop.f32.mrf.mxu0
          %v1216 = vadd.f32 0.0, %v1215
          %v1217 = vpop.f32.mrf.mxu0
          %v1218 = vadd.f32 0.0, %v1217
          %1219 = vmatmul.bf16.gmra.mxu0 %v1171
          %v1220 = vpop.f32.mrf.mxu0
          %v1221 = vadd.f32 0.0, %v1220
          %v1222 = vpop.f32.mrf.mxu0
          %v1223 = vadd.f32 0.0, %v1222
          %1224 = vmatmul.bf16.gmra.mxu0 %v1174
          %v1225 = vpop.f32.mrf.mxu0
          %v1226 = vadd.f32 0.0, %v1225
          %v1227 = vpop.f32.mrf.mxu0
          %v1228 = vadd.f32 0.0, %v1227
          %1229 = vmatmul.bf16.gmra.mxu0 %v1177
          %v1230 = vpop.f32.mrf.mxu0
          %v1231 = vadd.f32 0.0, %v1230
          %v1232 = vpop.f32.mrf.mxu0
          %v1233 = vadd.f32 0.0, %v1232
          %1234 = vdwg.mxu0
          %v1235 = vld [vmem:[#allocation3] sm:$0x1]
          %v1237 = vperm.slane %v1235, 0
          %v1239 = vmul.f32 %v1196, %v1237
          %v1240 = vmul.f32 %v1198, %v1237
          %v1241 = vmul.f32 %v1201, %v1237
          %v1242 = vmul.f32 %v1203, %v1237
          %v1243 = vmul.f32 %v1206, %v1237
          %v1244 = vmul.f32 %v1208, %v1237
          %v1245 = vmul.f32 %v1211, %v1237
          %v1246 = vmul.f32 %v1213, %v1237
          %v1247 = vmul.f32 %v1216, %v1237
          %v1248 = vmul.f32 %v1218, %v1237
          %v1249 = vmul.f32 %v1221, %v1237
          %v1250 = vmul.f32 %v1223, %v1237
          %v1251 = vmul.f32 %v1226, %v1237
          %v1252 = vmul.f32 %v1228, %v1237
          %v1253 = vmul.f32 %v1231, %v1237
          %v1254 = vmul.f32 %v1233, %v1237
          %v1255 = vld [vmem:[#allocation5] sm:$0x1]
          %v1257 = vperm.slane %v1255, 0
          %v1259 = vadd.f32 %v1239, %v1257
          %v1260 = vadd.f32 %v1240, %v1257
          %v1261 = vadd.f32 %v1241, %v1257
          %v1262 = vadd.f32 %v1242, %v1257
          %v1263 = vadd.f32 %v1243, %v1257
          %v1264 = vadd.f32 %v1244, %v1257
          %v1265 = vadd.f32 %v1245, %v1257
          %v1266 = vadd.f32 %v1246, %v1257
          %v1267 = vadd.f32 %v1247, %v1257
          %v1268 = vadd.f32 %v1248, %v1257
          %v1269 = vadd.f32 %v1249, %v1257
          %v1270 = vadd.f32 %v1250, %v1257
          %v1271 = vadd.f32 %v1251, %v1257
          %v1272 = vadd.f32 %v1252, %v1257
          %v1273 = vadd.f32 %v1253, %v1257
          %v1274 = vadd.f32 %v1254, %v1257
          %v1275 = vmax.f32 %v1259, 0.0
          %v1276 = vmax.f32 %v1260, 0.0
          %v1277 = vmax.f32 %v1261, 0.0
          %v1278 = vmax.f32 %v1262, 0.0
          %v1279 = vmax.f32 %v1263, 0.0
          %v1280 = vmax.f32 %v1264, 0.0
          %v1281 = vmax.f32 %v1265, 0.0
          %v1282 = vmax.f32 %v1266, 0.0
          %v1283 = vmax.f32 %v1267, 0.0
          %v1284 = vmax.f32 %v1268, 0.0
          %v1285 = vmax.f32 %v1269, 0.0
          %v1286 = vmax.f32 %v1270, 0.0
          %v1287 = vmax.f32 %v1271, 0.0
          %v1288 = vmax.f32 %v1272, 0.0
          %v1289 = vmax.f32 %v1273, 0.0
          %v1290 = vmax.f32 %v1274, 0.0
          %vm1299 = vcmask 1040384
          %v1300 = vrot.slane %v1275, 7
          %v1301 = vrot.slane %v1276, 7
          %v1302 = vsel %vm1299, %v1300, %v1301
          %v1303 = vrot.slane %v1277, 7
          %v1304 = vsel %vm1299, %v1301, %v1303
          %v1305 = vrot.slane %v1278, 7
          %v1306 = vsel %vm1299, %v1303, %v1305
          %v1307 = vrot.slane %v1279, 7
          %v1308 = vsel %vm1299, %v1305, %v1307
          %v1309 = vrot.slane %v1280, 7
          %v1310 = vsel %vm1299, %v1307, %v1309
          %v1311 = vrot.slane %v1281, 7
          %v1312 = vsel %vm1299, %v1309, %v1311
          %v1313 = vrot.slane %v1282, 7
          %v1314 = vsel %vm1299, %v1311, %v1313
          %v1324 = vsel %vm1299, 0.0, %v1300
          %v1325 = vsel %vm1299, %v1313, 0.0
          %vm1328 = vcmask 1046528
          %v1329 = vrot.slane %v1324, 1
          %v1330 = vrot.slane %v1302, 1
          %v1331 = vsel %vm1328, %v1329, %v1330
          %v1332 = vrot.slane %v1304, 1
          %v1333 = vsel %vm1328, %v1330, %v1332
          %v1334 = vrot.slane %v1306, 1
          %v1335 = vsel %vm1328, %v1332, %v1334
          %v1336 = vrot.slane %v1308, 1
          %v1337 = vsel %vm1328, %v1334, %v1336
          %v1338 = vrot.slane %v1310, 1
          %v1339 = vsel %vm1328, %v1336, %v1338
          %v1340 = vrot.slane %v1312, 1
          %v1341 = vsel %vm1328, %v1338, %v1340
          %v1342 = vrot.slane %v1314, 1
          %v1343 = vsel %vm1328, %v1340, %v1342
          %v1344 = vrot.slane %v1325, 1
          %v1345 = vsel %vm1328, %v1342, %v1344
          %1346 = vrot.lane.b32.xlu0 %v1331, 64
          %v1347 = vpop.permute.xlu0 %1346
          %1348 = vrot.lane.b32.xlu0 %v1333, 64
          %v1349 = vpop.permute.xlu0 %1348
          %1350 = vrot.lane.b32.xlu0 %v1335, 64
          %v1351 = vpop.permute.xlu0 %1350
          %1352 = vrot.lane.b32.xlu0 %v1337, 64
          %v1353 = vpop.permute.xlu0 %1352
          %1354 = vrot.lane.b32.xlu0 %v1339, 64
          %v1355 = vpop.permute.xlu0 %1354
          %1356 = vrot.lane.b32.xlu0 %v1341, 64
          %v1357 = vpop.permute.xlu0 %1356
          %1358 = vrot.lane.b32.xlu0 %v1343, 64
          %v1359 = vpop.permute.xlu0 %1358
          %1360 = vrot.lane.b32.xlu0 %v1345, 64
          %v1361 = vpop.permute.xlu0 %1360
          %vm1370 = vcmask 1045504
          %v1371 = vrot.slane %v1324, 2
          %v1372 = vrot.slane %v1302, 2
          %v1373 = vsel %vm1370, %v1371, %v1372
          %v1374 = vrot.slane %v1304, 2
          %v1375 = vsel %vm1370, %v1372, %v1374
          %v1376 = vrot.slane %v1306, 2
          %v1377 = vsel %vm1370, %v1374, %v1376
          %v1378 = vrot.slane %v1308, 2
          %v1379 = vsel %vm1370, %v1376, %v1378
          %v1380 = vrot.slane %v1310, 2
          %v1381 = vsel %vm1370, %v1378, %v1380
          %v1382 = vrot.slane %v1312, 2
          %v1383 = vsel %vm1370, %v1380, %v1382
          %v1384 = vrot.slane %v1314, 2
          %v1385 = vsel %vm1370, %v1382, %v1384
          %v1386 = vrot.slane %v1325, 2
          %v1387 = vsel %vm1370, %v1384, %v1386
          %vm1396 = vcmask 523264
          %v1397 = vsel %vm1396, %v1324, %v1347
          %v1398 = vsel %vm1396, %v1302, %v1349
          %v1399 = vsel %vm1396, %v1304, %v1351
          %v1400 = vsel %vm1396, %v1306, %v1353
          %v1401 = vsel %vm1396, %v1308, %v1355
          %v1402 = vsel %vm1396, %v1310, %v1357
          %v1403 = vsel %vm1396, %v1312, %v1359
          %v1404 = vsel %vm1396, %v1314, %v1361
          %v1413 = vrot.slane %v1283, 7
          %v1414 = vrot.slane %v1284, 7
          %v1415 = vsel %vm1299, %v1413, %v1414
          %v1416 = vrot.slane %v1285, 7
          %v1417 = vsel %vm1299, %v1414, %v1416
          %v1418 = vrot.slane %v1286, 7
          %v1419 = vsel %vm1299, %v1416, %v1418
          %v1420 = vrot.slane %v1287, 7
          %v1421 = vsel %vm1299, %v1418, %v1420
          %v1422 = vrot.slane %v1288, 7
          %v1423 = vsel %vm1299, %v1420, %v1422
          %v1424 = vrot.slane %v1289, 7
          %v1425 = vsel %vm1299, %v1422, %v1424
          %v1426 = vrot.slane %v1290, 7
          %v1427 = vsel %vm1299, %v1424, %v1426
          %v1437 = vsel %vm1299, 0.0, %v1413
          %v1438 = vsel %vm1299, %v1426, 0.0
          %v1441 = vrot.slane %v1437, 1
          %v1442 = vrot.slane %v1415, 1
          %v1443 = vsel %vm1328, %v1441, %v1442
          %v1444 = vrot.slane %v1417, 1
          %v1445 = vsel %vm1328, %v1442, %v1444
          %v1446 = vrot.slane %v1419, 1
          %v1447 = vsel %vm1328, %v1444, %v1446
          %v1448 = vrot.slane %v1421, 1
          %v1449 = vsel %vm1328, %v1446, %v1448
          %v1450 = vrot.slane %v1423, 1
          %v1451 = vsel %vm1328, %v1448, %v1450
          %v1452 = vrot.slane %v1425, 1
          %v1453 = vsel %vm1328, %v1450, %v1452
          %v1454 = vrot.slane %v1427, 1
          %v1455 = vsel %vm1328, %v1452, %v1454
          %v1456 = vrot.slane %v1438, 1
          %v1457 = vsel %vm1328, %v1454, %v1456
          %1458 = vrot.lane.b32.xlu0 %v1443, 64
          %v1459 = vpop.permute.xlu0 %1458
          %1460 = vrot.lane.b32.xlu0 %v1445, 64
          %v1461 = vpop.permute.xlu0 %1460
          %1462 = vrot.lane.b32.xlu0 %v1447, 64
          %v1463 = vpop.permute.xlu0 %1462
          %1464 = vrot.lane.b32.xlu0 %v1449, 64
          %v1465 = vpop.permute.xlu0 %1464
          %1466 = vrot.lane.b32.xlu0 %v1451, 64
          %v1467 = vpop.permute.xlu0 %1466
          %1468 = vrot.lane.b32.xlu0 %v1453, 64
          %v1469 = vpop.permute.xlu0 %1468
          %1470 = vrot.lane.b32.xlu0 %v1455, 64
          %v1471 = vpop.permute.xlu0 %1470
          %1472 = vrot.lane.b32.xlu0 %v1457, 64
          %v1473 = vpop.permute.xlu0 %1472
          %v1482 = vrot.slane %v1437, 2
          %v1483 = vrot.slane %v1415, 2
          %v1484 = vsel %vm1370, %v1482, %v1483
          %v1485 = vrot.slane %v1417, 2
          %v1486 = vsel %vm1370, %v1483, %v1485
          %v1487 = vrot.slane %v1419, 2
          %v1488 = vsel %vm1370, %v1485, %v1487
          %v1489 = vrot.slane %v1421, 2
          %v1490 = vsel %vm1370, %v1487, %v1489
          %v1491 = vrot.slane %v1423, 2
          %v1492 = vsel %vm1370, %v1489, %v1491
          %v1493 = vrot.slane %v1425, 2
          %v1494 = vsel %vm1370, %v1491, %v1493
          %v1495 = vrot.slane %v1427, 2
          %v1496 = vsel %vm1370, %v1493, %v1495
          %v1497 = vrot.slane %v1438, 2
          %v1498 = vsel %vm1370, %v1495, %v1497
          %v1507 = vsel %vm1396, %v1437, %v1459
          %v1508 = vsel %vm1396, %v1415, %v1461
          %v1509 = vsel %vm1396, %v1417, %v1463
          %v1510 = vsel %vm1396, %v1419, %v1465
          %v1511 = vsel %vm1396, %v1421, %v1467
          %v1512 = vsel %vm1396, %v1423, %v1469
          %v1513 = vsel %vm1396, %v1425, %v1471
          %v1514 = vsel %vm1396, %v1427, %v1473
          %v1515 = vpack.c.bf16 %v1398, %v1397
          %v1516 = vpack.c.bf16 %v1375, %v1373
          %v1517 = vpack.c.bf16 %v1400, %v1399
          %v1518 = vpack.c.bf16 %v1379, %v1377
          %v1519 = vpack.c.bf16 %v1402, %v1401
          %v1520 = vpack.c.bf16 %v1383, %v1381
          %v1521 = vpack.c.bf16 %v1404, %v1403
          %v1522 = vpack.c.bf16 %v1387, %v1385
          %v1523 = vpack.c.bf16 %v1508, %v1507
          %v1524 = vpack.c.bf16 %v1486, %v1484
          %v1525 = vpack.c.bf16 %v1510, %v1509
          %v1526 = vpack.c.bf16 %v1490, %v1488
          %v1527 = vpack.c.bf16 %v1512, %v1511
          %v1528 = vpack.c.bf16 %v1494, %v1492
          %v1529 = vpack.c.bf16 %v1514, %v1513
          %v1530 = vpack.c.bf16 %v1498, %v1496
          %v1531 = vld [vmem:[#allocation7] sm:$0xf]
          %v1532 = vld [vmem:[#allocation7 + $0x4] sm:$0xf]
          %v1533 = vld [vmem:[#allocation7 + $0x8] sm:$0xf]
          %v1534 = vld [vmem:[#allocation7 + $0xc] sm:$0xf]
          %v1535 = vld [vmem:[#allocation7 + $0x10] sm:$0xf]
          %v1536 = vld [vmem:[#allocation7 + $0x14] sm:$0xf]
          %v1537 = vld [vmem:[#allocation7 + $0x18] sm:$0xf]
          %v1538 = vld [vmem:[#allocation7 + $0x1c] sm:$0xf]
          %v1539 = vld [vmem:[#allocation7 + $0x20] sm:$0xf]
          %v1540 = vld [vmem:[#allocation7 + $0x24] sm:$0xf]
          %v1541 = vld [vmem:[#allocation7 + $0x28] sm:$0xf]
          %v1542 = vld [vmem:[#allocation7 + $0x2c] sm:$0xf]
          %v1543 = vld [vmem:[#allocation7 + $0x30] sm:$0xf]
          %v1544 = vld [vmem:[#allocation7 + $0x34] sm:$0xf]
          %v1545 = vld [vmem:[#allocation7 + $0x38] sm:$0xf]
          %v1546 = vld [vmem:[#allocation7 + $0x3c] sm:$0xf]
          %v1547 = vld [vmem:[#allocation7 + $0x40] sm:$0xf]
          %v1548 = vld [vmem:[#allocation7 + $0x44] sm:$0xf]
          %v1549 = vld [vmem:[#allocation7 + $0x48] sm:$0xf]
          %v1550 = vld [vmem:[#allocation7 + $0x4c] sm:$0xf]
          %v1551 = vld [vmem:[#allocation7 + $0x50] sm:$0xf]
          %v1552 = vld [vmem:[#allocation7 + $0x54] sm:$0xf]
          %v1553 = vld [vmem:[#allocation7 + $0x58] sm:$0xf]
          %v1554 = vld [vmem:[#allocation7 + $0x5c] sm:$0xf]
          %v1579 = vunpack.c.l.b16 %v1531
          %v1580 = vunpack.c.l.b16 %v1532
          %v1581 = vunpack.c.l.b16 %v1533
          %v1582 = vunpack.c.l.b16 %v1534
          %v1583 = vunpack.c.l.b16 %v1535
          %v1584 = vunpack.c.l.b16 %v1536
          %v1585 = vunpack.c.l.b16 %v1537
          %v1586 = vunpack.c.l.b16 %v1538
          %v1587 = vunpack.c.l.b16 %v1539
          %v1588 = vunpack.c.l.b16 %v1540
          %v1589 = vunpack.c.l.b16 %v1541
          %v1590 = vunpack.c.l.b16 %v1542
          %v1591 = vunpack.c.l.b16 %v1543
          %v1592 = vunpack.c.l.b16 %v1544
          %v1593 = vunpack.c.l.b16 %v1545
          %v1594 = vunpack.c.l.b16 %v1546
          %v1595 = vunpack.c.l.b16 %v1547
          %v1596 = vunpack.c.l.b16 %v1548
          %v1597 = vunpack.c.l.b16 %v1549
          %v1598 = vunpack.c.l.b16 %v1550
          %v1599 = vunpack.c.l.b16 %v1551
          %v1600 = vunpack.c.l.b16 %v1552
          %v1601 = vunpack.c.l.b16 %v1553
          %v1602 = vunpack.c.l.b16 %v1554
          %v1603 = vpack.c.b16 %v1580, %v1579
          %v1604 = vpack.c.b16 %v1582, %v1581
          %v1605 = vpack.c.b16 %v1584, %v1583
          %v1606 = vpack.c.b16 %v1586, %v1585
          %v1607 = vpack.c.b16 %v1588, %v1587
          %v1608 = vpack.c.b16 %v1590, %v1589
          %v1609 = vpack.c.b16 %v1592, %v1591
          %v1610 = vpack.c.b16 %v1594, %v1593
          %v1611 = vpack.c.b16 %v1596, %v1595
          %v1612 = vpack.c.b16 %v1598, %v1597
          %v1613 = vpack.c.b16 %v1600, %v1599
          %v1614 = vpack.c.b16 %v1602, %v1601
          %v1628 = vsel %vm1396, %v1516, 0
          %v1631 = vsel %vm1396, %v1518, 0
          %v1634 = vsel %vm1396, %v1520, 0
          %v1637 = vsel %vm1396, %v1522, 0
          %v1640 = vsel %vm1396, %v1524, 0
          %v1643 = vsel %vm1396, %v1526, 0
          %v1646 = vsel %vm1396, %v1528, 0
          %v1649 = vsel %vm1396, %v1530, 0
          %1651 = vmatpush.bf16.msra.mxu0 %v1610
          %1652 = vmatpush.bf16.msra.mxu0 %v1609
          %1653 = vmatpush.bf16.msra.mxu0 %v1608
          %1654 = vmatpush.bf16.msra.mxu0 %v1607
          %1655 = vmatpush.bf16.msra.mxu0 %v1606
          %1656 = vmatpush.bf16.msra.mxu0 %v1605
          %1657 = vmatpush.bf16.msra.mxu0 %v1604
          %1658 = vmatpush.bf16.msra.mxu0 %v1603
          %1659 = vmatmul.bf16.gmra.mxu0 %v1515
          %v1660 = vpop.f32.mrf.mxu0
          %v1661 = vadd.f32 0.0, %v1660
          %v1662 = vpop.f32.mrf.mxu0
          %v1663 = vadd.f32 0.0, %v1662
          %1664 = vmatmul.bf16.gmra.mxu0 %v1517
          %v1665 = vpop.f32.mrf.mxu0
          %v1666 = vadd.f32 0.0, %v1665
          %v1667 = vpop.f32.mrf.mxu0
          %v1668 = vadd.f32 0.0, %v1667
          %1669 = vmatmul.bf16.gmra.mxu0 %v1519
          %v1670 = vpop.f32.mrf.mxu0
          %v1671 = vadd.f32 0.0, %v1670
          %v1672 = vpop.f32.mrf.mxu0
          %v1673 = vadd.f32 0.0, %v1672
          %1674 = vmatmul.bf16.gmra.mxu0 %v1521
          %v1675 = vpop.f32.mrf.mxu0
          %v1676 = vadd.f32 0.0, %v1675
          %v1677 = vpop.f32.mrf.mxu0
          %v1678 = vadd.f32 0.0, %v1677
          %1679 = vmatmul.bf16.gmra.mxu0 %v1523
          %v1680 = vpop.f32.mrf.mxu0
          %v1681 = vadd.f32 0.0, %v1680
          %v1682 = vpop.f32.mrf.mxu0
          %v1683 = vadd.f32 0.0, %v1682
          %1684 = vmatmul.bf16.gmra.mxu0 %v1525
          %v1685 = vpop.f32.mrf.mxu0
          %v1686 = vadd.f32 0.0, %v1685
          %v1687 = vpop.f32.mrf.mxu0
          %v1688 = vadd.f32 0.0, %v1687
          %1689 = vmatmul.bf16.gmra.mxu0 %v1527
          %v1690 = vpop.f32.mrf.mxu0
          %v1691 = vadd.f32 0.0, %v1690
          %v1692 = vpop.f32.mrf.mxu0
          %v1693 = vadd.f32 0.0, %v1692
          %1694 = vmatmul.bf16.gmra.mxu0 %v1529
          %v1695 = vpop.f32.mrf.mxu0
          %v1696 = vadd.f32 0.0, %v1695
          %v1697 = vpop.f32.mrf.mxu0
          %v1698 = vadd.f32 0.0, %v1697
          %1699 = vdwg.mxu0
          %1700 = vmatpush.bf16.msra.mxu0 0
          %1701 = vmatpush.bf16.msra.mxu0 0
          %1702 = vmatpush.bf16.msra.mxu0 0
          %1703 = vmatpush.bf16.msra.mxu0 0
          %1704 = vmatpush.bf16.msra.mxu0 %v1614
          %1705 = vmatpush.bf16.msra.mxu0 %v1613
          %1706 = vmatpush.bf16.msra.mxu0 %v1612
          %1707 = vmatpush.bf16.msra.mxu0 %v1611
          %1708 = vmatmul.bf16.gmra.mxu0 %v1628
          %v1709 = vpop.f32.mrf.mxu0
          %v1710 = vadd.f32 %v1661, %v1709
          %v1711 = vpop.f32.mrf.mxu0
          %v1712 = vadd.f32 %v1663, %v1711
          %1713 = vmatmul.bf16.gmra.mxu0 %v1631
          %v1714 = vpop.f32.mrf.mxu0
          %v1715 = vadd.f32 %v1666, %v1714
          %v1716 = vpop.f32.mrf.mxu0
          %v1717 = vadd.f32 %v1668, %v1716
          %1718 = vmatmul.bf16.gmra.mxu0 %v1634
          %v1719 = vpop.f32.mrf.mxu0
          %v1720 = vadd.f32 %v1671, %v1719
          %v1721 = vpop.f32.mrf.mxu0
          %v1722 = vadd.f32 %v1673, %v1721
          %1723 = vmatmul.bf16.gmra.mxu0 %v1637
          %v1724 = vpop.f32.mrf.mxu0
          %v1725 = vadd.f32 %v1676, %v1724
          %v1726 = vpop.f32.mrf.mxu0
          %v1727 = vadd.f32 %v1678, %v1726
          %1728 = vmatmul.bf16.gmra.mxu0 %v1640
          %v1729 = vpop.f32.mrf.mxu0
          %v1730 = vadd.f32 %v1681, %v1729
          %v1731 = vpop.f32.mrf.mxu0
          %v1732 = vadd.f32 %v1683, %v1731
          %1733 = vmatmul.bf16.gmra.mxu0 %v1643
          %v1734 = vpop.f32.mrf.mxu0
          %v1735 = vadd.f32 %v1686, %v1734
          %v1736 = vpop.f32.mrf.mxu0
          %v1737 = vadd.f32 %v1688, %v1736
          %1738 = vmatmul.bf16.gmra.mxu0 %v1646
          %v1739 = vpop.f32.mrf.mxu0
          %v1740 = vadd.f32 %v1691, %v1739
          %v1741 = vpop.f32.mrf.mxu0
          %v1742 = vadd.f32 %v1693, %v1741
          %1743 = vmatmul.bf16.gmra.mxu0 %v1649
          %v1744 = vpop.f32.mrf.mxu0
          %v1745 = vadd.f32 %v1696, %v1744
          %v1746 = vpop.f32.mrf.mxu0
          %v1747 = vadd.f32 %v1698, %v1746
          %1748 = vdwg.mxu0
          %v1749 = vld [vmem:[#allocation8] sm:$0x1]
          %v1751 = vperm.slane %v1749, 0
          %v1753 = vmul.f32 %v1710, %v1751
          %v1754 = vmul.f32 %v1712, %v1751
          %v1755 = vmul.f32 %v1715, %v1751
          %v1756 = vmul.f32 %v1717, %v1751
          %v1757 = vmul.f32 %v1720, %v1751
          %v1758 = vmul.f32 %v1722, %v1751
          %v1759 = vmul.f32 %v1725, %v1751
          %v1760 = vmul.f32 %v1727, %v1751
          %v1761 = vmul.f32 %v1730, %v1751
          %v1762 = vmul.f32 %v1732, %v1751
          %v1763 = vmul.f32 %v1735, %v1751
          %v1764 = vmul.f32 %v1737, %v1751
          %v1765 = vmul.f32 %v1740, %v1751
          %v1766 = vmul.f32 %v1742, %v1751
          %v1767 = vmul.f32 %v1745, %v1751
          %v1768 = vmul.f32 %v1747, %v1751
          %v1769 = vld [vmem:[#allocation10] sm:$0x1]
          %v1771 = vperm.slane %v1769, 0
          %v1773 = vadd.f32 %v1753, %v1771
          %v1774 = vadd.f32 %v1754, %v1771
          %v1775 = vadd.f32 %v1755, %v1771
          %v1776 = vadd.f32 %v1756, %v1771
          %v1777 = vadd.f32 %v1757, %v1771
          %v1778 = vadd.f32 %v1758, %v1771
          %v1779 = vadd.f32 %v1759, %v1771
          %v1780 = vadd.f32 %v1760, %v1771
          %v1781 = vadd.f32 %v1761, %v1771
          %v1782 = vadd.f32 %v1762, %v1771
          %v1783 = vadd.f32 %v1763, %v1771
          %v1784 = vadd.f32 %v1764, %v1771
          %v1785 = vadd.f32 %v1765, %v1771
          %v1786 = vadd.f32 %v1766, %v1771
          %v1787 = vadd.f32 %v1767, %v1771
          %v1788 = vadd.f32 %v1768, %v1771
          %v1789 = vmax.f32 %v1773, 0.0
          %v1790 = vmax.f32 %v1774, 0.0
          %v1791 = vmax.f32 %v1775, 0.0
          %v1792 = vmax.f32 %v1776, 0.0
          %v1793 = vmax.f32 %v1777, 0.0
          %v1794 = vmax.f32 %v1778, 0.0
          %v1795 = vmax.f32 %v1779, 0.0
          %v1796 = vmax.f32 %v1780, 0.0
          %v1797 = vmax.f32 %v1781, 0.0
          %v1798 = vmax.f32 %v1782, 0.0
          %v1799 = vmax.f32 %v1783, 0.0
          %v1800 = vmax.f32 %v1784, 0.0
          %v1801 = vmax.f32 %v1785, 0.0
          %v1802 = vmax.f32 %v1786, 0.0
          %v1803 = vmax.f32 %v1787, 0.0
          %v1804 = vmax.f32 %v1788, 0.0
          %v1805 = vpack.c.bf16 %v1790, %v1789
          %v1806 = vpack.c.bf16 %v1792, %v1791
          %v1807 = vpack.c.bf16 %v1794, %v1793
          %v1808 = vpack.c.bf16 %v1796, %v1795
          %v1809 = vpack.c.bf16 %v1798, %v1797
          %v1810 = vpack.c.bf16 %v1800, %v1799
          %v1811 = vpack.c.bf16 %v1802, %v1801
          %v1812 = vpack.c.bf16 %v1804, %v1803
          %v1813 = vld [vmem:[%s7] sm:$0xf]
          %v1814 = vld [vmem:[%s7 + $0x4] sm:$0xf]
          %v1815 = vld [vmem:[%s7 + $0x8] sm:$0xf]
          %v1816 = vld [vmem:[%s7 + $0xc] sm:$0xf]
          %v1817 = vld [vmem:[%s7 + $0x10] sm:$0xf]
          %v1818 = vld [vmem:[%s7 + $0x14] sm:$0xf]
          %v1819 = vld [vmem:[%s7 + $0x18] sm:$0xf]
          %v1820 = vld [vmem:[%s7 + $0x1c] sm:$0xf]
          %v1821 = vld [vmem:[%s7 + $0x20] sm:$0xf]
          %v1822 = vld [vmem:[%s7 + $0x24] sm:$0xf]
          %v1823 = vld [vmem:[%s7 + $0x28] sm:$0xf]
          %v1824 = vld [vmem:[%s7 + $0x2c] sm:$0xf]
          %v1825 = vld [vmem:[%s7 + $0x30] sm:$0xf]
          %v1826 = vld [vmem:[%s7 + $0x34] sm:$0xf]
          %v1827 = vld [vmem:[%s7 + $0x38] sm:$0xf]
          %v1828 = vld [vmem:[%s7 + $0x3c] sm:$0xf]
          %v1829 = vld [vmem:[%s8] sm:$0x1]
          %v1831 = vperm.slane %v1829, 0
          %v1849 = vunpack.c.l.b16 %v1813
          %v1850 = vunpack.c.l.b16 %v1814
          %v1851 = vunpack.c.l.b16 %v1815
          %v1852 = vunpack.c.l.b16 %v1816
          %v1853 = vunpack.c.l.b16 %v1817
          %v1854 = vunpack.c.l.b16 %v1818
          %v1855 = vunpack.c.l.b16 %v1819
          %v1856 = vunpack.c.l.b16 %v1820
          %v1857 = vunpack.c.l.b16 %v1821
          %v1858 = vunpack.c.l.b16 %v1822
          %v1859 = vunpack.c.l.b16 %v1823
          %v1860 = vunpack.c.l.b16 %v1824
          %v1861 = vunpack.c.l.b16 %v1825
          %v1862 = vunpack.c.l.b16 %v1826
          %v1863 = vunpack.c.l.b16 %v1827
          %v1864 = vunpack.c.l.b16 %v1828
          %v1865 = vpack.c.b16 %v1850, %v1849
          %v1866 = vpack.c.b16 %v1852, %v1851
          %v1867 = vpack.c.b16 %v1854, %v1853
          %v1868 = vpack.c.b16 %v1856, %v1855
          %v1869 = vpack.c.b16 %v1858, %v1857
          %v1870 = vpack.c.b16 %v1860, %v1859
          %v1871 = vpack.c.b16 %v1862, %v1861
          %v1872 = vpack.c.b16 %v1864, %v1863
          %1881 = vmatpush.bf16.msra.mxu0 %v1872
          %1882 = vmatpush.bf16.msra.mxu0 %v1871
          %1883 = vmatpush.bf16.msra.mxu0 %v1870
          %1884 = vmatpush.bf16.msra.mxu0 %v1869
          %1885 = vmatpush.bf16.msra.mxu0 %v1868
          %1886 = vmatpush.bf16.msra.mxu0 %v1867
          %1887 = vmatpush.bf16.msra.mxu0 %v1866
          %1888 = vmatpush.bf16.msra.mxu0 %v1865
          %1889 = vmatmul.bf16.gmra.mxu0 %v1805
          %v1890 = vpop.f32.mrf.mxu0
          %v1891 = vadd.f32 %v1831, %v1890
          %v1892 = vpop.f32.mrf.mxu0
          %v1893 = vadd.f32 %v1831, %v1892
          %1894 = vmatmul.bf16.gmra.mxu0 %v1806
          %v1895 = vpop.f32.mrf.mxu0
          %v1896 = vadd.f32 %v1831, %v1895
          %v1897 = vpop.f32.mrf.mxu0
          %v1898 = vadd.f32 %v1831, %v1897
          %1899 = vmatmul.bf16.gmra.mxu0 %v1807
          %v1900 = vpop.f32.mrf.mxu0
          %v1901 = vadd.f32 %v1831, %v1900
          %v1902 = vpop.f32.mrf.mxu0
          %v1903 = vadd.f32 %v1831, %v1902
          %1904 = vmatmul.bf16.gmra.mxu0 %v1808
          %v1905 = vpop.f32.mrf.mxu0
          %v1906 = vadd.f32 %v1831, %v1905
          %v1907 = vpop.f32.mrf.mxu0
          %v1908 = vadd.f32 %v1831, %v1907
          %1909 = vmatmul.bf16.gmra.mxu0 %v1809
          %v1910 = vpop.f32.mrf.mxu0
          %v1911 = vadd.f32 %v1831, %v1910
          %v1912 = vpop.f32.mrf.mxu0
          %v1913 = vadd.f32 %v1831, %v1912
          %1914 = vmatmul.bf16.gmra.mxu0 %v1810
          %v1915 = vpop.f32.mrf.mxu0
          %v1916 = vadd.f32 %v1831, %v1915
          %v1917 = vpop.f32.mrf.mxu0
          %v1918 = vadd.f32 %v1831, %v1917
          %1919 = vmatmul.bf16.gmra.mxu0 %v1811
          %v1920 = vpop.f32.mrf.mxu0
          %v1921 = vadd.f32 %v1831, %v1920
          %v1922 = vpop.f32.mrf.mxu0
          %v1923 = vadd.f32 %v1831, %v1922
          %1924 = vmatmul.bf16.gmra.mxu0 %v1812
          %v1925 = vpop.f32.mrf.mxu0
          %v1926 = vadd.f32 %v1831, %v1925
          %v1927 = vpop.f32.mrf.mxu0
          %v1928 = vadd.f32 %v1831, %v1927
          %1929 = vdwg.mxu0
          %v1930 = vld [vmem:[#allocation11] sm:$0xff]
          %v1931 = vld [vmem:[#allocation11 + $0x8] sm:$0xff]
          %v1932 = vld [vmem:[#allocation11 + $0x10] sm:$0xff]
          %v1933 = vld [vmem:[#allocation11 + $0x18] sm:$0xff]
          %v1934 = vld [vmem:[#allocation11 + $0x20] sm:$0xff]
          %v1935 = vld [vmem:[#allocation11 + $0x28] sm:$0xff]
          %v1936 = vld [vmem:[#allocation11 + $0x30] sm:$0xff]
          %v1937 = vld [vmem:[#allocation11 + $0x38] sm:$0xff]
          %v1938 = vmul.f32 %v1891, 11.313708
          %v1939 = vmul.f32 %v1893, 11.313708
          %v1940 = vmul.f32 %v1896, 11.313708
          %v1941 = vmul.f32 %v1898, 11.313708
          %v1942 = vmul.f32 %v1901, 11.313708
          %v1943 = vmul.f32 %v1903, 11.313708
          %v1944 = vmul.f32 %v1906, 11.313708
          %v1945 = vmul.f32 %v1908, 11.313708
          %v1946 = vadd.f32 %v1938, %v1930
          %v1947 = vadd.f32 %v1939, %v1931
          %v1948 = vadd.f32 %v1940, %v1932
          %v1949 = vadd.f32 %v1941, %v1933
          %v1950 = vadd.f32 %v1942, %v1934
          %v1951 = vadd.f32 %v1943, %v1935
          %v1952 = vadd.f32 %v1944, %v1936
          %v1953 = vadd.f32 %v1945, %v1937
          %v1954 = vmul.f32 %v1911, 11.313708
          %v1955 = vmul.f32 %v1913, 11.313708
          %v1956 = vmul.f32 %v1916, 11.313708
          %v1957 = vmul.f32 %v1918, 11.313708
          %v1958 = vmul.f32 %v1921, 11.313708
          %v1959 = vmul.f32 %v1923, 11.313708
          %v1960 = vmul.f32 %v1926, 11.313708
          %v1961 = vmul.f32 %v1928, 11.313708
          %v1962 = vadd.f32 %v1954, %v1930
          %v1963 = vadd.f32 %v1955, %v1931
          %v1964 = vadd.f32 %v1956, %v1932
          %v1965 = vadd.f32 %v1957, %v1933
          %v1966 = vadd.f32 %v1958, %v1934
          %v1967 = vadd.f32 %v1959, %v1935
          %v1968 = vadd.f32 %v1960, %v1936
          %v1969 = vadd.f32 %v1961, %v1937
          %1970 = vst [vmem:[#allocation2] sm:$0xff] %v1946
          %1971 = vst [vmem:[#allocation2 + $0x8] sm:$0xff] %v1947
          %1972 = vst [vmem:[#allocation2 + $0x10] sm:$0xff] %v1948
          %1973 = vst [vmem:[#allocation2 + $0x18] sm:$0xff] %v1949
          %1974 = vst [vmem:[#allocation2 + $0x20] sm:$0xff] %v1950
          %1975 = vst [vmem:[#allocation2 + $0x28] sm:$0xff] %v1951
          %1976 = vst [vmem:[#allocation2 + $0x30] sm:$0xff] %v1952
          %1977 = vst [vmem:[#allocation2 + $0x38] sm:$0xff] %v1953
          %1978 = vst [vmem:[#allocation2 + $0x40] sm:$0xff] %v1962
          %1979 = vst [vmem:[#allocation2 + $0x48] sm:$0xff] %v1963
          %1980 = vst [vmem:[#allocation2 + $0x50] sm:$0xff] %v1964
          %1981 = vst [vmem:[#allocation2 + $0x58] sm:$0xff] %v1965
          %1982 = vst [vmem:[#allocation2 + $0x60] sm:$0xff] %v1966
          %1983 = vst [vmem:[#allocation2 + $0x68] sm:$0xff] %v1967
          %1984 = vst [vmem:[#allocation2 + $0x70] sm:$0xff] %v1968
          %1985 = vst [vmem:[#allocation2 + $0x78] sm:$0xff] %v1969
        $region172: #{forward.1} parent=115 // pred_fallthru
          _
        %v1986 = vld [vmem:[#allocation2] sm:$0xff]
        %v1987 = vld [vmem:[#allocation2 + $0x8] sm:$0xff]
        %v1988 = vld [vmem:[#allocation2 + $0x10] sm:$0xff]
        %v1989 = vld [vmem:[#allocation2 + $0x18] sm:$0xff]
        %v1990 = vld [vmem:[#allocation2 + $0x20] sm:$0xff]
        %v1991 = vld [vmem:[#allocation2 + $0x28] sm:$0xff]
        %v1992 = vld [vmem:[#allocation2 + $0x30] sm:$0xff]
        %v1993 = vld [vmem:[#allocation2 + $0x38] sm:$0xff]
        %v1994 = vld [vmem:[#allocation2 + $0x40] sm:$0xff]
        %v1995 = vld [vmem:[#allocation2 + $0x48] sm:$0xff]
        %v1996 = vld [vmem:[#allocation2 + $0x50] sm:$0xff]
        %v1997 = vld [vmem:[#allocation2 + $0x58] sm:$0xff]
        %v1998 = vld [vmem:[#allocation2 + $0x60] sm:$0xff]
        %v1999 = vld [vmem:[#allocation2 + $0x68] sm:$0xff]
        %v2000 = vld [vmem:[#allocation2 + $0x70] sm:$0xff]
        %v2001 = vld [vmem:[#allocation2 + $0x78] sm:$0xff]
        %v2002 = vpack.c.bf16 %v1987, %v1986
        %v2003 = vpack.c.bf16 %v1989, %v1988
        %v2004 = vpack.c.bf16 %v1991, %v1990
        %v2005 = vpack.c.bf16 %v1993, %v1992
        %v2006 = vpack.c.bf16 %v1995, %v1994
        %v2007 = vpack.c.bf16 %v1997, %v1996
        %v2008 = vpack.c.bf16 %v1999, %v1998
        %v2009 = vpack.c.bf16 %v2001, %v2000
        %v2010 = vld [vmem:[%s939] sm:$0xff]
        %v2011 = vld [vmem:[%s939 + $0x8] sm:$0xf]
        %v2012 = vld [vmem:[%s939 + $0xc] sm:$0xff]
        %v2013 = vld [vmem:[%s939 + $0x14] sm:$0xf]
        %v2014 = vld [vmem:[%s939 + $0x18] sm:$0xff]
        %v2015 = vld [vmem:[%s939 + $0x20] sm:$0xf]
        %v2016 = vld [vmem:[%s939 + $0x24] sm:$0xff]
        %v2017 = vld [vmem:[%s939 + $0x2c] sm:$0xf]
        %v2018 = vld [vmem:[%s939 + $0x30] sm:$0xff]
        %v2019 = vld [vmem:[%s939 + $0x38] sm:$0xf]
        %v2020 = vld [vmem:[%s939 + $0x3c] sm:$0xff]
        %v2021 = vld [vmem:[%s939 + $0x44] sm:$0xf]
        %v2022 = vld [vmem:[%s939 + $0x48] sm:$0xff]
        %v2023 = vld [vmem:[%s939 + $0x50] sm:$0xf]
        %v2024 = vld [vmem:[%s939 + $0x54] sm:$0xff]
        %v2025 = vld [vmem:[%s939 + $0x5c] sm:$0xf]
        %v2026 = vld [vmem:[%s939 + $0x60] sm:$0xff]
        %v2027 = vld [vmem:[%s939 + $0x68] sm:$0xf]
        %v2028 = vld [vmem:[%s939 + $0x6c] sm:$0xff]
        %v2029 = vld [vmem:[%s939 + $0x74] sm:$0xf]
        %v2030 = vld [vmem:[%s939 + $0x78] sm:$0xff]
        %v2031 = vld [vmem:[%s939 + $0x80] sm:$0xf]
        %v2032 = vld [vmem:[%s939 + $0x84] sm:$0xff]
        %v2033 = vld [vmem:[%s939 + $0x8c] sm:$0xf]
        %v2034 = vld [vmem:[%s939 + $0x90] sm:$0xff]
        %v2035 = vld [vmem:[%s939 + $0x98] sm:$0xf]
        %v2036 = vld [vmem:[%s939 + $0x9c] sm:$0xff]
        %v2037 = vld [vmem:[%s939 + $0xa4] sm:$0xf]
        %v2038 = vld [vmem:[%s939 + $0xa8] sm:$0xff]
        %v2039 = vld [vmem:[%s939 + $0xb0] sm:$0xf]
        %v2040 = vld [vmem:[%s939 + $0xb4] sm:$0xff]
        %v2041 = vld [vmem:[%s939 + $0xbc] sm:$0xf]
        %v2042 = vld [vmem:[%s1099] sm:$0x7]
        %v2044 = vperm.slane %v2042, 0
        %v2045 = vperm.slane %v2042, 1
        %v2046 = vperm.slane %v2042, 2
        %v2082 = vunpack.c.l.b16 %v2010
        %v2083 = vunpack.c.h.b16 %v2010
        %v2084 = vunpack.c.l.b16 %v2011
        %v2085 = vunpack.c.l.b16 %v2012
        %v2086 = vunpack.c.h.b16 %v2012
        %v2087 = vunpack.c.l.b16 %v2013
        %v2088 = vunpack.c.l.b16 %v2014
        %v2089 = vunpack.c.h.b16 %v2014
        %v2090 = vunpack.c.l.b16 %v2015
        %v2091 = vunpack.c.l.b16 %v2016
        %v2092 = vunpack.c.h.b16 %v2016
        %v2093 = vunpack.c.l.b16 %v2017
        %v2094 = vunpack.c.l.b16 %v2018
        %v2095 = vunpack.c.h.b16 %v2018
        %v2096 = vunpack.c.l.b16 %v2019
        %v2097 = vunpack.c.l.b16 %v2020
        %v2098 = vunpack.c.h.b16 %v2020
        %v2099 = vunpack.c.l.b16 %v2021
        %v2100 = vunpack.c.l.b16 %v2022
        %v2101 = vunpack.c.h.b16 %v2022
        %v2102 = vunpack.c.l.b16 %v2023
        %v2103 = vunpack.c.l.b16 %v2024
        %v2104 = vunpack.c.h.b16 %v2024
        %v2105 = vunpack.c.l.b16 %v2025
        %v2106 = vunpack.c.l.b16 %v2026
        %v2107 = vunpack.c.h.b16 %v2026
        %v2108 = vunpack.c.l.b16 %v2027
        %v2109 = vunpack.c.l.b16 %v2028
        %v2110 = vunpack.c.h.b16 %v2028
        %v2111 = vunpack.c.l.b16 %v2029
        %v2112 = vunpack.c.l.b16 %v2030
        %v2113 = vunpack.c.h.b16 %v2030
        %v2114 = vunpack.c.l.b16 %v2031
        %v2115 = vunpack.c.l.b16 %v2032
        %v2116 = vunpack.c.h.b16 %v2032
        %v2117 = vunpack.c.l.b16 %v2033
        %v2118 = vunpack.c.l.b16 %v2034
        %v2119 = vunpack.c.h.b16 %v2034
        %v2120 = vunpack.c.l.b16 %v2035
        %v2121 = vunpack.c.l.b16 %v2036
        %v2122 = vunpack.c.h.b16 %v2036
        %v2123 = vunpack.c.l.b16 %v2037
        %v2124 = vunpack.c.l.b16 %v2038
        %v2125 = vunpack.c.h.b16 %v2038
        %v2126 = vunpack.c.l.b16 %v2039
        %v2127 = vunpack.c.l.b16 %v2040
        %v2128 = vunpack.c.h.b16 %v2040
        %v2129 = vunpack.c.l.b16 %v2041
        %v2130 = vpack.c.b16 %v2085, %v2082
        %v2131 = vpack.c.b16 %v2086, %v2083
        %v2132 = vpack.c.b16 %v2087, %v2084
        %v2133 = vpack.c.b16 %v2091, %v2088
        %v2134 = vpack.c.b16 %v2092, %v2089
        %v2135 = vpack.c.b16 %v2093, %v2090
        %v2136 = vpack.c.b16 %v2097, %v2094
        %v2137 = vpack.c.b16 %v2098, %v2095
        %v2138 = vpack.c.b16 %v2099, %v2096
        %v2139 = vpack.c.b16 %v2103, %v2100
        %v2140 = vpack.c.b16 %v2104, %v2101
        %v2141 = vpack.c.b16 %v2105, %v2102
        %v2142 = vpack.c.b16 %v2109, %v2106
        %v2143 = vpack.c.b16 %v2110, %v2107
        %v2144 = vpack.c.b16 %v2111, %v2108
        %v2145 = vpack.c.b16 %v2115, %v2112
        %v2146 = vpack.c.b16 %v2116, %v2113
        %v2147 = vpack.c.b16 %v2117, %v2114
        %v2148 = vpack.c.b16 %v2121, %v2118
        %v2149 = vpack.c.b16 %v2122, %v2119
        %v2150 = vpack.c.b16 %v2123, %v2120
        %v2151 = vpack.c.b16 %v2127, %v2124
        %v2152 = vpack.c.b16 %v2128, %v2125
        %v2153 = vpack.c.b16 %v2129, %v2126
        %2178 = vmatpush.bf16.msra.mxu0 %v2151
        %2179 = vmatpush.bf16.msra.mxu0 %v2148
        %2180 = vmatpush.bf16.msra.mxu0 %v2145
        %2181 = vmatpush.bf16.msra.mxu0 %v2142
        %2182 = vmatpush.bf16.msra.mxu0 %v2139
        %2183 = vmatpush.bf16.msra.mxu0 %v2136
        %2184 = vmatpush.bf16.msra.mxu0 %v2133
        %2185 = vmatpush.bf16.msra.mxu0 %v2130
        %2186 = vmatmul.bf16.gmra.mxu0 %v2002
        %v2187 = vpop.f32.mrf.mxu0
        %v2188 = vadd.f32 %v2044, %v2187
        %v2189 = vpop.f32.mrf.mxu0
        %v2190 = vadd.f32 %v2044, %v2189
        %2191 = vmatmul.bf16.gmra.mxu0 %v2003
        %v2192 = vpop.f32.mrf.mxu0
        %v2193 = vadd.f32 %v2044, %v2192
        %v2194 = vpop.f32.mrf.mxu0
        %v2195 = vadd.f32 %v2044, %v2194
        %2196 = vmatmul.bf16.gmra.mxu0 %v2004
        %v2197 = vpop.f32.mrf.mxu0
        %v2198 = vadd.f32 %v2044, %v2197
        %v2199 = vpop.f32.mrf.mxu0
        %v2200 = vadd.f32 %v2044, %v2199
        %2201 = vmatmul.bf16.gmra.mxu0 %v2005
        %v2202 = vpop.f32.mrf.mxu0
        %v2203 = vadd.f32 %v2044, %v2202
        %v2204 = vpop.f32.mrf.mxu0
        %v2205 = vadd.f32 %v2044, %v2204
        %2206 = vmatmul.bf16.gmra.mxu0 %v2006
        %v2207 = vpop.f32.mrf.mxu0
        %v2208 = vadd.f32 %v2044, %v2207
        %v2209 = vpop.f32.mrf.mxu0
        %v2210 = vadd.f32 %v2044, %v2209
        %2211 = vmatmul.bf16.gmra.mxu0 %v2007
        %v2212 = vpop.f32.mrf.mxu0
        %v2213 = vadd.f32 %v2044, %v2212
        %v2214 = vpop.f32.mrf.mxu0
        %v2215 = vadd.f32 %v2044, %v2214
        %2216 = vmatmul.bf16.gmra.mxu0 %v2008
        %v2217 = vpop.f32.mrf.mxu0
        %v2218 = vadd.f32 %v2044, %v2217
        %v2219 = vpop.f32.mrf.mxu0
        %v2220 = vadd.f32 %v2044, %v2219
        %2221 = vmatmul.bf16.gmra.mxu0 %v2009
        %v2222 = vpop.f32.mrf.mxu0
        %v2223 = vadd.f32 %v2044, %v2222
        %v2224 = vpop.f32.mrf.mxu0
        %v2225 = vadd.f32 %v2044, %v2224
        %2226 = vdwg.mxu0
        %2227 = vmatpush.bf16.msra.mxu0 %v2152
        %2228 = vmatpush.bf16.msra.mxu0 %v2149
        %2229 = vmatpush.bf16.msra.mxu0 %v2146
        %2230 = vmatpush.bf16.msra.mxu0 %v2143
        %2231 = vmatpush.bf16.msra.mxu0 %v2140
        %2232 = vmatpush.bf16.msra.mxu0 %v2137
        %2233 = vmatpush.bf16.msra.mxu0 %v2134
        %2234 = vmatpush.bf16.msra.mxu0 %v2131
        %2235 = vmatmul.bf16.gmra.mxu0 %v2002
        %v2236 = vpop.f32.mrf.mxu0
        %v2237 = vadd.f32 %v2045, %v2236
        %v2238 = vpop.f32.mrf.mxu0
        %v2239 = vadd.f32 %v2045, %v2238
        %2240 = vmatmul.bf16.gmra.mxu0 %v2003
        %v2241 = vpop.f32.mrf.mxu0
        %v2242 = vadd.f32 %v2045, %v2241
        %v2243 = vpop.f32.mrf.mxu0
        %v2244 = vadd.f32 %v2045, %v2243
        %2245 = vmatmul.bf16.gmra.mxu0 %v2004
        %v2246 = vpop.f32.mrf.mxu0
        %v2247 = vadd.f32 %v2045, %v2246
        %v2248 = vpop.f32.mrf.mxu0
        %v2249 = vadd.f32 %v2045, %v2248
        %2250 = vmatmul.bf16.gmra.mxu0 %v2005
        %v2251 = vpop.f32.mrf.mxu0
        %v2252 = vadd.f32 %v2045, %v2251
        %v2253 = vpop.f32.mrf.mxu0
        %v2254 = vadd.f32 %v2045, %v2253
        %2255 = vmatmul.bf16.gmra.mxu0 %v2006
        %v2256 = vpop.f32.mrf.mxu0
        %v2257 = vadd.f32 %v2045, %v2256
        %v2258 = vpop.f32.mrf.mxu0
        %v2259 = vadd.f32 %v2045, %v2258
        %2260 = vmatmul.bf16.gmra.mxu0 %v2007
        %v2261 = vpop.f32.mrf.mxu0
        %v2262 = vadd.f32 %v2045, %v2261
        %v2263 = vpop.f32.mrf.mxu0
        %v2264 = vadd.f32 %v2045, %v2263
        %2265 = vmatmul.bf16.gmra.mxu0 %v2008
        %v2266 = vpop.f32.mrf.mxu0
        %v2267 = vadd.f32 %v2045, %v2266
        %v2268 = vpop.f32.mrf.mxu0
        %v2269 = vadd.f32 %v2045, %v2268
        %2270 = vmatmul.bf16.gmra.mxu0 %v2009
        %v2271 = vpop.f32.mrf.mxu0
        %v2272 = vadd.f32 %v2045, %v2271
        %v2273 = vpop.f32.mrf.mxu0
        %v2274 = vadd.f32 %v2045, %v2273
        %2275 = vdwg.mxu0
        %2276 = vmatpush.bf16.msra.mxu0 %v2153
        %2277 = vmatpush.bf16.msra.mxu0 %v2150
        %2278 = vmatpush.bf16.msra.mxu0 %v2147
        %2279 = vmatpush.bf16.msra.mxu0 %v2144
        %2280 = vmatpush.bf16.msra.mxu0 %v2141
        %2281 = vmatpush.bf16.msra.mxu0 %v2138
        %2282 = vmatpush.bf16.msra.mxu0 %v2135
        %2283 = vmatpush.bf16.msra.mxu0 %v2132
        %2284 = vmatmul.bf16.gmra.mxu0 %v2002
        %v2285 = vpop.f32.mrf.mxu0
        %v2286 = vadd.f32 %v2046, %v2285
        %v2287 = vpop.f32.mrf.mxu0
        %v2288 = vadd.f32 %v2046, %v2287
        %2289 = vmatmul.bf16.gmra.mxu0 %v2003
        %v2290 = vpop.f32.mrf.mxu0
        %v2291 = vadd.f32 %v2046, %v2290
        %v2292 = vpop.f32.mrf.mxu0
        %v2293 = vadd.f32 %v2046, %v2292
        %2294 = vmatmul.bf16.gmra.mxu0 %v2004
        %v2295 = vpop.f32.mrf.mxu0
        %v2296 = vadd.f32 %v2046, %v2295
        %v2297 = vpop.f32.mrf.mxu0
        %v2298 = vadd.f32 %v2046, %v2297
        %2299 = vmatmul.bf16.gmra.mxu0 %v2005
        %v2300 = vpop.f32.mrf.mxu0
        %v2301 = vadd.f32 %v2046, %v2300
        %v2302 = vpop.f32.mrf.mxu0
        %v2303 = vadd.f32 %v2046, %v2302
        %2304 = vmatmul.bf16.gmra.mxu0 %v2006
        %v2305 = vpop.f32.mrf.mxu0
        %v2306 = vadd.f32 %v2046, %v2305
        %v2307 = vpop.f32.mrf.mxu0
        %v2308 = vadd.f32 %v2046, %v2307
        %2309 = vmatmul.bf16.gmra.mxu0 %v2007
        %v2310 = vpop.f32.mrf.mxu0
        %v2311 = vadd.f32 %v2046, %v2310
        %v2312 = vpop.f32.mrf.mxu0
        %v2313 = vadd.f32 %v2046, %v2312
        %2314 = vmatmul.bf16.gmra.mxu0 %v2008
        %v2315 = vpop.f32.mrf.mxu0
        %v2316 = vadd.f32 %v2046, %v2315
        %v2317 = vpop.f32.mrf.mxu0
        %v2318 = vadd.f32 %v2046, %v2317
        %2319 = vmatmul.bf16.gmra.mxu0 %v2009
        %v2320 = vpop.f32.mrf.mxu0
        %v2321 = vadd.f32 %v2046, %v2320
        %v2322 = vpop.f32.mrf.mxu0
        %v2323 = vadd.f32 %v2046, %v2322
        %2324 = vdwg.mxu0
        %2333 = vrot.lane.b32.xlu0 %v2188, 96
        %v2334 = vpop.permute.xlu0 %2333
        %2335 = vrot.lane.b32.xlu0 %v2190, 96
        %v2336 = vpop.permute.xlu0 %2335
        %2337 = vrot.lane.b32.xlu0 %v2193, 96
        %v2338 = vpop.permute.xlu0 %2337
        %2339 = vrot.lane.b32.xlu0 %v2195, 96
        %v2340 = vpop.permute.xlu0 %2339
        %2341 = vrot.lane.b32.xlu0 %v2198, 96
        %v2342 = vpop.permute.xlu0 %2341
        %2343 = vrot.lane.b32.xlu0 %v2200, 96
        %v2344 = vpop.permute.xlu0 %2343
        %2345 = vrot.lane.b32.xlu0 %v2203, 96
        %v2346 = vpop.permute.xlu0 %2345
        %2347 = vrot.lane.b32.xlu0 %v2205, 96
        %v2348 = vpop.permute.xlu0 %2347
        %2357 = vrot.lane.b32.xlu0 %v2188, 64
        %v2358 = vpop.permute.xlu0 %2357
        %2359 = vrot.lane.b32.xlu0 %v2190, 64
        %v2360 = vpop.permute.xlu0 %2359
        %2361 = vrot.lane.b32.xlu0 %v2193, 64
        %v2362 = vpop.permute.xlu0 %2361
        %2363 = vrot.lane.b32.xlu0 %v2195, 64
        %v2364 = vpop.permute.xlu0 %2363
        %2365 = vrot.lane.b32.xlu0 %v2198, 64
        %v2366 = vpop.permute.xlu0 %2365
        %2367 = vrot.lane.b32.xlu0 %v2200, 64
        %v2368 = vpop.permute.xlu0 %2367
        %2369 = vrot.lane.b32.xlu0 %v2203, 64
        %v2370 = vpop.permute.xlu0 %2369
        %2371 = vrot.lane.b32.xlu0 %v2205, 64
        %v2372 = vpop.permute.xlu0 %2371
        %2381 = vrot.lane.b32.xlu0 %v2188, 32
        %v2382 = vpop.permute.xlu0 %2381
        %2383 = vrot.lane.b32.xlu0 %v2190, 32
        %v2384 = vpop.permute.xlu0 %2383
        %2385 = vrot.lane.b32.xlu0 %v2193, 32
        %v2386 = vpop.permute.xlu0 %2385
        %2387 = vrot.lane.b32.xlu0 %v2195, 32
        %v2388 = vpop.permute.xlu0 %2387
        %2389 = vrot.lane.b32.xlu0 %v2198, 32
        %v2390 = vpop.permute.xlu0 %2389
        %2391 = vrot.lane.b32.xlu0 %v2200, 32
        %v2392 = vpop.permute.xlu0 %2391
        %2393 = vrot.lane.b32.xlu0 %v2203, 32
        %v2394 = vpop.permute.xlu0 %2393
        %2395 = vrot.lane.b32.xlu0 %v2205, 32
        %v2396 = vpop.permute.xlu0 %2395
        %v2405 = vpack.c.bf16 %v2188, %v2188
        %v2406 = vpack.c.bf16 %v2190, %v2190
        %v2407 = vpack.c.bf16 %v2193, %v2193
        %v2408 = vpack.c.bf16 %v2195, %v2195
        %v2409 = vpack.c.bf16 %v2198, %v2198
        %v2410 = vpack.c.bf16 %v2200, %v2200
        %v2411 = vpack.c.bf16 %v2203, %v2203
        %v2412 = vpack.c.bf16 %v2205, %v2205
        %v2413 = vpack.c.bf16 %v2334, %v2334
        %v2414 = vpack.c.bf16 %v2336, %v2336
        %v2415 = vpack.c.bf16 %v2338, %v2338
        %v2416 = vpack.c.bf16 %v2340, %v2340
        %v2417 = vpack.c.bf16 %v2342, %v2342
        %v2418 = vpack.c.bf16 %v2344, %v2344
        %v2419 = vpack.c.bf16 %v2346, %v2346
        %v2420 = vpack.c.bf16 %v2348, %v2348
        %v2421 = vpack.c.bf16 %v2358, %v2358
        %v2422 = vpack.c.bf16 %v2360, %v2360
        %v2423 = vpack.c.bf16 %v2362, %v2362
        %v2424 = vpack.c.bf16 %v2364, %v2364
        %v2425 = vpack.c.bf16 %v2366, %v2366
        %v2426 = vpack.c.bf16 %v2368, %v2368
        %v2427 = vpack.c.bf16 %v2370, %v2370
        %v2428 = vpack.c.bf16 %v2372, %v2372
        %v2429 = vpack.c.bf16 %v2382, %v2382
        %v2430 = vpack.c.bf16 %v2384, %v2384
        %v2431 = vpack.c.bf16 %v2386, %v2386
        %v2432 = vpack.c.bf16 %v2388, %v2388
        %v2433 = vpack.c.bf16 %v2390, %v2390
        %v2434 = vpack.c.bf16 %v2392, %v2392
        %v2435 = vpack.c.bf16 %v2394, %v2394
        %v2436 = vpack.c.bf16 %v2396, %v2396
        %2445 = vrot.lane.b32.xlu0 %v2237, 96
        %v2446 = vpop.permute.xlu0 %2445
        %2447 = vrot.lane.b32.xlu0 %v2239, 96
        %v2448 = vpop.permute.xlu0 %2447
        %2449 = vrot.lane.b32.xlu0 %v2242, 96
        %v2450 = vpop.permute.xlu0 %2449
        %2451 = vrot.lane.b32.xlu0 %v2244, 96
        %v2452 = vpop.permute.xlu0 %2451
        %2453 = vrot.lane.b32.xlu0 %v2247, 96
        %v2454 = vpop.permute.xlu0 %2453
        %2455 = vrot.lane.b32.xlu0 %v2249, 96
        %v2456 = vpop.permute.xlu0 %2455
        %2457 = vrot.lane.b32.xlu0 %v2252, 96
        %v2458 = vpop.permute.xlu0 %2457
        %2459 = vrot.lane.b32.xlu0 %v2254, 96
        %v2460 = vpop.permute.xlu0 %2459
        %2469 = vrot.lane.b32.xlu0 %v2237, 64
        %v2470 = vpop.permute.xlu0 %2469
        %2471 = vrot.lane.b32.xlu0 %v2239, 64
        %v2472 = vpop.permute.xlu0 %2471
        %2473 = vrot.lane.b32.xlu0 %v2242, 64
        %v2474 = vpop.permute.xlu0 %2473
        %2475 = vrot.lane.b32.xlu0 %v2244, 64
        %v2476 = vpop.permute.xlu0 %2475
        %2477 = vrot.lane.b32.xlu0 %v2247, 64
        %v2478 = vpop.permute.xlu0 %2477
        %2479 = vrot.lane.b32.xlu0 %v2249, 64
        %v2480 = vpop.permute.xlu0 %2479
        %2481 = vrot.lane.b32.xlu0 %v2252, 64
        %v2482 = vpop.permute.xlu0 %2481
        %2483 = vrot.lane.b32.xlu0 %v2254, 64
        %v2484 = vpop.permute.xlu0 %2483
        %2493 = vrot.lane.b32.xlu0 %v2237, 32
        %v2494 = vpop.permute.xlu0 %2493
        %2495 = vrot.lane.b32.xlu0 %v2239, 32
        %v2496 = vpop.permute.xlu0 %2495
        %2497 = vrot.lane.b32.xlu0 %v2242, 32
        %v2498 = vpop.permute.xlu0 %2497
        %2499 = vrot.lane.b32.xlu0 %v2244, 32
        %v2500 = vpop.permute.xlu0 %2499
        %2501 = vrot.lane.b32.xlu0 %v2247, 32
        %v2502 = vpop.permute.xlu0 %2501
        %2503 = vrot.lane.b32.xlu0 %v2249, 32
        %v2504 = vpop.permute.xlu0 %2503
        %2505 = vrot.lane.b32.xlu0 %v2252, 32
        %v2506 = vpop.permute.xlu0 %2505
        %2507 = vrot.lane.b32.xlu0 %v2254, 32
        %v2508 = vpop.permute.xlu0 %2507
        %v2517 = vpack.c.bf16 %v2237, %v2237
        %v2518 = vpack.c.bf16 %v2239, %v2239
        %v2519 = vpack.c.bf16 %v2242, %v2242
        %v2520 = vpack.c.bf16 %v2244, %v2244
        %v2521 = vpack.c.bf16 %v2247, %v2247
        %v2522 = vpack.c.bf16 %v2249, %v2249
        %v2523 = vpack.c.bf16 %v2252, %v2252
        %v2524 = vpack.c.bf16 %v2254, %v2254
        %v2525 = vpack.c.bf16 %v2446, %v2446
        %v2526 = vpack.c.bf16 %v2448, %v2448
        %v2527 = vpack.c.bf16 %v2450, %v2450
        %v2528 = vpack.c.bf16 %v2452, %v2452
        %v2529 = vpack.c.bf16 %v2454, %v2454
        %v2530 = vpack.c.bf16 %v2456, %v2456
        %v2531 = vpack.c.bf16 %v2458, %v2458
        %v2532 = vpack.c.bf16 %v2460, %v2460
        %v2533 = vpack.c.bf16 %v2470, %v2470
        %v2534 = vpack.c.bf16 %v2472, %v2472
        %v2535 = vpack.c.bf16 %v2474, %v2474
        %v2536 = vpack.c.bf16 %v2476, %v2476
        %v2537 = vpack.c.bf16 %v2478, %v2478
        %v2538 = vpack.c.bf16 %v2480, %v2480
        %v2539 = vpack.c.bf16 %v2482, %v2482
        %v2540 = vpack.c.bf16 %v2484, %v2484
        %v2541 = vpack.c.bf16 %v2494, %v2494
        %v2542 = vpack.c.bf16 %v2496, %v2496
        %v2543 = vpack.c.bf16 %v2498, %v2498
        %v2544 = vpack.c.bf16 %v2500, %v2500
        %v2545 = vpack.c.bf16 %v2502, %v2502
        %v2546 = vpack.c.bf16 %v2504, %v2504
        %v2547 = vpack.c.bf16 %v2506, %v2506
        %v2548 = vpack.c.bf16 %v2508, %v2508
        %2557 = vrot.lane.b32.xlu0 %v2286, 96
        %v2558 = vpop.permute.xlu0 %2557
        %2559 = vrot.lane.b32.xlu0 %v2288, 96
        %v2560 = vpop.permute.xlu0 %2559
        %2561 = vrot.lane.b32.xlu0 %v2291, 96
        %v2562 = vpop.permute.xlu0 %2561
        %2563 = vrot.lane.b32.xlu0 %v2293, 96
        %v2564 = vpop.permute.xlu0 %2563
        %2565 = vrot.lane.b32.xlu0 %v2296, 96
        %v2566 = vpop.permute.xlu0 %2565
        %2567 = vrot.lane.b32.xlu0 %v2298, 96
        %v2568 = vpop.permute.xlu0 %2567
        %2569 = vrot.lane.b32.xlu0 %v2301, 96
        %v2570 = vpop.permute.xlu0 %2569
        %2571 = vrot.lane.b32.xlu0 %v2303, 96
        %v2572 = vpop.permute.xlu0 %2571
        %2581 = vrot.lane.b32.xlu0 %v2286, 64
        %v2582 = vpop.permute.xlu0 %2581
        %2583 = vrot.lane.b32.xlu0 %v2288, 64
        %v2584 = vpop.permute.xlu0 %2583
        %2585 = vrot.lane.b32.xlu0 %v2291, 64
        %v2586 = vpop.permute.xlu0 %2585
        %2587 = vrot.lane.b32.xlu0 %v2293, 64
        %v2588 = vpop.permute.xlu0 %2587
        %2589 = vrot.lane.b32.xlu0 %v2296, 64
        %v2590 = vpop.permute.xlu0 %2589
        %2591 = vrot.lane.b32.xlu0 %v2298, 64
        %v2592 = vpop.permute.xlu0 %2591
        %2593 = vrot.lane.b32.xlu0 %v2301, 64
        %v2594 = vpop.permute.xlu0 %2593
        %2595 = vrot.lane.b32.xlu0 %v2303, 64
        %v2596 = vpop.permute.xlu0 %2595
        %2605 = vrot.lane.b32.xlu0 %v2286, 32
        %v2606 = vpop.permute.xlu0 %2605
        %2607 = vrot.lane.b32.xlu0 %v2288, 32
        %v2608 = vpop.permute.xlu0 %2607
        %2609 = vrot.lane.b32.xlu0 %v2291, 32
        %v2610 = vpop.permute.xlu0 %2609
        %2611 = vrot.lane.b32.xlu0 %v2293, 32
        %v2612 = vpop.permute.xlu0 %2611
        %2613 = vrot.lane.b32.xlu0 %v2296, 32
        %v2614 = vpop.permute.xlu0 %2613
        %2615 = vrot.lane.b32.xlu0 %v2298, 32
        %v2616 = vpop.permute.xlu0 %2615
        %2617 = vrot.lane.b32.xlu0 %v2301, 32
        %v2618 = vpop.permute.xlu0 %2617
        %2619 = vrot.lane.b32.xlu0 %v2303, 32
        %v2620 = vpop.permute.xlu0 %2619
        %v2629 = vpack.c.bf16 %v2286, %v2286
        %v2630 = vpack.c.bf16 %v2288, %v2288
        %v2631 = vpack.c.bf16 %v2291, %v2291
        %v2632 = vpack.c.bf16 %v2293, %v2293
        %v2633 = vpack.c.bf16 %v2296, %v2296
        %v2634 = vpack.c.bf16 %v2298, %v2298
        %v2635 = vpack.c.bf16 %v2301, %v2301
        %v2636 = vpack.c.bf16 %v2303, %v2303
        %v2637 = vpack.c.bf16 %v2558, %v2558
        %v2638 = vpack.c.bf16 %v2560, %v2560
        %v2639 = vpack.c.bf16 %v2562, %v2562
        %v2640 = vpack.c.bf16 %v2564, %v2564
        %v2641 = vpack.c.bf16 %v2566, %v2566
        %v2642 = vpack.c.bf16 %v2568, %v2568
        %v2643 = vpack.c.bf16 %v2570, %v2570
        %v2644 = vpack.c.bf16 %v2572, %v2572
        %v2645 = vpack.c.bf16 %v2582, %v2582
        %v2646 = vpack.c.bf16 %v2584, %v2584
        %v2647 = vpack.c.bf16 %v2586, %v2586
        %v2648 = vpack.c.bf16 %v2588, %v2588
        %v2649 = vpack.c.bf16 %v2590, %v2590
        %v2650 = vpack.c.bf16 %v2592, %v2592
        %v2651 = vpack.c.bf16 %v2594, %v2594
        %v2652 = vpack.c.bf16 %v2596, %v2596
        %v2653 = vpack.c.bf16 %v2606, %v2606
        %v2654 = vpack.c.bf16 %v2608, %v2608
        %v2655 = vpack.c.bf16 %v2610, %v2610
        %v2656 = vpack.c.bf16 %v2612, %v2612
        %v2657 = vpack.c.bf16 %v2614, %v2614
        %v2658 = vpack.c.bf16 %v2616, %v2616
        %v2659 = vpack.c.bf16 %v2618, %v2618
        %v2660 = vpack.c.bf16 %v2620, %v2620
        %v2669 = vunpack.c.l.b16 %v2405
        %v2670 = vunpack.c.l.b16 %v2406
        %v2671 = vunpack.c.l.b16 %v2407
        %v2672 = vunpack.c.l.b16 %v2408
        %v2673 = vunpack.c.l.b16 %v2409
        %v2674 = vunpack.c.l.b16 %v2410
        %v2675 = vunpack.c.l.b16 %v2411
        %v2676 = vunpack.c.l.b16 %v2412
        %v2677 = vpack.c.b16 %v2670, %v2669
        %v2678 = vpack.c.b16 %v2672, %v2671
        %v2679 = vpack.c.b16 %v2674, %v2673
        %v2680 = vpack.c.b16 %v2676, %v2675
        %v2689 = vunpack.c.l.b16 %v2517
        %v2690 = vunpack.c.l.b16 %v2518
        %v2691 = vunpack.c.l.b16 %v2519
        %v2692 = vunpack.c.l.b16 %v2520
        %v2693 = vunpack.c.l.b16 %v2521
        %v2694 = vunpack.c.l.b16 %v2522
        %v2695 = vunpack.c.l.b16 %v2523
        %v2696 = vunpack.c.l.b16 %v2524
        %v2697 = vpack.c.b16 %v2690, %v2689
        %v2698 = vpack.c.b16 %v2692, %v2691
        %v2699 = vpack.c.b16 %v2694, %v2693
        %v2700 = vpack.c.b16 %v2696, %v2695
        %vm2701 = vcmask 261120
        %v2703 = vsel %vm2701, %v2677, 0
        %v2706 = vsel %vm2701, %v2678, 0
        %v2709 = vsel %vm2701, %v2679, 0
        %v2712 = vsel %vm2701, %v2680, 0
        %v2715 = vsel %vm2701, %v2697, 0
        %v2718 = vsel %vm2701, %v2698, 0
        %v2721 = vsel %vm2701, %v2699, 0
        %v2724 = vsel %vm2701, %v2700, 0
        %2726 = vmatpush.bf16.xpose.msra.mxu0 0
        %2727 = vmatpush.bf16.xpose.msra.mxu0 0
        %2728 = vmatpush.bf16.xpose.msra.mxu0 0
        %2729 = vmatpush.bf16.xpose.msra.mxu0 0
        %2730 = vmatpush.bf16.xpose.msra.mxu0 %v2724
        %2731 = vmatpush.bf16.xpose.msra.mxu0 %v2721
        %2732 = vmatpush.bf16.xpose.msra.mxu0 %v2718
        %2733 = vmatpush.bf16.xpose.msra.mxu0 %v2715
        %2734 = vmatmul.bf16.gmra.mxu0 %v2703
        %v2735 = vpop.f32.mrf.mxu0
        %v2736 = vadd.f32 0.0, %v2735
        %v2737 = vpop.f32.mrf.mxu0
        %v2738 = vadd.f32 0.0, %v2737
        %2739 = vmatmul.bf16.gmra.mxu0 %v2706
        %v2740 = vpop.f32.mrf.mxu0
        %v2741 = vadd.f32 0.0, %v2740
        %v2742 = vpop.f32.mrf.mxu0
        %v2743 = vadd.f32 0.0, %v2742
        %2744 = vmatmul.bf16.gmra.mxu0 %v2709
        %v2745 = vpop.f32.mrf.mxu0
        %v2746 = vadd.f32 0.0, %v2745
        %v2747 = vpop.f32.mrf.mxu0
        %v2748 = vadd.f32 0.0, %v2747
        %2749 = vmatmul.bf16.gmra.mxu0 %v2712
        %v2750 = vpop.f32.mrf.mxu0
        %v2751 = vadd.f32 0.0, %v2750
        %v2752 = vpop.f32.mrf.mxu0
        %v2753 = vadd.f32 0.0, %v2752
        %2754 = vdwg.mxu0
        %v2763 = vunpack.c.l.b16 %v2413
        %v2764 = vunpack.c.l.b16 %v2414
        %v2765 = vunpack.c.l.b16 %v2415
        %v2766 = vunpack.c.l.b16 %v2416
        %v2767 = vunpack.c.l.b16 %v2417
        %v2768 = vunpack.c.l.b16 %v2418
        %v2769 = vunpack.c.l.b16 %v2419
        %v2770 = vunpack.c.l.b16 %v2420
        %v2771 = vpack.c.b16 %v2764, %v2763
        %v2772 = vpack.c.b16 %v2766, %v2765
        %v2773 = vpack.c.b16 %v2768, %v2767
        %v2774 = vpack.c.b16 %v2770, %v2769
        %v2783 = vunpack.c.l.b16 %v2525
        %v2784 = vunpack.c.l.b16 %v2526
        %v2785 = vunpack.c.l.b16 %v2527
        %v2786 = vunpack.c.l.b16 %v2528
        %v2787 = vunpack.c.l.b16 %v2529
        %v2788 = vunpack.c.l.b16 %v2530
        %v2789 = vunpack.c.l.b16 %v2531
        %v2790 = vunpack.c.l.b16 %v2532
        %v2791 = vpack.c.b16 %v2784, %v2783
        %v2792 = vpack.c.b16 %v2786, %v2785
        %v2793 = vpack.c.b16 %v2788, %v2787
        %v2794 = vpack.c.b16 %v2790, %v2789
        %v2796 = vsel %vm2701, %v2771, 0
        %v2799 = vsel %vm2701, %v2772, 0
        %v2802 = vsel %vm2701, %v2773, 0
        %v2805 = vsel %vm2701, %v2774, 0
        %v2808 = vsel %vm2701, %v2791, 0
        %v2811 = vsel %vm2701, %v2792, 0
        %v2814 = vsel %vm2701, %v2793, 0
        %v2817 = vsel %vm2701, %v2794, 0
        %2819 = vmatpush.bf16.xpose.msra.mxu0 0
        %2820 = vmatpush.bf16.xpose.msra.mxu0 0
        %2821 = vmatpush.bf16.xpose.msra.mxu0 0
        %2822 = vmatpush.bf16.xpose.msra.mxu0 0
        %2823 = vmatpush.bf16.xpose.msra.mxu0 %v2817
        %2824 = vmatpush.bf16.xpose.msra.mxu0 %v2814
        %2825 = vmatpush.bf16.xpose.msra.mxu0 %v2811
        %2826 = vmatpush.bf16.xpose.msra.mxu0 %v2808
        %2827 = vmatmul.bf16.gmra.mxu0 %v2796
        %v2828 = vpop.f32.mrf.mxu0
        %v2829 = vadd.f32 0.0, %v2828
        %v2830 = vpop.f32.mrf.mxu0
        %v2831 = vadd.f32 0.0, %v2830
        %2832 = vmatmul.bf16.gmra.mxu0 %v2799
        %v2833 = vpop.f32.mrf.mxu0
        %v2834 = vadd.f32 0.0, %v2833
        %v2835 = vpop.f32.mrf.mxu0
        %v2836 = vadd.f32 0.0, %v2835
        %2837 = vmatmul.bf16.gmra.mxu0 %v2802
        %v2838 = vpop.f32.mrf.mxu0
        %v2839 = vadd.f32 0.0, %v2838
        %v2840 = vpop.f32.mrf.mxu0
        %v2841 = vadd.f32 0.0, %v2840
        %2842 = vmatmul.bf16.gmra.mxu0 %v2805
        %v2843 = vpop.f32.mrf.mxu0
        %v2844 = vadd.f32 0.0, %v2843
        %v2845 = vpop.f32.mrf.mxu0
        %v2846 = vadd.f32 0.0, %v2845
        %2847 = vdwg.mxu0
        %v2856 = vunpack.c.l.b16 %v2421
        %v2857 = vunpack.c.l.b16 %v2422
        %v2858 = vunpack.c.l.b16 %v2423
        %v2859 = vunpack.c.l.b16 %v2424
        %v2860 = vunpack.c.l.b16 %v2425
        %v2861 = vunpack.c.l.b16 %v2426
        %v2862 = vunpack.c.l.b16 %v2427
        %v2863 = vunpack.c.l.b16 %v2428
        %v2864 = vpack.c.b16 %v2857, %v2856
        %v2865 = vpack.c.b16 %v2859, %v2858
        %v2866 = vpack.c.b16 %v2861, %v2860
        %v2867 = vpack.c.b16 %v2863, %v2862
        %v2876 = vunpack.c.l.b16 %v2533
        %v2877 = vunpack.c.l.b16 %v2534
        %v2878 = vunpack.c.l.b16 %v2535
        %v2879 = vunpack.c.l.b16 %v2536
        %v2880 = vunpack.c.l.b16 %v2537
        %v2881 = vunpack.c.l.b16 %v2538
        %v2882 = vunpack.c.l.b16 %v2539
        %v2883 = vunpack.c.l.b16 %v2540
        %v2884 = vpack.c.b16 %v2877, %v2876
        %v2885 = vpack.c.b16 %v2879, %v2878
        %v2886 = vpack.c.b16 %v2881, %v2880
        %v2887 = vpack.c.b16 %v2883, %v2882
        %v2889 = vsel %vm2701, %v2864, 0
        %v2892 = vsel %vm2701, %v2865, 0
        %v2895 = vsel %vm2701, %v2866, 0
        %v2898 = vsel %vm2701, %v2867, 0
        %v2901 = vsel %vm2701, %v2884, 0
        %v2904 = vsel %vm2701, %v2885, 0
        %v2907 = vsel %vm2701, %v2886, 0
        %v2910 = vsel %vm2701, %v2887, 0
        %2912 = vmatpush.bf16.xpose.msra.mxu0 0
        %2913 = vmatpush.bf16.xpose.msra.mxu0 0
        %2914 = vmatpush.bf16.xpose.msra.mxu0 0
        %2915 = vmatpush.bf16.xpose.msra.mxu0 0
        %2916 = vmatpush.bf16.xpose.msra.mxu0 %v2910
        %2917 = vmatpush.bf16.xpose.msra.mxu0 %v2907
        %2918 = vmatpush.bf16.xpose.msra.mxu0 %v2904
        %2919 = vmatpush.bf16.xpose.msra.mxu0 %v2901
        %2920 = vmatmul.bf16.gmra.mxu0 %v2889
        %v2921 = vpop.f32.mrf.mxu0
        %v2922 = vadd.f32 0.0, %v2921
        %v2923 = vpop.f32.mrf.mxu0
        %v2924 = vadd.f32 0.0, %v2923
        %2925 = vmatmul.bf16.gmra.mxu0 %v2892
        %v2926 = vpop.f32.mrf.mxu0
        %v2927 = vadd.f32 0.0, %v2926
        %v2928 = vpop.f32.mrf.mxu0
        %v2929 = vadd.f32 0.0, %v2928
        %2930 = vmatmul.bf16.gmra.mxu0 %v2895
        %v2931 = vpop.f32.mrf.mxu0
        %v2932 = vadd.f32 0.0, %v2931
        %v2933 = vpop.f32.mrf.mxu0
        %v2934 = vadd.f32 0.0, %v2933
        %2935 = vmatmul.bf16.gmra.mxu0 %v2898
        %v2936 = vpop.f32.mrf.mxu0
        %v2937 = vadd.f32 0.0, %v2936
        %v2938 = vpop.f32.mrf.mxu0
        %v2939 = vadd.f32 0.0, %v2938
        %2940 = vdwg.mxu0
        %v2949 = vunpack.c.l.b16 %v2429
        %v2950 = vunpack.c.l.b16 %v2430
        %v2951 = vunpack.c.l.b16 %v2431
        %v2952 = vunpack.c.l.b16 %v2432
        %v2953 = vunpack.c.l.b16 %v2433
        %v2954 = vunpack.c.l.b16 %v2434
        %v2955 = vunpack.c.l.b16 %v2435
        %v2956 = vunpack.c.l.b16 %v2436
        %v2957 = vpack.c.b16 %v2950, %v2949
        %v2958 = vpack.c.b16 %v2952, %v2951
        %v2959 = vpack.c.b16 %v2954, %v2953
        %v2960 = vpack.c.b16 %v2956, %v2955
        %v2969 = vunpack.c.l.b16 %v2541
        %v2970 = vunpack.c.l.b16 %v2542
        %v2971 = vunpack.c.l.b16 %v2543
        %v2972 = vunpack.c.l.b16 %v2544
        %v2973 = vunpack.c.l.b16 %v2545
        %v2974 = vunpack.c.l.b16 %v2546
        %v2975 = vunpack.c.l.b16 %v2547
        %v2976 = vunpack.c.l.b16 %v2548
        %v2977 = vpack.c.b16 %v2970, %v2969
        %v2978 = vpack.c.b16 %v2972, %v2971
        %v2979 = vpack.c.b16 %v2974, %v2973
        %v2980 = vpack.c.b16 %v2976, %v2975
        %v2982 = vsel %vm2701, %v2957, 0
        %v2985 = vsel %vm2701, %v2958, 0
        %v2988 = vsel %vm2701, %v2959, 0
        %v2991 = vsel %vm2701, %v2960, 0
        %v2994 = vsel %vm2701, %v2977, 0
        %v2997 = vsel %vm2701, %v2978, 0
        %v3000 = vsel %vm2701, %v2979, 0
        %v3003 = vsel %vm2701, %v2980, 0
        %3005 = vmatpush.bf16.xpose.msra.mxu0 0
        %3006 = vmatpush.bf16.xpose.msra.mxu0 0
        %3007 = vmatpush.bf16.xpose.msra.mxu0 0
        %3008 = vmatpush.bf16.xpose.msra.mxu0 0
        %3009 = vmatpush.bf16.xpose.msra.mxu0 %v3003
        %3010 = vmatpush.bf16.xpose.msra.mxu0 %v3000
        %3011 = vmatpush.bf16.xpose.msra.mxu0 %v2997
        %3012 = vmatpush.bf16.xpose.msra.mxu0 %v2994
        %3013 = vmatmul.bf16.gmra.mxu0 %v2982
        %v3014 = vpop.f32.mrf.mxu0
        %v3015 = vadd.f32 0.0, %v3014
        %v3016 = vpop.f32.mrf.mxu0
        %v3017 = vadd.f32 0.0, %v3016
        %3018 = vmatmul.bf16.gmra.mxu0 %v2985
        %v3019 = vpop.f32.mrf.mxu0
        %v3020 = vadd.f32 0.0, %v3019
        %v3021 = vpop.f32.mrf.mxu0
        %v3022 = vadd.f32 0.0, %v3021
        %3023 = vmatmul.bf16.gmra.mxu0 %v2988
        %v3024 = vpop.f32.mrf.mxu0
        %v3025 = vadd.f32 0.0, %v3024
        %v3026 = vpop.f32.mrf.mxu0
        %v3027 = vadd.f32 0.0, %v3026
        %3028 = vmatmul.bf16.gmra.mxu0 %v2991
        %v3029 = vpop.f32.mrf.mxu0
        %v3030 = vadd.f32 0.0, %v3029
        %v3031 = vpop.f32.mrf.mxu0
        %v3032 = vadd.f32 0.0, %v3031
        %3033 = vdwg.mxu0
        %v3034 = vmul.f32 %v2736, 0.17677669
        %v3035 = vmul.f32 %v2738, 0.17677669
        %v3036 = vmul.f32 %v2741, 0.17677669
        %v3037 = vmul.f32 %v2743, 0.17677669
        %v3038 = vmul.f32 %v2746, 0.17677669
        %v3039 = vmul.f32 %v2748, 0.17677669
        %v3040 = vmul.f32 %v2751, 0.17677669
        %v3041 = vmul.f32 %v2753, 0.17677669
        %v3042 = vmul.f32 %v2829, 0.17677669
        %v3043 = vmul.f32 %v2831, 0.17677669
        %v3044 = vmul.f32 %v2834, 0.17677669
        %v3045 = vmul.f32 %v2836, 0.17677669
        %v3046 = vmul.f32 %v2839, 0.17677669
        %v3047 = vmul.f32 %v2841, 0.17677669
        %v3048 = vmul.f32 %v2844, 0.17677669
        %v3049 = vmul.f32 %v2846, 0.17677669
        %v3050 = vmul.f32 %v2922, 0.17677669
        %v3051 = vmul.f32 %v2924, 0.17677669
        %v3052 = vmul.f32 %v2927, 0.17677669
        %v3053 = vmul.f32 %v2929, 0.17677669
        %v3054 = vmul.f32 %v2932, 0.17677669
        %v3055 = vmul.f32 %v2934, 0.17677669
        %v3056 = vmul.f32 %v2937, 0.17677669
        %v3057 = vmul.f32 %v2939, 0.17677669
        %v3058 = vmul.f32 %v3015, 0.17677669
        %v3059 = vmul.f32 %v3017, 0.17677669
        %v3060 = vmul.f32 %v3020, 0.17677669
        %v3061 = vmul.f32 %v3022, 0.17677669
        %v3062 = vmul.f32 %v3025, 0.17677669
        %v3063 = vmul.f32 %v3027, 0.17677669
        %v3064 = vmul.f32 %v3030, 0.17677669
        %v3065 = vmul.f32 %v3032, 0.17677669
        %vm3066 = vcmask 523264
        %v3067 = vsel %vm3066, %v3034, -inf
        %3068 = vmax.xlane.f32.xlu0 %v3067
        %v3069 = vpop.xlane.xlu0 %3068
        %v3070 = vsel %vm3066, %v3035, -inf
        %3071 = vmax.xlane.f32.xlu0 %v3070
        %v3072 = vpop.xlane.xlu0 %3071
        %v3073 = vsel %vm3066, %v3036, -inf
        %3074 = vmax.xlane.f32.xlu0 %v3073
        %v3075 = vpop.xlane.xlu0 %3074
        %v3076 = vsel %vm3066, %v3037, -inf
        %3077 = vmax.xlane.f32.xlu0 %v3076
        %v3078 = vpop.xlane.xlu0 %3077
        %v3079 = vsel %vm3066, %v3038, -inf
        %3080 = vmax.xlane.f32.xlu0 %v3079
        %v3081 = vpop.xlane.xlu0 %3080
        %v3082 = vsel %vm3066, %v3039, -inf
        %3083 = vmax.xlane.f32.xlu0 %v3082
        %v3084 = vpop.xlane.xlu0 %3083
        %v3085 = vsel %vm3066, %v3040, -inf
        %3086 = vmax.xlane.f32.xlu0 %v3085
        %v3087 = vpop.xlane.xlu0 %3086
        %v3088 = vsel %vm3066, %v3041, -inf
        %3089 = vmax.xlane.f32.xlu0 %v3088
        %v3090 = vpop.xlane.xlu0 %3089
        %v3091 = vsel %vm3066, %v3042, -inf
        %3092 = vmax.xlane.f32.xlu0 %v3091
        %v3093 = vpop.xlane.xlu0 %3092
        %v3094 = vsel %vm3066, %v3043, -inf
        %3095 = vmax.xlane.f32.xlu0 %v3094
        %v3096 = vpop.xlane.xlu0 %3095
        %v3097 = vsel %vm3066, %v3044, -inf
        %3098 = vmax.xlane.f32.xlu0 %v3097
        %v3099 = vpop.xlane.xlu0 %3098
        %v3100 = vsel %vm3066, %v3045, -inf
        %3101 = vmax.xlane.f32.xlu0 %v3100
        %v3102 = vpop.xlane.xlu0 %3101
        %v3103 = vsel %vm3066, %v3046, -inf
        %3104 = vmax.xlane.f32.xlu0 %v3103
        %v3105 = vpop.xlane.xlu0 %3104
        %v3106 = vsel %vm3066, %v3047, -inf
        %3107 = vmax.xlane.f32.xlu0 %v3106
        %v3108 = vpop.xlane.xlu0 %3107
        %v3109 = vsel %vm3066, %v3048, -inf
        %3110 = vmax.xlane.f32.xlu0 %v3109
        %v3111 = vpop.xlane.xlu0 %3110
        %v3112 = vsel %vm3066, %v3049, -inf
        %3113 = vmax.xlane.f32.xlu0 %v3112
        %v3114 = vpop.xlane.xlu0 %3113
        %v3115 = vsel %vm3066, %v3050, -inf
        %3116 = vmax.xlane.f32.xlu0 %v3115
        %v3117 = vpop.xlane.xlu0 %3116
        %v3118 = vsel %vm3066, %v3051, -inf
        %3119 = vmax.xlane.f32.xlu0 %v3118
        %v3120 = vpop.xlane.xlu0 %3119
        %v3121 = vsel %vm3066, %v3052, -inf
        %3122 = vmax.xlane.f32.xlu0 %v3121
        %v3123 = vpop.xlane.xlu0 %3122
        %v3124 = vsel %vm3066, %v3053, -inf
        %3125 = vmax.xlane.f32.xlu0 %v3124
        %v3126 = vpop.xlane.xlu0 %3125
        %v3127 = vsel %vm3066, %v3054, -inf
        %3128 = vmax.xlane.f32.xlu0 %v3127
        %v3129 = vpop.xlane.xlu0 %3128
        %v3130 = vsel %vm3066, %v3055, -inf
        %3131 = vmax.xlane.f32.xlu0 %v3130
        %v3132 = vpop.xlane.xlu0 %3131
        %v3133 = vsel %vm3066, %v3056, -inf
        %3134 = vmax.xlane.f32.xlu0 %v3133
        %v3135 = vpop.xlane.xlu0 %3134
        %v3136 = vsel %vm3066, %v3057, -inf
        %3137 = vmax.xlane.f32.xlu0 %v3136
        %v3138 = vpop.xlane.xlu0 %3137
        %v3139 = vsel %vm3066, %v3058, -inf
        %3140 = vmax.xlane.f32.xlu0 %v3139
        %v3141 = vpop.xlane.xlu0 %3140
        %v3142 = vsel %vm3066, %v3059, -inf
        %3143 = vmax.xlane.f32.xlu0 %v3142
        %v3144 = vpop.xlane.xlu0 %3143
        %v3145 = vsel %vm3066, %v3060, -inf
        %3146 = vmax.xlane.f32.xlu0 %v3145
        %v3147 = vpop.xlane.xlu0 %3146
        %v3148 = vsel %vm3066, %v3061, -inf
        %3149 = vmax.xlane.f32.xlu0 %v3148
        %v3150 = vpop.xlane.xlu0 %3149
        %v3151 = vsel %vm3066, %v3062, -inf
        %3152 = vmax.xlane.f32.xlu0 %v3151
        %v3153 = vpop.xlane.xlu0 %3152
        %v3154 = vsel %vm3066, %v3063, -inf
        %3155 = vmax.xlane.f32.xlu0 %v3154
        %v3156 = vpop.xlane.xlu0 %3155
        %v3157 = vsel %vm3066, %v3064, -inf
        %3158 = vmax.xlane.f32.xlu0 %v3157
        %v3159 = vpop.xlane.xlu0 %3158
        %v3160 = vsel %vm3066, %v3065, -inf
        %3161 = vmax.xlane.f32.xlu0 %v3160
        %v3162 = vpop.xlane.xlu0 %3161
        %v3163 = vsub.f32 %v3034, %v3069
        %v3164 = vsub.f32 %v3035, %v3072
        %v3165 = vsub.f32 %v3036, %v3075
        %v3166 = vsub.f32 %v3037, %v3078
        %v3167 = vsub.f32 %v3038, %v3081
        %v3168 = vsub.f32 %v3039, %v3084
        %v3169 = vsub.f32 %v3040, %v3087
        %v3170 = vsub.f32 %v3041, %v3090
        %v3171 = vsub.f32 %v3042, %v3093
        %v3172 = vsub.f32 %v3043, %v3096
        %v3173 = vsub.f32 %v3044, %v3099
        %v3174 = vsub.f32 %v3045, %v3102
        %v3175 = vsub.f32 %v3046, %v3105
        %v3176 = vsub.f32 %v3047, %v3108
        %v3177 = vsub.f32 %v3048, %v3111
        %v3178 = vsub.f32 %v3049, %v3114
        %v3179 = vsub.f32 %v3050, %v3117
        %v3180 = vsub.f32 %v3051, %v3120
        %v3181 = vsub.f32 %v3052, %v3123
        %v3182 = vsub.f32 %v3053, %v3126
        %v3183 = vsub.f32 %v3054, %v3129
        %v3184 = vsub.f32 %v3055, %v3132
        %v3185 = vsub.f32 %v3056, %v3135
        %v3186 = vsub.f32 %v3057, %v3138
        %v3187 = vsub.f32 %v3058, %v3141
        %v3188 = vsub.f32 %v3059, %v3144
        %v3189 = vsub.f32 %v3060, %v3147
        %v3190 = vsub.f32 %v3061, %v3150
        %v3191 = vsub.f32 %v3062, %v3153
        %v3192 = vsub.f32 %v3063, %v3156
        %v3193 = vsub.f32 %v3064, %v3159
        %v3194 = vsub.f32 %v3065, %v3162
        %v3195 = vmul.f32 %v3163, 1.442695
        %v3196 = vpow.pop %v3195
        %v3197 = vmul.f32 %v3164, 1.442695
        %v3198 = vpow.pop %v3197
        %v3199 = vmul.f32 %v3165, 1.442695
        %v3200 = vpow.pop %v3199
        %v3201 = vmul.f32 %v3166, 1.442695
        %v3202 = vpow.pop %v3201
        %v3203 = vmul.f32 %v3167, 1.442695
        %v3204 = vpow.pop %v3203
        %v3205 = vmul.f32 %v3168, 1.442695
        %v3206 = vpow.pop %v3205
        %v3207 = vmul.f32 %v3169, 1.442695
        %v3208 = vpow.pop %v3207
        %v3209 = vmul.f32 %v3170, 1.442695
        %v3210 = vpow.pop %v3209
        %v3211 = vmul.f32 %v3171, 1.442695
        %v3212 = vpow.pop %v3211
        %v3213 = vmul.f32 %v3172, 1.442695
        %v3214 = vpow.pop %v3213
        %v3215 = vmul.f32 %v3173, 1.442695
        %v3216 = vpow.pop %v3215
        %v3217 = vmul.f32 %v3174, 1.442695
        %v3218 = vpow.pop %v3217
        %v3219 = vmul.f32 %v3175, 1.442695
        %v3220 = vpow.pop %v3219
        %v3221 = vmul.f32 %v3176, 1.442695
        %v3222 = vpow.pop %v3221
        %v3223 = vmul.f32 %v3177, 1.442695
        %v3224 = vpow.pop %v3223
        %v3225 = vmul.f32 %v3178, 1.442695
        %v3226 = vpow.pop %v3225
        %v3227 = vmul.f32 %v3179, 1.442695
        %v3228 = vpow.pop %v3227
        %v3229 = vmul.f32 %v3180, 1.442695
        %v3230 = vpow.pop %v3229
        %v3231 = vmul.f32 %v3181, 1.442695
        %v3232 = vpow.pop %v3231
        %v3233 = vmul.f32 %v3182, 1.442695
        %v3234 = vpow.pop %v3233
        %v3235 = vmul.f32 %v3183, 1.442695
        %v3236 = vpow.pop %v3235
        %v3237 = vmul.f32 %v3184, 1.442695
        %v3238 = vpow.pop %v3237
        %v3239 = vmul.f32 %v3185, 1.442695
        %v3240 = vpow.pop %v3239
        %v3241 = vmul.f32 %v3186, 1.442695
        %v3242 = vpow.pop %v3241
        %v3243 = vmul.f32 %v3187, 1.442695
        %v3244 = vpow.pop %v3243
        %v3245 = vmul.f32 %v3188, 1.442695
        %v3246 = vpow.pop %v3245
        %v3247 = vmul.f32 %v3189, 1.442695
        %v3248 = vpow.pop %v3247
        %v3249 = vmul.f32 %v3190, 1.442695
        %v3250 = vpow.pop %v3249
        %v3251 = vmul.f32 %v3191, 1.442695
        %v3252 = vpow.pop %v3251
        %v3253 = vmul.f32 %v3192, 1.442695
        %v3254 = vpow.pop %v3253
        %v3255 = vmul.f32 %v3193, 1.442695
        %v3256 = vpow.pop %v3255
        %v3257 = vmul.f32 %v3194, 1.442695
        %v3258 = vpow.pop %v3257
        %v3259 = vsel %vm3066, %v3196, 0.0
        %3260 = vadd.xlane.f32.xlu0 %v3259
        %v3261 = vpop.xlane.xlu0 %3260
        %v3262 = vsel %vm3066, %v3198, 0.0
        %3263 = vadd.xlane.f32.xlu0 %v3262
        %v3264 = vpop.xlane.xlu0 %3263
        %v3265 = vsel %vm3066, %v3200, 0.0
        %3266 = vadd.xlane.f32.xlu0 %v3265
        %v3267 = vpop.xlane.xlu0 %3266
        %v3268 = vsel %vm3066, %v3202, 0.0
        %3269 = vadd.xlane.f32.xlu0 %v3268
        %v3270 = vpop.xlane.xlu0 %3269
        %v3271 = vsel %vm3066, %v3204, 0.0
        %3272 = vadd.xlane.f32.xlu0 %v3271
        %v3273 = vpop.xlane.xlu0 %3272
        %v3274 = vsel %vm3066, %v3206, 0.0
        %3275 = vadd.xlane.f32.xlu0 %v3274
        %v3276 = vpop.xlane.xlu0 %3275
        %v3277 = vsel %vm3066, %v3208, 0.0
        %3278 = vadd.xlane.f32.xlu0 %v3277
        %v3279 = vpop.xlane.xlu0 %3278
        %v3280 = vsel %vm3066, %v3210, 0.0
        %3281 = vadd.xlane.f32.xlu0 %v3280
        %v3282 = vpop.xlane.xlu0 %3281
        %v3283 = vsel %vm3066, %v3212, 0.0
        %3284 = vadd.xlane.f32.xlu0 %v3283
        %v3285 = vpop.xlane.xlu0 %3284
        %v3286 = vsel %vm3066, %v3214, 0.0
        %3287 = vadd.xlane.f32.xlu0 %v3286
        %v3288 = vpop.xlane.xlu0 %3287
        %v3289 = vsel %vm3066, %v3216, 0.0
        %3290 = vadd.xlane.f32.xlu0 %v3289
        %v3291 = vpop.xlane.xlu0 %3290
        %v3292 = vsel %vm3066, %v3218, 0.0
        %3293 = vadd.xlane.f32.xlu0 %v3292
        %v3294 = vpop.xlane.xlu0 %3293
        %v3295 = vsel %vm3066, %v3220, 0.0
        %3296 = vadd.xlane.f32.xlu0 %v3295
        %v3297 = vpop.xlane.xlu0 %3296
        %v3298 = vsel %vm3066, %v3222, 0.0
        %3299 = vadd.xlane.f32.xlu0 %v3298
        %v3300 = vpop.xlane.xlu0 %3299
        %v3301 = vsel %vm3066, %v3224, 0.0
        %3302 = vadd.xlane.f32.xlu0 %v3301
        %v3303 = vpop.xlane.xlu0 %3302
        %v3304 = vsel %vm3066, %v3226, 0.0
        %3305 = vadd.xlane.f32.xlu0 %v3304
        %v3306 = vpop.xlane.xlu0 %3305
        %v3307 = vsel %vm3066, %v3228, 0.0
        %3308 = vadd.xlane.f32.xlu0 %v3307
        %v3309 = vpop.xlane.xlu0 %3308
        %v3310 = vsel %vm3066, %v3230, 0.0
        %3311 = vadd.xlane.f32.xlu0 %v3310
        %v3312 = vpop.xlane.xlu0 %3311
        %v3313 = vsel %vm3066, %v3232, 0.0
        %3314 = vadd.xlane.f32.xlu0 %v3313
        %v3315 = vpop.xlane.xlu0 %3314
        %v3316 = vsel %vm3066, %v3234, 0.0
        %3317 = vadd.xlane.f32.xlu0 %v3316
        %v3318 = vpop.xlane.xlu0 %3317
        %v3319 = vsel %vm3066, %v3236, 0.0
        %3320 = vadd.xlane.f32.xlu0 %v3319
        %v3321 = vpop.xlane.xlu0 %3320
        %v3322 = vsel %vm3066, %v3238, 0.0
        %3323 = vadd.xlane.f32.xlu0 %v3322
        %v3324 = vpop.xlane.xlu0 %3323
        %v3325 = vsel %vm3066, %v3240, 0.0
        %3326 = vadd.xlane.f32.xlu0 %v3325
        %v3327 = vpop.xlane.xlu0 %3326
        %v3328 = vsel %vm3066, %v3242, 0.0
        %3329 = vadd.xlane.f32.xlu0 %v3328
        %v3330 = vpop.xlane.xlu0 %3329
        %v3331 = vsel %vm3066, %v3244, 0.0
        %3332 = vadd.xlane.f32.xlu0 %v3331
        %v3333 = vpop.xlane.xlu0 %3332
        %v3334 = vsel %vm3066, %v3246, 0.0
        %3335 = vadd.xlane.f32.xlu0 %v3334
        %v3336 = vpop.xlane.xlu0 %3335
        %v3337 = vsel %vm3066, %v3248, 0.0
        %3338 = vadd.xlane.f32.xlu0 %v3337
        %v3339 = vpop.xlane.xlu0 %3338
        %v3340 = vsel %vm3066, %v3250, 0.0
        %3341 = vadd.xlane.f32.xlu0 %v3340
        %v3342 = vpop.xlane.xlu0 %3341
        %v3343 = vsel %vm3066, %v3252, 0.0
        %3344 = vadd.xlane.f32.xlu0 %v3343
        %v3345 = vpop.xlane.xlu0 %3344
        %v3346 = vsel %vm3066, %v3254, 0.0
        %3347 = vadd.xlane.f32.xlu0 %v3346
        %v3348 = vpop.xlane.xlu0 %3347
        %v3349 = vsel %vm3066, %v3256, 0.0
        %3350 = vadd.xlane.f32.xlu0 %v3349
        %v3351 = vpop.xlane.xlu0 %3350
        %v3352 = vsel %vm3066, %v3258, 0.0
        %3353 = vadd.xlane.f32.xlu0 %v3352
        %v3354 = vpop.xlane.xlu0 %3353
        %v3355 = vrcp.pop %v3261
        %v3356 = vrcp.pop %v3264
        %v3357 = vrcp.pop %v3267
        %v3358 = vrcp.pop %v3270
        %v3359 = vrcp.pop %v3273
        %v3360 = vrcp.pop %v3276
        %v3361 = vrcp.pop %v3279
        %v3362 = vrcp.pop %v3282
        %v3363 = vrcp.pop %v3285
        %v3364 = vrcp.pop %v3288
        %v3365 = vrcp.pop %v3291
        %v3366 = vrcp.pop %v3294
        %v3367 = vrcp.pop %v3297
        %v3368 = vrcp.pop %v3300
        %v3369 = vrcp.pop %v3303
        %v3370 = vrcp.pop %v3306
        %v3371 = vrcp.pop %v3309
        %v3372 = vrcp.pop %v3312
        %v3373 = vrcp.pop %v3315
        %v3374 = vrcp.pop %v3318
        %v3375 = vrcp.pop %v3321
        %v3376 = vrcp.pop %v3324
        %v3377 = vrcp.pop %v3327
        %v3378 = vrcp.pop %v3330
        %v3379 = vrcp.pop %v3333
        %v3380 = vrcp.pop %v3336
        %v3381 = vrcp.pop %v3339
        %v3382 = vrcp.pop %v3342
        %v3383 = vrcp.pop %v3345
        %v3384 = vrcp.pop %v3348
        %v3385 = vrcp.pop %v3351
        %v3386 = vrcp.pop %v3354
        %v3387 = vmul.f32 %v3196, %v3355
        %v3388 = vmul.f32 %v3198, %v3356
        %v3389 = vmul.f32 %v3200, %v3357
        %v3390 = vmul.f32 %v3202, %v3358
        %v3391 = vmul.f32 %v3204, %v3359
        %v3392 = vmul.f32 %v3206, %v3360
        %v3393 = vmul.f32 %v3208, %v3361
        %v3394 = vmul.f32 %v3210, %v3362
        %v3395 = vmul.f32 %v3212, %v3363
        %v3396 = vmul.f32 %v3214, %v3364
        %v3397 = vmul.f32 %v3216, %v3365
        %v3398 = vmul.f32 %v3218, %v3366
        %v3399 = vmul.f32 %v3220, %v3367
        %v3400 = vmul.f32 %v3222, %v3368
        %v3401 = vmul.f32 %v3224, %v3369
        %v3402 = vmul.f32 %v3226, %v3370
        %v3403 = vmul.f32 %v3228, %v3371
        %v3404 = vmul.f32 %v3230, %v3372
        %v3405 = vmul.f32 %v3232, %v3373
        %v3406 = vmul.f32 %v3234, %v3374
        %v3407 = vmul.f32 %v3236, %v3375
        %v3408 = vmul.f32 %v3238, %v3376
        %v3409 = vmul.f32 %v3240, %v3377
        %v3410 = vmul.f32 %v3242, %v3378
        %v3411 = vmul.f32 %v3244, %v3379
        %v3412 = vmul.f32 %v3246, %v3380
        %v3413 = vmul.f32 %v3248, %v3381
        %v3414 = vmul.f32 %v3250, %v3382
        %v3415 = vmul.f32 %v3252, %v3383
        %v3416 = vmul.f32 %v3254, %v3384
        %v3417 = vmul.f32 %v3256, %v3385
        %v3418 = vmul.f32 %v3258, %v3386
        %v3419 = vpack.c.bf16 %v3387, %v3387
        %v3420 = vpack.c.bf16 %v3388, %v3388
        %v3421 = vpack.c.bf16 %v3389, %v3389
        %v3422 = vpack.c.bf16 %v3390, %v3390
        %v3423 = vpack.c.bf16 %v3391, %v3391
        %v3424 = vpack.c.bf16 %v3392, %v3392
        %v3425 = vpack.c.bf16 %v3393, %v3393
        %v3426 = vpack.c.bf16 %v3394, %v3394
        %v3427 = vpack.c.bf16 %v3395, %v3395
        %v3428 = vpack.c.bf16 %v3396, %v3396
        %v3429 = vpack.c.bf16 %v3397, %v3397
        %v3430 = vpack.c.bf16 %v3398, %v3398
        %v3431 = vpack.c.bf16 %v3399, %v3399
        %v3432 = vpack.c.bf16 %v3400, %v3400
        %v3433 = vpack.c.bf16 %v3401, %v3401
        %v3434 = vpack.c.bf16 %v3402, %v3402
        %v3435 = vpack.c.bf16 %v3403, %v3403
        %v3436 = vpack.c.bf16 %v3404, %v3404
        %v3437 = vpack.c.bf16 %v3405, %v3405
        %v3438 = vpack.c.bf16 %v3406, %v3406
        %v3439 = vpack.c.bf16 %v3407, %v3407
        %v3440 = vpack.c.bf16 %v3408, %v3408
        %v3441 = vpack.c.bf16 %v3409, %v3409
        %v3442 = vpack.c.bf16 %v3410, %v3410
        %v3443 = vpack.c.bf16 %v3411, %v3411
        %v3444 = vpack.c.bf16 %v3412, %v3412
        %v3445 = vpack.c.bf16 %v3413, %v3413
        %v3446 = vpack.c.bf16 %v3414, %v3414
        %v3447 = vpack.c.bf16 %v3415, %v3415
        %v3448 = vpack.c.bf16 %v3416, %v3416
        %v3449 = vpack.c.bf16 %v3417, %v3417
        %v3450 = vpack.c.bf16 %v3418, %v3418
        %v3459 = vunpack.c.l.b16 %v3419
        %v3460 = vunpack.c.l.b16 %v3420
        %v3461 = vunpack.c.l.b16 %v3421
        %v3462 = vunpack.c.l.b16 %v3422
        %v3463 = vunpack.c.l.b16 %v3423
        %v3464 = vunpack.c.l.b16 %v3424
        %v3465 = vunpack.c.l.b16 %v3425
        %v3466 = vunpack.c.l.b16 %v3426
        %v3467 = vpack.c.b16 %v3460, %v3459
        %v3468 = vpack.c.b16 %v3462, %v3461
        %v3469 = vpack.c.b16 %v3464, %v3463
        %v3470 = vpack.c.b16 %v3466, %v3465
        %v3479 = vunpack.c.l.b16 %v2629
        %v3480 = vunpack.c.l.b16 %v2630
        %v3481 = vunpack.c.l.b16 %v2631
        %v3482 = vunpack.c.l.b16 %v2632
        %v3483 = vunpack.c.l.b16 %v2633
        %v3484 = vunpack.c.l.b16 %v2634
        %v3485 = vunpack.c.l.b16 %v2635
        %v3486 = vunpack.c.l.b16 %v2636
        %v3487 = vpack.c.b16 %v3480, %v3479
        %v3488 = vpack.c.b16 %v3482, %v3481
        %v3489 = vpack.c.b16 %v3484, %v3483
        %v3490 = vpack.c.b16 %v3486, %v3485
        %v3496 = vsel %vm3066, %v3467, 0
        %v3499 = vsel %vm3066, %v3468, 0
        %v3502 = vsel %vm3066, %v3469, 0
        %v3505 = vsel %vm3066, %v3470, 0
        %3507 = vmatpush.bf16.msra.mxu0 0
        %3508 = vmatpush.bf16.msra.mxu0 0
        %3509 = vmatpush.bf16.msra.mxu0 0
        %3510 = vmatpush.bf16.msra.mxu0 0
        %3511 = vmatpush.bf16.msra.mxu0 %v3490
        %3512 = vmatpush.bf16.msra.mxu0 %v3489
        %3513 = vmatpush.bf16.msra.mxu0 %v3488
        %3514 = vmatpush.bf16.msra.mxu0 %v3487
        %3515 = vmatmul.bf16.gmra.mxu0 %v3496
        %v3516 = vpop.f32.mrf.mxu0
        %v3517 = vadd.f32 0.0, %v3516
        %v3518 = vpop.f32.mrf.mxu0
        %v3519 = vadd.f32 0.0, %v3518
        %3520 = vmatmul.bf16.gmra.mxu0 %v3499
        %v3521 = vpop.f32.mrf.mxu0
        %v3522 = vadd.f32 0.0, %v3521
        %v3523 = vpop.f32.mrf.mxu0
        %v3524 = vadd.f32 0.0, %v3523
        %3525 = vmatmul.bf16.gmra.mxu0 %v3502
        %v3526 = vpop.f32.mrf.mxu0
        %v3527 = vadd.f32 0.0, %v3526
        %v3528 = vpop.f32.mrf.mxu0
        %v3529 = vadd.f32 0.0, %v3528
        %3530 = vmatmul.bf16.gmra.mxu0 %v3505
        %v3531 = vpop.f32.mrf.mxu0
        %v3532 = vadd.f32 0.0, %v3531
        %v3533 = vpop.f32.mrf.mxu0
        %v3534 = vadd.f32 0.0, %v3533
        %3535 = vdwg.mxu0
        %v3544 = vunpack.c.l.b16 %v3427
        %v3545 = vunpack.c.l.b16 %v3428
        %v3546 = vunpack.c.l.b16 %v3429
        %v3547 = vunpack.c.l.b16 %v3430
        %v3548 = vunpack.c.l.b16 %v3431
        %v3549 = vunpack.c.l.b16 %v3432
        %v3550 = vunpack.c.l.b16 %v3433
        %v3551 = vunpack.c.l.b16 %v3434
        %v3552 = vpack.c.b16 %v3545, %v3544
        %v3553 = vpack.c.b16 %v3547, %v3546
        %v3554 = vpack.c.b16 %v3549, %v3548
        %v3555 = vpack.c.b16 %v3551, %v3550
        %v3564 = vunpack.c.l.b16 %v2637
        %v3565 = vunpack.c.l.b16 %v2638
        %v3566 = vunpack.c.l.b16 %v2639
        %v3567 = vunpack.c.l.b16 %v2640
        %v3568 = vunpack.c.l.b16 %v2641
        %v3569 = vunpack.c.l.b16 %v2642
        %v3570 = vunpack.c.l.b16 %v2643
        %v3571 = vunpack.c.l.b16 %v2644
        %v3572 = vpack.c.b16 %v3565, %v3564
        %v3573 = vpack.c.b16 %v3567, %v3566
        %v3574 = vpack.c.b16 %v3569, %v3568
        %v3575 = vpack.c.b16 %v3571, %v3570
        %v3581 = vsel %vm3066, %v3552, 0
        %v3584 = vsel %vm3066, %v3553, 0
        %v3587 = vsel %vm3066, %v3554, 0
        %v3590 = vsel %vm3066, %v3555, 0
        %3592 = vmatpush.bf16.msra.mxu0 0
        %3593 = vmatpush.bf16.msra.mxu0 0
        %3594 = vmatpush.bf16.msra.mxu0 0
        %3595 = vmatpush.bf16.msra.mxu0 0
        %3596 = vmatpush.bf16.msra.mxu0 %v3575
        %3597 = vmatpush.bf16.msra.mxu0 %v3574
        %3598 = vmatpush.bf16.msra.mxu0 %v3573
        %3599 = vmatpush.bf16.msra.mxu0 %v3572
        %3600 = vmatmul.bf16.gmra.mxu0 %v3581
        %v3601 = vpop.f32.mrf.mxu0
        %v3602 = vadd.f32 0.0, %v3601
        %v3603 = vpop.f32.mrf.mxu0
        %v3604 = vadd.f32 0.0, %v3603
        %3605 = vmatmul.bf16.gmra.mxu0 %v3584
        %v3606 = vpop.f32.mrf.mxu0
        %v3607 = vadd.f32 0.0, %v3606
        %v3608 = vpop.f32.mrf.mxu0
        %v3609 = vadd.f32 0.0, %v3608
        %3610 = vmatmul.bf16.gmra.mxu0 %v3587
        %v3611 = vpop.f32.mrf.mxu0
        %v3612 = vadd.f32 0.0, %v3611
        %v3613 = vpop.f32.mrf.mxu0
        %v3614 = vadd.f32 0.0, %v3613
        %3615 = vmatmul.bf16.gmra.mxu0 %v3590
        %v3616 = vpop.f32.mrf.mxu0
        %v3617 = vadd.f32 0.0, %v3616
        %v3618 = vpop.f32.mrf.mxu0
        %v3619 = vadd.f32 0.0, %v3618
        %3620 = vdwg.mxu0
        %v3629 = vunpack.c.l.b16 %v3435
        %v3630 = vunpack.c.l.b16 %v3436
        %v3631 = vunpack.c.l.b16 %v3437
        %v3632 = vunpack.c.l.b16 %v3438
        %v3633 = vunpack.c.l.b16 %v3439
        %v3634 = vunpack.c.l.b16 %v3440
        %v3635 = vunpack.c.l.b16 %v3441
        %v3636 = vunpack.c.l.b16 %v3442
        %v3637 = vpack.c.b16 %v3630, %v3629
        %v3638 = vpack.c.b16 %v3632, %v3631
        %v3639 = vpack.c.b16 %v3634, %v3633
        %v3640 = vpack.c.b16 %v3636, %v3635
        %v3649 = vunpack.c.l.b16 %v2645
        %v3650 = vunpack.c.l.b16 %v2646
        %v3651 = vunpack.c.l.b16 %v2647
        %v3652 = vunpack.c.l.b16 %v2648
        %v3653 = vunpack.c.l.b16 %v2649
        %v3654 = vunpack.c.l.b16 %v2650
        %v3655 = vunpack.c.l.b16 %v2651
        %v3656 = vunpack.c.l.b16 %v2652
        %v3657 = vpack.c.b16 %v3650, %v3649
        %v3658 = vpack.c.b16 %v3652, %v3651
        %v3659 = vpack.c.b16 %v3654, %v3653
        %v3660 = vpack.c.b16 %v3656, %v3655
        %v3666 = vsel %vm3066, %v3637, 0
        %v3669 = vsel %vm3066, %v3638, 0
        %v3672 = vsel %vm3066, %v3639, 0
        %v3675 = vsel %vm3066, %v3640, 0
        %3677 = vmatpush.bf16.msra.mxu0 0
        %3678 = vmatpush.bf16.msra.mxu0 0
        %3679 = vmatpush.bf16.msra.mxu0 0
        %3680 = vmatpush.bf16.msra.mxu0 0
        %3681 = vmatpush.bf16.msra.mxu0 %v3660
        %3682 = vmatpush.bf16.msra.mxu0 %v3659
        %3683 = vmatpush.bf16.msra.mxu0 %v3658
        %3684 = vmatpush.bf16.msra.mxu0 %v3657
        %3685 = vmatmul.bf16.gmra.mxu0 %v3666
        %v3686 = vpop.f32.mrf.mxu0
        %v3687 = vadd.f32 0.0, %v3686
        %v3688 = vpop.f32.mrf.mxu0
        %v3689 = vadd.f32 0.0, %v3688
        %3690 = vmatmul.bf16.gmra.mxu0 %v3669
        %v3691 = vpop.f32.mrf.mxu0
        %v3692 = vadd.f32 0.0, %v3691
        %v3693 = vpop.f32.mrf.mxu0
        %v3694 = vadd.f32 0.0, %v3693
        %3695 = vmatmul.bf16.gmra.mxu0 %v3672
        %v3696 = vpop.f32.mrf.mxu0
        %v3697 = vadd.f32 0.0, %v3696
        %v3698 = vpop.f32.mrf.mxu0
        %v3699 = vadd.f32 0.0, %v3698
        %3700 = vmatmul.bf16.gmra.mxu0 %v3675
        %v3701 = vpop.f32.mrf.mxu0
        %v3702 = vadd.f32 0.0, %v3701
        %v3703 = vpop.f32.mrf.mxu0
        %v3704 = vadd.f32 0.0, %v3703
        %3705 = vdwg.mxu0
        %v3714 = vunpack.c.l.b16 %v3443
        %v3715 = vunpack.c.l.b16 %v3444
        %v3716 = vunpack.c.l.b16 %v3445
        %v3717 = vunpack.c.l.b16 %v3446
        %v3718 = vunpack.c.l.b16 %v3447
        %v3719 = vunpack.c.l.b16 %v3448
        %v3720 = vunpack.c.l.b16 %v3449
        %v3721 = vunpack.c.l.b16 %v3450
        %v3722 = vpack.c.b16 %v3715, %v3714
        %v3723 = vpack.c.b16 %v3717, %v3716
        %v3724 = vpack.c.b16 %v3719, %v3718
        %v3725 = vpack.c.b16 %v3721, %v3720
        %v3734 = vunpack.c.l.b16 %v2653
        %v3735 = vunpack.c.l.b16 %v2654
        %v3736 = vunpack.c.l.b16 %v2655
        %v3737 = vunpack.c.l.b16 %v2656
        %v3738 = vunpack.c.l.b16 %v2657
        %v3739 = vunpack.c.l.b16 %v2658
        %v3740 = vunpack.c.l.b16 %v2659
        %v3741 = vunpack.c.l.b16 %v2660
        %v3742 = vpack.c.b16 %v3735, %v3734
        %v3743 = vpack.c.b16 %v3737, %v3736
        %v3744 = vpack.c.b16 %v3739, %v3738
        %v3745 = vpack.c.b16 %v3741, %v3740
        %v3751 = vsel %vm3066, %v3722, 0
        %v3754 = vsel %vm3066, %v3723, 0
        %v3757 = vsel %vm3066, %v3724, 0
        %v3760 = vsel %vm3066, %v3725, 0
        %3762 = vmatpush.bf16.msra.mxu0 0
        %3763 = vmatpush.bf16.msra.mxu0 0
        %3764 = vmatpush.bf16.msra.mxu0 0
        %3765 = vmatpush.bf16.msra.mxu0 0
        %3766 = vmatpush.bf16.msra.mxu0 %v3745
        %3767 = vmatpush.bf16.msra.mxu0 %v3744
        %3768 = vmatpush.bf16.msra.mxu0 %v3743
        %3769 = vmatpush.bf16.msra.mxu0 %v3742
        %3770 = vmatmul.bf16.gmra.mxu0 %v3751
        %v3771 = vpop.f32.mrf.mxu0
        %v3772 = vadd.f32 0.0, %v3771
        %v3773 = vpop.f32.mrf.mxu0
        %v3774 = vadd.f32 0.0, %v3773
        %3775 = vmatmul.bf16.gmra.mxu0 %v3754
        %v3776 = vpop.f32.mrf.mxu0
        %v3777 = vadd.f32 0.0, %v3776
        %v3778 = vpop.f32.mrf.mxu0
        %v3779 = vadd.f32 0.0, %v3778
        %3780 = vmatmul.bf16.gmra.mxu0 %v3757
        %v3781 = vpop.f32.mrf.mxu0
        %v3782 = vadd.f32 0.0, %v3781
        %v3783 = vpop.f32.mrf.mxu0
        %v3784 = vadd.f32 0.0, %v3783
        %3785 = vmatmul.bf16.gmra.mxu0 %v3760
        %v3786 = vpop.f32.mrf.mxu0
        %v3787 = vadd.f32 0.0, %v3786
        %v3788 = vpop.f32.mrf.mxu0
        %v3789 = vadd.f32 0.0, %v3788
        %3790 = vdwg.mxu0
        %3799 = vrot.lane.b32.xlu0 %v3602, 32
        %v3800 = vpop.permute.xlu0 %3799
        %3801 = vrot.lane.b32.xlu0 %v3604, 32
        %v3802 = vpop.permute.xlu0 %3801
        %3803 = vrot.lane.b32.xlu0 %v3607, 32
        %v3804 = vpop.permute.xlu0 %3803
        %3805 = vrot.lane.b32.xlu0 %v3609, 32
        %v3806 = vpop.permute.xlu0 %3805
        %3807 = vrot.lane.b32.xlu0 %v3612, 32
        %v3808 = vpop.permute.xlu0 %3807
        %3809 = vrot.lane.b32.xlu0 %v3614, 32
        %v3810 = vpop.permute.xlu0 %3809
        %3811 = vrot.lane.b32.xlu0 %v3617, 32
        %v3812 = vpop.permute.xlu0 %3811
        %3813 = vrot.lane.b32.xlu0 %v3619, 32
        %v3814 = vpop.permute.xlu0 %3813
        %3831 = vrot.lane.b32.xlu0 %v3687, 64
        %v3832 = vpop.permute.xlu0 %3831
        %3833 = vrot.lane.b32.xlu0 %v3689, 64
        %v3834 = vpop.permute.xlu0 %3833
        %3835 = vrot.lane.b32.xlu0 %v3692, 64
        %v3836 = vpop.permute.xlu0 %3835
        %3837 = vrot.lane.b32.xlu0 %v3694, 64
        %v3838 = vpop.permute.xlu0 %3837
        %3839 = vrot.lane.b32.xlu0 %v3697, 64
        %v3840 = vpop.permute.xlu0 %3839
        %3841 = vrot.lane.b32.xlu0 %v3699, 64
        %v3842 = vpop.permute.xlu0 %3841
        %3843 = vrot.lane.b32.xlu0 %v3702, 64
        %v3844 = vpop.permute.xlu0 %3843
        %3845 = vrot.lane.b32.xlu0 %v3704, 64
        %v3846 = vpop.permute.xlu0 %3845
        %3863 = vrot.lane.b32.xlu0 %v3772, 96
        %v3864 = vpop.permute.xlu0 %3863
        %3865 = vrot.lane.b32.xlu0 %v3774, 96
        %v3866 = vpop.permute.xlu0 %3865
        %3867 = vrot.lane.b32.xlu0 %v3777, 96
        %v3868 = vpop.permute.xlu0 %3867
        %3869 = vrot.lane.b32.xlu0 %v3779, 96
        %v3870 = vpop.permute.xlu0 %3869
        %3871 = vrot.lane.b32.xlu0 %v3782, 96
        %v3872 = vpop.permute.xlu0 %3871
        %3873 = vrot.lane.b32.xlu0 %v3784, 96
        %v3874 = vpop.permute.xlu0 %3873
        %3875 = vrot.lane.b32.xlu0 %v3787, 96
        %v3876 = vpop.permute.xlu0 %3875
        %3877 = vrot.lane.b32.xlu0 %v3789, 96
        %v3878 = vpop.permute.xlu0 %3877
        %v3887 = vsel %vm2701, %v3517, %v3800
        %v3888 = vsel %vm2701, %v3519, %v3802
        %v3889 = vsel %vm2701, %v3522, %v3804
        %v3890 = vsel %vm2701, %v3524, %v3806
        %v3891 = vsel %vm2701, %v3527, %v3808
        %v3892 = vsel %vm2701, %v3529, %v3810
        %v3893 = vsel %vm2701, %v3532, %v3812
        %v3894 = vsel %vm2701, %v3534, %v3814
        %v3895 = vsel %vm3066, %v3887, %v3832
        %v3896 = vsel %vm3066, %v3888, %v3834
        %v3897 = vsel %vm3066, %v3889, %v3836
        %v3898 = vsel %vm3066, %v3890, %v3838
        %v3899 = vsel %vm3066, %v3891, %v3840
        %v3900 = vsel %vm3066, %v3892, %v3842
        %v3901 = vsel %vm3066, %v3893, %v3844
        %v3902 = vsel %vm3066, %v3894, %v3846
        %vm3903 = vcmask 785408
        %v3904 = vsel %vm3903, %v3895, %v3864
        %v3905 = vsel %vm3903, %v3896, %v3866
        %v3906 = vsel %vm3903, %v3897, %v3868
        %v3907 = vsel %vm3903, %v3898, %v3870
        %v3908 = vsel %vm3903, %v3899, %v3872
        %v3909 = vsel %vm3903, %v3900, %v3874
        %v3910 = vsel %vm3903, %v3901, %v3876
        %v3911 = vsel %vm3903, %v3902, %v3878
        %3920 = vrot.lane.b32.xlu0 %v2208, 96
        %v3921 = vpop.permute.xlu0 %3920
        %3922 = vrot.lane.b32.xlu0 %v2210, 96
        %v3923 = vpop.permute.xlu0 %3922
        %3924 = vrot.lane.b32.xlu0 %v2213, 96
        %v3925 = vpop.permute.xlu0 %3924
        %3926 = vrot.lane.b32.xlu0 %v2215, 96
        %v3927 = vpop.permute.xlu0 %3926
        %3928 = vrot.lane.b32.xlu0 %v2218, 96
        %v3929 = vpop.permute.xlu0 %3928
        %3930 = vrot.lane.b32.xlu0 %v2220, 96
        %v3931 = vpop.permute.xlu0 %3930
        %3932 = vrot.lane.b32.xlu0 %v2223, 96
        %v3933 = vpop.permute.xlu0 %3932
        %3934 = vrot.lane.b32.xlu0 %v2225, 96
        %v3935 = vpop.permute.xlu0 %3934
        %3944 = vrot.lane.b32.xlu0 %v2208, 64
        %v3945 = vpop.permute.xlu0 %3944
        %3946 = vrot.lane.b32.xlu0 %v2210, 64
        %v3947 = vpop.permute.xlu0 %3946
        %3948 = vrot.lane.b32.xlu0 %v2213, 64
        %v3949 = vpop.permute.xlu0 %3948
        %3950 = vrot.lane.b32.xlu0 %v2215, 64
        %v3951 = vpop.permute.xlu0 %3950
        %3952 = vrot.lane.b32.xlu0 %v2218, 64
        %v3953 = vpop.permute.xlu0 %3952
        %3954 = vrot.lane.b32.xlu0 %v2220, 64
        %v3955 = vpop.permute.xlu0 %3954
        %3956 = vrot.lane.b32.xlu0 %v2223, 64
        %v3957 = vpop.permute.xlu0 %3956
        %3958 = vrot.lane.b32.xlu0 %v2225, 64
        %v3959 = vpop.permute.xlu0 %3958
        %3968 = vrot.lane.b32.xlu0 %v2208, 32
        %v3969 = vpop.permute.xlu0 %3968
        %3970 = vrot.lane.b32.xlu0 %v2210, 32
        %v3971 = vpop.permute.xlu0 %3970
        %3972 = vrot.lane.b32.xlu0 %v2213, 32
        %v3973 = vpop.permute.xlu0 %3972
        %3974 = vrot.lane.b32.xlu0 %v2215, 32
        %v3975 = vpop.permute.xlu0 %3974
        %3976 = vrot.lane.b32.xlu0 %v2218, 32
        %v3977 = vpop.permute.xlu0 %3976
        %3978 = vrot.lane.b32.xlu0 %v2220, 32
        %v3979 = vpop.permute.xlu0 %3978
        %3980 = vrot.lane.b32.xlu0 %v2223, 32
        %v3981 = vpop.permute.xlu0 %3980
        %3982 = vrot.lane.b32.xlu0 %v2225, 32
        %v3983 = vpop.permute.xlu0 %3982
        %v3992 = vpack.c.bf16 %v2208, %v2208
        %v3993 = vpack.c.bf16 %v2210, %v2210
        %v3994 = vpack.c.bf16 %v2213, %v2213
        %v3995 = vpack.c.bf16 %v2215, %v2215
        %v3996 = vpack.c.bf16 %v2218, %v2218
        %v3997 = vpack.c.bf16 %v2220, %v2220
        %v3998 = vpack.c.bf16 %v2223, %v2223
        %v3999 = vpack.c.bf16 %v2225, %v2225
        %v4000 = vpack.c.bf16 %v3921, %v3921
        %v4001 = vpack.c.bf16 %v3923, %v3923
        %v4002 = vpack.c.bf16 %v3925, %v3925
        %v4003 = vpack.c.bf16 %v3927, %v3927
        %v4004 = vpack.c.bf16 %v3929, %v3929
        %v4005 = vpack.c.bf16 %v3931, %v3931
        %v4006 = vpack.c.bf16 %v3933, %v3933
        %v4007 = vpack.c.bf16 %v3935, %v3935
        %v4008 = vpack.c.bf16 %v3945, %v3945
        %v4009 = vpack.c.bf16 %v3947, %v3947
        %v4010 = vpack.c.bf16 %v3949, %v3949
        %v4011 = vpack.c.bf16 %v3951, %v3951
        %v4012 = vpack.c.bf16 %v3953, %v3953
        %v4013 = vpack.c.bf16 %v3955, %v3955
        %v4014 = vpack.c.bf16 %v3957, %v3957
        %v4015 = vpack.c.bf16 %v3959, %v3959
        %v4016 = vpack.c.bf16 %v3969, %v3969
        %v4017 = vpack.c.bf16 %v3971, %v3971
        %v4018 = vpack.c.bf16 %v3973, %v3973
        %v4019 = vpack.c.bf16 %v3975, %v3975
        %v4020 = vpack.c.bf16 %v3977, %v3977
        %v4021 = vpack.c.bf16 %v3979, %v3979
        %v4022 = vpack.c.bf16 %v3981, %v3981
        %v4023 = vpack.c.bf16 %v3983, %v3983
        %4032 = vrot.lane.b32.xlu0 %v2257, 96
        %v4033 = vpop.permute.xlu0 %4032
        %4034 = vrot.lane.b32.xlu0 %v2259, 96
        %v4035 = vpop.permute.xlu0 %4034
        %4036 = vrot.lane.b32.xlu0 %v2262, 96
        %v4037 = vpop.permute.xlu0 %4036
        %4038 = vrot.lane.b32.xlu0 %v2264, 96
        %v4039 = vpop.permute.xlu0 %4038
        %4040 = vrot.lane.b32.xlu0 %v2267, 96
        %v4041 = vpop.permute.xlu0 %4040
        %4042 = vrot.lane.b32.xlu0 %v2269, 96
        %v4043 = vpop.permute.xlu0 %4042
        %4044 = vrot.lane.b32.xlu0 %v2272, 96
        %v4045 = vpop.permute.xlu0 %4044
        %4046 = vrot.lane.b32.xlu0 %v2274, 96
        %v4047 = vpop.permute.xlu0 %4046
        %4056 = vrot.lane.b32.xlu0 %v2257, 64
        %v4057 = vpop.permute.xlu0 %4056
        %4058 = vrot.lane.b32.xlu0 %v2259, 64
        %v4059 = vpop.permute.xlu0 %4058
        %4060 = vrot.lane.b32.xlu0 %v2262, 64
        %v4061 = vpop.permute.xlu0 %4060
        %4062 = vrot.lane.b32.xlu0 %v2264, 64
        %v4063 = vpop.permute.xlu0 %4062
        %4064 = vrot.lane.b32.xlu0 %v2267, 64
        %v4065 = vpop.permute.xlu0 %4064
        %4066 = vrot.lane.b32.xlu0 %v2269, 64
        %v4067 = vpop.permute.xlu0 %4066
        %4068 = vrot.lane.b32.xlu0 %v2272, 64
        %v4069 = vpop.permute.xlu0 %4068
        %4070 = vrot.lane.b32.xlu0 %v2274, 64
        %v4071 = vpop.permute.xlu0 %4070
        %4080 = vrot.lane.b32.xlu0 %v2257, 32
        %v4081 = vpop.permute.xlu0 %4080
        %4082 = vrot.lane.b32.xlu0 %v2259, 32
        %v4083 = vpop.permute.xlu0 %4082
        %4084 = vrot.lane.b32.xlu0 %v2262, 32
        %v4085 = vpop.permute.xlu0 %4084
        %4086 = vrot.lane.b32.xlu0 %v2264, 32
        %v4087 = vpop.permute.xlu0 %4086
        %4088 = vrot.lane.b32.xlu0 %v2267, 32
        %v4089 = vpop.permute.xlu0 %4088
        %4090 = vrot.lane.b32.xlu0 %v2269, 32
        %v4091 = vpop.permute.xlu0 %4090
        %4092 = vrot.lane.b32.xlu0 %v2272, 32
        %v4093 = vpop.permute.xlu0 %4092
        %4094 = vrot.lane.b32.xlu0 %v2274, 32
        %v4095 = vpop.permute.xlu0 %4094
        %v4104 = vpack.c.bf16 %v2257, %v2257
        %v4105 = vpack.c.bf16 %v2259, %v2259
        %v4106 = vpack.c.bf16 %v2262, %v2262
        %v4107 = vpack.c.bf16 %v2264, %v2264
        %v4108 = vpack.c.bf16 %v2267, %v2267
        %v4109 = vpack.c.bf16 %v2269, %v2269
        %v4110 = vpack.c.bf16 %v2272, %v2272
        %v4111 = vpack.c.bf16 %v2274, %v2274
        %v4112 = vpack.c.bf16 %v4033, %v4033
        %v4113 = vpack.c.bf16 %v4035, %v4035
        %v4114 = vpack.c.bf16 %v4037, %v4037
        %v4115 = vpack.c.bf16 %v4039, %v4039
        %v4116 = vpack.c.bf16 %v4041, %v4041
        %v4117 = vpack.c.bf16 %v4043, %v4043
        %v4118 = vpack.c.bf16 %v4045, %v4045
        %v4119 = vpack.c.bf16 %v4047, %v4047
        %v4120 = vpack.c.bf16 %v4057, %v4057
        %v4121 = vpack.c.bf16 %v4059, %v4059
        %v4122 = vpack.c.bf16 %v4061, %v4061
        %v4123 = vpack.c.bf16 %v4063, %v4063
        %v4124 = vpack.c.bf16 %v4065, %v4065
        %v4125 = vpack.c.bf16 %v4067, %v4067
        %v4126 = vpack.c.bf16 %v4069, %v4069
        %v4127 = vpack.c.bf16 %v4071, %v4071
        %v4128 = vpack.c.bf16 %v4081, %v4081
        %v4129 = vpack.c.bf16 %v4083, %v4083
        %v4130 = vpack.c.bf16 %v4085, %v4085
        %v4131 = vpack.c.bf16 %v4087, %v4087
        %v4132 = vpack.c.bf16 %v4089, %v4089
        %v4133 = vpack.c.bf16 %v4091, %v4091
        %v4134 = vpack.c.bf16 %v4093, %v4093
        %v4135 = vpack.c.bf16 %v4095, %v4095
        %4144 = vrot.lane.b32.xlu0 %v2306, 96
        %v4145 = vpop.permute.xlu0 %4144
        %4146 = vrot.lane.b32.xlu0 %v2308, 96
        %v4147 = vpop.permute.xlu0 %4146
        %4148 = vrot.lane.b32.xlu0 %v2311, 96
        %v4149 = vpop.permute.xlu0 %4148
        %4150 = vrot.lane.b32.xlu0 %v2313, 96
        %v4151 = vpop.permute.xlu0 %4150
        %4152 = vrot.lane.b32.xlu0 %v2316, 96
        %v4153 = vpop.permute.xlu0 %4152
        %4154 = vrot.lane.b32.xlu0 %v2318, 96
        %v4155 = vpop.permute.xlu0 %4154
        %4156 = vrot.lane.b32.xlu0 %v2321, 96
        %v4157 = vpop.permute.xlu0 %4156
        %4158 = vrot.lane.b32.xlu0 %v2323, 96
        %v4159 = vpop.permute.xlu0 %4158
        %4168 = vrot.lane.b32.xlu0 %v2306, 64
        %v4169 = vpop.permute.xlu0 %4168
        %4170 = vrot.lane.b32.xlu0 %v2308, 64
        %v4171 = vpop.permute.xlu0 %4170
        %4172 = vrot.lane.b32.xlu0 %v2311, 64
        %v4173 = vpop.permute.xlu0 %4172
        %4174 = vrot.lane.b32.xlu0 %v2313, 64
        %v4175 = vpop.permute.xlu0 %4174
        %4176 = vrot.lane.b32.xlu0 %v2316, 64
        %v4177 = vpop.permute.xlu0 %4176
        %4178 = vrot.lane.b32.xlu0 %v2318, 64
        %v4179 = vpop.permute.xlu0 %4178
        %4180 = vrot.lane.b32.xlu0 %v2321, 64
        %v4181 = vpop.permute.xlu0 %4180
        %4182 = vrot.lane.b32.xlu0 %v2323, 64
        %v4183 = vpop.permute.xlu0 %4182
        %4192 = vrot.lane.b32.xlu0 %v2306, 32
        %v4193 = vpop.permute.xlu0 %4192
        %4194 = vrot.lane.b32.xlu0 %v2308, 32
        %v4195 = vpop.permute.xlu0 %4194
        %4196 = vrot.lane.b32.xlu0 %v2311, 32
        %v4197 = vpop.permute.xlu0 %4196
        %4198 = vrot.lane.b32.xlu0 %v2313, 32
        %v4199 = vpop.permute.xlu0 %4198
        %4200 = vrot.lane.b32.xlu0 %v2316, 32
        %v4201 = vpop.permute.xlu0 %4200
        %4202 = vrot.lane.b32.xlu0 %v2318, 32
        %v4203 = vpop.permute.xlu0 %4202
        %4204 = vrot.lane.b32.xlu0 %v2321, 32
        %v4205 = vpop.permute.xlu0 %4204
        %4206 = vrot.lane.b32.xlu0 %v2323, 32
        %v4207 = vpop.permute.xlu0 %4206
        %v4216 = vpack.c.bf16 %v2306, %v2306
        %v4217 = vpack.c.bf16 %v2308, %v2308
        %v4218 = vpack.c.bf16 %v2311, %v2311
        %v4219 = vpack.c.bf16 %v2313, %v2313
        %v4220 = vpack.c.bf16 %v2316, %v2316
        %v4221 = vpack.c.bf16 %v2318, %v2318
        %v4222 = vpack.c.bf16 %v2321, %v2321
        %v4223 = vpack.c.bf16 %v2323, %v2323
        %v4224 = vpack.c.bf16 %v4145, %v4145
        %v4225 = vpack.c.bf16 %v4147, %v4147
        %v4226 = vpack.c.bf16 %v4149, %v4149
        %v4227 = vpack.c.bf16 %v4151, %v4151
        %v4228 = vpack.c.bf16 %v4153, %v4153
        %v4229 = vpack.c.bf16 %v4155, %v4155
        %v4230 = vpack.c.bf16 %v4157, %v4157
        %v4231 = vpack.c.bf16 %v4159, %v4159
        %v4232 = vpack.c.bf16 %v4169, %v4169
        %v4233 = vpack.c.bf16 %v4171, %v4171
        %v4234 = vpack.c.bf16 %v4173, %v4173
        %v4235 = vpack.c.bf16 %v4175, %v4175
        %v4236 = vpack.c.bf16 %v4177, %v4177
        %v4237 = vpack.c.bf16 %v4179, %v4179
        %v4238 = vpack.c.bf16 %v4181, %v4181
        %v4239 = vpack.c.bf16 %v4183, %v4183
        %v4240 = vpack.c.bf16 %v4193, %v4193
        %v4241 = vpack.c.bf16 %v4195, %v4195
        %v4242 = vpack.c.bf16 %v4197, %v4197
        %v4243 = vpack.c.bf16 %v4199, %v4199
        %v4244 = vpack.c.bf16 %v4201, %v4201
        %v4245 = vpack.c.bf16 %v4203, %v4203
        %v4246 = vpack.c.bf16 %v4205, %v4205
        %v4247 = vpack.c.bf16 %v4207, %v4207
        %v4256 = vunpack.c.l.b16 %v3992
        %v4257 = vunpack.c.l.b16 %v3993
        %v4258 = vunpack.c.l.b16 %v3994
        %v4259 = vunpack.c.l.b16 %v3995
        %v4260 = vunpack.c.l.b16 %v3996
        %v4261 = vunpack.c.l.b16 %v3997
        %v4262 = vunpack.c.l.b16 %v3998
        %v4263 = vunpack.c.l.b16 %v3999
        %v4264 = vpack.c.b16 %v4257, %v4256
        %v4265 = vpack.c.b16 %v4259, %v4258
        %v4266 = vpack.c.b16 %v4261, %v4260
        %v4267 = vpack.c.b16 %v4263, %v4262
        %v4276 = vunpack.c.l.b16 %v4104
        %v4277 = vunpack.c.l.b16 %v4105
        %v4278 = vunpack.c.l.b16 %v4106
        %v4279 = vunpack.c.l.b16 %v4107
        %v4280 = vunpack.c.l.b16 %v4108
        %v4281 = vunpack.c.l.b16 %v4109
        %v4282 = vunpack.c.l.b16 %v4110
        %v4283 = vunpack.c.l.b16 %v4111
        %v4284 = vpack.c.b16 %v4277, %v4276
        %v4285 = vpack.c.b16 %v4279, %v4278
        %v4286 = vpack.c.b16 %v4281, %v4280
        %v4287 = vpack.c.b16 %v4283, %v4282
        %v4289 = vsel %vm2701, %v4264, 0
        %v4292 = vsel %vm2701, %v4265, 0
        %v4295 = vsel %vm2701, %v4266, 0
        %v4298 = vsel %vm2701, %v4267, 0
        %v4301 = vsel %vm2701, %v4284, 0
        %v4304 = vsel %vm2701, %v4285, 0
        %v4307 = vsel %vm2701, %v4286, 0
        %v4310 = vsel %vm2701, %v4287, 0
        %4312 = vmatpush.bf16.xpose.msra.mxu0 0
        %4313 = vmatpush.bf16.xpose.msra.mxu0 0
        %4314 = vmatpush.bf16.xpose.msra.mxu0 0
        %4315 = vmatpush.bf16.xpose.msra.mxu0 0
        %4316 = vmatpush.bf16.xpose.msra.mxu0 %v4310
        %4317 = vmatpush.bf16.xpose.msra.mxu0 %v4307
        %4318 = vmatpush.bf16.xpose.msra.mxu0 %v4304
        %4319 = vmatpush.bf16.xpose.msra.mxu0 %v4301
        %4320 = vmatmul.bf16.gmra.mxu0 %v4289
        %v4321 = vpop.f32.mrf.mxu0
        %v4322 = vadd.f32 0.0, %v4321
        %v4323 = vpop.f32.mrf.mxu0
        %v4324 = vadd.f32 0.0, %v4323
        %4325 = vmatmul.bf16.gmra.mxu0 %v4292
        %v4326 = vpop.f32.mrf.mxu0
        %v4327 = vadd.f32 0.0, %v4326
        %v4328 = vpop.f32.mrf.mxu0
        %v4329 = vadd.f32 0.0, %v4328
        %4330 = vmatmul.bf16.gmra.mxu0 %v4295
        %v4331 = vpop.f32.mrf.mxu0
        %v4332 = vadd.f32 0.0, %v4331
        %v4333 = vpop.f32.mrf.mxu0
        %v4334 = vadd.f32 0.0, %v4333
        %4335 = vmatmul.bf16.gmra.mxu0 %v4298
        %v4336 = vpop.f32.mrf.mxu0
        %v4337 = vadd.f32 0.0, %v4336
        %v4338 = vpop.f32.mrf.mxu0
        %v4339 = vadd.f32 0.0, %v4338
        %4340 = vdwg.mxu0
        %v4349 = vunpack.c.l.b16 %v4000
        %v4350 = vunpack.c.l.b16 %v4001
        %v4351 = vunpack.c.l.b16 %v4002
        %v4352 = vunpack.c.l.b16 %v4003
        %v4353 = vunpack.c.l.b16 %v4004
        %v4354 = vunpack.c.l.b16 %v4005
        %v4355 = vunpack.c.l.b16 %v4006
        %v4356 = vunpack.c.l.b16 %v4007
        %v4357 = vpack.c.b16 %v4350, %v4349
        %v4358 = vpack.c.b16 %v4352, %v4351
        %v4359 = vpack.c.b16 %v4354, %v4353
        %v4360 = vpack.c.b16 %v4356, %v4355
        %v4369 = vunpack.c.l.b16 %v4112
        %v4370 = vunpack.c.l.b16 %v4113
        %v4371 = vunpack.c.l.b16 %v4114
        %v4372 = vunpack.c.l.b16 %v4115
        %v4373 = vunpack.c.l.b16 %v4116
        %v4374 = vunpack.c.l.b16 %v4117
        %v4375 = vunpack.c.l.b16 %v4118
        %v4376 = vunpack.c.l.b16 %v4119
        %v4377 = vpack.c.b16 %v4370, %v4369
        %v4378 = vpack.c.b16 %v4372, %v4371
        %v4379 = vpack.c.b16 %v4374, %v4373
        %v4380 = vpack.c.b16 %v4376, %v4375
        %v4382 = vsel %vm2701, %v4357, 0
        %v4385 = vsel %vm2701, %v4358, 0
        %v4388 = vsel %vm2701, %v4359, 0
        %v4391 = vsel %vm2701, %v4360, 0
        %v4394 = vsel %vm2701, %v4377, 0
        %v4397 = vsel %vm2701, %v4378, 0
        %v4400 = vsel %vm2701, %v4379, 0
        %v4403 = vsel %vm2701, %v4380, 0
        %4405 = vmatpush.bf16.xpose.msra.mxu0 0
        %4406 = vmatpush.bf16.xpose.msra.mxu0 0
        %4407 = vmatpush.bf16.xpose.msra.mxu0 0
        %4408 = vmatpush.bf16.xpose.msra.mxu0 0
        %4409 = vmatpush.bf16.xpose.msra.mxu0 %v4403
        %4410 = vmatpush.bf16.xpose.msra.mxu0 %v4400
        %4411 = vmatpush.bf16.xpose.msra.mxu0 %v4397
        %4412 = vmatpush.bf16.xpose.msra.mxu0 %v4394
        %4413 = vmatmul.bf16.gmra.mxu0 %v4382
        %v4414 = vpop.f32.mrf.mxu0
        %v4415 = vadd.f32 0.0, %v4414
        %v4416 = vpop.f32.mrf.mxu0
        %v4417 = vadd.f32 0.0, %v4416
        %4418 = vmatmul.bf16.gmra.mxu0 %v4385
        %v4419 = vpop.f32.mrf.mxu0
        %v4420 = vadd.f32 0.0, %v4419
        %v4421 = vpop.f32.mrf.mxu0
        %v4422 = vadd.f32 0.0, %v4421
        %4423 = vmatmul.bf16.gmra.mxu0 %v4388
        %v4424 = vpop.f32.mrf.mxu0
        %v4425 = vadd.f32 0.0, %v4424
        %v4426 = vpop.f32.mrf.mxu0
        %v4427 = vadd.f32 0.0, %v4426
        %4428 = vmatmul.bf16.gmra.mxu0 %v4391
        %v4429 = vpop.f32.mrf.mxu0
        %v4430 = vadd.f32 0.0, %v4429
        %v4431 = vpop.f32.mrf.mxu0
        %v4432 = vadd.f32 0.0, %v4431
        %4433 = vdwg.mxu0
        %v4442 = vunpack.c.l.b16 %v4008
        %v4443 = vunpack.c.l.b16 %v4009
        %v4444 = vunpack.c.l.b16 %v4010
        %v4445 = vunpack.c.l.b16 %v4011
        %v4446 = vunpack.c.l.b16 %v4012
        %v4447 = vunpack.c.l.b16 %v4013
        %v4448 = vunpack.c.l.b16 %v4014
        %v4449 = vunpack.c.l.b16 %v4015
        %v4450 = vpack.c.b16 %v4443, %v4442
        %v4451 = vpack.c.b16 %v4445, %v4444
        %v4452 = vpack.c.b16 %v4447, %v4446
        %v4453 = vpack.c.b16 %v4449, %v4448
        %v4462 = vunpack.c.l.b16 %v4120
        %v4463 = vunpack.c.l.b16 %v4121
        %v4464 = vunpack.c.l.b16 %v4122
        %v4465 = vunpack.c.l.b16 %v4123
        %v4466 = vunpack.c.l.b16 %v4124
        %v4467 = vunpack.c.l.b16 %v4125
        %v4468 = vunpack.c.l.b16 %v4126
        %v4469 = vunpack.c.l.b16 %v4127
        %v4470 = vpack.c.b16 %v4463, %v4462
        %v4471 = vpack.c.b16 %v4465, %v4464
        %v4472 = vpack.c.b16 %v4467, %v4466
        %v4473 = vpack.c.b16 %v4469, %v4468
        %v4475 = vsel %vm2701, %v4450, 0
        %v4478 = vsel %vm2701, %v4451, 0
        %v4481 = vsel %vm2701, %v4452, 0
        %v4484 = vsel %vm2701, %v4453, 0
        %v4487 = vsel %vm2701, %v4470, 0
        %v4490 = vsel %vm2701, %v4471, 0
        %v4493 = vsel %vm2701, %v4472, 0
        %v4496 = vsel %vm2701, %v4473, 0
        %4498 = vmatpush.bf16.xpose.msra.mxu0 0
        %4499 = vmatpush.bf16.xpose.msra.mxu0 0
        %4500 = vmatpush.bf16.xpose.msra.mxu0 0
        %4501 = vmatpush.bf16.xpose.msra.mxu0 0
        %4502 = vmatpush.bf16.xpose.msra.mxu0 %v4496
        %4503 = vmatpush.bf16.xpose.msra.mxu0 %v4493
        %4504 = vmatpush.bf16.xpose.msra.mxu0 %v4490
        %4505 = vmatpush.bf16.xpose.msra.mxu0 %v4487
        %4506 = vmatmul.bf16.gmra.mxu0 %v4475
        %v4507 = vpop.f32.mrf.mxu0
        %v4508 = vadd.f32 0.0, %v4507
        %v4509 = vpop.f32.mrf.mxu0
        %v4510 = vadd.f32 0.0, %v4509
        %4511 = vmatmul.bf16.gmra.mxu0 %v4478
        %v4512 = vpop.f32.mrf.mxu0
        %v4513 = vadd.f32 0.0, %v4512
        %v4514 = vpop.f32.mrf.mxu0
        %v4515 = vadd.f32 0.0, %v4514
        %4516 = vmatmul.bf16.gmra.mxu0 %v4481
        %v4517 = vpop.f32.mrf.mxu0
        %v4518 = vadd.f32 0.0, %v4517
        %v4519 = vpop.f32.mrf.mxu0
        %v4520 = vadd.f32 0.0, %v4519
        %4521 = vmatmul.bf16.gmra.mxu0 %v4484
        %v4522 = vpop.f32.mrf.mxu0
        %v4523 = vadd.f32 0.0, %v4522
        %v4524 = vpop.f32.mrf.mxu0
        %v4525 = vadd.f32 0.0, %v4524
        %4526 = vdwg.mxu0
        %v4535 = vunpack.c.l.b16 %v4016
        %v4536 = vunpack.c.l.b16 %v4017
        %v4537 = vunpack.c.l.b16 %v4018
        %v4538 = vunpack.c.l.b16 %v4019
        %v4539 = vunpack.c.l.b16 %v4020
        %v4540 = vunpack.c.l.b16 %v4021
        %v4541 = vunpack.c.l.b16 %v4022
        %v4542 = vunpack.c.l.b16 %v4023
        %v4543 = vpack.c.b16 %v4536, %v4535
        %v4544 = vpack.c.b16 %v4538, %v4537
        %v4545 = vpack.c.b16 %v4540, %v4539
        %v4546 = vpack.c.b16 %v4542, %v4541
        %v4555 = vunpack.c.l.b16 %v4128
        %v4556 = vunpack.c.l.b16 %v4129
        %v4557 = vunpack.c.l.b16 %v4130
        %v4558 = vunpack.c.l.b16 %v4131
        %v4559 = vunpack.c.l.b16 %v4132
        %v4560 = vunpack.c.l.b16 %v4133
        %v4561 = vunpack.c.l.b16 %v4134
        %v4562 = vunpack.c.l.b16 %v4135
        %v4563 = vpack.c.b16 %v4556, %v4555
        %v4564 = vpack.c.b16 %v4558, %v4557
        %v4565 = vpack.c.b16 %v4560, %v4559
        %v4566 = vpack.c.b16 %v4562, %v4561
        %v4568 = vsel %vm2701, %v4543, 0
        %v4571 = vsel %vm2701, %v4544, 0
        %v4574 = vsel %vm2701, %v4545, 0
        %v4577 = vsel %vm2701, %v4546, 0
        %v4580 = vsel %vm2701, %v4563, 0
        %v4583 = vsel %vm2701, %v4564, 0
        %v4586 = vsel %vm2701, %v4565, 0
        %v4589 = vsel %vm2701, %v4566, 0
        %4591 = vmatpush.bf16.xpose.msra.mxu0 0
        %4592 = vmatpush.bf16.xpose.msra.mxu0 0
        %4593 = vmatpush.bf16.xpose.msra.mxu0 0
        %4594 = vmatpush.bf16.xpose.msra.mxu0 0
        %4595 = vmatpush.bf16.xpose.msra.mxu0 %v4589
        %4596 = vmatpush.bf16.xpose.msra.mxu0 %v4586
        %4597 = vmatpush.bf16.xpose.msra.mxu0 %v4583
        %4598 = vmatpush.bf16.xpose.msra.mxu0 %v4580
        %4599 = vmatmul.bf16.gmra.mxu0 %v4568
        %v4600 = vpop.f32.mrf.mxu0
        %v4601 = vadd.f32 0.0, %v4600
        %v4602 = vpop.f32.mrf.mxu0
        %v4603 = vadd.f32 0.0, %v4602
        %4604 = vmatmul.bf16.gmra.mxu0 %v4571
        %v4605 = vpop.f32.mrf.mxu0
        %v4606 = vadd.f32 0.0, %v4605
        %v4607 = vpop.f32.mrf.mxu0
        %v4608 = vadd.f32 0.0, %v4607
        %4609 = vmatmul.bf16.gmra.mxu0 %v4574
        %v4610 = vpop.f32.mrf.mxu0
        %v4611 = vadd.f32 0.0, %v4610
        %v4612 = vpop.f32.mrf.mxu0
        %v4613 = vadd.f32 0.0, %v4612
        %4614 = vmatmul.bf16.gmra.mxu0 %v4577
        %v4615 = vpop.f32.mrf.mxu0
        %v4616 = vadd.f32 0.0, %v4615
        %v4617 = vpop.f32.mrf.mxu0
        %v4618 = vadd.f32 0.0, %v4617
        %4619 = vdwg.mxu0
        %v4620 = vmul.f32 %v4322, 0.17677669
        %v4621 = vmul.f32 %v4324, 0.17677669
        %v4622 = vmul.f32 %v4327, 0.17677669
        %v4623 = vmul.f32 %v4329, 0.17677669
        %v4624 = vmul.f32 %v4332, 0.17677669
        %v4625 = vmul.f32 %v4334, 0.17677669
        %v4626 = vmul.f32 %v4337, 0.17677669
        %v4627 = vmul.f32 %v4339, 0.17677669
        %v4628 = vmul.f32 %v4415, 0.17677669
        %v4629 = vmul.f32 %v4417, 0.17677669
        %v4630 = vmul.f32 %v4420, 0.17677669
        %v4631 = vmul.f32 %v4422, 0.17677669
        %v4632 = vmul.f32 %v4425, 0.17677669
        %v4633 = vmul.f32 %v4427, 0.17677669
        %v4634 = vmul.f32 %v4430, 0.17677669
        %v4635 = vmul.f32 %v4432, 0.17677669
        %v4636 = vmul.f32 %v4508, 0.17677669
        %v4637 = vmul.f32 %v4510, 0.17677669
        %v4638 = vmul.f32 %v4513, 0.17677669
        %v4639 = vmul.f32 %v4515, 0.17677669
        %v4640 = vmul.f32 %v4518, 0.17677669
        %v4641 = vmul.f32 %v4520, 0.17677669
        %v4642 = vmul.f32 %v4523, 0.17677669
        %v4643 = vmul.f32 %v4525, 0.17677669
        %v4644 = vmul.f32 %v4601, 0.17677669
        %v4645 = vmul.f32 %v4603, 0.17677669
        %v4646 = vmul.f32 %v4606, 0.17677669
        %v4647 = vmul.f32 %v4608, 0.17677669
        %v4648 = vmul.f32 %v4611, 0.17677669
        %v4649 = vmul.f32 %v4613, 0.17677669
        %v4650 = vmul.f32 %v4616, 0.17677669
        %v4651 = vmul.f32 %v4618, 0.17677669
        %v4652 = vsel %vm3066, %v4620, -inf
        %4653 = vmax.xlane.f32.xlu0 %v4652
        %v4654 = vpop.xlane.xlu0 %4653
        %v4655 = vsel %vm3066, %v4621, -inf
        %4656 = vmax.xlane.f32.xlu0 %v4655
        %v4657 = vpop.xlane.xlu0 %4656
        %v4658 = vsel %vm3066, %v4622, -inf
        %4659 = vmax.xlane.f32.xlu0 %v4658
        %v4660 = vpop.xlane.xlu0 %4659
        %v4661 = vsel %vm3066, %v4623, -inf
        %4662 = vmax.xlane.f32.xlu0 %v4661
        %v4663 = vpop.xlane.xlu0 %4662
        %v4664 = vsel %vm3066, %v4624, -inf
        %4665 = vmax.xlane.f32.xlu0 %v4664
        %v4666 = vpop.xlane.xlu0 %4665
        %v4667 = vsel %vm3066, %v4625, -inf
        %4668 = vmax.xlane.f32.xlu0 %v4667
        %v4669 = vpop.xlane.xlu0 %4668
        %v4670 = vsel %vm3066, %v4626, -inf
        %4671 = vmax.xlane.f32.xlu0 %v4670
        %v4672 = vpop.xlane.xlu0 %4671
        %v4673 = vsel %vm3066, %v4627, -inf
        %4674 = vmax.xlane.f32.xlu0 %v4673
        %v4675 = vpop.xlane.xlu0 %4674
        %v4676 = vsel %vm3066, %v4628, -inf
        %4677 = vmax.xlane.f32.xlu0 %v4676
        %v4678 = vpop.xlane.xlu0 %4677
        %v4679 = vsel %vm3066, %v4629, -inf
        %4680 = vmax.xlane.f32.xlu0 %v4679
        %v4681 = vpop.xlane.xlu0 %4680
        %v4682 = vsel %vm3066, %v4630, -inf
        %4683 = vmax.xlane.f32.xlu0 %v4682
        %v4684 = vpop.xlane.xlu0 %4683
        %v4685 = vsel %vm3066, %v4631, -inf
        %4686 = vmax.xlane.f32.xlu0 %v4685
        %v4687 = vpop.xlane.xlu0 %4686
        %v4688 = vsel %vm3066, %v4632, -inf
        %4689 = vmax.xlane.f32.xlu0 %v4688
        %v4690 = vpop.xlane.xlu0 %4689
        %v4691 = vsel %vm3066, %v4633, -inf
        %4692 = vmax.xlane.f32.xlu0 %v4691
        %v4693 = vpop.xlane.xlu0 %4692
        %v4694 = vsel %vm3066, %v4634, -inf
        %4695 = vmax.xlane.f32.xlu0 %v4694
        %v4696 = vpop.xlane.xlu0 %4695
        %v4697 = vsel %vm3066, %v4635, -inf
        %4698 = vmax.xlane.f32.xlu0 %v4697
        %v4699 = vpop.xlane.xlu0 %4698
        %v4700 = vsel %vm3066, %v4636, -inf
        %4701 = vmax.xlane.f32.xlu0 %v4700
        %v4702 = vpop.xlane.xlu0 %4701
        %v4703 = vsel %vm3066, %v4637, -inf
        %4704 = vmax.xlane.f32.xlu0 %v4703
        %v4705 = vpop.xlane.xlu0 %4704
        %v4706 = vsel %vm3066, %v4638, -inf
        %4707 = vmax.xlane.f32.xlu0 %v4706
        %v4708 = vpop.xlane.xlu0 %4707
        %v4709 = vsel %vm3066, %v4639, -inf
        %4710 = vmax.xlane.f32.xlu0 %v4709
        %v4711 = vpop.xlane.xlu0 %4710
        %v4712 = vsel %vm3066, %v4640, -inf
        %4713 = vmax.xlane.f32.xlu0 %v4712
        %v4714 = vpop.xlane.xlu0 %4713
        %v4715 = vsel %vm3066, %v4641, -inf
        %4716 = vmax.xlane.f32.xlu0 %v4715
        %v4717 = vpop.xlane.xlu0 %4716
        %v4718 = vsel %vm3066, %v4642, -inf
        %4719 = vmax.xlane.f32.xlu0 %v4718
        %v4720 = vpop.xlane.xlu0 %4719
        %v4721 = vsel %vm3066, %v4643, -inf
        %4722 = vmax.xlane.f32.xlu0 %v4721
        %v4723 = vpop.xlane.xlu0 %4722
        %v4724 = vsel %vm3066, %v4644, -inf
        %4725 = vmax.xlane.f32.xlu0 %v4724
        %v4726 = vpop.xlane.xlu0 %4725
        %v4727 = vsel %vm3066, %v4645, -inf
        %4728 = vmax.xlane.f32.xlu0 %v4727
        %v4729 = vpop.xlane.xlu0 %4728
        %v4730 = vsel %vm3066, %v4646, -inf
        %4731 = vmax.xlane.f32.xlu0 %v4730
        %v4732 = vpop.xlane.xlu0 %4731
        %v4733 = vsel %vm3066, %v4647, -inf
        %4734 = vmax.xlane.f32.xlu0 %v4733
        %v4735 = vpop.xlane.xlu0 %4734
        %v4736 = vsel %vm3066, %v4648, -inf
        %4737 = vmax.xlane.f32.xlu0 %v4736
        %v4738 = vpop.xlane.xlu0 %4737
        %v4739 = vsel %vm3066, %v4649, -inf
        %4740 = vmax.xlane.f32.xlu0 %v4739
        %v4741 = vpop.xlane.xlu0 %4740
        %v4742 = vsel %vm3066, %v4650, -inf
        %4743 = vmax.xlane.f32.xlu0 %v4742
        %v4744 = vpop.xlane.xlu0 %4743
        %v4745 = vsel %vm3066, %v4651, -inf
        %4746 = vmax.xlane.f32.xlu0 %v4745
        %v4747 = vpop.xlane.xlu0 %4746
        %v4748 = vsub.f32 %v4620, %v4654
        %v4749 = vsub.f32 %v4621, %v4657
        %v4750 = vsub.f32 %v4622, %v4660
        %v4751 = vsub.f32 %v4623, %v4663
        %v4752 = vsub.f32 %v4624, %v4666
        %v4753 = vsub.f32 %v4625, %v4669
        %v4754 = vsub.f32 %v4626, %v4672
        %v4755 = vsub.f32 %v4627, %v4675
        %v4756 = vsub.f32 %v4628, %v4678
        %v4757 = vsub.f32 %v4629, %v4681
        %v4758 = vsub.f32 %v4630, %v4684
        %v4759 = vsub.f32 %v4631, %v4687
        %v4760 = vsub.f32 %v4632, %v4690
        %v4761 = vsub.f32 %v4633, %v4693
        %v4762 = vsub.f32 %v4634, %v4696
        %v4763 = vsub.f32 %v4635, %v4699
        %v4764 = vsub.f32 %v4636, %v4702
        %v4765 = vsub.f32 %v4637, %v4705
        %v4766 = vsub.f32 %v4638, %v4708
        %v4767 = vsub.f32 %v4639, %v4711
        %v4768 = vsub.f32 %v4640, %v4714
        %v4769 = vsub.f32 %v4641, %v4717
        %v4770 = vsub.f32 %v4642, %v4720
        %v4771 = vsub.f32 %v4643, %v4723
        %v4772 = vsub.f32 %v4644, %v4726
        %v4773 = vsub.f32 %v4645, %v4729
        %v4774 = vsub.f32 %v4646, %v4732
        %v4775 = vsub.f32 %v4647, %v4735
        %v4776 = vsub.f32 %v4648, %v4738
        %v4777 = vsub.f32 %v4649, %v4741
        %v4778 = vsub.f32 %v4650, %v4744
        %v4779 = vsub.f32 %v4651, %v4747
        %v4780 = vmul.f32 %v4748, 1.442695
        %v4781 = vpow.pop %v4780
        %v4782 = vmul.f32 %v4749, 1.442695
        %v4783 = vpow.pop %v4782
        %v4784 = vmul.f32 %v4750, 1.442695
        %v4785 = vpow.pop %v4784
        %v4786 = vmul.f32 %v4751, 1.442695
        %v4787 = vpow.pop %v4786
        %v4788 = vmul.f32 %v4752, 1.442695
        %v4789 = vpow.pop %v4788
        %v4790 = vmul.f32 %v4753, 1.442695
        %v4791 = vpow.pop %v4790
        %v4792 = vmul.f32 %v4754, 1.442695
        %v4793 = vpow.pop %v4792
        %v4794 = vmul.f32 %v4755, 1.442695
        %v4795 = vpow.pop %v4794
        %v4796 = vmul.f32 %v4756, 1.442695
        %v4797 = vpow.pop %v4796
        %v4798 = vmul.f32 %v4757, 1.442695
        %v4799 = vpow.pop %v4798
        %v4800 = vmul.f32 %v4758, 1.442695
        %v4801 = vpow.pop %v4800
        %v4802 = vmul.f32 %v4759, 1.442695
        %v4803 = vpow.pop %v4802
        %v4804 = vmul.f32 %v4760, 1.442695
        %v4805 = vpow.pop %v4804
        %v4806 = vmul.f32 %v4761, 1.442695
        %v4807 = vpow.pop %v4806
        %v4808 = vmul.f32 %v4762, 1.442695
        %v4809 = vpow.pop %v4808
        %v4810 = vmul.f32 %v4763, 1.442695
        %v4811 = vpow.pop %v4810
        %v4812 = vmul.f32 %v4764, 1.442695
        %v4813 = vpow.pop %v4812
        %v4814 = vmul.f32 %v4765, 1.442695
        %v4815 = vpow.pop %v4814
        %v4816 = vmul.f32 %v4766, 1.442695
        %v4817 = vpow.pop %v4816
        %v4818 = vmul.f32 %v4767, 1.442695
        %v4819 = vpow.pop %v4818
        %v4820 = vmul.f32 %v4768, 1.442695
        %v4821 = vpow.pop %v4820
        %v4822 = vmul.f32 %v4769, 1.442695
        %v4823 = vpow.pop %v4822
        %v4824 = vmul.f32 %v4770, 1.442695
        %v4825 = vpow.pop %v4824
        %v4826 = vmul.f32 %v4771, 1.442695
        %v4827 = vpow.pop %v4826
        %v4828 = vmul.f32 %v4772, 1.442695
        %v4829 = vpow.pop %v4828
        %v4830 = vmul.f32 %v4773, 1.442695
        %v4831 = vpow.pop %v4830
        %v4832 = vmul.f32 %v4774, 1.442695
        %v4833 = vpow.pop %v4832
        %v4834 = vmul.f32 %v4775, 1.442695
        %v4835 = vpow.pop %v4834
        %v4836 = vmul.f32 %v4776, 1.442695
        %v4837 = vpow.pop %v4836
        %v4838 = vmul.f32 %v4777, 1.442695
        %v4839 = vpow.pop %v4838
        %v4840 = vmul.f32 %v4778, 1.442695
        %v4841 = vpow.pop %v4840
        %v4842 = vmul.f32 %v4779, 1.442695
        %v4843 = vpow.pop %v4842
        %v4844 = vsel %vm3066, %v4781, 0.0
        %4845 = vadd.xlane.f32.xlu0 %v4844
        %v4846 = vpop.xlane.xlu0 %4845
        %v4847 = vsel %vm3066, %v4783, 0.0
        %4848 = vadd.xlane.f32.xlu0 %v4847
        %v4849 = vpop.xlane.xlu0 %4848
        %v4850 = vsel %vm3066, %v4785, 0.0
        %4851 = vadd.xlane.f32.xlu0 %v4850
        %v4852 = vpop.xlane.xlu0 %4851
        %v4853 = vsel %vm3066, %v4787, 0.0
        %4854 = vadd.xlane.f32.xlu0 %v4853
        %v4855 = vpop.xlane.xlu0 %4854
        %v4856 = vsel %vm3066, %v4789, 0.0
        %4857 = vadd.xlane.f32.xlu0 %v4856
        %v4858 = vpop.xlane.xlu0 %4857
        %v4859 = vsel %vm3066, %v4791, 0.0
        %4860 = vadd.xlane.f32.xlu0 %v4859
        %v4861 = vpop.xlane.xlu0 %4860
        %v4862 = vsel %vm3066, %v4793, 0.0
        %4863 = vadd.xlane.f32.xlu0 %v4862
        %v4864 = vpop.xlane.xlu0 %4863
        %v4865 = vsel %vm3066, %v4795, 0.0
        %4866 = vadd.xlane.f32.xlu0 %v4865
        %v4867 = vpop.xlane.xlu0 %4866
        %v4868 = vsel %vm3066, %v4797, 0.0
        %4869 = vadd.xlane.f32.xlu0 %v4868
        %v4870 = vpop.xlane.xlu0 %4869
        %v4871 = vsel %vm3066, %v4799, 0.0
        %4872 = vadd.xlane.f32.xlu0 %v4871
        %v4873 = vpop.xlane.xlu0 %4872
        %v4874 = vsel %vm3066, %v4801, 0.0
        %4875 = vadd.xlane.f32.xlu0 %v4874
        %v4876 = vpop.xlane.xlu0 %4875
        %v4877 = vsel %vm3066, %v4803, 0.0
        %4878 = vadd.xlane.f32.xlu0 %v4877
        %v4879 = vpop.xlane.xlu0 %4878
        %v4880 = vsel %vm3066, %v4805, 0.0
        %4881 = vadd.xlane.f32.xlu0 %v4880
        %v4882 = vpop.xlane.xlu0 %4881
        %v4883 = vsel %vm3066, %v4807, 0.0
        %4884 = vadd.xlane.f32.xlu0 %v4883
        %v4885 = vpop.xlane.xlu0 %4884
        %v4886 = vsel %vm3066, %v4809, 0.0
        %4887 = vadd.xlane.f32.xlu0 %v4886
        %v4888 = vpop.xlane.xlu0 %4887
        %v4889 = vsel %vm3066, %v4811, 0.0
        %4890 = vadd.xlane.f32.xlu0 %v4889
        %v4891 = vpop.xlane.xlu0 %4890
        %v4892 = vsel %vm3066, %v4813, 0.0
        %4893 = vadd.xlane.f32.xlu0 %v4892
        %v4894 = vpop.xlane.xlu0 %4893
        %v4895 = vsel %vm3066, %v4815, 0.0
        %4896 = vadd.xlane.f32.xlu0 %v4895
        %v4897 = vpop.xlane.xlu0 %4896
        %v4898 = vsel %vm3066, %v4817, 0.0
        %4899 = vadd.xlane.f32.xlu0 %v4898
        %v4900 = vpop.xlane.xlu0 %4899
        %v4901 = vsel %vm3066, %v4819, 0.0
        %4902 = vadd.xlane.f32.xlu0 %v4901
        %v4903 = vpop.xlane.xlu0 %4902
        %v4904 = vsel %vm3066, %v4821, 0.0
        %4905 = vadd.xlane.f32.xlu0 %v4904
        %v4906 = vpop.xlane.xlu0 %4905
        %v4907 = vsel %vm3066, %v4823, 0.0
        %4908 = vadd.xlane.f32.xlu0 %v4907
        %v4909 = vpop.xlane.xlu0 %4908
        %v4910 = vsel %vm3066, %v4825, 0.0
        %4911 = vadd.xlane.f32.xlu0 %v4910
        %v4912 = vpop.xlane.xlu0 %4911
        %v4913 = vsel %vm3066, %v4827, 0.0
        %4914 = vadd.xlane.f32.xlu0 %v4913
        %v4915 = vpop.xlane.xlu0 %4914
        %v4916 = vsel %vm3066, %v4829, 0.0
        %4917 = vadd.xlane.f32.xlu0 %v4916
        %v4918 = vpop.xlane.xlu0 %4917
        %v4919 = vsel %vm3066, %v4831, 0.0
        %4920 = vadd.xlane.f32.xlu0 %v4919
        %v4921 = vpop.xlane.xlu0 %4920
        %v4922 = vsel %vm3066, %v4833, 0.0
        %4923 = vadd.xlane.f32.xlu0 %v4922
        %v4924 = vpop.xlane.xlu0 %4923
        %v4925 = vsel %vm3066, %v4835, 0.0
        %4926 = vadd.xlane.f32.xlu0 %v4925
        %v4927 = vpop.xlane.xlu0 %4926
        %v4928 = vsel %vm3066, %v4837, 0.0
        %4929 = vadd.xlane.f32.xlu0 %v4928
        %v4930 = vpop.xlane.xlu0 %4929
        %v4931 = vsel %vm3066, %v4839, 0.0
        %4932 = vadd.xlane.f32.xlu0 %v4931
        %v4933 = vpop.xlane.xlu0 %4932
        %v4934 = vsel %vm3066, %v4841, 0.0
        %4935 = vadd.xlane.f32.xlu0 %v4934
        %v4936 = vpop.xlane.xlu0 %4935
        %v4937 = vsel %vm3066, %v4843, 0.0
        %4938 = vadd.xlane.f32.xlu0 %v4937
        %v4939 = vpop.xlane.xlu0 %4938
        %v4940 = vrcp.pop %v4846
        %v4941 = vrcp.pop %v4849
        %v4942 = vrcp.pop %v4852
        %v4943 = vrcp.pop %v4855
        %v4944 = vrcp.pop %v4858
        %v4945 = vrcp.pop %v4861
        %v4946 = vrcp.pop %v4864
        %v4947 = vrcp.pop %v4867
        %v4948 = vrcp.pop %v4870
        %v4949 = vrcp.pop %v4873
        %v4950 = vrcp.pop %v4876
        %v4951 = vrcp.pop %v4879
        %v4952 = vrcp.pop %v4882
        %v4953 = vrcp.pop %v4885
        %v4954 = vrcp.pop %v4888
        %v4955 = vrcp.pop %v4891
        %v4956 = vrcp.pop %v4894
        %v4957 = vrcp.pop %v4897
        %v4958 = vrcp.pop %v4900
        %v4959 = vrcp.pop %v4903
        %v4960 = vrcp.pop %v4906
        %v4961 = vrcp.pop %v4909
        %v4962 = vrcp.pop %v4912
        %v4963 = vrcp.pop %v4915
        %v4964 = vrcp.pop %v4918
        %v4965 = vrcp.pop %v4921
        %v4966 = vrcp.pop %v4924
        %v4967 = vrcp.pop %v4927
        %v4968 = vrcp.pop %v4930
        %v4969 = vrcp.pop %v4933
        %v4970 = vrcp.pop %v4936
        %v4971 = vrcp.pop %v4939
        %v4972 = vmul.f32 %v4781, %v4940
        %v4973 = vmul.f32 %v4783, %v4941
        %v4974 = vmul.f32 %v4785, %v4942
        %v4975 = vmul.f32 %v4787, %v4943
        %v4976 = vmul.f32 %v4789, %v4944
        %v4977 = vmul.f32 %v4791, %v4945
        %v4978 = vmul.f32 %v4793, %v4946
        %v4979 = vmul.f32 %v4795, %v4947
        %v4980 = vmul.f32 %v4797, %v4948
        %v4981 = vmul.f32 %v4799, %v4949
        %v4982 = vmul.f32 %v4801, %v4950
        %v4983 = vmul.f32 %v4803, %v4951
        %v4984 = vmul.f32 %v4805, %v4952
        %v4985 = vmul.f32 %v4807, %v4953
        %v4986 = vmul.f32 %v4809, %v4954
        %v4987 = vmul.f32 %v4811, %v4955
        %v4988 = vmul.f32 %v4813, %v4956
        %v4989 = vmul.f32 %v4815, %v4957
        %v4990 = vmul.f32 %v4817, %v4958
        %v4991 = vmul.f32 %v4819, %v4959
        %v4992 = vmul.f32 %v4821, %v4960
        %v4993 = vmul.f32 %v4823, %v4961
        %v4994 = vmul.f32 %v4825, %v4962
        %v4995 = vmul.f32 %v4827, %v4963
        %v4996 = vmul.f32 %v4829, %v4964
        %v4997 = vmul.f32 %v4831, %v4965
        %v4998 = vmul.f32 %v4833, %v4966
        %v4999 = vmul.f32 %v4835, %v4967
        %v5000 = vmul.f32 %v4837, %v4968
        %v5001 = vmul.f32 %v4839, %v4969
        %v5002 = vmul.f32 %v4841, %v4970
        %v5003 = vmul.f32 %v4843, %v4971
        %v5004 = vpack.c.bf16 %v4972, %v4972
        %v5005 = vpack.c.bf16 %v4973, %v4973
        %v5006 = vpack.c.bf16 %v4974, %v4974
        %v5007 = vpack.c.bf16 %v4975, %v4975
        %v5008 = vpack.c.bf16 %v4976, %v4976
        %v5009 = vpack.c.bf16 %v4977, %v4977
        %v5010 = vpack.c.bf16 %v4978, %v4978
        %v5011 = vpack.c.bf16 %v4979, %v4979
        %v5012 = vpack.c.bf16 %v4980, %v4980
        %v5013 = vpack.c.bf16 %v4981, %v4981
        %v5014 = vpack.c.bf16 %v4982, %v4982
        %v5015 = vpack.c.bf16 %v4983, %v4983
        %v5016 = vpack.c.bf16 %v4984, %v4984
        %v5017 = vpack.c.bf16 %v4985, %v4985
        %v5018 = vpack.c.bf16 %v4986, %v4986
        %v5019 = vpack.c.bf16 %v4987, %v4987
        %v5020 = vpack.c.bf16 %v4988, %v4988
        %v5021 = vpack.c.bf16 %v4989, %v4989
        %v5022 = vpack.c.bf16 %v4990, %v4990
        %v5023 = vpack.c.bf16 %v4991, %v4991
        %v5024 = vpack.c.bf16 %v4992, %v4992
        %v5025 = vpack.c.bf16 %v4993, %v4993
        %v5026 = vpack.c.bf16 %v4994, %v4994
        %v5027 = vpack.c.bf16 %v4995, %v4995
        %v5028 = vpack.c.bf16 %v4996, %v4996
        %v5029 = vpack.c.bf16 %v4997, %v4997
        %v5030 = vpack.c.bf16 %v4998, %v4998
        %v5031 = vpack.c.bf16 %v4999, %v4999
        %v5032 = vpack.c.bf16 %v5000, %v5000
        %v5033 = vpack.c.bf16 %v5001, %v5001
        %v5034 = vpack.c.bf16 %v5002, %v5002
        %v5035 = vpack.c.bf16 %v5003, %v5003
        %v5044 = vunpack.c.l.b16 %v5004
        %v5045 = vunpack.c.l.b16 %v5005
        %v5046 = vunpack.c.l.b16 %v5006
        %v5047 = vunpack.c.l.b16 %v5007
        %v5048 = vunpack.c.l.b16 %v5008
        %v5049 = vunpack.c.l.b16 %v5009
        %v5050 = vunpack.c.l.b16 %v5010
        %v5051 = vunpack.c.l.b16 %v5011
        %v5052 = vpack.c.b16 %v5045, %v5044
        %v5053 = vpack.c.b16 %v5047, %v5046
        %v5054 = vpack.c.b16 %v5049, %v5048
        %v5055 = vpack.c.b16 %v5051, %v5050
        %v5064 = vunpack.c.l.b16 %v4216
        %v5065 = vunpack.c.l.b16 %v4217
        %v5066 = vunpack.c.l.b16 %v4218
        %v5067 = vunpack.c.l.b16 %v4219
        %v5068 = vunpack.c.l.b16 %v4220
        %v5069 = vunpack.c.l.b16 %v4221
        %v5070 = vunpack.c.l.b16 %v4222
        %v5071 = vunpack.c.l.b16 %v4223
        %v5072 = vpack.c.b16 %v5065, %v5064
        %v5073 = vpack.c.b16 %v5067, %v5066
        %v5074 = vpack.c.b16 %v5069, %v5068
        %v5075 = vpack.c.b16 %v5071, %v5070
        %v5081 = vsel %vm3066, %v5052, 0
        %v5084 = vsel %vm3066, %v5053, 0
        %v5087 = vsel %vm3066, %v5054, 0
        %v5090 = vsel %vm3066, %v5055, 0
        %5092 = vmatpush.bf16.msra.mxu0 0
        %5093 = vmatpush.bf16.msra.mxu0 0
        %5094 = vmatpush.bf16.msra.mxu0 0
        %5095 = vmatpush.bf16.msra.mxu0 0
        %5096 = vmatpush.bf16.msra.mxu0 %v5075
        %5097 = vmatpush.bf16.msra.mxu0 %v5074
        %5098 = vmatpush.bf16.msra.mxu0 %v5073
        %5099 = vmatpush.bf16.msra.mxu0 %v5072
        %5100 = vmatmul.bf16.gmra.mxu0 %v5081
        %v5101 = vpop.f32.mrf.mxu0
        %v5102 = vadd.f32 0.0, %v5101
        %v5103 = vpop.f32.mrf.mxu0
        %v5104 = vadd.f32 0.0, %v5103
        %5105 = vmatmul.bf16.gmra.mxu0 %v5084
        %v5106 = vpop.f32.mrf.mxu0
        %v5107 = vadd.f32 0.0, %v5106
        %v5108 = vpop.f32.mrf.mxu0
        %v5109 = vadd.f32 0.0, %v5108
        %5110 = vmatmul.bf16.gmra.mxu0 %v5087
        %v5111 = vpop.f32.mrf.mxu0
        %v5112 = vadd.f32 0.0, %v5111
        %v5113 = vpop.f32.mrf.mxu0
        %v5114 = vadd.f32 0.0, %v5113
        %5115 = vmatmul.bf16.gmra.mxu0 %v5090
        %v5116 = vpop.f32.mrf.mxu0
        %v5117 = vadd.f32 0.0, %v5116
        %v5118 = vpop.f32.mrf.mxu0
        %v5119 = vadd.f32 0.0, %v5118
        %5120 = vdwg.mxu0
        %v5129 = vunpack.c.l.b16 %v5012
        %v5130 = vunpack.c.l.b16 %v5013
        %v5131 = vunpack.c.l.b16 %v5014
        %v5132 = vunpack.c.l.b16 %v5015
        %v5133 = vunpack.c.l.b16 %v5016
        %v5134 = vunpack.c.l.b16 %v5017
        %v5135 = vunpack.c.l.b16 %v5018
        %v5136 = vunpack.c.l.b16 %v5019
        %v5137 = vpack.c.b16 %v5130, %v5129
        %v5138 = vpack.c.b16 %v5132, %v5131
        %v5139 = vpack.c.b16 %v5134, %v5133
        %v5140 = vpack.c.b16 %v5136, %v5135
        %v5149 = vunpack.c.l.b16 %v4224
        %v5150 = vunpack.c.l.b16 %v4225
        %v5151 = vunpack.c.l.b16 %v4226
        %v5152 = vunpack.c.l.b16 %v4227
        %v5153 = vunpack.c.l.b16 %v4228
        %v5154 = vunpack.c.l.b16 %v4229
        %v5155 = vunpack.c.l.b16 %v4230
        %v5156 = vunpack.c.l.b16 %v4231
        %v5157 = vpack.c.b16 %v5150, %v5149
        %v5158 = vpack.c.b16 %v5152, %v5151
        %v5159 = vpack.c.b16 %v5154, %v5153
        %v5160 = vpack.c.b16 %v5156, %v5155
        %v5166 = vsel %vm3066, %v5137, 0
        %v5169 = vsel %vm3066, %v5138, 0
        %v5172 = vsel %vm3066, %v5139, 0
        %v5175 = vsel %vm3066, %v5140, 0
        %5177 = vmatpush.bf16.msra.mxu0 0
        %5178 = vmatpush.bf16.msra.mxu0 0
        %5179 = vmatpush.bf16.msra.mxu0 0
        %5180 = vmatpush.bf16.msra.mxu0 0
        %5181 = vmatpush.bf16.msra.mxu0 %v5160
        %5182 = vmatpush.bf16.msra.mxu0 %v5159
        %5183 = vmatpush.bf16.msra.mxu0 %v5158
        %5184 = vmatpush.bf16.msra.mxu0 %v5157
        %5185 = vmatmul.bf16.gmra.mxu0 %v5166
        %v5186 = vpop.f32.mrf.mxu0
        %v5187 = vadd.f32 0.0, %v5186
        %v5188 = vpop.f32.mrf.mxu0
        %v5189 = vadd.f32 0.0, %v5188
        %5190 = vmatmul.bf16.gmra.mxu0 %v5169
        %v5191 = vpop.f32.mrf.mxu0
        %v5192 = vadd.f32 0.0, %v5191
        %v5193 = vpop.f32.mrf.mxu0
        %v5194 = vadd.f32 0.0, %v5193
        %5195 = vmatmul.bf16.gmra.mxu0 %v5172
        %v5196 = vpop.f32.mrf.mxu0
        %v5197 = vadd.f32 0.0, %v5196
        %v5198 = vpop.f32.mrf.mxu0
        %v5199 = vadd.f32 0.0, %v5198
        %5200 = vmatmul.bf16.gmra.mxu0 %v5175
        %v5201 = vpop.f32.mrf.mxu0
        %v5202 = vadd.f32 0.0, %v5201
        %v5203 = vpop.f32.mrf.mxu0
        %v5204 = vadd.f32 0.0, %v5203
        %5205 = vdwg.mxu0
        %v5214 = vunpack.c.l.b16 %v5020
        %v5215 = vunpack.c.l.b16 %v5021
        %v5216 = vunpack.c.l.b16 %v5022
        %v5217 = vunpack.c.l.b16 %v5023
        %v5218 = vunpack.c.l.b16 %v5024
        %v5219 = vunpack.c.l.b16 %v5025
        %v5220 = vunpack.c.l.b16 %v5026
        %v5221 = vunpack.c.l.b16 %v5027
        %v5222 = vpack.c.b16 %v5215, %v5214
        %v5223 = vpack.c.b16 %v5217, %v5216
        %v5224 = vpack.c.b16 %v5219, %v5218
        %v5225 = vpack.c.b16 %v5221, %v5220
        %v5234 = vunpack.c.l.b16 %v4232
        %v5235 = vunpack.c.l.b16 %v4233
        %v5236 = vunpack.c.l.b16 %v4234
        %v5237 = vunpack.c.l.b16 %v4235
        %v5238 = vunpack.c.l.b16 %v4236
        %v5239 = vunpack.c.l.b16 %v4237
        %v5240 = vunpack.c.l.b16 %v4238
        %v5241 = vunpack.c.l.b16 %v4239
        %v5242 = vpack.c.b16 %v5235, %v5234
        %v5243 = vpack.c.b16 %v5237, %v5236
        %v5244 = vpack.c.b16 %v5239, %v5238
        %v5245 = vpack.c.b16 %v5241, %v5240
        %v5251 = vsel %vm3066, %v5222, 0
        %v5254 = vsel %vm3066, %v5223, 0
        %v5257 = vsel %vm3066, %v5224, 0
        %v5260 = vsel %vm3066, %v5225, 0
        %5262 = vmatpush.bf16.msra.mxu0 0
        %5263 = vmatpush.bf16.msra.mxu0 0
        %5264 = vmatpush.bf16.msra.mxu0 0
        %5265 = vmatpush.bf16.msra.mxu0 0
        %5266 = vmatpush.bf16.msra.mxu0 %v5245
        %5267 = vmatpush.bf16.msra.mxu0 %v5244
        %5268 = vmatpush.bf16.msra.mxu0 %v5243
        %5269 = vmatpush.bf16.msra.mxu0 %v5242
        %5270 = vmatmul.bf16.gmra.mxu0 %v5251
        %v5271 = vpop.f32.mrf.mxu0
        %v5272 = vadd.f32 0.0, %v5271
        %v5273 = vpop.f32.mrf.mxu0
        %v5274 = vadd.f32 0.0, %v5273
        %5275 = vmatmul.bf16.gmra.mxu0 %v5254
        %v5276 = vpop.f32.mrf.mxu0
        %v5277 = vadd.f32 0.0, %v5276
        %v5278 = vpop.f32.mrf.mxu0
        %v5279 = vadd.f32 0.0, %v5278
        %5280 = vmatmul.bf16.gmra.mxu0 %v5257
        %v5281 = vpop.f32.mrf.mxu0
        %v5282 = vadd.f32 0.0, %v5281
        %v5283 = vpop.f32.mrf.mxu0
        %v5284 = vadd.f32 0.0, %v5283
        %5285 = vmatmul.bf16.gmra.mxu0 %v5260
        %v5286 = vpop.f32.mrf.mxu0
        %v5287 = vadd.f32 0.0, %v5286
        %v5288 = vpop.f32.mrf.mxu0
        %v5289 = vadd.f32 0.0, %v5288
        %5290 = vdwg.mxu0
        %v5299 = vunpack.c.l.b16 %v5028
        %v5300 = vunpack.c.l.b16 %v5029
        %v5301 = vunpack.c.l.b16 %v5030
        %v5302 = vunpack.c.l.b16 %v5031
        %v5303 = vunpack.c.l.b16 %v5032
        %v5304 = vunpack.c.l.b16 %v5033
        %v5305 = vunpack.c.l.b16 %v5034
        %v5306 = vunpack.c.l.b16 %v5035
        %v5307 = vpack.c.b16 %v5300, %v5299
        %v5308 = vpack.c.b16 %v5302, %v5301
        %v5309 = vpack.c.b16 %v5304, %v5303
        %v5310 = vpack.c.b16 %v5306, %v5305
        %v5319 = vunpack.c.l.b16 %v4240
        %v5320 = vunpack.c.l.b16 %v4241
        %v5321 = vunpack.c.l.b16 %v4242
        %v5322 = vunpack.c.l.b16 %v4243
        %v5323 = vunpack.c.l.b16 %v4244
        %v5324 = vunpack.c.l.b16 %v4245
        %v5325 = vunpack.c.l.b16 %v4246
        %v5326 = vunpack.c.l.b16 %v4247
        %v5327 = vpack.c.b16 %v5320, %v5319
        %v5328 = vpack.c.b16 %v5322, %v5321
        %v5329 = vpack.c.b16 %v5324, %v5323
        %v5330 = vpack.c.b16 %v5326, %v5325
        %v5336 = vsel %vm3066, %v5307, 0
        %v5339 = vsel %vm3066, %v5308, 0
        %v5342 = vsel %vm3066, %v5309, 0
        %v5345 = vsel %vm3066, %v5310, 0
        %5347 = vmatpush.bf16.msra.mxu0 0
        %5348 = vmatpush.bf16.msra.mxu0 0
        %5349 = vmatpush.bf16.msra.mxu0 0
        %5350 = vmatpush.bf16.msra.mxu0 0
        %5351 = vmatpush.bf16.msra.mxu0 %v5330
        %5352 = vmatpush.bf16.msra.mxu0 %v5329
        %5353 = vmatpush.bf16.msra.mxu0 %v5328
        %5354 = vmatpush.bf16.msra.mxu0 %v5327
        %5355 = vmatmul.bf16.gmra.mxu0 %v5336
        %v5356 = vpop.f32.mrf.mxu0
        %v5357 = vadd.f32 0.0, %v5356
        %v5358 = vpop.f32.mrf.mxu0
        %v5359 = vadd.f32 0.0, %v5358
        %5360 = vmatmul.bf16.gmra.mxu0 %v5339
        %v5361 = vpop.f32.mrf.mxu0
        %v5362 = vadd.f32 0.0, %v5361
        %v5363 = vpop.f32.mrf.mxu0
        %v5364 = vadd.f32 0.0, %v5363
        %5365 = vmatmul.bf16.gmra.mxu0 %v5342
        %v5366 = vpop.f32.mrf.mxu0
        %v5367 = vadd.f32 0.0, %v5366
        %v5368 = vpop.f32.mrf.mxu0
        %v5369 = vadd.f32 0.0, %v5368
        %5370 = vmatmul.bf16.gmra.mxu0 %v5345
        %v5371 = vpop.f32.mrf.mxu0
        %v5372 = vadd.f32 0.0, %v5371
        %v5373 = vpop.f32.mrf.mxu0
        %v5374 = vadd.f32 0.0, %v5373
        %5375 = vdwg.mxu0
        %5384 = vrot.lane.b32.xlu0 %v5187, 32
        %v5385 = vpop.permute.xlu0 %5384
        %5386 = vrot.lane.b32.xlu0 %v5189, 32
        %v5387 = vpop.permute.xlu0 %5386
        %5388 = vrot.lane.b32.xlu0 %v5192, 32
        %v5389 = vpop.permute.xlu0 %5388
        %5390 = vrot.lane.b32.xlu0 %v5194, 32
        %v5391 = vpop.permute.xlu0 %5390
        %5392 = vrot.lane.b32.xlu0 %v5197, 32
        %v5393 = vpop.permute.xlu0 %5392
        %5394 = vrot.lane.b32.xlu0 %v5199, 32
        %v5395 = vpop.permute.xlu0 %5394
        %5396 = vrot.lane.b32.xlu0 %v5202, 32
        %v5397 = vpop.permute.xlu0 %5396
        %5398 = vrot.lane.b32.xlu0 %v5204, 32
        %v5399 = vpop.permute.xlu0 %5398
        %5416 = vrot.lane.b32.xlu0 %v5272, 64
        %v5417 = vpop.permute.xlu0 %5416
        %5418 = vrot.lane.b32.xlu0 %v5274, 64
        %v5419 = vpop.permute.xlu0 %5418
        %5420 = vrot.lane.b32.xlu0 %v5277, 64
        %v5421 = vpop.permute.xlu0 %5420
        %5422 = vrot.lane.b32.xlu0 %v5279, 64
        %v5423 = vpop.permute.xlu0 %5422
        %5424 = vrot.lane.b32.xlu0 %v5282, 64
        %v5425 = vpop.permute.xlu0 %5424
        %5426 = vrot.lane.b32.xlu0 %v5284, 64
        %v5427 = vpop.permute.xlu0 %5426
        %5428 = vrot.lane.b32.xlu0 %v5287, 64
        %v5429 = vpop.permute.xlu0 %5428
        %5430 = vrot.lane.b32.xlu0 %v5289, 64
        %v5431 = vpop.permute.xlu0 %5430
        %5448 = vrot.lane.b32.xlu0 %v5357, 96
        %v5449 = vpop.permute.xlu0 %5448
        %5450 = vrot.lane.b32.xlu0 %v5359, 96
        %v5451 = vpop.permute.xlu0 %5450
        %5452 = vrot.lane.b32.xlu0 %v5362, 96
        %v5453 = vpop.permute.xlu0 %5452
        %5454 = vrot.lane.b32.xlu0 %v5364, 96
        %v5455 = vpop.permute.xlu0 %5454
        %5456 = vrot.lane.b32.xlu0 %v5367, 96
        %v5457 = vpop.permute.xlu0 %5456
        %5458 = vrot.lane.b32.xlu0 %v5369, 96
        %v5459 = vpop.permute.xlu0 %5458
        %5460 = vrot.lane.b32.xlu0 %v5372, 96
        %v5461 = vpop.permute.xlu0 %5460
        %5462 = vrot.lane.b32.xlu0 %v5374, 96
        %v5463 = vpop.permute.xlu0 %5462
        %v5472 = vsel %vm2701, %v5102, %v5385
        %v5473 = vsel %vm2701, %v5104, %v5387
        %v5474 = vsel %vm2701, %v5107, %v5389
        %v5475 = vsel %vm2701, %v5109, %v5391
        %v5476 = vsel %vm2701, %v5112, %v5393
        %v5477 = vsel %vm2701, %v5114, %v5395
        %v5478 = vsel %vm2701, %v5117, %v5397
        %v5479 = vsel %vm2701, %v5119, %v5399
        %v5480 = vsel %vm3066, %v5472, %v5417
        %v5481 = vsel %vm3066, %v5473, %v5419
        %v5482 = vsel %vm3066, %v5474, %v5421
        %v5483 = vsel %vm3066, %v5475, %v5423
        %v5484 = vsel %vm3066, %v5476, %v5425
        %v5485 = vsel %vm3066, %v5477, %v5427
        %v5486 = vsel %vm3066, %v5478, %v5429
        %v5487 = vsel %vm3066, %v5479, %v5431
        %v5488 = vsel %vm3903, %v5480, %v5449
        %v5489 = vsel %vm3903, %v5481, %v5451
        %v5490 = vsel %vm3903, %v5482, %v5453
        %v5491 = vsel %vm3903, %v5483, %v5455
        %v5492 = vsel %vm3903, %v5484, %v5457
        %v5493 = vsel %vm3903, %v5485, %v5459
        %v5494 = vsel %vm3903, %v5486, %v5461
        %v5495 = vsel %vm3903, %v5487, %v5463
        %v5496 = vpack.c.bf16 %v3905, %v3904
        %v5497 = vpack.c.bf16 %v3907, %v3906
        %v5498 = vpack.c.bf16 %v3909, %v3908
        %v5499 = vpack.c.bf16 %v3911, %v3910
        %v5500 = vpack.c.bf16 %v5489, %v5488
        %v5501 = vpack.c.bf16 %v5491, %v5490
        %v5502 = vpack.c.bf16 %v5493, %v5492
        %v5503 = vpack.c.bf16 %v5495, %v5494
        %v5504 = vld [vmem:[%s1104] sm:$0xf]
        %v5505 = vld [vmem:[%s1104 + $0x4] sm:$0xf]
        %v5506 = vld [vmem:[%s1104 + $0x8] sm:$0xf]
        %v5507 = vld [vmem:[%s1104 + $0xc] sm:$0xf]
        %v5508 = vld [vmem:[%s1104 + $0x10] sm:$0xf]
        %v5509 = vld [vmem:[%s1104 + $0x14] sm:$0xf]
        %v5510 = vld [vmem:[%s1104 + $0x18] sm:$0xf]
        %v5511 = vld [vmem:[%s1104 + $0x1c] sm:$0xf]
        %v5512 = vld [vmem:[%s1104 + $0x20] sm:$0xf]
        %v5513 = vld [vmem:[%s1104 + $0x24] sm:$0xf]
        %v5514 = vld [vmem:[%s1104 + $0x28] sm:$0xf]
        %v5515 = vld [vmem:[%s1104 + $0x2c] sm:$0xf]
        %v5516 = vld [vmem:[%s1104 + $0x30] sm:$0xf]
        %v5517 = vld [vmem:[%s1104 + $0x34] sm:$0xf]
        %v5518 = vld [vmem:[%s1104 + $0x38] sm:$0xf]
        %v5519 = vld [vmem:[%s1104 + $0x3c] sm:$0xf]
        %v5520 = vld [vmem:[%s1107] sm:$0x1]
        %v5522 = vperm.slane %v5520, 0
        %v5540 = vunpack.c.l.b16 %v5504
        %v5541 = vunpack.c.l.b16 %v5505
        %v5542 = vunpack.c.l.b16 %v5506
        %v5543 = vunpack.c.l.b16 %v5507
        %v5544 = vunpack.c.l.b16 %v5508
        %v5545 = vunpack.c.l.b16 %v5509
        %v5546 = vunpack.c.l.b16 %v5510
        %v5547 = vunpack.c.l.b16 %v5511
        %v5548 = vunpack.c.l.b16 %v5512
        %v5549 = vunpack.c.l.b16 %v5513
        %v5550 = vunpack.c.l.b16 %v5514
        %v5551 = vunpack.c.l.b16 %v5515
        %v5552 = vunpack.c.l.b16 %v5516
        %v5553 = vunpack.c.l.b16 %v5517
        %v5554 = vunpack.c.l.b16 %v5518
        %v5555 = vunpack.c.l.b16 %v5519
        %v5556 = vpack.c.b16 %v5541, %v5540
        %v5557 = vpack.c.b16 %v5543, %v5542
        %v5558 = vpack.c.b16 %v5545, %v5544
        %v5559 = vpack.c.b16 %v5547, %v5546
        %v5560 = vpack.c.b16 %v5549, %v5548
        %v5561 = vpack.c.b16 %v5551, %v5550
        %v5562 = vpack.c.b16 %v5553, %v5552
        %v5563 = vpack.c.b16 %v5555, %v5554
        %5572 = vmatpush.bf16.msra.mxu0 %v5563
        %5573 = vmatpush.bf16.msra.mxu0 %v5562
        %5574 = vmatpush.bf16.msra.mxu0 %v5561
        %5575 = vmatpush.bf16.msra.mxu0 %v5560
        %5576 = vmatpush.bf16.msra.mxu0 %v5559
        %5577 = vmatpush.bf16.msra.mxu0 %v5558
        %5578 = vmatpush.bf16.msra.mxu0 %v5557
        %5579 = vmatpush.bf16.msra.mxu0 %v5556
        %5580 = vmatmul.bf16.gmra.mxu0 %v5496
        %v5581 = vpop.f32.mrf.mxu0
        %v5582 = vadd.f32 %v5522, %v5581
        %v5583 = vpop.f32.mrf.mxu0
        %v5584 = vadd.f32 %v5522, %v5583
        %5585 = vmatmul.bf16.gmra.mxu0 %v5497
        %v5586 = vpop.f32.mrf.mxu0
        %v5587 = vadd.f32 %v5522, %v5586
        %v5588 = vpop.f32.mrf.mxu0
        %v5589 = vadd.f32 %v5522, %v5588
        %5590 = vmatmul.bf16.gmra.mxu0 %v5498
        %v5591 = vpop.f32.mrf.mxu0
        %v5592 = vadd.f32 %v5522, %v5591
        %v5593 = vpop.f32.mrf.mxu0
        %v5594 = vadd.f32 %v5522, %v5593
        %5595 = vmatmul.bf16.gmra.mxu0 %v5499
        %v5596 = vpop.f32.mrf.mxu0
        %v5597 = vadd.f32 %v5522, %v5596
        %v5598 = vpop.f32.mrf.mxu0
        %v5599 = vadd.f32 %v5522, %v5598
        %5600 = vmatmul.bf16.gmra.mxu0 %v5500
        %v5601 = vpop.f32.mrf.mxu0
        %v5602 = vadd.f32 %v5522, %v5601
        %v5603 = vpop.f32.mrf.mxu0
        %v5604 = vadd.f32 %v5522, %v5603
        %5605 = vmatmul.bf16.gmra.mxu0 %v5501
        %v5606 = vpop.f32.mrf.mxu0
        %v5607 = vadd.f32 %v5522, %v5606
        %v5608 = vpop.f32.mrf.mxu0
        %v5609 = vadd.f32 %v5522, %v5608
        %5610 = vmatmul.bf16.gmra.mxu0 %v5502
        %v5611 = vpop.f32.mrf.mxu0
        %v5612 = vadd.f32 %v5522, %v5611
        %v5613 = vpop.f32.mrf.mxu0
        %v5614 = vadd.f32 %v5522, %v5613
        %5615 = vmatmul.bf16.gmra.mxu0 %v5503
        %v5616 = vpop.f32.mrf.mxu0
        %v5617 = vadd.f32 %v5522, %v5616
        %v5618 = vpop.f32.mrf.mxu0
        %v5619 = vadd.f32 %v5522, %v5618
        %5620 = vdwg.mxu0
        %v5621 = vadd.f32 %v1986, %v5582
        %v5622 = vadd.f32 %v1987, %v5584
        %v5623 = vadd.f32 %v1988, %v5587
        %v5624 = vadd.f32 %v1989, %v5589
        %v5625 = vadd.f32 %v1990, %v5592
        %v5626 = vadd.f32 %v1991, %v5594
        %v5627 = vadd.f32 %v1992, %v5597
        %v5628 = vadd.f32 %v1993, %v5599
        %v5629 = vadd.f32 %v1994, %v5602
        %v5630 = vadd.f32 %v1995, %v5604
        %v5631 = vadd.f32 %v1996, %v5607
        %v5632 = vadd.f32 %v1997, %v5609
        %v5633 = vadd.f32 %v1998, %v5612
        %v5634 = vadd.f32 %v1999, %v5614
        %v5635 = vadd.f32 %v2000, %v5617
        %v5636 = vadd.f32 %v2001, %v5619
        %v5637 = vld [vmem:[%s1110] sm:$0x1]
        %v5638 = vld [vmem:[%s948] sm:$0x1]
        %5639 = vadd.xlane.f32.xlu0 %v5621
        %v5640 = vpop.xlane.xlu0 %5639
        %5641 = vadd.xlane.f32.xlu0 %v5622
        %v5642 = vpop.xlane.xlu0 %5641
        %5643 = vadd.xlane.f32.xlu0 %v5623
        %v5644 = vpop.xlane.xlu0 %5643
        %5645 = vadd.xlane.f32.xlu0 %v5624
        %v5646 = vpop.xlane.xlu0 %5645
        %5647 = vadd.xlane.f32.xlu0 %v5625
        %v5648 = vpop.xlane.xlu0 %5647
        %5649 = vadd.xlane.f32.xlu0 %v5626
        %v5650 = vpop.xlane.xlu0 %5649
        %5651 = vadd.xlane.f32.xlu0 %v5627
        %v5652 = vpop.xlane.xlu0 %5651
        %5653 = vadd.xlane.f32.xlu0 %v5628
        %v5654 = vpop.xlane.xlu0 %5653
        %5655 = vadd.xlane.f32.xlu0 %v5629
        %v5656 = vpop.xlane.xlu0 %5655
        %5657 = vadd.xlane.f32.xlu0 %v5630
        %v5658 = vpop.xlane.xlu0 %5657
        %5659 = vadd.xlane.f32.xlu0 %v5631
        %v5660 = vpop.xlane.xlu0 %5659
        %5661 = vadd.xlane.f32.xlu0 %v5632
        %v5662 = vpop.xlane.xlu0 %5661
        %5663 = vadd.xlane.f32.xlu0 %v5633
        %v5664 = vpop.xlane.xlu0 %5663
        %5665 = vadd.xlane.f32.xlu0 %v5634
        %v5666 = vpop.xlane.xlu0 %5665
        %5667 = vadd.xlane.f32.xlu0 %v5635
        %v5668 = vpop.xlane.xlu0 %5667
        %5669 = vadd.xlane.f32.xlu0 %v5636
        %v5670 = vpop.xlane.xlu0 %5669
        %v5671 = vrcp.pop 128.0
        %v5672 = vmul.f32 128.0, %v5671
        %v5673 = vsub.f32 1.0, %v5672
        %v5674 = vmul.f32 %v5671, %v5673
        %v5675 = vadd.f32 %v5671, %v5674
        %vm5676 = vweird.f32 %v5671
        %v5677 = vsel %vm5676, %v5671, %v5675
        %v5678 = vmul.f32 %v5640, %v5677
        %v5679 = vmul.f32 %v5642, %v5677
        %v5680 = vmul.f32 %v5644, %v5677
        %v5681 = vmul.f32 %v5646, %v5677
        %v5682 = vmul.f32 %v5648, %v5677
        %v5683 = vmul.f32 %v5650, %v5677
        %v5684 = vmul.f32 %v5652, %v5677
        %v5685 = vmul.f32 %v5654, %v5677
        %v5686 = vmul.f32 %v5656, %v5677
        %v5687 = vmul.f32 %v5658, %v5677
        %v5688 = vmul.f32 %v5660, %v5677
        %v5689 = vmul.f32 %v5662, %v5677
        %v5690 = vmul.f32 %v5664, %v5677
        %v5691 = vmul.f32 %v5666, %v5677
        %v5692 = vmul.f32 %v5668, %v5677
        %v5693 = vmul.f32 %v5670, %v5677
        %v5694 = vsub.f32 %v5621, %v5678
        %v5695 = vsub.f32 %v5622, %v5679
        %v5696 = vsub.f32 %v5623, %v5680
        %v5697 = vsub.f32 %v5624, %v5681
        %v5698 = vsub.f32 %v5625, %v5682
        %v5699 = vsub.f32 %v5626, %v5683
        %v5700 = vsub.f32 %v5627, %v5684
        %v5701 = vsub.f32 %v5628, %v5685
        %v5702 = vsub.f32 %v5629, %v5686
        %v5703 = vsub.f32 %v5630, %v5687
        %v5704 = vsub.f32 %v5631, %v5688
        %v5705 = vsub.f32 %v5632, %v5689
        %v5706 = vsub.f32 %v5633, %v5690
        %v5707 = vsub.f32 %v5634, %v5691
        %v5708 = vsub.f32 %v5635, %v5692
        %v5709 = vsub.f32 %v5636, %v5693
        %v5710 = vmul.f32 %v5694, %v5694
        %v5711 = vmul.f32 %v5695, %v5695
        %v5712 = vmul.f32 %v5696, %v5696
        %v5713 = vmul.f32 %v5697, %v5697
        %v5714 = vmul.f32 %v5698, %v5698
        %v5715 = vmul.f32 %v5699, %v5699
        %v5716 = vmul.f32 %v5700, %v5700
        %v5717 = vmul.f32 %v5701, %v5701
        %v5718 = vmul.f32 %v5702, %v5702
        %v5719 = vmul.f32 %v5703, %v5703
        %v5720 = vmul.f32 %v5704, %v5704
        %v5721 = vmul.f32 %v5705, %v5705
        %v5722 = vmul.f32 %v5706, %v5706
        %v5723 = vmul.f32 %v5707, %v5707
        %v5724 = vmul.f32 %v5708, %v5708
        %v5725 = vmul.f32 %v5709, %v5709
        %5726 = vadd.xlane.f32.xlu0 %v5710
        %v5727 = vpop.xlane.xlu0 %5726
        %5728 = vadd.xlane.f32.xlu0 %v5711
        %v5729 = vpop.xlane.xlu0 %5728
        %5730 = vadd.xlane.f32.xlu0 %v5712
        %v5731 = vpop.xlane.xlu0 %5730
        %5732 = vadd.xlane.f32.xlu0 %v5713
        %v5733 = vpop.xlane.xlu0 %5732
        %5734 = vadd.xlane.f32.xlu0 %v5714
        %v5735 = vpop.xlane.xlu0 %5734
        %5736 = vadd.xlane.f32.xlu0 %v5715
        %v5737 = vpop.xlane.xlu0 %5736
        %5738 = vadd.xlane.f32.xlu0 %v5716
        %v5739 = vpop.xlane.xlu0 %5738
        %5740 = vadd.xlane.f32.xlu0 %v5717
        %v5741 = vpop.xlane.xlu0 %5740
        %5742 = vadd.xlane.f32.xlu0 %v5718
        %v5743 = vpop.xlane.xlu0 %5742
        %5744 = vadd.xlane.f32.xlu0 %v5719
        %v5745 = vpop.xlane.xlu0 %5744
        %5746 = vadd.xlane.f32.xlu0 %v5720
        %v5747 = vpop.xlane.xlu0 %5746
        %5748 = vadd.xlane.f32.xlu0 %v5721
        %v5749 = vpop.xlane.xlu0 %5748
        %5750 = vadd.xlane.f32.xlu0 %v5722
        %v5751 = vpop.xlane.xlu0 %5750
        %5752 = vadd.xlane.f32.xlu0 %v5723
        %v5753 = vpop.xlane.xlu0 %5752
        %5754 = vadd.xlane.f32.xlu0 %v5724
        %v5755 = vpop.xlane.xlu0 %5754
        %5756 = vadd.xlane.f32.xlu0 %v5725
        %v5757 = vpop.xlane.xlu0 %5756
        %v5758 = vmul.f32 %v5727, %v5677
        %v5759 = vmul.f32 %v5729, %v5677
        %v5760 = vmul.f32 %v5731, %v5677
        %v5761 = vmul.f32 %v5733, %v5677
        %v5762 = vmul.f32 %v5735, %v5677
        %v5763 = vmul.f32 %v5737, %v5677
        %v5764 = vmul.f32 %v5739, %v5677
        %v5765 = vmul.f32 %v5741, %v5677
        %v5766 = vmul.f32 %v5743, %v5677
        %v5767 = vmul.f32 %v5745, %v5677
        %v5768 = vmul.f32 %v5747, %v5677
        %v5769 = vmul.f32 %v5749, %v5677
        %v5770 = vmul.f32 %v5751, %v5677
        %v5771 = vmul.f32 %v5753, %v5677
        %v5772 = vmul.f32 %v5755, %v5677
        %v5773 = vmul.f32 %v5757, %v5677
        %v5774 = vadd.f32 %v5758, 1e-05
        %v5775 = vadd.f32 %v5759, 1e-05
        %v5776 = vadd.f32 %v5760, 1e-05
        %v5777 = vadd.f32 %v5761, 1e-05
        %v5778 = vadd.f32 %v5762, 1e-05
        %v5779 = vadd.f32 %v5763, 1e-05
        %v5780 = vadd.f32 %v5764, 1e-05
        %v5781 = vadd.f32 %v5765, 1e-05
        %v5782 = vadd.f32 %v5766, 1e-05
        %v5783 = vadd.f32 %v5767, 1e-05
        %v5784 = vadd.f32 %v5768, 1e-05
        %v5785 = vadd.f32 %v5769, 1e-05
        %v5786 = vadd.f32 %v5770, 1e-05
        %v5787 = vadd.f32 %v5771, 1e-05
        %v5788 = vadd.f32 %v5772, 1e-05
        %v5789 = vadd.f32 %v5773, 1e-05
        %v5790 = vrsqrt.pop %v5774
        %v5791 = vmul.f32 %v5790, %v5774
        %v5792 = vmul.f32 %v5791, %v5790
        %v5793 = vmul.f32 0.5, %v5792
        %v5794 = vsub.f32 1.5, %v5793
        %v5795 = vmul.f32 %v5790, %v5794
        %vm5796 = vweird.f32 %v5774
        %vm5797 = vweird.f32 %v5790
        %vm5798 = vmor %vm5796, %vm5797
        %v5799 = vsel %vm5798, %v5790, %v5795
        %v5800 = vrsqrt.pop %v5775
        %v5801 = vmul.f32 %v5800, %v5775
        %v5802 = vmul.f32 %v5801, %v5800
        %v5803 = vmul.f32 0.5, %v5802
        %v5804 = vsub.f32 1.5, %v5803
        %v5805 = vmul.f32 %v5800, %v5804
        %vm5806 = vweird.f32 %v5775
        %vm5807 = vweird.f32 %v5800
        %vm5808 = vmor %vm5806, %vm5807
        %v5809 = vsel %vm5808, %v5800, %v5805
        %v5810 = vrsqrt.pop %v5776
        %v5811 = vmul.f32 %v5810, %v5776
        %v5812 = vmul.f32 %v5811, %v5810
        %v5813 = vmul.f32 0.5, %v5812
        %v5814 = vsub.f32 1.5, %v5813
        %v5815 = vmul.f32 %v5810, %v5814
        %vm5816 = vweird.f32 %v5776
        %vm5817 = vweird.f32 %v5810
        %vm5818 = vmor %vm5816, %vm5817
        %v5819 = vsel %vm5818, %v5810, %v5815
        %v5820 = vrsqrt.pop %v5777
        %v5821 = vmul.f32 %v5820, %v5777
        %v5822 = vmul.f32 %v5821, %v5820
        %v5823 = vmul.f32 0.5, %v5822
        %v5824 = vsub.f32 1.5, %v5823
        %v5825 = vmul.f32 %v5820, %v5824
        %vm5826 = vweird.f32 %v5777
        %vm5827 = vweird.f32 %v5820
        %vm5828 = vmor %vm5826, %vm5827
        %v5829 = vsel %vm5828, %v5820, %v5825
        %v5830 = vrsqrt.pop %v5778
        %v5831 = vmul.f32 %v5830, %v5778
        %v5832 = vmul.f32 %v5831, %v5830
        %v5833 = vmul.f32 0.5, %v5832
        %v5834 = vsub.f32 1.5, %v5833
        %v5835 = vmul.f32 %v5830, %v5834
        %vm5836 = vweird.f32 %v5778
        %vm5837 = vweird.f32 %v5830
        %vm5838 = vmor %vm5836, %vm5837
        %v5839 = vsel %vm5838, %v5830, %v5835
        %v5840 = vrsqrt.pop %v5779
        %v5841 = vmul.f32 %v5840, %v5779
        %v5842 = vmul.f32 %v5841, %v5840
        %v5843 = vmul.f32 0.5, %v5842
        %v5844 = vsub.f32 1.5, %v5843
        %v5845 = vmul.f32 %v5840, %v5844
        %vm5846 = vweird.f32 %v5779
        %vm5847 = vweird.f32 %v5840
        %vm5848 = vmor %vm5846, %vm5847
        %v5849 = vsel %vm5848, %v5840, %v5845
        %v5850 = vrsqrt.pop %v5780
        %v5851 = vmul.f32 %v5850, %v5780
        %v5852 = vmul.f32 %v5851, %v5850
        %v5853 = vmul.f32 0.5, %v5852
        %v5854 = vsub.f32 1.5, %v5853
        %v5855 = vmul.f32 %v5850, %v5854
        %vm5856 = vweird.f32 %v5780
        %vm5857 = vweird.f32 %v5850
        %vm5858 = vmor %vm5856, %vm5857
        %v5859 = vsel %vm5858, %v5850, %v5855
        %v5860 = vrsqrt.pop %v5781
        %v5861 = vmul.f32 %v5860, %v5781
        %v5862 = vmul.f32 %v5861, %v5860
        %v5863 = vmul.f32 0.5, %v5862
        %v5864 = vsub.f32 1.5, %v5863
        %v5865 = vmul.f32 %v5860, %v5864
        %vm5866 = vweird.f32 %v5781
        %vm5867 = vweird.f32 %v5860
        %vm5868 = vmor %vm5866, %vm5867
        %v5869 = vsel %vm5868, %v5860, %v5865
        %v5870 = vrsqrt.pop %v5782
        %v5871 = vmul.f32 %v5870, %v5782
        %v5872 = vmul.f32 %v5871, %v5870
        %v5873 = vmul.f32 0.5, %v5872
        %v5874 = vsub.f32 1.5, %v5873
        %v5875 = vmul.f32 %v5870, %v5874
        %vm5876 = vweird.f32 %v5782
        %vm5877 = vweird.f32 %v5870
        %vm5878 = vmor %vm5876, %vm5877
        %v5879 = vsel %vm5878, %v5870, %v5875
        %v5880 = vrsqrt.pop %v5783
        %v5881 = vmul.f32 %v5880, %v5783
        %v5882 = vmul.f32 %v5881, %v5880
        %v5883 = vmul.f32 0.5, %v5882
        %v5884 = vsub.f32 1.5, %v5883
        %v5885 = vmul.f32 %v5880, %v5884
        %vm5886 = vweird.f32 %v5783
        %vm5887 = vweird.f32 %v5880
        %vm5888 = vmor %vm5886, %vm5887
        %v5889 = vsel %vm5888, %v5880, %v5885
        %v5890 = vrsqrt.pop %v5784
        %v5891 = vmul.f32 %v5890, %v5784
        %v5892 = vmul.f32 %v5891, %v5890
        %v5893 = vmul.f32 0.5, %v5892
        %v5894 = vsub.f32 1.5, %v5893
        %v5895 = vmul.f32 %v5890, %v5894
        %vm5896 = vweird.f32 %v5784
        %vm5897 = vweird.f32 %v5890
        %vm5898 = vmor %vm5896, %vm5897
        %v5899 = vsel %vm5898, %v5890, %v5895
        %v5900 = vrsqrt.pop %v5785
        %v5901 = vmul.f32 %v5900, %v5785
        %v5902 = vmul.f32 %v5901, %v5900
        %v5903 = vmul.f32 0.5, %v5902
        %v5904 = vsub.f32 1.5, %v5903
        %v5905 = vmul.f32 %v5900, %v5904
        %vm5906 = vweird.f32 %v5785
        %vm5907 = vweird.f32 %v5900
        %vm5908 = vmor %vm5906, %vm5907
        %v5909 = vsel %vm5908, %v5900, %v5905
        %v5910 = vrsqrt.pop %v5786
        %v5911 = vmul.f32 %v5910, %v5786
        %v5912 = vmul.f32 %v5911, %v5910
        %v5913 = vmul.f32 0.5, %v5912
        %v5914 = vsub.f32 1.5, %v5913
        %v5915 = vmul.f32 %v5910, %v5914
        %vm5916 = vweird.f32 %v5786
        %vm5917 = vweird.f32 %v5910
        %vm5918 = vmor %vm5916, %vm5917
        %v5919 = vsel %vm5918, %v5910, %v5915
        %v5920 = vrsqrt.pop %v5787
        %v5921 = vmul.f32 %v5920, %v5787
        %v5922 = vmul.f32 %v5921, %v5920
        %v5923 = vmul.f32 0.5, %v5922
        %v5924 = vsub.f32 1.5, %v5923
        %v5925 = vmul.f32 %v5920, %v5924
        %vm5926 = vweird.f32 %v5787
        %vm5927 = vweird.f32 %v5920
        %vm5928 = vmor %vm5926, %vm5927
        %v5929 = vsel %vm5928, %v5920, %v5925
        %v5930 = vrsqrt.pop %v5788
        %v5931 = vmul.f32 %v5930, %v5788
        %v5932 = vmul.f32 %v5931, %v5930
        %v5933 = vmul.f32 0.5, %v5932
        %v5934 = vsub.f32 1.5, %v5933
        %v5935 = vmul.f32 %v5930, %v5934
        %vm5936 = vweird.f32 %v5788
        %vm5937 = vweird.f32 %v5930
        %vm5938 = vmor %vm5936, %vm5937
        %v5939 = vsel %vm5938, %v5930, %v5935
        %v5940 = vrsqrt.pop %v5789
        %v5941 = vmul.f32 %v5940, %v5789
        %v5942 = vmul.f32 %v5941, %v5940
        %v5943 = vmul.f32 0.5, %v5942
        %v5944 = vsub.f32 1.5, %v5943
        %v5945 = vmul.f32 %v5940, %v5944
        %vm5946 = vweird.f32 %v5789
        %vm5947 = vweird.f32 %v5940
        %vm5948 = vmor %vm5946, %vm5947
        %v5949 = vsel %vm5948, %v5940, %v5945
        %v5950 = vmul.f32 %v5694, %v5799
        %v5951 = vmul.f32 %v5695, %v5809
        %v5952 = vmul.f32 %v5696, %v5819
        %v5953 = vmul.f32 %v5697, %v5829
        %v5954 = vmul.f32 %v5698, %v5839
        %v5955 = vmul.f32 %v5699, %v5849
        %v5956 = vmul.f32 %v5700, %v5859
        %v5957 = vmul.f32 %v5701, %v5869
        %v5958 = vmul.f32 %v5702, %v5879
        %v5959 = vmul.f32 %v5703, %v5889
        %v5960 = vmul.f32 %v5704, %v5899
        %v5961 = vmul.f32 %v5705, %v5909
        %v5962 = vmul.f32 %v5706, %v5919
        %v5963 = vmul.f32 %v5707, %v5929
        %v5964 = vmul.f32 %v5708, %v5939
        %v5965 = vmul.f32 %v5709, %v5949
        %v5967 = vperm.slane %v5637, 0
        %v5969 = vmul.f32 %v5950, %v5967
        %v5970 = vmul.f32 %v5951, %v5967
        %v5971 = vmul.f32 %v5952, %v5967
        %v5972 = vmul.f32 %v5953, %v5967
        %v5973 = vmul.f32 %v5954, %v5967
        %v5974 = vmul.f32 %v5955, %v5967
        %v5975 = vmul.f32 %v5956, %v5967
        %v5976 = vmul.f32 %v5957, %v5967
        %v5977 = vmul.f32 %v5958, %v5967
        %v5978 = vmul.f32 %v5959, %v5967
        %v5979 = vmul.f32 %v5960, %v5967
        %v5980 = vmul.f32 %v5961, %v5967
        %v5981 = vmul.f32 %v5962, %v5967
        %v5982 = vmul.f32 %v5963, %v5967
        %v5983 = vmul.f32 %v5964, %v5967
        %v5984 = vmul.f32 %v5965, %v5967
        %v5986 = vperm.slane %v5638, 0
        %v5988 = vadd.f32 %v5969, %v5986
        %v5989 = vadd.f32 %v5970, %v5986
        %v5990 = vadd.f32 %v5971, %v5986
        %v5991 = vadd.f32 %v5972, %v5986
        %v5992 = vadd.f32 %v5973, %v5986
        %v5993 = vadd.f32 %v5974, %v5986
        %v5994 = vadd.f32 %v5975, %v5986
        %v5995 = vadd.f32 %v5976, %v5986
        %v5996 = vadd.f32 %v5977, %v5986
        %v5997 = vadd.f32 %v5978, %v5986
        %v5998 = vadd.f32 %v5979, %v5986
        %v5999 = vadd.f32 %v5980, %v5986
        %v6000 = vadd.f32 %v5981, %v5986
        %v6001 = vadd.f32 %v5982, %v5986
        %v6002 = vadd.f32 %v5983, %v5986
        %v6003 = vadd.f32 %v5984, %v5986
        %v6004 = vpack.c.bf16 %v5989, %v5988
        %v6005 = vpack.c.bf16 %v5991, %v5990
        %v6006 = vpack.c.bf16 %v5993, %v5992
        %v6007 = vpack.c.bf16 %v5995, %v5994
        %v6008 = vpack.c.bf16 %v5997, %v5996
        %v6009 = vpack.c.bf16 %v5999, %v5998
        %v6010 = vpack.c.bf16 %v6001, %v6000
        %v6011 = vpack.c.bf16 %v6003, %v6002
        %v6012 = vld [vmem:[%s958] sm:$0xff]
        %v6013 = vld [vmem:[%s958 + $0x8] sm:$0xff]
        %v6014 = vld [vmem:[%s958 + $0x10] sm:$0xff]
        %v6015 = vld [vmem:[%s958 + $0x18] sm:$0xff]
        %v6016 = vld [vmem:[%s958 + $0x20] sm:$0xff]
        %v6017 = vld [vmem:[%s958 + $0x28] sm:$0xff]
        %v6018 = vld [vmem:[%s958 + $0x30] sm:$0xff]
        %v6019 = vld [vmem:[%s958 + $0x38] sm:$0xff]
        %v6020 = vld [vmem:[%s958 + $0x40] sm:$0xff]
        %v6021 = vld [vmem:[%s958 + $0x48] sm:$0xff]
        %v6022 = vld [vmem:[%s958 + $0x50] sm:$0xff]
        %v6023 = vld [vmem:[%s958 + $0x58] sm:$0xff]
        %v6024 = vld [vmem:[%s958 + $0x60] sm:$0xff]
        %v6025 = vld [vmem:[%s958 + $0x68] sm:$0xff]
        %v6026 = vld [vmem:[%s958 + $0x70] sm:$0xff]
        %v6027 = vld [vmem:[%s958 + $0x78] sm:$0xff]
        %v6028 = vld [vmem:[%s1114] sm:$0x3]
        %v6030 = vperm.slane %v6028, 0
        %v6031 = vperm.slane %v6028, 1
        %v6050 = vunpack.c.l.b16 %v6012
        %v6051 = vunpack.c.h.b16 %v6012
        %v6052 = vunpack.c.l.b16 %v6013
        %v6053 = vunpack.c.h.b16 %v6013
        %v6054 = vunpack.c.l.b16 %v6014
        %v6055 = vunpack.c.h.b16 %v6014
        %v6056 = vunpack.c.l.b16 %v6015
        %v6057 = vunpack.c.h.b16 %v6015
        %v6058 = vunpack.c.l.b16 %v6016
        %v6059 = vunpack.c.h.b16 %v6016
        %v6060 = vunpack.c.l.b16 %v6017
        %v6061 = vunpack.c.h.b16 %v6017
        %v6062 = vunpack.c.l.b16 %v6018
        %v6063 = vunpack.c.h.b16 %v6018
        %v6064 = vunpack.c.l.b16 %v6019
        %v6065 = vunpack.c.h.b16 %v6019
        %v6066 = vunpack.c.l.b16 %v6020
        %v6067 = vunpack.c.h.b16 %v6020
        %v6068 = vunpack.c.l.b16 %v6021
        %v6069 = vunpack.c.h.b16 %v6021
        %v6070 = vunpack.c.l.b16 %v6022
        %v6071 = vunpack.c.h.b16 %v6022
        %v6072 = vunpack.c.l.b16 %v6023
        %v6073 = vunpack.c.h.b16 %v6023
        %v6074 = vunpack.c.l.b16 %v6024
        %v6075 = vunpack.c.h.b16 %v6024
        %v6076 = vunpack.c.l.b16 %v6025
        %v6077 = vunpack.c.h.b16 %v6025
        %v6078 = vunpack.c.l.b16 %v6026
        %v6079 = vunpack.c.h.b16 %v6026
        %v6080 = vunpack.c.l.b16 %v6027
        %v6081 = vunpack.c.h.b16 %v6027
        %v6082 = vpack.c.b16 %v6052, %v6050
        %v6083 = vpack.c.b16 %v6053, %v6051
        %v6084 = vpack.c.b16 %v6056, %v6054
        %v6085 = vpack.c.b16 %v6057, %v6055
        %v6086 = vpack.c.b16 %v6060, %v6058
        %v6087 = vpack.c.b16 %v6061, %v6059
        %v6088 = vpack.c.b16 %v6064, %v6062
        %v6089 = vpack.c.b16 %v6065, %v6063
        %v6090 = vpack.c.b16 %v6068, %v6066
        %v6091 = vpack.c.b16 %v6069, %v6067
        %v6092 = vpack.c.b16 %v6072, %v6070
        %v6093 = vpack.c.b16 %v6073, %v6071
        %v6094 = vpack.c.b16 %v6076, %v6074
        %v6095 = vpack.c.b16 %v6077, %v6075
        %v6096 = vpack.c.b16 %v6080, %v6078
        %v6097 = vpack.c.b16 %v6081, %v6079
        %6114 = vmatpush.bf16.msra.mxu0 %v6096
        %6115 = vmatpush.bf16.msra.mxu0 %v6094
        %6116 = vmatpush.bf16.msra.mxu0 %v6092
        %6117 = vmatpush.bf16.msra.mxu0 %v6090
        %6118 = vmatpush.bf16.msra.mxu0 %v6088
        %6119 = vmatpush.bf16.msra.mxu0 %v6086
        %6120 = vmatpush.bf16.msra.mxu0 %v6084
        %6121 = vmatpush.bf16.msra.mxu0 %v6082
        %6122 = vmatmul.bf16.gmra.mxu0 %v6004
        %v6123 = vpop.f32.mrf.mxu0
        %v6124 = vadd.f32 %v6030, %v6123
        %v6125 = vpop.f32.mrf.mxu0
        %v6126 = vadd.f32 %v6030, %v6125
        %6127 = vmatmul.bf16.gmra.mxu0 %v6005
        %v6128 = vpop.f32.mrf.mxu0
        %v6129 = vadd.f32 %v6030, %v6128
        %v6130 = vpop.f32.mrf.mxu0
        %v6131 = vadd.f32 %v6030, %v6130
        %6132 = vmatmul.bf16.gmra.mxu0 %v6006
        %v6133 = vpop.f32.mrf.mxu0
        %v6134 = vadd.f32 %v6030, %v6133
        %v6135 = vpop.f32.mrf.mxu0
        %v6136 = vadd.f32 %v6030, %v6135
        %6137 = vmatmul.bf16.gmra.mxu0 %v6007
        %v6138 = vpop.f32.mrf.mxu0
        %v6139 = vadd.f32 %v6030, %v6138
        %v6140 = vpop.f32.mrf.mxu0
        %v6141 = vadd.f32 %v6030, %v6140
        %6142 = vmatmul.bf16.gmra.mxu0 %v6008
        %v6143 = vpop.f32.mrf.mxu0
        %v6144 = vadd.f32 %v6030, %v6143
        %v6145 = vpop.f32.mrf.mxu0
        %v6146 = vadd.f32 %v6030, %v6145
        %6147 = vmatmul.bf16.gmra.mxu0 %v6009
        %v6148 = vpop.f32.mrf.mxu0
        %v6149 = vadd.f32 %v6030, %v6148
        %v6150 = vpop.f32.mrf.mxu0
        %v6151 = vadd.f32 %v6030, %v6150
        %6152 = vmatmul.bf16.gmra.mxu0 %v6010
        %v6153 = vpop.f32.mrf.mxu0
        %v6154 = vadd.f32 %v6030, %v6153
        %v6155 = vpop.f32.mrf.mxu0
        %v6156 = vadd.f32 %v6030, %v6155
        %6157 = vmatmul.bf16.gmra.mxu0 %v6011
        %v6158 = vpop.f32.mrf.mxu0
        %v6159 = vadd.f32 %v6030, %v6158
        %v6160 = vpop.f32.mrf.mxu0
        %v6161 = vadd.f32 %v6030, %v6160
        %6162 = vdwg.mxu0
        %6163 = vmatpush.bf16.msra.mxu0 %v6097
        %6164 = vmatpush.bf16.msra.mxu0 %v6095
        %6165 = vmatpush.bf16.msra.mxu0 %v6093
        %6166 = vmatpush.bf16.msra.mxu0 %v6091
        %6167 = vmatpush.bf16.msra.mxu0 %v6089
        %6168 = vmatpush.bf16.msra.mxu0 %v6087
        %6169 = vmatpush.bf16.msra.mxu0 %v6085
        %6170 = vmatpush.bf16.msra.mxu0 %v6083
        %6171 = vmatmul.bf16.gmra.mxu0 %v6004
        %v6172 = vpop.f32.mrf.mxu0
        %v6173 = vadd.f32 %v6031, %v6172
        %v6174 = vpop.f32.mrf.mxu0
        %v6175 = vadd.f32 %v6031, %v6174
        %6176 = vmatmul.bf16.gmra.mxu0 %v6005
        %v6177 = vpop.f32.mrf.mxu0
        %v6178 = vadd.f32 %v6031, %v6177
        %v6179 = vpop.f32.mrf.mxu0
        %v6180 = vadd.f32 %v6031, %v6179
        %6181 = vmatmul.bf16.gmra.mxu0 %v6006
        %v6182 = vpop.f32.mrf.mxu0
        %v6183 = vadd.f32 %v6031, %v6182
        %v6184 = vpop.f32.mrf.mxu0
        %v6185 = vadd.f32 %v6031, %v6184
        %6186 = vmatmul.bf16.gmra.mxu0 %v6007
        %v6187 = vpop.f32.mrf.mxu0
        %v6188 = vadd.f32 %v6031, %v6187
        %v6189 = vpop.f32.mrf.mxu0
        %v6190 = vadd.f32 %v6031, %v6189
        %6191 = vmatmul.bf16.gmra.mxu0 %v6008
        %v6192 = vpop.f32.mrf.mxu0
        %v6193 = vadd.f32 %v6031, %v6192
        %v6194 = vpop.f32.mrf.mxu0
        %v6195 = vadd.f32 %v6031, %v6194
        %6196 = vmatmul.bf16.gmra.mxu0 %v6009
        %v6197 = vpop.f32.mrf.mxu0
        %v6198 = vadd.f32 %v6031, %v6197
        %v6199 = vpop.f32.mrf.mxu0
        %v6200 = vadd.f32 %v6031, %v6199
        %6201 = vmatmul.bf16.gmra.mxu0 %v6010
        %v6202 = vpop.f32.mrf.mxu0
        %v6203 = vadd.f32 %v6031, %v6202
        %v6204 = vpop.f32.mrf.mxu0
        %v6205 = vadd.f32 %v6031, %v6204
        %6206 = vmatmul.bf16.gmra.mxu0 %v6011
        %v6207 = vpop.f32.mrf.mxu0
        %v6208 = vadd.f32 %v6031, %v6207
        %v6209 = vpop.f32.mrf.mxu0
        %v6210 = vadd.f32 %v6031, %v6209
        %6211 = vdwg.mxu0
        %v6212 = vmax.f32 %v6124, 0.0
        %v6213 = vmax.f32 %v6173, 0.0
        %v6214 = vmax.f32 %v6126, 0.0
        %v6215 = vmax.f32 %v6175, 0.0
        %v6216 = vmax.f32 %v6129, 0.0
        %v6217 = vmax.f32 %v6178, 0.0
        %v6218 = vmax.f32 %v6131, 0.0
        %v6219 = vmax.f32 %v6180, 0.0
        %v6220 = vmax.f32 %v6134, 0.0
        %v6221 = vmax.f32 %v6183, 0.0
        %v6222 = vmax.f32 %v6136, 0.0
        %v6223 = vmax.f32 %v6185, 0.0
        %v6224 = vmax.f32 %v6139, 0.0
        %v6225 = vmax.f32 %v6188, 0.0
        %v6226 = vmax.f32 %v6141, 0.0
        %v6227 = vmax.f32 %v6190, 0.0
        %v6228 = vmax.f32 %v6144, 0.0
        %v6229 = vmax.f32 %v6193, 0.0
        %v6230 = vmax.f32 %v6146, 0.0
        %v6231 = vmax.f32 %v6195, 0.0
        %v6232 = vmax.f32 %v6149, 0.0
        %v6233 = vmax.f32 %v6198, 0.0
        %v6234 = vmax.f32 %v6151, 0.0
        %v6235 = vmax.f32 %v6200, 0.0
        %v6236 = vmax.f32 %v6154, 0.0
        %v6237 = vmax.f32 %v6203, 0.0
        %v6238 = vmax.f32 %v6156, 0.0
        %v6239 = vmax.f32 %v6205, 0.0
        %v6240 = vmax.f32 %v6159, 0.0
        %v6241 = vmax.f32 %v6208, 0.0
        %v6242 = vmax.f32 %v6161, 0.0
        %v6243 = vmax.f32 %v6210, 0.0
        %v6244 = vpack.c.bf16 %v6214, %v6212
        %v6245 = vpack.c.bf16 %v6215, %v6213
        %v6246 = vpack.c.bf16 %v6218, %v6216
        %v6247 = vpack.c.bf16 %v6219, %v6217
        %v6248 = vpack.c.bf16 %v6222, %v6220
        %v6249 = vpack.c.bf16 %v6223, %v6221
        %v6250 = vpack.c.bf16 %v6226, %v6224
        %v6251 = vpack.c.bf16 %v6227, %v6225
        %v6252 = vpack.c.bf16 %v6230, %v6228
        %v6253 = vpack.c.bf16 %v6231, %v6229
        %v6254 = vpack.c.bf16 %v6234, %v6232
        %v6255 = vpack.c.bf16 %v6235, %v6233
        %v6256 = vpack.c.bf16 %v6238, %v6236
        %v6257 = vpack.c.bf16 %v6239, %v6237
        %v6258 = vpack.c.bf16 %v6242, %v6240
        %v6259 = vpack.c.bf16 %v6243, %v6241
        %v6260 = vld [vmem:[%s968] sm:$0xf]
        %v6261 = vld [vmem:[%s968 + $0x4] sm:$0xf]
        %v6262 = vld [vmem:[%s968 + $0x8] sm:$0xf]
        %v6263 = vld [vmem:[%s968 + $0xc] sm:$0xf]
        %v6264 = vld [vmem:[%s968 + $0x10] sm:$0xf]
        %v6265 = vld [vmem:[%s968 + $0x14] sm:$0xf]
        %v6266 = vld [vmem:[%s968 + $0x18] sm:$0xf]
        %v6267 = vld [vmem:[%s968 + $0x1c] sm:$0xf]
        %v6268 = vld [vmem:[%s968 + $0x20] sm:$0xf]
        %v6269 = vld [vmem:[%s968 + $0x24] sm:$0xf]
        %v6270 = vld [vmem:[%s968 + $0x28] sm:$0xf]
        %v6271 = vld [vmem:[%s968 + $0x2c] sm:$0xf]
        %v6272 = vld [vmem:[%s968 + $0x30] sm:$0xf]
        %v6273 = vld [vmem:[%s968 + $0x34] sm:$0xf]
        %v6274 = vld [vmem:[%s968 + $0x38] sm:$0xf]
        %v6275 = vld [vmem:[%s968 + $0x3c] sm:$0xf]
        %v6276 = vld [vmem:[%s968 + $0x40] sm:$0xf]
        %v6277 = vld [vmem:[%s968 + $0x44] sm:$0xf]
        %v6278 = vld [vmem:[%s968 + $0x48] sm:$0xf]
        %v6279 = vld [vmem:[%s968 + $0x4c] sm:$0xf]
        %v6280 = vld [vmem:[%s968 + $0x50] sm:$0xf]
        %v6281 = vld [vmem:[%s968 + $0x54] sm:$0xf]
        %v6282 = vld [vmem:[%s968 + $0x58] sm:$0xf]
        %v6283 = vld [vmem:[%s968 + $0x5c] sm:$0xf]
        %v6284 = vld [vmem:[%s968 + $0x60] sm:$0xf]
        %v6285 = vld [vmem:[%s968 + $0x64] sm:$0xf]
        %v6286 = vld [vmem:[%s968 + $0x68] sm:$0xf]
        %v6287 = vld [vmem:[%s968 + $0x6c] sm:$0xf]
        %v6288 = vld [vmem:[%s968 + $0x70] sm:$0xf]
        %v6289 = vld [vmem:[%s968 + $0x74] sm:$0xf]
        %v6290 = vld [vmem:[%s968 + $0x78] sm:$0xf]
        %v6291 = vld [vmem:[%s968 + $0x7c] sm:$0xf]
        %v6292 = vld [vmem:[%s1117] sm:$0x1]
        %v6294 = vperm.slane %v6292, 0
        %v6328 = vunpack.c.l.b16 %v6260
        %v6329 = vunpack.c.l.b16 %v6261
        %v6330 = vunpack.c.l.b16 %v6262
        %v6331 = vunpack.c.l.b16 %v6263
        %v6332 = vunpack.c.l.b16 %v6264
        %v6333 = vunpack.c.l.b16 %v6265
        %v6334 = vunpack.c.l.b16 %v6266
        %v6335 = vunpack.c.l.b16 %v6267
        %v6336 = vunpack.c.l.b16 %v6268
        %v6337 = vunpack.c.l.b16 %v6269
        %v6338 = vunpack.c.l.b16 %v6270
        %v6339 = vunpack.c.l.b16 %v6271
        %v6340 = vunpack.c.l.b16 %v6272
        %v6341 = vunpack.c.l.b16 %v6273
        %v6342 = vunpack.c.l.b16 %v6274
        %v6343 = vunpack.c.l.b16 %v6275
        %v6344 = vunpack.c.l.b16 %v6276
        %v6345 = vunpack.c.l.b16 %v6277
        %v6346 = vunpack.c.l.b16 %v6278
        %v6347 = vunpack.c.l.b16 %v6279
        %v6348 = vunpack.c.l.b16 %v6280
        %v6349 = vunpack.c.l.b16 %v6281
        %v6350 = vunpack.c.l.b16 %v6282
        %v6351 = vunpack.c.l.b16 %v6283
        %v6352 = vunpack.c.l.b16 %v6284
        %v6353 = vunpack.c.l.b16 %v6285
        %v6354 = vunpack.c.l.b16 %v6286
        %v6355 = vunpack.c.l.b16 %v6287
        %v6356 = vunpack.c.l.b16 %v6288
        %v6357 = vunpack.c.l.b16 %v6289
        %v6358 = vunpack.c.l.b16 %v6290
        %v6359 = vunpack.c.l.b16 %v6291
        %v6360 = vpack.c.b16 %v6329, %v6328
        %v6361 = vpack.c.b16 %v6331, %v6330
        %v6362 = vpack.c.b16 %v6333, %v6332
        %v6363 = vpack.c.b16 %v6335, %v6334
        %v6364 = vpack.c.b16 %v6337, %v6336
        %v6365 = vpack.c.b16 %v6339, %v6338
        %v6366 = vpack.c.b16 %v6341, %v6340
        %v6367 = vpack.c.b16 %v6343, %v6342
        %v6368 = vpack.c.b16 %v6345, %v6344
        %v6369 = vpack.c.b16 %v6347, %v6346
        %v6370 = vpack.c.b16 %v6349, %v6348
        %v6371 = vpack.c.b16 %v6351, %v6350
        %v6372 = vpack.c.b16 %v6353, %v6352
        %v6373 = vpack.c.b16 %v6355, %v6354
        %v6374 = vpack.c.b16 %v6357, %v6356
        %v6375 = vpack.c.b16 %v6359, %v6358
        %6392 = vmatpush.bf16.msra.mxu0 %v6367
        %6393 = vmatpush.bf16.msra.mxu0 %v6366
        %6394 = vmatpush.bf16.msra.mxu0 %v6365
        %6395 = vmatpush.bf16.msra.mxu0 %v6364
        %6396 = vmatpush.bf16.msra.mxu0 %v6363
        %6397 = vmatpush.bf16.msra.mxu0 %v6362
        %6398 = vmatpush.bf16.msra.mxu0 %v6361
        %6399 = vmatpush.bf16.msra.mxu0 %v6360
        %6400 = vmatmul.bf16.gmra.mxu0 %v6244
        %v6401 = vpop.f32.mrf.mxu0
        %v6402 = vadd.f32 %v6294, %v6401
        %v6403 = vpop.f32.mrf.mxu0
        %v6404 = vadd.f32 %v6294, %v6403
        %6405 = vmatmul.bf16.gmra.mxu0 %v6246
        %v6406 = vpop.f32.mrf.mxu0
        %v6407 = vadd.f32 %v6294, %v6406
        %v6408 = vpop.f32.mrf.mxu0
        %v6409 = vadd.f32 %v6294, %v6408
        %6410 = vmatmul.bf16.gmra.mxu0 %v6248
        %v6411 = vpop.f32.mrf.mxu0
        %v6412 = vadd.f32 %v6294, %v6411
        %v6413 = vpop.f32.mrf.mxu0
        %v6414 = vadd.f32 %v6294, %v6413
        %6415 = vmatmul.bf16.gmra.mxu0 %v6250
        %v6416 = vpop.f32.mrf.mxu0
        %v6417 = vadd.f32 %v6294, %v6416
        %v6418 = vpop.f32.mrf.mxu0
        %v6419 = vadd.f32 %v6294, %v6418
        %6420 = vmatmul.bf16.gmra.mxu0 %v6252
        %v6421 = vpop.f32.mrf.mxu0
        %v6422 = vadd.f32 %v6294, %v6421
        %v6423 = vpop.f32.mrf.mxu0
        %v6424 = vadd.f32 %v6294, %v6423
        %6425 = vmatmul.bf16.gmra.mxu0 %v6254
        %v6426 = vpop.f32.mrf.mxu0
        %v6427 = vadd.f32 %v6294, %v6426
        %v6428 = vpop.f32.mrf.mxu0
        %v6429 = vadd.f32 %v6294, %v6428
        %6430 = vmatmul.bf16.gmra.mxu0 %v6256
        %v6431 = vpop.f32.mrf.mxu0
        %v6432 = vadd.f32 %v6294, %v6431
        %v6433 = vpop.f32.mrf.mxu0
        %v6434 = vadd.f32 %v6294, %v6433
        %6435 = vmatmul.bf16.gmra.mxu0 %v6258
        %v6436 = vpop.f32.mrf.mxu0
        %v6437 = vadd.f32 %v6294, %v6436
        %v6438 = vpop.f32.mrf.mxu0
        %v6439 = vadd.f32 %v6294, %v6438
        %6440 = vdwg.mxu0
        %6441 = vmatpush.bf16.msra.mxu0 %v6375
        %6442 = vmatpush.bf16.msra.mxu0 %v6374
        %6443 = vmatpush.bf16.msra.mxu0 %v6373
        %6444 = vmatpush.bf16.msra.mxu0 %v6372
        %6445 = vmatpush.bf16.msra.mxu0 %v6371
        %6446 = vmatpush.bf16.msra.mxu0 %v6370
        %6447 = vmatpush.bf16.msra.mxu0 %v6369
        %6448 = vmatpush.bf16.msra.mxu0 %v6368
        %6449 = vmatmul.bf16.gmra.mxu0 %v6245
        %v6450 = vpop.f32.mrf.mxu0
        %v6451 = vadd.f32 %v6402, %v6450
        %v6452 = vpop.f32.mrf.mxu0
        %v6453 = vadd.f32 %v6404, %v6452
        %6454 = vmatmul.bf16.gmra.mxu0 %v6247
        %v6455 = vpop.f32.mrf.mxu0
        %v6456 = vadd.f32 %v6407, %v6455
        %v6457 = vpop.f32.mrf.mxu0
        %v6458 = vadd.f32 %v6409, %v6457
        %6459 = vmatmul.bf16.gmra.mxu0 %v6249
        %v6460 = vpop.f32.mrf.mxu0
        %v6461 = vadd.f32 %v6412, %v6460
        %v6462 = vpop.f32.mrf.mxu0
        %v6463 = vadd.f32 %v6414, %v6462
        %6464 = vmatmul.bf16.gmra.mxu0 %v6251
        %v6465 = vpop.f32.mrf.mxu0
        %v6466 = vadd.f32 %v6417, %v6465
        %v6467 = vpop.f32.mrf.mxu0
        %v6468 = vadd.f32 %v6419, %v6467
        %6469 = vmatmul.bf16.gmra.mxu0 %v6253
        %v6470 = vpop.f32.mrf.mxu0
        %v6471 = vadd.f32 %v6422, %v6470
        %v6472 = vpop.f32.mrf.mxu0
        %v6473 = vadd.f32 %v6424, %v6472
        %6474 = vmatmul.bf16.gmra.mxu0 %v6255
        %v6475 = vpop.f32.mrf.mxu0
        %v6476 = vadd.f32 %v6427, %v6475
        %v6477 = vpop.f32.mrf.mxu0
        %v6478 = vadd.f32 %v6429, %v6477
        %6479 = vmatmul.bf16.gmra.mxu0 %v6257
        %v6480 = vpop.f32.mrf.mxu0
        %v6481 = vadd.f32 %v6432, %v6480
        %v6482 = vpop.f32.mrf.mxu0
        %v6483 = vadd.f32 %v6434, %v6482
        %6484 = vmatmul.bf16.gmra.mxu0 %v6259
        %v6485 = vpop.f32.mrf.mxu0
        %v6486 = vadd.f32 %v6437, %v6485
        %v6487 = vpop.f32.mrf.mxu0
        %v6488 = vadd.f32 %v6439, %v6487
        %6489 = vdwg.mxu0
        %v6490 = vadd.f32 %v5988, %v6451
        %v6491 = vadd.f32 %v5989, %v6453
        %v6492 = vadd.f32 %v5990, %v6456
        %v6493 = vadd.f32 %v5991, %v6458
        %v6494 = vadd.f32 %v5992, %v6461
        %v6495 = vadd.f32 %v5993, %v6463
        %v6496 = vadd.f32 %v5994, %v6466
        %v6497 = vadd.f32 %v5995, %v6468
        %v6498 = vadd.f32 %v5996, %v6471
        %v6499 = vadd.f32 %v5997, %v6473
        %v6500 = vadd.f32 %v5998, %v6476
        %v6501 = vadd.f32 %v5999, %v6478
        %v6502 = vadd.f32 %v6000, %v6481
        %v6503 = vadd.f32 %v6001, %v6483
        %v6504 = vadd.f32 %v6002, %v6486
        %v6505 = vadd.f32 %v6003, %v6488
        %v6506 = vld [vmem:[%s977] sm:$0x1]
        %v6507 = vld [vmem:[%s986] sm:$0x1]
        %6508 = vadd.xlane.f32.xlu0 %v6490
        %v6509 = vpop.xlane.xlu0 %6508
        %6510 = vadd.xlane.f32.xlu0 %v6491
        %v6511 = vpop.xlane.xlu0 %6510
        %6512 = vadd.xlane.f32.xlu0 %v6492
        %v6513 = vpop.xlane.xlu0 %6512
        %6514 = vadd.xlane.f32.xlu0 %v6493
        %v6515 = vpop.xlane.xlu0 %6514
        %6516 = vadd.xlane.f32.xlu0 %v6494
        %v6517 = vpop.xlane.xlu0 %6516
        %6518 = vadd.xlane.f32.xlu0 %v6495
        %v6519 = vpop.xlane.xlu0 %6518
        %6520 = vadd.xlane.f32.xlu0 %v6496
        %v6521 = vpop.xlane.xlu0 %6520
        %6522 = vadd.xlane.f32.xlu0 %v6497
        %v6523 = vpop.xlane.xlu0 %6522
        %6524 = vadd.xlane.f32.xlu0 %v6498
        %v6525 = vpop.xlane.xlu0 %6524
        %6526 = vadd.xlane.f32.xlu0 %v6499
        %v6527 = vpop.xlane.xlu0 %6526
        %6528 = vadd.xlane.f32.xlu0 %v6500
        %v6529 = vpop.xlane.xlu0 %6528
        %6530 = vadd.xlane.f32.xlu0 %v6501
        %v6531 = vpop.xlane.xlu0 %6530
        %6532 = vadd.xlane.f32.xlu0 %v6502
        %v6533 = vpop.xlane.xlu0 %6532
        %6534 = vadd.xlane.f32.xlu0 %v6503
        %v6535 = vpop.xlane.xlu0 %6534
        %6536 = vadd.xlane.f32.xlu0 %v6504
        %v6537 = vpop.xlane.xlu0 %6536
        %6538 = vadd.xlane.f32.xlu0 %v6505
        %v6539 = vpop.xlane.xlu0 %6538
        %v6540 = vmul.f32 %v6509, %v5677
        %v6541 = vmul.f32 %v6511, %v5677
        %v6542 = vmul.f32 %v6513, %v5677
        %v6543 = vmul.f32 %v6515, %v5677
        %v6544 = vmul.f32 %v6517, %v5677
        %v6545 = vmul.f32 %v6519, %v5677
        %v6546 = vmul.f32 %v6521, %v5677
        %v6547 = vmul.f32 %v6523, %v5677
        %v6548 = vmul.f32 %v6525, %v5677
        %v6549 = vmul.f32 %v6527, %v5677
        %v6550 = vmul.f32 %v6529, %v5677
        %v6551 = vmul.f32 %v6531, %v5677
        %v6552 = vmul.f32 %v6533, %v5677
        %v6553 = vmul.f32 %v6535, %v5677
        %v6554 = vmul.f32 %v6537, %v5677
        %v6555 = vmul.f32 %v6539, %v5677
        %v6556 = vsub.f32 %v6490, %v6540
        %v6557 = vsub.f32 %v6491, %v6541
        %v6558 = vsub.f32 %v6492, %v6542
        %v6559 = vsub.f32 %v6493, %v6543
        %v6560 = vsub.f32 %v6494, %v6544
        %v6561 = vsub.f32 %v6495, %v6545
        %v6562 = vsub.f32 %v6496, %v6546
        %v6563 = vsub.f32 %v6497, %v6547
        %v6564 = vsub.f32 %v6498, %v6548
        %v6565 = vsub.f32 %v6499, %v6549
        %v6566 = vsub.f32 %v6500, %v6550
        %v6567 = vsub.f32 %v6501, %v6551
        %v6568 = vsub.f32 %v6502, %v6552
        %v6569 = vsub.f32 %v6503, %v6553
        %v6570 = vsub.f32 %v6504, %v6554
        %v6571 = vsub.f32 %v6505, %v6555
        %v6572 = vmul.f32 %v6556, %v6556
        %v6573 = vmul.f32 %v6557, %v6557
        %v6574 = vmul.f32 %v6558, %v6558
        %v6575 = vmul.f32 %v6559, %v6559
        %v6576 = vmul.f32 %v6560, %v6560
        %v6577 = vmul.f32 %v6561, %v6561
        %v6578 = vmul.f32 %v6562, %v6562
        %v6579 = vmul.f32 %v6563, %v6563
        %v6580 = vmul.f32 %v6564, %v6564
        %v6581 = vmul.f32 %v6565, %v6565
        %v6582 = vmul.f32 %v6566, %v6566
        %v6583 = vmul.f32 %v6567, %v6567
        %v6584 = vmul.f32 %v6568, %v6568
        %v6585 = vmul.f32 %v6569, %v6569
        %v6586 = vmul.f32 %v6570, %v6570
        %v6587 = vmul.f32 %v6571, %v6571
        %6588 = vadd.xlane.f32.xlu0 %v6572
        %v6589 = vpop.xlane.xlu0 %6588
        %6590 = vadd.xlane.f32.xlu0 %v6573
        %v6591 = vpop.xlane.xlu0 %6590
        %6592 = vadd.xlane.f32.xlu0 %v6574
        %v6593 = vpop.xlane.xlu0 %6592
        %6594 = vadd.xlane.f32.xlu0 %v6575
        %v6595 = vpop.xlane.xlu0 %6594
        %6596 = vadd.xlane.f32.xlu0 %v6576
        %v6597 = vpop.xlane.xlu0 %6596
        %6598 = vadd.xlane.f32.xlu0 %v6577
        %v6599 = vpop.xlane.xlu0 %6598
        %6600 = vadd.xlane.f32.xlu0 %v6578
        %v6601 = vpop.xlane.xlu0 %6600
        %6602 = vadd.xlane.f32.xlu0 %v6579
        %v6603 = vpop.xlane.xlu0 %6602
        %6604 = vadd.xlane.f32.xlu0 %v6580
        %v6605 = vpop.xlane.xlu0 %6604
        %6606 = vadd.xlane.f32.xlu0 %v6581
        %v6607 = vpop.xlane.xlu0 %6606
        %6608 = vadd.xlane.f32.xlu0 %v6582
        %v6609 = vpop.xlane.xlu0 %6608
        %6610 = vadd.xlane.f32.xlu0 %v6583
        %v6611 = vpop.xlane.xlu0 %6610
        %6612 = vadd.xlane.f32.xlu0 %v6584
        %v6613 = vpop.xlane.xlu0 %6612
        %6614 = vadd.xlane.f32.xlu0 %v6585
        %v6615 = vpop.xlane.xlu0 %6614
        %6616 = vadd.xlane.f32.xlu0 %v6586
        %v6617 = vpop.xlane.xlu0 %6616
        %6618 = vadd.xlane.f32.xlu0 %v6587
        %v6619 = vpop.xlane.xlu0 %6618
        %v6620 = vmul.f32 %v6589, %v5677
        %v6621 = vmul.f32 %v6591, %v5677
        %v6622 = vmul.f32 %v6593, %v5677
        %v6623 = vmul.f32 %v6595, %v5677
        %v6624 = vmul.f32 %v6597, %v5677
        %v6625 = vmul.f32 %v6599, %v5677
        %v6626 = vmul.f32 %v6601, %v5677
        %v6627 = vmul.f32 %v6603, %v5677
        %v6628 = vmul.f32 %v6605, %v5677
        %v6629 = vmul.f32 %v6607, %v5677
        %v6630 = vmul.f32 %v6609, %v5677
        %v6631 = vmul.f32 %v6611, %v5677
        %v6632 = vmul.f32 %v6613, %v5677
        %v6633 = vmul.f32 %v6615, %v5677
        %v6634 = vmul.f32 %v6617, %v5677
        %v6635 = vmul.f32 %v6619, %v5677
        %v6636 = vadd.f32 %v6620, 1e-05
        %v6637 = vadd.f32 %v6621, 1e-05
        %v6638 = vadd.f32 %v6622, 1e-05
        %v6639 = vadd.f32 %v6623, 1e-05
        %v6640 = vadd.f32 %v6624, 1e-05
        %v6641 = vadd.f32 %v6625, 1e-05
        %v6642 = vadd.f32 %v6626, 1e-05
        %v6643 = vadd.f32 %v6627, 1e-05
        %v6644 = vadd.f32 %v6628, 1e-05
        %v6645 = vadd.f32 %v6629, 1e-05
        %v6646 = vadd.f32 %v6630, 1e-05
        %v6647 = vadd.f32 %v6631, 1e-05
        %v6648 = vadd.f32 %v6632, 1e-05
        %v6649 = vadd.f32 %v6633, 1e-05
        %v6650 = vadd.f32 %v6634, 1e-05
        %v6651 = vadd.f32 %v6635, 1e-05
        %v6652 = vrsqrt.pop %v6636
        %v6653 = vmul.f32 %v6652, %v6636
        %v6654 = vmul.f32 %v6653, %v6652
        %v6655 = vmul.f32 0.5, %v6654
        %v6656 = vsub.f32 1.5, %v6655
        %v6657 = vmul.f32 %v6652, %v6656
        %vm6658 = vweird.f32 %v6636
        %vm6659 = vweird.f32 %v6652
        %vm6660 = vmor %vm6658, %vm6659
        %v6661 = vsel %vm6660, %v6652, %v6657
        %v6662 = vrsqrt.pop %v6637
        %v6663 = vmul.f32 %v6662, %v6637
        %v6664 = vmul.f32 %v6663, %v6662
        %v6665 = vmul.f32 0.5, %v6664
        %v6666 = vsub.f32 1.5, %v6665
        %v6667 = vmul.f32 %v6662, %v6666
        %vm6668 = vweird.f32 %v6637
        %vm6669 = vweird.f32 %v6662
        %vm6670 = vmor %vm6668, %vm6669
        %v6671 = vsel %vm6670, %v6662, %v6667
        %v6672 = vrsqrt.pop %v6638
        %v6673 = vmul.f32 %v6672, %v6638
        %v6674 = vmul.f32 %v6673, %v6672
        %v6675 = vmul.f32 0.5, %v6674
        %v6676 = vsub.f32 1.5, %v6675
        %v6677 = vmul.f32 %v6672, %v6676
        %vm6678 = vweird.f32 %v6638
        %vm6679 = vweird.f32 %v6672
        %vm6680 = vmor %vm6678, %vm6679
        %v6681 = vsel %vm6680, %v6672, %v6677
        %v6682 = vrsqrt.pop %v6639
        %v6683 = vmul.f32 %v6682, %v6639
        %v6684 = vmul.f32 %v6683, %v6682
        %v6685 = vmul.f32 0.5, %v6684
        %v6686 = vsub.f32 1.5, %v6685
        %v6687 = vmul.f32 %v6682, %v6686
        %vm6688 = vweird.f32 %v6639
        %vm6689 = vweird.f32 %v6682
        %vm6690 = vmor %vm6688, %vm6689
        %v6691 = vsel %vm6690, %v6682, %v6687
        %v6692 = vrsqrt.pop %v6640
        %v6693 = vmul.f32 %v6692, %v6640
        %v6694 = vmul.f32 %v6693, %v6692
        %v6695 = vmul.f32 0.5, %v6694
        %v6696 = vsub.f32 1.5, %v6695
        %v6697 = vmul.f32 %v6692, %v6696
        %vm6698 = vweird.f32 %v6640
        %vm6699 = vweird.f32 %v6692
        %vm6700 = vmor %vm6698, %vm6699
        %v6701 = vsel %vm6700, %v6692, %v6697
        %v6702 = vrsqrt.pop %v6641
        %v6703 = vmul.f32 %v6702, %v6641
        %v6704 = vmul.f32 %v6703, %v6702
        %v6705 = vmul.f32 0.5, %v6704
        %v6706 = vsub.f32 1.5, %v6705
        %v6707 = vmul.f32 %v6702, %v6706
        %vm6708 = vweird.f32 %v6641
        %vm6709 = vweird.f32 %v6702
        %vm6710 = vmor %vm6708, %vm6709
        %v6711 = vsel %vm6710, %v6702, %v6707
        %v6712 = vrsqrt.pop %v6642
        %v6713 = vmul.f32 %v6712, %v6642
        %v6714 = vmul.f32 %v6713, %v6712
        %v6715 = vmul.f32 0.5, %v6714
        %v6716 = vsub.f32 1.5, %v6715
        %v6717 = vmul.f32 %v6712, %v6716
        %vm6718 = vweird.f32 %v6642
        %vm6719 = vweird.f32 %v6712
        %vm6720 = vmor %vm6718, %vm6719
        %v6721 = vsel %vm6720, %v6712, %v6717
        %v6722 = vrsqrt.pop %v6643
        %v6723 = vmul.f32 %v6722, %v6643
        %v6724 = vmul.f32 %v6723, %v6722
        %v6725 = vmul.f32 0.5, %v6724
        %v6726 = vsub.f32 1.5, %v6725
        %v6727 = vmul.f32 %v6722, %v6726
        %vm6728 = vweird.f32 %v6643
        %vm6729 = vweird.f32 %v6722
        %vm6730 = vmor %vm6728, %vm6729
        %v6731 = vsel %vm6730, %v6722, %v6727
        %v6732 = vrsqrt.pop %v6644
        %v6733 = vmul.f32 %v6732, %v6644
        %v6734 = vmul.f32 %v6733, %v6732
        %v6735 = vmul.f32 0.5, %v6734
        %v6736 = vsub.f32 1.5, %v6735
        %v6737 = vmul.f32 %v6732, %v6736
        %vm6738 = vweird.f32 %v6644
        %vm6739 = vweird.f32 %v6732
        %vm6740 = vmor %vm6738, %vm6739
        %v6741 = vsel %vm6740, %v6732, %v6737
        %v6742 = vrsqrt.pop %v6645
        %v6743 = vmul.f32 %v6742, %v6645
        %v6744 = vmul.f32 %v6743, %v6742
        %v6745 = vmul.f32 0.5, %v6744
        %v6746 = vsub.f32 1.5, %v6745
        %v6747 = vmul.f32 %v6742, %v6746
        %vm6748 = vweird.f32 %v6645
        %vm6749 = vweird.f32 %v6742
        %vm6750 = vmor %vm6748, %vm6749
        %v6751 = vsel %vm6750, %v6742, %v6747
        %v6752 = vrsqrt.pop %v6646
        %v6753 = vmul.f32 %v6752, %v6646
        %v6754 = vmul.f32 %v6753, %v6752
        %v6755 = vmul.f32 0.5, %v6754
        %v6756 = vsub.f32 1.5, %v6755
        %v6757 = vmul.f32 %v6752, %v6756
        %vm6758 = vweird.f32 %v6646
        %vm6759 = vweird.f32 %v6752
        %vm6760 = vmor %vm6758, %vm6759
        %v6761 = vsel %vm6760, %v6752, %v6757
        %v6762 = vrsqrt.pop %v6647
        %v6763 = vmul.f32 %v6762, %v6647
        %v6764 = vmul.f32 %v6763, %v6762
        %v6765 = vmul.f32 0.5, %v6764
        %v6766 = vsub.f32 1.5, %v6765
        %v6767 = vmul.f32 %v6762, %v6766
        %vm6768 = vweird.f32 %v6647
        %vm6769 = vweird.f32 %v6762
        %vm6770 = vmor %vm6768, %vm6769
        %v6771 = vsel %vm6770, %v6762, %v6767
        %v6772 = vrsqrt.pop %v6648
        %v6773 = vmul.f32 %v6772, %v6648
        %v6774 = vmul.f32 %v6773, %v6772
        %v6775 = vmul.f32 0.5, %v6774
        %v6776 = vsub.f32 1.5, %v6775
        %v6777 = vmul.f32 %v6772, %v6776
        %vm6778 = vweird.f32 %v6648
        %vm6779 = vweird.f32 %v6772
        %vm6780 = vmor %vm6778, %vm6779
        %v6781 = vsel %vm6780, %v6772, %v6777
        %v6782 = vrsqrt.pop %v6649
        %v6783 = vmul.f32 %v6782, %v6649
        %v6784 = vmul.f32 %v6783, %v6782
        %v6785 = vmul.f32 0.5, %v6784
        %v6786 = vsub.f32 1.5, %v6785
        %v6787 = vmul.f32 %v6782, %v6786
        %vm6788 = vweird.f32 %v6649
        %vm6789 = vweird.f32 %v6782
        %vm6790 = vmor %vm6788, %vm6789
        %v6791 = vsel %vm6790, %v6782, %v6787
        %v6792 = vrsqrt.pop %v6650
        %v6793 = vmul.f32 %v6792, %v6650
        %v6794 = vmul.f32 %v6793, %v6792
        %v6795 = vmul.f32 0.5, %v6794
        %v6796 = vsub.f32 1.5, %v6795
        %v6797 = vmul.f32 %v6792, %v6796
        %vm6798 = vweird.f32 %v6650
        %vm6799 = vweird.f32 %v6792
        %vm6800 = vmor %vm6798, %vm6799
        %v6801 = vsel %vm6800, %v6792, %v6797
        %v6802 = vrsqrt.pop %v6651
        %v6803 = vmul.f32 %v6802, %v6651
        %v6804 = vmul.f32 %v6803, %v6802
        %v6805 = vmul.f32 0.5, %v6804
        %v6806 = vsub.f32 1.5, %v6805
        %v6807 = vmul.f32 %v6802, %v6806
        %vm6808 = vweird.f32 %v6651
        %vm6809 = vweird.f32 %v6802
        %vm6810 = vmor %vm6808, %vm6809
        %v6811 = vsel %vm6810, %v6802, %v6807
        %v6812 = vmul.f32 %v6556, %v6661
        %v6813 = vmul.f32 %v6557, %v6671
        %v6814 = vmul.f32 %v6558, %v6681
        %v6815 = vmul.f32 %v6559, %v6691
        %v6816 = vmul.f32 %v6560, %v6701
        %v6817 = vmul.f32 %v6561, %v6711
        %v6818 = vmul.f32 %v6562, %v6721
        %v6819 = vmul.f32 %v6563, %v6731
        %v6820 = vmul.f32 %v6564, %v6741
        %v6821 = vmul.f32 %v6565, %v6751
        %v6822 = vmul.f32 %v6566, %v6761
        %v6823 = vmul.f32 %v6567, %v6771
        %v6824 = vmul.f32 %v6568, %v6781
        %v6825 = vmul.f32 %v6569, %v6791
        %v6826 = vmul.f32 %v6570, %v6801
        %v6827 = vmul.f32 %v6571, %v6811
        %v6829 = vperm.slane %v6506, 0
        %v6831 = vmul.f32 %v6812, %v6829
        %v6832 = vmul.f32 %v6813, %v6829
        %v6833 = vmul.f32 %v6814, %v6829
        %v6834 = vmul.f32 %v6815, %v6829
        %v6835 = vmul.f32 %v6816, %v6829
        %v6836 = vmul.f32 %v6817, %v6829
        %v6837 = vmul.f32 %v6818, %v6829
        %v6838 = vmul.f32 %v6819, %v6829
        %v6839 = vmul.f32 %v6820, %v6829
        %v6840 = vmul.f32 %v6821, %v6829
        %v6841 = vmul.f32 %v6822, %v6829
        %v6842 = vmul.f32 %v6823, %v6829
        %v6843 = vmul.f32 %v6824, %v6829
        %v6844 = vmul.f32 %v6825, %v6829
        %v6845 = vmul.f32 %v6826, %v6829
        %v6846 = vmul.f32 %v6827, %v6829
        %v6848 = vperm.slane %v6507, 0
        %v6850 = vadd.f32 %v6831, %v6848
        %v6851 = vadd.f32 %v6832, %v6848
        %v6852 = vadd.f32 %v6833, %v6848
        %v6853 = vadd.f32 %v6834, %v6848
        %v6854 = vadd.f32 %v6835, %v6848
        %v6855 = vadd.f32 %v6836, %v6848
        %v6856 = vadd.f32 %v6837, %v6848
        %v6857 = vadd.f32 %v6838, %v6848
        %v6858 = vadd.f32 %v6839, %v6848
        %v6859 = vadd.f32 %v6840, %v6848
        %v6860 = vadd.f32 %v6841, %v6848
        %v6861 = vadd.f32 %v6842, %v6848
        %v6862 = vadd.f32 %v6843, %v6848
        %v6863 = vadd.f32 %v6844, %v6848
        %v6864 = vadd.f32 %v6845, %v6848
        %v6865 = vadd.f32 %v6846, %v6848
        %6866 = vst [vmem:[#allocation2] sm:$0xff] %v6850
        %6867 = vst [vmem:[#allocation2 + $0x8] sm:$0xff] %v6851
        %6868 = vst [vmem:[#allocation2 + $0x10] sm:$0xff] %v6852
        %6869 = vst [vmem:[#allocation2 + $0x18] sm:$0xff] %v6853
        %6870 = vst [vmem:[#allocation2 + $0x20] sm:$0xff] %v6854
        %6871 = vst [vmem:[#allocation2 + $0x28] sm:$0xff] %v6855
        %6872 = vst [vmem:[#allocation2 + $0x30] sm:$0xff] %v6856
        %6873 = vst [vmem:[#allocation2 + $0x38] sm:$0xff] %v6857
        %6874 = vst [vmem:[#allocation2 + $0x40] sm:$0xff] %v6858
        %6875 = vst [vmem:[#allocation2 + $0x48] sm:$0xff] %v6859
        %6876 = vst [vmem:[#allocation2 + $0x50] sm:$0xff] %v6860
        %6877 = vst [vmem:[#allocation2 + $0x58] sm:$0xff] %v6861
        %6878 = vst [vmem:[#allocation2 + $0x60] sm:$0xff] %v6862
        %6879 = vst [vmem:[#allocation2 + $0x68] sm:$0xff] %v6863
        %6880 = vst [vmem:[#allocation2 + $0x70] sm:$0xff] %v6864
        %6881 = vst [vmem:[#allocation2 + $0x78] sm:$0xff] %v6865
        %p6882 = scmp.eq.s32.totalorder %s39, 1
        // Predicated region
        $region173: #{forward.1} parent=115 // pred_check
          %p6883 = pneg %p6882
        $region174: #{forward.1} parent=115 // pred_check_branch
          %6885 = sbr.rel (%p6883) target = $region176
        $region175: #{forward.1} parent=115 // pred_region
          %v6886 = vld [vmem:[#allocation19] sm:$0x3]
          %v6887 = vpack.c.bf16 %v6851, %v6850
          %v6888 = vpack.c.bf16 %v6853, %v6852
          %v6889 = vpack.c.bf16 %v6855, %v6854
          %v6890 = vpack.c.bf16 %v6857, %v6856
          %v6891 = vpack.c.bf16 %v6859, %v6858
          %v6892 = vpack.c.bf16 %v6861, %v6860
          %v6893 = vpack.c.bf16 %v6863, %v6862
          %v6894 = vpack.c.bf16 %v6865, %v6864
          %v6895 = vld [vmem:[%s23] sm:$0x7]
          %6897 = vset.pattern.permute.xlu0 0
          %6898 = vperm.xlu0 %6897, %v6895
          %v6899 = vpop.permute.xlu0 %6898
          %6901 = vmatpush.bf16.xpose.msra.mxu0 %v6894
          %6902 = vmatpush.bf16.xpose.msra.mxu0 %v6893
          %6903 = vmatpush.bf16.xpose.msra.mxu0 %v6892
          %6904 = vmatpush.bf16.xpose.msra.mxu0 %v6891
          %6905 = vmatpush.bf16.xpose.msra.mxu0 %v6890
          %6906 = vmatpush.bf16.xpose.msra.mxu0 %v6889
          %6907 = vmatpush.bf16.xpose.msra.mxu0 %v6888
          %6908 = vmatpush.bf16.xpose.msra.mxu0 %v6887
          %6909 = vmatmul.bf16.gmra.mxu0 %v6886
          %v6910 = vpop.f32.mrf.mxu0
          %v6911 = vadd.f32 %v6899, %v6910
          %v6912 = vpop.f32.mrf.mxu0
          %6913 = vdwg.mxu0
          %vm6914 = vcmask 1042432
          %v6915 = vsel %vm6914, %v6911, -inf
          %v6916 = vrot.slane %v6915, 4
          %v6917 = vmax.f32 %v6915, %v6916
          %v6918 = vrot.slane %v6917, 2
          %v6919 = vmax.f32 %v6917, %v6918
          %v6920 = vrot.slane %v6919, 1
          %v6921 = vmax.f32 %v6919, %v6920
          %v6922 = vsub.f32 %v6911, %v6921
          %v6923 = vmul.f32 %v6922, 1.442695
          %v6924 = vpow.pop %v6923
          %v6925 = vsel %vm6914, %v6924, 0.0
          %v6926 = vrot.slane %v6925, 4
          %v6927 = vadd.f32 %v6925, %v6926
          %v6928 = vrot.slane %v6927, 2
          %v6929 = vadd.f32 %v6927, %v6928
          %v6930 = vrot.slane %v6929, 1
          %v6931 = vadd.f32 %v6929, %v6930
          %v6932 = vlog2.pop %v6931
          %v6933 = vmul.f32 %v6932, 0.6931472
          %v6934 = vadd.f32 %v6921, %v6933
          %v6935 = vsub.f32 %v6911, %v6934
          %6936 = vst [vmem:[%s24] sm:$0x7] %v6935
        $region176: #{forward.1} parent=115 // pred_fallthru
          _
        // Predicated region
        $region177: #{forward.1} parent=115 // pred_check
          %p6937 = pneg %p616
        $region178: #{forward.1} parent=115 // pred_check_branch
          %6939 = sbr.rel (%p6937) target = $region180
        $region179: #{forward.1} parent=115 // pred_region
          _
        $region180: #{forward.1} parent=115 // pred_fallthru
          _
        // Predicated region
        $region181: #{forward.1} parent=115 // pred_check
          %p6940 = pneg %p616
        $region182: #{forward.1} parent=115 // pred_check_branch
          %6942 = sbr.rel (%p6940) target = $region184
        $region183: #{forward.1} parent=115 // pred_region
          _
        $region184: #{forward.1} parent=115 // pred_fallthru
          _
      $region116: #{forward.1} parent=5 // pred_fallthru
        _
      %p6943 = scmp.le.s32.totalorder 2, %s34
      // Predicated region
      $region185: #{forward.1} parent=5 // pred_check
        %p6944 = pneg %p6943
      $region186: #{forward.1} parent=5 // pred_check_branch
        %6946 = sbr.rel (%p6944) target = $region188
      $region187: #{forward.1} parent=5 // pred_region
        %s6947 = ssub.s32 %s34, 2
      $region188: #{forward.1} parent=5 // pred_fallthru
        _
    $region6: #{forward.1} parent=1 // loop_footer
      %s38 = sadd.s32 1, %s34
    $region7: #{forward.1} parent=1 // loop_footer_branch
      %33 = sbr.rel target = $region3
    $region8: #{forward.1} parent=1 // loop_exit
      _
    %6948 = vsyncpa [#allocation4], 1
    %s6949 = scalar_lea.sflag [#allocation4], 1
    %6950 = vsyncpa %s6949, 1
    %6951 = vsyncpa [#allocation6], 1
    %6952 = vsyncpa [#allocation9], 1
    %6953 = vsyncpa [#allocation12], 1

</llo_original>
